<compile_context>
chip_gen: v5e
topology: v5e:2x2
jax: 0.10.0
libtpu: 0.0.40
codegen_flags: <defaults>
</compile_context>

<pallas_src>
import functools

import jax
import jax.numpy as jnp
from jax.experimental import pallas as pl
from jax.experimental.pallas import tpu as pltpu

# ----------------------------- options (options.*) --------------------------
HIDDEN_DIM = 32           # options.hidden_dim
COORD_DIM = 3             # options.coord_dim
LAST_HIDDEN_DIM = 16      # options.last_hidden_dim
BLOCK_NUM = 6             # GraphBottleneck(6, ...)
GRAPHCONV_ACTIVATION = True
Z_THRESHOLD = 0.0         # options.z_threshold

CAMERA_F = (35.0, 35.0)
CAMERA_C = (15.5, 15.5)
MESH_POS = (0.0, 0.0, -0.8)

# mesh sizes (synthetic ellipsoid, 3 refinement levels)
N1, E1 = 10, 6
N2 = N1 + E1              # 16
E2 = 8
N3 = N2 + E2              # 24

ENC_DIMS = [(3, 8), (8, 16), (16, 32), (32, 64)]   # synthetic encoder channels
FEATURES_DIM_ENC = sum(c for _, c in ENC_DIMS)     # 120
FEATURES_DIM = FEATURES_DIM_ENC + COORD_DIM        # 123


# ============================ Pallas kernels ================================
def _matmul_bias_kernel(a_ref, b_ref, bias_ref, o_ref, *, relu):
    acc = jnp.dot(a_ref[...], b_ref[...], preferred_element_type=jnp.float32)
    acc = acc + bias_ref[...]
    if relu:
        acc = jnp.maximum(acc, 0.0)
    o_ref[...] = acc.astype(o_ref.dtype)


def pallas_matmul_bias(a, b, bias, relu=False):
    """(M,K) @ (K,N) + bias (+ReLU) on the MXU.  bf16 operands, f32 accumulate,
    M tiled with a 'parallel' grid so v7x megacore / pipelining can engage."""
    M, K = a.shape
    _, N = b.shape
    if M % 256 == 0:
        tile_m = 256
    elif M % 128 == 0:
        tile_m = 128
    else:
        tile_m = M                      # small M: single full block
    grid = (M // tile_m,)
    cost = pl.CostEstimate(
        flops=2 * M * K * N, transcendentals=0,
        bytes_accessed=M * K * 2 + K * N * 2 + N * 4 + M * N * 4)
    return pl.pallas_call(
        functools.partial(_matmul_bias_kernel, relu=relu),
        out_shape=jax.ShapeDtypeStruct((M, N), jnp.float32),
        grid=grid,
        in_specs=[
            pl.BlockSpec((tile_m, K), lambda i: (i, 0)),
            pl.BlockSpec((K, N), lambda i: (0, 0)),
            pl.BlockSpec((1, N), lambda i: (0, 0)),
        ],
        out_specs=pl.BlockSpec((tile_m, N), lambda i: (i, 0)),
        compiler_params=pltpu.CompilerParams(dimension_semantics=("parallel",)),
        cost_estimate=cost,
    )(a, b, bias.reshape(1, N))


def _fused_gconv(adj_bf16, h_f32, w_bf16, b_f32, relu):
    """GraphConv with merged weights (2 MXU ops):
       adj @ (h @ W) + h @ W_loop + b == concat([adj@h, h], -1) @ [[W],[W_loop]] + b
    """
    ax = jnp.dot(adj_bf16, h_f32.astype(jnp.bfloat16),
                 preferred_element_type=jnp.float32)
    cat = jnp.concatenate([ax, h_f32], axis=-1).astype(jnp.bfloat16)
    out = jnp.dot(cat, w_bf16, preferred_element_type=jnp.float32) + b_f32
    if relu:
        out = jnp.maximum(out, 0.0)
    return out


def _bottleneck_kernel(x_ref, adj_ref, wc1_ref, bc1_ref, wb_ref, bb_ref,
                       wc2_ref, bc2_ref, xout_ref, hout_ref, *, block_num, relu):
    """Whole GraphBottleneck in one kernel: conv1 + block_num GResBlocks + conv2.
    Activations stay resident in VMEM/vregs; weights are indexed statically."""
    adj = adj_ref[...]
    h = _fused_gconv(adj, x_ref[...], wc1_ref[...], bc1_ref[...], relu)
    for k in range(block_num):                      # static unroll (BLOCK_NUM=6)
        y = _fused_gconv(adj, h, wb_ref[2 * k], bb_ref[2 * k], relu)
        y = _fused_gconv(adj, y, wb_ref[2 * k + 1], bb_ref[2 * k + 1], relu)
        h = (h + y) * 0.5                            # GResBlock residual
    xout_ref[...] = _fused_gconv(adj, h, wc2_ref[...], bc2_ref[...], False)
    hout_ref[...] = h


def graph_bottleneck(x_flat, adj_bd, p, activation):
    """x_flat: (B*N, Fin) with batch folded into rows (block-diag adjacency)."""
    BN, fin = x_flat.shape
    hidden = p["wc1"].shape[1]
    fout = p["wc2"].shape[1]
    block_num = p["wb"].shape[0] // 2

    def gflops(f, fo):
        return 2 * BN * BN * f + 2 * BN * (2 * f) * fo

    flops = (gflops(fin, hidden) + 2 * block_num * gflops(hidden, hidden)
             + gflops(hidden, fout))
    operands = (x_flat, adj_bd, p["wc1"], p["bc1"], p["wb"], p["bb"],
                p["wc2"], p["bc2"])
    bytes_accessed = (sum(int(t.size) * t.dtype.itemsize for t in operands)
                      + BN * (fout + hidden) * 4)
    return pl.pallas_call(
        functools.partial(_bottleneck_kernel, block_num=block_num,
                          relu=activation),
        out_shape=(jax.ShapeDtypeStruct((BN, fout), jnp.float32),
                   jax.ShapeDtypeStruct((BN, hidden), jnp.float32)),
        cost_estimate=pl.CostEstimate(flops=flops, transcendentals=0,
                                      bytes_accessed=bytes_accessed),
    )(*operands)


def _gconv_kernel(x_ref, adj_ref, w_ref, b_ref, o_ref, *, relu):
    o_ref[...] = _fused_gconv(adj_ref[...], x_ref[...], w_ref[...],
                              b_ref[...], relu)


def graph_conv_single(x_flat, adj_bd, w_cat, b, relu=False):
    BN = x_flat.shape[0]
    fout = w_cat.shape[1]
    return pl.pallas_call(
        functools.partial(_gconv_kernel, relu=relu),
        out_shape=jax.ShapeDtypeStruct((BN, fout), jnp.float32),
    )(x_flat, adj_bd, w_cat, b)


# ============================ JAX glue layers ===============================
def conv2d(x_nhwc, w_hwio, b, stride, padding, relu=True):
    """3x3 strided conv via im2col (glue, tiny tensors) + Pallas bf16 matmul."""
    kh, kw, cin, cout = w_hwio.shape
    xp = jnp.pad(x_nhwc, ((0, 0), (padding, padding), (padding, padding), (0, 0)))
    B, Hp, Wp, _ = xp.shape
    Ho = (Hp - kh) // stride + 1
    Wo = (Wp - kw) // stride + 1
    cols = [xp[:, i:i + stride * Ho:stride, j:j + stride * Wo:stride, :]
            for i in range(kh) for j in range(kw)]
    patches = jnp.concatenate(cols, axis=-1).astype(jnp.bfloat16)
    a = patches.reshape(B * Ho * Wo, kh * kw * cin)
    w2 = w_hwio.reshape(kh * kw * cin, cout)               # already bf16
    out = pallas_matmul_bias(a, w2, b, relu=relu)
    return out.reshape(B, Ho, Wo, cout)


def nn_encoder(params, img_nchw):
    x = jnp.transpose(img_nchw, (0, 2, 3, 1))              # NCHW -> NHWC
    feats = []
    for (w, b) in params["encoder"]:
        x = conv2d(x, w, b, stride=2, padding=1, relu=True)
        feats.append(x)
    return feats                                            # list of NHWC maps


def grid_sample_bilinear(feat, grid):
    """F.grid_sample(align_corners=False, padding_mode='zeros') equivalent.
    feat: (B,H,W,C) NHWC, grid: (B,N,2) normalized (x=w, y=h) in [-1,1]."""
    B, H, W, C = feat.shape
    gx, gy = grid[..., 0], grid[..., 1]
    x = ((gx + 1.0) * W - 1.0) * 0.5
    y = ((gy + 1.0) * H - 1.0) * 0.5
    x0 = jnp.floor(x)
    y0 = jnp.floor(y)
    x1 = x0 + 1.0
    y1 = y0 + 1.0
    wa = (x1 - x) * (y1 - y)
    wb = (x1 - x) * (y - y0)
    wc = (x - x0) * (y1 - y)
    wd = (x - x0) * (y - y0)

    flat = feat.reshape(B, H * W, C)
    bidx = jnp.arange(B)[:, None]

    def sample(xi, yi):
        valid = (xi >= 0) & (xi < W) & (yi >= 0) & (yi < H)
        xc = jnp.clip(xi, 0, W - 1).astype(jnp.int32)
        yc = jnp.clip(yi, 0, H - 1).astype(jnp.int32)
        vals = flat[bidx, yc * W + xc]                      # (B,N,C)
        return vals * valid[..., None].astype(feat.dtype)

    return (sample(x0, y0) * wa[..., None] + sample(x0, y1) * wb[..., None]
            + sample(x1, y0) * wc[..., None] + sample(x1, y1) * wd[..., None])


def bound_val(z, bound):
    if bound < 0:
        return -jax.nn.relu(-z - bound) - bound
    elif bound > 0:
        return jax.nn.relu(z - bound) + bound
    return z


def graph_projection(img_shape, img_feats, pts):
    """GraphProjection.forward: cat([pts, sampled feats per level], dim=2)."""
    resolution = jnp.asarray(img_shape, jnp.float32)        # (W, H)
    half_res = (resolution - 1.0) / 2.0
    cam_c_off = jnp.asarray(CAMERA_C, jnp.float32) - half_res
    positions = pts + jnp.asarray(MESH_POS, jnp.float32)
    z = bound_val(positions[..., 2], Z_THRESHOLD)
    w = -CAMERA_F[1] * (positions[..., 0] / z) + cam_c_off[0]
    h = CAMERA_F[0] * (positions[..., 1] / z) + cam_c_off[1]
    w = jnp.clip(w / half_res[0], -1.0, 1.0)
    h = jnp.clip(h / half_res[1], -1.0, 1.0)
    grid = jnp.stack([w, h], axis=-1)                       # (B,N,2)
    feats = [pts]
    for f in img_feats:
        feats.append(grid_sample_bilinear(f, grid))
    return jnp.concatenate(feats, axis=2)


def graph_unpool(x, unpool_idx):
    new_v = 0.5 * (x[:, unpool_idx[:, 0]] + x[:, unpool_idx[:, 1]])
    return jnp.concatenate([x, new_v], axis=1)


# ============================ full forward ==================================
def reconstruction3d_forward(params, img):
    B = img.shape[0]
    img_feats = nn_encoder(params, img)
    img_shape = (img.shape[-1], img.shape[-2])              # (W, H)
    init_pts = jnp.broadcast_to(params["init_pts"][None],
                                (B,) + params["init_pts"].shape)
    # block-diagonal adjacency folds the batch into rows (one MXU op per layer)
    eye_b = jnp.eye(B, dtype=jnp.bfloat16)
    adj_bd = [jnp.kron(eye_b, a) for a in params["adj"]]
    up = params["unpool_idx"]

    def bottleneck(x_bnf, level):
        b, n, f = x_bnf.shape
        xo, ho = graph_bottleneck(x_bnf.reshape(b * n, f), adj_bd[level],
                                  params["gcns"][level], GRAPHCONV_ACTIVATION)
        return xo.reshape(b, n, -1), ho.reshape(b, n, -1)

    x = graph_projection(img_shape, img_feats, init_pts)
    x1, x_hidden = bottleneck(x, 0)
    x1_up = graph_unpool(x1, up[0])

    x = graph_projection(img_shape, img_feats, x1)
    x = graph_unpool(jnp.concatenate([x, x_hidden], axis=2), up[0])
    x2, x_hidden = bottleneck(x, 1)
    x2_up = graph_unpool(x2, up[1])

    x = graph_projection(img_shape, img_feats, x2)
    x = graph_unpool(jnp.concatenate([x, x_hidden], axis=2), up[1])
    x3, _ = bottleneck(x, 2)
    if GRAPHCONV_ACTIVATION:
        x3 = jax.nn.relu(x3)
    w_gc, b_gc = params["graphconv"]
    b3, n3, _ = x3.shape
    x3 = graph_conv_single(x3.reshape(b3 * n3, -1), adj_bd[2], w_gc, b_gc,
                           relu=False).reshape(b3, n3, COORD_DIM)

    return {"pred_coord": [x1, x2, x3],
            "pred_coord_before_deform": [init_pts, x1_up, x2_up]}


# ============================ parameter init ================================
def _gconv_params(key, fin, fout, scale=0.05):
    k1, k2 = jax.random.split(key)
    w = jax.random.normal(k1, (fin, fout), jnp.float32) * scale
    wl = jax.random.normal(k2, (fin, fout), jnp.float32) * scale
    b = jnp.zeros((fout,), jnp.float32)
    return (w, wl, b)


def _bottleneck_params(key, block_num, fin, hidden, fout):
    keys = jax.random.split(key, 2 + 2 * block_num)
    return {
        "conv1": _gconv_params(keys[0], fin, hidden),
        "conv2": _gconv_params(keys[1], hidden, fout),
        "blocks": [(_gconv_params(keys[2 + 2 * i], hidden, hidden),
                    _gconv_params(keys[3 + 2 * i], hidden, hidden))
                   for i in range(block_num)],
    }


def _make_adj(key, n):
    a = (jax.random.uniform(key, (n, n)) < 0.4).astype(jnp.float32)
    a = jnp.triu(a, k=1)
    a = a + a.T
    deg = jnp.maximum(a.sum(axis=1, keepdims=True), 1.0)
    return (a / deg).astype(jnp.float32)


def init_params(key):
    keys = jax.random.split(key, 16)
    # synthetic ellipsoid
    init_pts = jax.random.uniform(keys[0], (N1, COORD_DIM), jnp.float32,
                                  minval=-0.2, maxval=0.2)
    adj = [_make_adj(keys[1], N1), _make_adj(keys[2], N2), _make_adj(keys[3], N3)]
    unpool_idx = [
        jnp.array([[i, (i + 1) % N1] for i in range(E1)], jnp.int32),
        jnp.array([[i, (i + 3) % N2] for i in range(E2)], jnp.int32),
    ]
    # synthetic encoder (stands in for resnet50)
    encoder = []
    ek = jax.random.split(keys[4], len(ENC_DIMS))
    for k, (cin, cout) in zip(ek, ENC_DIMS):
        w = jax.random.normal(k, (3, 3, cin, cout), jnp.float32) * 0.05
        b = jnp.zeros((cout,), jnp.float32)
        encoder.append((w, b))
    # graph bottlenecks
    gcns = [
        _bottleneck_params(keys[5], BLOCK_NUM, FEATURES_DIM, HIDDEN_DIM, COORD_DIM),
        _bottleneck_params(keys[6], BLOCK_NUM, FEATURES_DIM + HIDDEN_DIM,
                           HIDDEN_DIM, COORD_DIM),
        _bottleneck_params(keys[7], BLOCK_NUM, FEATURES_DIM + HIDDEN_DIM,
                           HIDDEN_DIM, LAST_HIDDEN_DIM),
    ]
    graphconv = _gconv_params(keys[8], LAST_HIDDEN_DIM, COORD_DIM)
    return {"init_pts": init_pts, "adj": adj, "unpool_idx": unpool_idx,
            "encoder": encoder, "gcns": gcns, "graphconv": graphconv}


def _fuse_gconv_weights(p):
    w, wl, b = p
    w_cat = jnp.concatenate([w, wl], axis=0).astype(jnp.bfloat16)   # (2*Fin,Fout)
    return w_cat, b.reshape(1, -1).astype(jnp.float32)


def prepare_params(raw):
    """Pack the module's parameters into the fused / bf16 layout the kernels use:
    W,W_loop concatenated, GResBlock weights stacked for the fused bottleneck."""
    packed = {
        "init_pts": raw["init_pts"],
        "adj": [a.astype(jnp.bfloat16) for a in raw["adj"]],
        "unpool_idx": raw["unpool_idx"],
        "encoder": [(w.astype(jnp.bfloat16), b) for (w, b) in raw["encoder"]],
    }
    gcns = []
    for p in raw["gcns"]:
        wc1, bc1 = _fuse_gconv_weights(p["conv1"])
        wc2, bc2 = _fuse_gconv_weights(p["conv2"])
        wbs, bbs = [], []
        for (c1, c2) in p["blocks"]:
            for c in (c1, c2):
                wk, bk = _fuse_gconv_weights(c)
                wbs.append(wk)
                bbs.append(bk)
        gcns.append({"wc1": wc1, "bc1": bc1,
                     "wb": jnp.stack(wbs),       # (2*BLOCK_NUM, 2*H, H) bf16
                     "bb": jnp.stack(bbs),       # (2*BLOCK_NUM, 1, H) f32
                     "wc2": wc2, "bc2": bc2})
    packed["gcns"] = gcns
    packed["graphconv"] = _fuse_gconv_weights(raw["graphconv"])
    return packed


# ================================= main =====================================
if __name__ == "__main__":
    key = jax.random.PRNGKey(0)
    k_param, k_img = jax.random.split(key)
    raw_params = init_params(k_param)
    params = prepare_params(raw_params)
    img = jax.random.normal(k_img, (2, 3, 32, 32), jnp.float32)   # NCHW input

    fwd = jax.jit(reconstruction3d_forward)
    out = fwd(params, img)
    out = jax.block_until_ready(out)

    # light sanity checks on shapes
    assert out["pred_coord"][0].shape == (2, N1, COORD_DIM)
    assert out["pred_coord"][1].shape == (2, N2, COORD_DIM)
    assert out["pred_coord"][2].shape == (2, N3, COORD_DIM)
    assert out["pred_coord_before_deform"][0].shape == (2, N1, COORD_DIM)
    assert out["pred_coord_before_deform"][1].shape == (2, N2, COORD_DIM)
    assert out["pred_coord_before_deform"][2].shape == (2, N3, COORD_DIM)

    print("KERNEL_OK")
</pallas_src>

<mosaic_0001>
module attributes {stable_mosaic.version = 11 : i64} {
  func.func @_matmul_bias_kernel(%arg0: i32, %arg1: memref<256x27xbf16, #tpu.memory_space<vmem>>, %arg2: memref<27x8xbf16, #tpu.memory_space<vmem>>, %arg3: memref<1x8xf32, #tpu.memory_space<vmem>>, %arg4: memref<256x8xf32, #tpu.memory_space<vmem>>) attributes {dimension_semantics = [#tpu.dimension_semantics<parallel>], iteration_bounds = array<i64: 2>, scalar_prefetch = 0 : i64, scratch_operands = 0 : i64, tpu.core_type = #tpu.core_type<tc>, window_params = [{transform_indices = @transform_0, window_bounds = array<i64: 256, 27>}, {pipeline_mode = #tpu.pipeline_mode<synchronous>, transform_indices = @transform_1, window_bounds = array<i64: 27, 8>}, {pipeline_mode = #tpu.pipeline_mode<synchronous>, transform_indices = @transform_2, window_bounds = array<i64: 1, 8>}, {transform_indices = @transform_3, window_bounds = array<i64: 256, 8>}]} {
    %c0 = arith.constant 0 : index
    %c0_0 = arith.constant 0 : index
    %0 = vector.load %arg1[%c0, %c0_0] : memref<256x27xbf16, #tpu.memory_space<vmem>>, vector<256x27xbf16>
    %c0_1 = arith.constant 0 : index
    %c0_2 = arith.constant 0 : index
    %1 = vector.load %arg2[%c0_1, %c0_2] : memref<27x8xbf16, #tpu.memory_space<vmem>>, vector<27x8xbf16>
    %cst = arith.constant dense<0.000000e+00> : vector<256x8xf32>
    %2 = tpu.matmul %0, %1, %cst {dimension_numbers = #tpu.dot_dimension_numbers<[1], [0], [0], [1], [0, 0, 1, 1], [], []>} : vector<256x27xbf16>, vector<27x8xbf16>, vector<256x8xf32> -> vector<256x8xf32>
    %c0_3 = arith.constant 0 : index
    %c0_4 = arith.constant 0 : index
    %3 = vector.load %arg3[%c0_3, %c0_4] : memref<1x8xf32, #tpu.memory_space<vmem>>, vector<1x8xf32>
    %4 = vector.broadcast %3 : vector<1x8xf32> to vector<256x8xf32>
    %5 = arith.addf %2, %4 : vector<256x8xf32>
    %cst_5 = arith.constant 0.000000e+00 : f32
    %6 = vector.broadcast %cst_5 : f32 to vector<256x8xf32>
    %7 = arith.maximumf %5, %6 : vector<256x8xf32>
    %c0_6 = arith.constant 0 : index
    %c0_7 = arith.constant 0 : index
    %8 = vector.load %arg4[%c0_6, %c0_7] : memref<256x8xf32, #tpu.memory_space<vmem>>, vector<256x8xf32>
    tpu.vector_store %arg4[%c0_6, %c0_7], %7 {strides = array<i32>} : memref<256x8xf32, #tpu.memory_space<vmem>>, vector<256x8xf32>,
    return
  }
  func.func @transform_0(%arg0: i32) -> (i32, i32) {
    %c0_i32 = arith.constant 0 : i32
    %c0_i32_0 = arith.constant 0 : i32
    return %arg0, %c0_i32 : i32, i32
  }
  func.func @transform_1(%arg0: i32) -> (i32, i32) {
    %c0_i32 = arith.constant 0 : i32
    %c0_i32_0 = arith.constant 0 : i32
    %c0_i32_1 = arith.constant 0 : i32
    return %c0_i32, %c0_i32_0 : i32, i32
  }
  func.func @transform_2(%arg0: i32) -> (i32, i32) {
    %c0_i32 = arith.constant 0 : i32
    %c0_i32_0 = arith.constant 0 : i32
    %c0_i32_1 = arith.constant 0 : i32
    return %c0_i32, %c0_i32_0 : i32, i32
  }
  func.func @transform_3(%arg0: i32) -> (i32, i32) {
    %c0_i32 = arith.constant 0 : i32
    %c0_i32_0 = arith.constant 0 : i32
    return %arg0, %c0_i32 : i32, i32
  }
}

module attributes {stable_mosaic.version = 11 : i64} {
  func.func @_matmul_bias_kernel(%arg0: i32, %arg1: memref<128x72xbf16, #tpu.memory_space<vmem>>, %arg2: memref<72x16xbf16, #tpu.memory_space<vmem>>, %arg3: memref<1x16xf32, #tpu.memory_space<vmem>>, %arg4: memref<128x16xf32, #tpu.memory_space<vmem>>) attributes {dimension_semantics = [#tpu.dimension_semantics<parallel>], iteration_bounds = array<i64: 1>, scalar_prefetch = 0 : i64, scratch_operands = 0 : i64, tpu.core_type = #tpu.core_type<tc>, window_params = [{transform_indices = @transform_0, window_bounds = array<i64: 128, 72>}, {pipeline_mode = #tpu.pipeline_mode<synchronous>, transform_indices = @transform_1, window_bounds = array<i64: 72, 16>}, {pipeline_mode = #tpu.pipeline_mode<synchronous>, transform_indices = @transform_2, window_bounds = array<i64: 1, 16>}, {transform_indices = @transform_3, window_bounds = array<i64: 128, 16>}]} {
    %c0 = arith.constant 0 : index
    %c0_0 = arith.constant 0 : index
    %0 = vector.load %arg1[%c0, %c0_0] : memref<128x72xbf16, #tpu.memory_space<vmem>>, vector<128x72xbf16>
    %c0_1 = arith.constant 0 : index
    %c0_2 = arith.constant 0 : index
    %1 = vector.load %arg2[%c0_1, %c0_2] : memref<72x16xbf16, #tpu.memory_space<vmem>>, vector<72x16xbf16>
    %cst = arith.constant dense<0.000000e+00> : vector<128x16xf32>
    %2 = tpu.matmul %0, %1, %cst {dimension_numbers = #tpu.dot_dimension_numbers<[1], [0], [0], [1], [0, 0, 1, 1], [], []>} : vector<128x72xbf16>, vector<72x16xbf16>, vector<128x16xf32> -> vector<128x16xf32>
    %c0_3 = arith.constant 0 : index
    %c0_4 = arith.constant 0 : index
    %3 = vector.load %arg3[%c0_3, %c0_4] : memref<1x16xf32, #tpu.memory_space<vmem>>, vector<1x16xf32>
    %4 = vector.broadcast %3 : vector<1x16xf32> to vector<128x16xf32>
    %5 = arith.addf %2, %4 : vector<128x16xf32>
    %cst_5 = arith.constant 0.000000e+00 : f32
    %6 = vector.broadcast %cst_5 : f32 to vector<128x16xf32>
    %7 = arith.maximumf %5, %6 : vector<128x16xf32>
    %c0_6 = arith.constant 0 : index
    %c0_7 = arith.constant 0 : index
    %8 = vector.load %arg4[%c0_6, %c0_7] : memref<128x16xf32, #tpu.memory_space<vmem>>, vector<128x16xf32>
    tpu.vector_store %arg4[%c0_6, %c0_7], %7 {strides = array<i32>} : memref<128x16xf32, #tpu.memory_space<vmem>>, vector<128x16xf32>,
    return
  }
  func.func @transform_0(%arg0: i32) -> (i32, i32) {
    %c0_i32 = arith.constant 0 : i32
    %c0_i32_0 = arith.constant 0 : i32
    return %arg0, %c0_i32 : i32, i32
  }
  func.func @transform_1(%arg0: i32) -> (i32, i32) {
    %c0_i32 = arith.constant 0 : i32
    %c0_i32_0 = arith.constant 0 : i32
    %c0_i32_1 = arith.constant 0 : i32
    return %c0_i32, %c0_i32_0 : i32, i32
  }
  func.func @transform_2(%arg0: i32) -> (i32, i32) {
    %c0_i32 = arith.constant 0 : i32
    %c0_i32_0 = arith.constant 0 : i32
    %c0_i32_1 = arith.constant 0 : i32
    return %c0_i32, %c0_i32_0 : i32, i32
  }
  func.func @transform_3(%arg0: i32) -> (i32, i32) {
    %c0_i32 = arith.constant 0 : i32
    %c0_i32_0 = arith.constant 0 : i32
    return %arg0, %c0_i32 : i32, i32
  }
}

module attributes {stable_mosaic.version = 11 : i64} {
  func.func @_matmul_bias_kernel(%arg0: i32, %arg1: memref<32x144xbf16, #tpu.memory_space<vmem>>, %arg2: memref<144x32xbf16, #tpu.memory_space<vmem>>, %arg3: memref<1x32xf32, #tpu.memory_space<vmem>>, %arg4: memref<32x32xf32, #tpu.memory_space<vmem>>) attributes {dimension_semantics = [#tpu.dimension_semantics<parallel>], iteration_bounds = array<i64: 1>, scalar_prefetch = 0 : i64, scratch_operands = 0 : i64, tpu.core_type = #tpu.core_type<tc>, window_params = [{transform_indices = @transform_0, window_bounds = array<i64: 32, 144>}, {pipeline_mode = #tpu.pipeline_mode<synchronous>, transform_indices = @transform_1, window_bounds = array<i64: 144, 32>}, {pipeline_mode = #tpu.pipeline_mode<synchronous>, transform_indices = @transform_2, window_bounds = array<i64: 1, 32>}, {transform_indices = @transform_3, window_bounds = array<i64: 32, 32>}]} {
    %c0 = arith.constant 0 : index
    %c0_0 = arith.constant 0 : index
    %0 = vector.load %arg1[%c0, %c0_0] : memref<32x144xbf16, #tpu.memory_space<vmem>>, vector<32x144xbf16>
    %c0_1 = arith.constant 0 : index
    %c0_2 = arith.constant 0 : index
    %1 = vector.load %arg2[%c0_1, %c0_2] : memref<144x32xbf16, #tpu.memory_space<vmem>>, vector<144x32xbf16>
    %cst = arith.constant dense<0.000000e+00> : vector<32x32xf32>
    %2 = tpu.matmul %0, %1, %cst {dimension_numbers = #tpu.dot_dimension_numbers<[1], [0], [0], [1], [0, 0, 1, 1], [], []>} : vector<32x144xbf16>, vector<144x32xbf16>, vector<32x32xf32> -> vector<32x32xf32>
    %c0_3 = arith.constant 0 : index
    %c0_4 = arith.constant 0 : index
    %3 = vector.load %arg3[%c0_3, %c0_4] : memref<1x32xf32, #tpu.memory_space<vmem>>, vector<1x32xf32>
    %4 = vector.broadcast %3 : vector<1x32xf32> to vector<32x32xf32>
    %5 = arith.addf %2, %4 : vector<32x32xf32>
    %cst_5 = arith.constant 0.000000e+00 : f32
    %6 = vector.broadcast %cst_5 : f32 to vector<32x32xf32>
    %7 = arith.maximumf %5, %6 : vector<32x32xf32>
    %c0_6 = arith.constant 0 : index
    %c0_7 = arith.constant 0 : index
    %8 = vector.load %arg4[%c0_6, %c0_7] : memref<32x32xf32, #tpu.memory_space<vmem>>, vector<32x32xf32>
    tpu.vector_store %arg4[%c0_6, %c0_7], %7 {strides = array<i32>} : memref<32x32xf32, #tpu.memory_space<vmem>>, vector<32x32xf32>,
    return
  }
  func.func @transform_0(%arg0: i32) -> (i32, i32) {
    %c0_i32 = arith.constant 0 : i32
    %c0_i32_0 = arith.constant 0 : i32
    return %arg0, %c0_i32 : i32, i32
  }
  func.func @transform_1(%arg0: i32) -> (i32, i32) {
    %c0_i32 = arith.constant 0 : i32
    %c0_i32_0 = arith.constant 0 : i32
    %c0_i32_1 = arith.constant 0 : i32
    return %c0_i32, %c0_i32_0 : i32, i32
  }
  func.func @transform_2(%arg0: i32) -> (i32, i32) {
    %c0_i32 = arith.constant 0 : i32
    %c0_i32_0 = arith.constant 0 : i32
    %c0_i32_1 = arith.constant 0 : i32
    return %c0_i32, %c0_i32_0 : i32, i32
  }
  func.func @transform_3(%arg0: i32) -> (i32, i32) {
    %c0_i32 = arith.constant 0 : i32
    %c0_i32_0 = arith.constant 0 : i32
    return %arg0, %c0_i32 : i32, i32
  }
}

module attributes {stable_mosaic.version = 11 : i64} {
  func.func @_matmul_bias_kernel(%arg0: i32, %arg1: memref<8x288xbf16, #tpu.memory_space<vmem>>, %arg2: memref<288x64xbf16, #tpu.memory_space<vmem>>, %arg3: memref<1x64xf32, #tpu.memory_space<vmem>>, %arg4: memref<8x64xf32, #tpu.memory_space<vmem>>) attributes {dimension_semantics = [#tpu.dimension_semantics<parallel>], iteration_bounds = array<i64: 1>, scalar_prefetch = 0 : i64, scratch_operands = 0 : i64, tpu.core_type = #tpu.core_type<tc>, window_params = [{transform_indices = @transform_0, window_bounds = array<i64: 8, 288>}, {pipeline_mode = #tpu.pipeline_mode<synchronous>, transform_indices = @transform_1, window_bounds = array<i64: 288, 64>}, {pipeline_mode = #tpu.pipeline_mode<synchronous>, transform_indices = @transform_2, window_bounds = array<i64: 1, 64>}, {transform_indices = @transform_3, window_bounds = array<i64: 8, 64>}]} {
    %c0 = arith.constant 0 : index
    %c0_0 = arith.constant 0 : index
    %0 = vector.load %arg1[%c0, %c0_0] : memref<8x288xbf16, #tpu.memory_space<vmem>>, vector<8x288xbf16>
    %c0_1 = arith.constant 0 : index
    %c0_2 = arith.constant 0 : index
    %1 = vector.load %arg2[%c0_1, %c0_2] : memref<288x64xbf16, #tpu.memory_space<vmem>>, vector<288x64xbf16>
    %cst = arith.constant dense<0.000000e+00> : vector<8x64xf32>
    %2 = tpu.matmul %0, %1, %cst {dimension_numbers = #tpu.dot_dimension_numbers<[1], [0], [0], [1], [0, 0, 1, 1], [], []>} : vector<8x288xbf16>, vector<288x64xbf16>, vector<8x64xf32> -> vector<8x64xf32>
    %c0_3 = arith.constant 0 : index
    %c0_4 = arith.constant 0 : index
    %3 = vector.load %arg3[%c0_3, %c0_4] : memref<1x64xf32, #tpu.memory_space<vmem>>, vector<1x64xf32>
    %4 = vector.broadcast %3 : vector<1x64xf32> to vector<8x64xf32>
    %5 = arith.addf %2, %4 : vector<8x64xf32>
    %cst_5 = arith.constant 0.000000e+00 : f32
    %6 = vector.broadcast %cst_5 : f32 to vector<8x64xf32>
    %7 = arith.maximumf %5, %6 : vector<8x64xf32>
    %c0_6 = arith.constant 0 : index
    %c0_7 = arith.constant 0 : index
    %8 = vector.load %arg4[%c0_6, %c0_7] : memref<8x64xf32, #tpu.memory_space<vmem>>, vector<8x64xf32>
    tpu.vector_store %arg4[%c0_6, %c0_7], %7 {strides = array<i32>} : memref<8x64xf32, #tpu.memory_space<vmem>>, vector<8x64xf32>,
    return
  }
  func.func @transform_0(%arg0: i32) -> (i32, i32) {
    %c0_i32 = arith.constant 0 : i32
    %c0_i32_0 = arith.constant 0 : i32
    return %arg0, %c0_i32 : i32, i32
  }
  func.func @transform_1(%arg0: i32) -> (i32, i32) {
    %c0_i32 = arith.constant 0 : i32
    %c0_i32_0 = arith.constant 0 : i32
    %c0_i32_1 = arith.constant 0 : i32
    return %c0_i32, %c0_i32_0 : i32, i32
  }
  func.func @transform_2(%arg0: i32) -> (i32, i32) {
    %c0_i32 = arith.constant 0 : i32
    %c0_i32_0 = arith.constant 0 : i32
    %c0_i32_1 = arith.constant 0 : i32
    return %c0_i32, %c0_i32_0 : i32, i32
  }
  func.func @transform_3(%arg0: i32) -> (i32, i32) {
    %c0_i32 = arith.constant 0 : i32
    %c0_i32_0 = arith.constant 0 : i32
    return %arg0, %c0_i32 : i32, i32
  }
}

module attributes {stable_mosaic.version = 11 : i64} {
  func.func @_bottleneck_kernel(%arg0: memref<20x123xf32, #tpu.memory_space<vmem>>, %arg1: memref<20x20xbf16, #tpu.memory_space<vmem>>, %arg2: memref<246x32xbf16, #tpu.memory_space<vmem>>, %arg3: memref<1x32xf32, #tpu.memory_space<vmem>>, %arg4: memref<12x64x32xbf16, #tpu.memory_space<vmem>>, %arg5: memref<12x1x32xf32, #tpu.memory_space<vmem>>, %arg6: memref<64x3xbf16, #tpu.memory_space<vmem>>, %arg7: memref<1x3xf32, #tpu.memory_space<vmem>>, %arg8: memref<20x3xf32, #tpu.memory_space<vmem>>, %arg9: memref<20x32xf32, #tpu.memory_space<vmem>>) attributes {dimension_semantics = [], scalar_prefetch = 0 : i64, scratch_operands = 0 : i64, tpu.core_type = #tpu.core_type<tc>} {
    %c0 = arith.constant 0 : index
    %c0_0 = arith.constant 0 : index
    %0 = vector.load %arg1[%c0, %c0_0] : memref<20x20xbf16, #tpu.memory_space<vmem>>, vector<20x20xbf16>
    %c0_1 = arith.constant 0 : index
    %c0_2 = arith.constant 0 : index
    %1 = vector.load %arg0[%c0_1, %c0_2] : memref<20x123xf32, #tpu.memory_space<vmem>>, vector<20x123xf32>
    %c0_3 = arith.constant 0 : index
    %c0_4 = arith.constant 0 : index
    %2 = vector.load %arg2[%c0_3, %c0_4] : memref<246x32xbf16, #tpu.memory_space<vmem>>, vector<246x32xbf16>
    %c0_5 = arith.constant 0 : index
    %c0_6 = arith.constant 0 : index
    %3 = vector.load %arg3[%c0_5, %c0_6] : memref<1x32xf32, #tpu.memory_space<vmem>>, vector<1x32xf32>
    %4 = arith.truncf %1 : vector<20x123xf32> to vector<20x123xbf16>
    %cst = arith.constant dense<0.000000e+00> : vector<20x123xf32>
    %5 = tpu.matmul %0, %4, %cst {dimension_numbers = #tpu.dot_dimension_numbers<[1], [0], [0], [1], [0, 0, 1, 1], [], []>} : vector<20x20xbf16>, vector<20x123xbf16>, vector<20x123xf32> -> vector<20x123xf32>
    %6 = tpu.concatenate %5, %1 in 1 : vector<20x123xf32>, vector<20x123xf32> -> vector<20x246xf32>
    %7 = arith.truncf %6 : vector<20x246xf32> to vector<20x246xbf16>
    %cst_7 = arith.constant dense<0.000000e+00> : vector<20x32xf32>
    %8 = tpu.matmul %7, %2, %cst_7 {dimension_numbers = #tpu.dot_dimension_numbers<[1], [0], [0], [1], [0, 0, 1, 1], [], []>} : vector<20x246xbf16>, vector<246x32xbf16>, vector<20x32xf32> -> vector<20x32xf32>
    %9 = vector.broadcast %3 : vector<1x32xf32> to vector<20x32xf32>
    %10 = arith.addf %8, %9 : vector<20x32xf32>
    %cst_8 = arith.constant 0.000000e+00 : f32
    %11 = vector.broadcast %cst_8 : f32 to vector<20x32xf32>
    %12 = arith.maximumf %10, %11 : vector<20x32xf32>
    %c0_9 = arith.constant 0 : index
    %c0_10 = arith.constant 0 : index
    %c0_11 = arith.constant 0 : index
    %13 = vector.load %arg4[%c0_9, %c0_10, %c0_11] : memref<12x64x32xbf16, #tpu.memory_space<vmem>>, vector<1x64x32xbf16>
    %14 = vector.shape_cast %13 : vector<1x64x32xbf16> to vector<64x32xbf16>
    %c0_12 = arith.constant 0 : index
    %c0_13 = arith.constant 0 : index
    %c0_14 = arith.constant 0 : index
    %15 = vector.load %arg5[%c0_12, %c0_13, %c0_14] : memref<12x1x32xf32, #tpu.memory_space<vmem>>, vector<1x1x32xf32>
    %16 = vector.shape_cast %15 : vector<1x1x32xf32> to vector<1x32xf32>
    %17 = arith.truncf %12 : vector<20x32xf32> to vector<20x32xbf16>
    %cst_15 = arith.constant dense<0.000000e+00> : vector<20x32xf32>
    %18 = tpu.matmul %0, %17, %cst_15 {dimension_numbers = #tpu.dot_dimension_numbers<[1], [0], [0], [1], [0, 0, 1, 1], [], []>} : vector<20x20xbf16>, vector<20x32xbf16>, vector<20x32xf32> -> vector<20x32xf32>
    %19 = tpu.concatenate %18, %12 in 1 : vector<20x32xf32>, vector<20x32xf32> -> vector<20x64xf32>
    %20 = arith.truncf %19 : vector<20x64xf32> to vector<20x64xbf16>
    %cst_16 = arith.constant dense<0.000000e+00> : vector<20x32xf32>
    %21 = tpu.matmul %20, %14, %cst_16 {dimension_numbers = #tpu.dot_dimension_numbers<[1], [0], [0], [1], [0, 0, 1, 1], [], []>} : vector<20x64xbf16>, vector<64x32xbf16>, vector<20x32xf32> -> vector<20x32xf32>
    %22 = vector.broadcast %16 : vector<1x32xf32> to vector<20x32xf32>
    %23 = arith.addf %21, %22 : vector<20x32xf32>
    %cst_17 = arith.constant 0.000000e+00 : f32
    %24 = vector.broadcast %cst_17 : f32 to vector<20x32xf32>
    %25 = arith.maximumf %23, %24 : vector<20x32xf32>
    %c1 = arith.constant 1 : index
    %c0_18 = arith.constant 0 : index
    %c0_19 = arith.constant 0 : index
    %26 = vector.load %arg4[%c1, %c0_18, %c0_19] : memref<12x64x32xbf16, #tpu.memory_space<vmem>>, vector<1x64x32xbf16>
    %27 = vector.shape_cast %26 : vector<1x64x32xbf16> to vector<64x32xbf16>
    %c1_20 = arith.constant 1 : index
    %c0_21 = arith.constant 0 : index
    %c0_22 = arith.constant 0 : index
    %28 = vector.load %arg5[%c1_20, %c0_21, %c0_22] : memref<12x1x32xf32, #tpu.memory_space<vmem>>, vector<1x1x32xf32>
    %29 = vector.shape_cast %28 : vector<1x1x32xf32> to vector<1x32xf32>
    %30 = arith.truncf %25 : vector<20x32xf32> to vector<20x32xbf16>
    %cst_23 = arith.constant dense<0.000000e+00> : vector<20x32xf32>
    %31 = tpu.matmul %0, %30, %cst_23 {dimension_numbers = #tpu.dot_dimension_numbers<[1], [0], [0], [1], [0, 0, 1, 1], [], []>} : vector<20x20xbf16>, vector<20x32xbf16>, vector<20x32xf32> -> vector<20x32xf32>
    %32 = tpu.concatenate %31, %25 in 1 : vector<20x32xf32>, vector<20x32xf32> -> vector<20x64xf32>
    %33 = arith.truncf %32 : vector<20x64xf32> to vector<20x64xbf16>
    %cst_24 = arith.constant dense<0.000000e+00> : vector<20x32xf32>
    %34 = tpu.matmul %33, %27, %cst_24 {dimension_numbers = #tpu.dot_dimension_numbers<[1], [0], [0], [1], [0, 0, 1, 1], [], []>} : vector<20x64xbf16>, vector<64x32xbf16>, vector<20x32xf32> -> vector<20x32xf32>
    %35 = vector.broadcast %29 : vector<1x32xf32> to vector<20x32xf32>
    %36 = arith.addf %34, %35 : vector<20x32xf32>
    %cst_25 = arith.constant 0.000000e+00 : f32
    %37 = vector.broadcast %cst_25 : f32 to vector<20x32xf32>
    %38 = arith.maximumf %36, %37 : vector<20x32xf32>
    %39 = arith.addf %12, %38 : vector<20x32xf32>
    %cst_26 = arith.constant 5.000000e-01 : f32
    %40 = vector.broadcast %cst_26 : f32 to vector<20x32xf32>
    %41 = arith.mulf %39, %40 : vector<20x32xf32>
    %c2 = arith.constant 2 : index
    %c0_27 = arith.constant 0 : index
    %c0_28 = arith.constant 0 : index
    %42 = vector.load %arg4[%c2, %c0_27, %c0_28] : memref<12x64x32xbf16, #tpu.memory_space<vmem>>, vector<1x64x32xbf16>
    %43 = vector.shape_cast %42 : vector<1x64x32xbf16> to vector<64x32xbf16>
    %c2_29 = arith.constant 2 : index
    %c0_30 = arith.constant 0 : index
    %c0_31 = arith.constant 0 : index
    %44 = vector.load %arg5[%c2_29, %c0_30, %c0_31] : memref<12x1x32xf32, #tpu.memory_space<vmem>>, vector<1x1x32xf32>
    %45 = vector.shape_cast %44 : vector<1x1x32xf32> to vector<1x32xf32>
    %46 = arith.truncf %41 : vector<20x32xf32> to vector<20x32xbf16>
    %cst_32 = arith.constant dense<0.000000e+00> : vector<20x32xf32>
    %47 = tpu.matmul %0, %46, %cst_32 {dimension_numbers = #tpu.dot_dimension_numbers<[1], [0], [0], [1], [0, 0, 1, 1], [], []>} : vector<20x20xbf16>, vector<20x32xbf16>, vector<20x32xf32> -> vector<20x32xf32>
    %48 = tpu.concatenate %47, %41 in 1 : vector<20x32xf32>, vector<20x32xf32> -> vector<20x64xf32>
    %49 = arith.truncf %48 : vector<20x64xf32> to vector<20x64xbf16>
    %cst_33 = arith.constant dense<0.000000e+00> : vector<20x32xf32>
    %50 = tpu.matmul %49, %43, %cst_33 {dimension_numbers = #tpu.dot_dimension_numbers<[1], [0], [0], [1], [0, 0, 1, 1], [], []>} : vector<20x64xbf16>, vector<64x32xbf16>, vector<20x32xf32> -> vector<20x32xf32>
    %51 = vector.broadcast %45 : vector<1x32xf32> to vector<20x32xf32>
    %52 = arith.addf %50, %51 : vector<20x32xf32>
    %cst_34 = arith.constant 0.000000e+00 : f32
    %53 = vector.broadcast %cst_34 : f32 to vector<20x32xf32>
    %54 = arith.maximumf %52, %53 : vector<20x32xf32>
    %c3 = arith.constant 3 : index
    %c0_35 = arith.constant 0 : index
    %c0_36 = arith.constant 0 : index
    %55 = vector.load %arg4[%c3, %c0_35, %c0_36] : memref<12x64x32xbf16, #tpu.memory_space<vmem>>, vector<1x64x32xbf16>
    %56 = vector.shape_cast %55 : vector<1x64x32xbf16> to vector<64x32xbf16>
    %c3_37 = arith.constant 3 : index
    %c0_38 = arith.constant 0 : index
    %c0_39 = arith.constant 0 : index
    %57 = vector.load %arg5[%c3_37, %c0_38, %c0_39] : memref<12x1x32xf32, #tpu.memory_space<vmem>>, vector<1x1x32xf32>
    %58 = vector.shape_cast %57 : vector<1x1x32xf32> to vector<1x32xf32>
    %59 = arith.truncf %54 : vector<20x32xf32> to vector<20x32xbf16>
    %cst_40 = arith.constant dense<0.000000e+00> : vector<20x32xf32>
    %60 = tpu.matmul %0, %59, %cst_40 {dimension_numbers = #tpu.dot_dimension_numbers<[1], [0], [0], [1], [0, 0, 1, 1], [], []>} : vector<20x20xbf16>, vector<20x32xbf16>, vector<20x32xf32> -> vector<20x32xf32>
    %61 = tpu.concatenate %60, %54 in 1 : vector<20x32xf32>, vector<20x32xf32> -> vector<20x64xf32>
    %62 = arith.truncf %61 : vector<20x64xf32> to vector<20x64xbf16>
    %cst_41 = arith.constant dense<0.000000e+00> : vector<20x32xf32>
    %63 = tpu.matmul %62, %56, %cst_41 {dimension_numbers = #tpu.dot_dimension_numbers<[1], [0], [0], [1], [0, 0, 1, 1], [], []>} : vector<20x64xbf16>, vector<64x32xbf16>, vector<20x32xf32> -> vector<20x32xf32>
    %64 = vector.broadcast %58 : vector<1x32xf32> to vector<20x32xf32>
    %65 = arith.addf %63, %64 : vector<20x32xf32>
    %cst_42 = arith.constant 0.000000e+00 : f32
    %66 = vector.broadcast %cst_42 : f32 to vector<20x32xf32>
    %67 = arith.maximumf %65, %66 : vector<20x32xf32>
    %68 = arith.addf %41, %67 : vector<20x32xf32>
    %cst_43 = arith.constant 5.000000e-01 : f32
    %69 = vector.broadcast %cst_43 : f32 to vector<20x32xf32>
    %70 = arith.mulf %68, %69 : vector<20x32xf32>
    %c4 = arith.constant 4 : index
    %c0_44 = arith.constant 0 : index
    %c0_45 = arith.constant 0 : index
    %71 = vector.load %arg4[%c4, %c0_44, %c0_45] : memref<12x64x32xbf16, #tpu.memory_space<vmem>>, vector<1x64x32xbf16>
    %72 = vector.shape_cast %71 : vector<1x64x32xbf16> to vector<64x32xbf16>
    %c4_46 = arith.constant 4 : index
    %c0_47 = arith.constant 0 : index
    %c0_48 = arith.constant 0 : index
    %73 = vector.load %arg5[%c4_46, %c0_47, %c0_48] : memref<12x1x32xf32, #tpu.memory_space<vmem>>, vector<1x1x32xf32>
    %74 = vector.shape_cast %73 : vector<1x1x32xf32> to vector<1x32xf32>
    %75 = arith.truncf %70 : vector<20x32xf32> to vector<20x32xbf16>
    %cst_49 = arith.constant dense<0.000000e+00> : vector<20x32xf32>
    %76 = tpu.matmul %0, %75, %cst_49 {dimension_numbers = #tpu.dot_dimension_numbers<[1], [0], [0], [1], [0, 0, 1, 1], [], []>} : vector<20x20xbf16>, vector<20x32xbf16>, vector<20x32xf32> -> vector<20x32xf32>
    %77 = tpu.concatenate %76, %70 in 1 : vector<20x32xf32>, vector<20x32xf32> -> vector<20x64xf32>
    %78 = arith.truncf %77 : vector<20x64xf32> to vector<20x64xbf16>
    %cst_50 = arith.constant dense<0.000000e+00> : vector<20x32xf32>
    %79 = tpu.matmul %78, %72, %cst_50 {dimension_numbers = #tpu.dot_dimension_numbers<[1], [0], [0], [1], [0, 0, 1, 1], [], []>} : vector<20x64xbf16>, vector<64x32xbf16>, vector<20x32xf32> -> vector<20x32xf32>
    %80 = vector.broadcast %74 : vector<1x32xf32> to vector<20x32xf32>
    %81 = arith.addf %79, %80 : vector<20x32xf32>
    %cst_51 = arith.constant 0.000000e+00 : f32
    %82 = vector.broadcast %cst_51 : f32 to vector<20x32xf32>
    %83 = arith.maximumf %81, %82 : vector<20x32xf32>
    %c5 = arith.constant 5 : index
    %c0_52 = arith.constant 0 : index
    %c0_53 = arith.constant 0 : index
    %84 = vector.load %arg4[%c5, %c0_52, %c0_53] : memref<12x64x32xbf16, #tpu.memory_space<vmem>>, vector<1x64x32xbf16>
    %85 = vector.shape_cast %84 : vector<1x64x32xbf16> to vector<64x32xbf16>
    %c5_54 = arith.constant 5 : index
    %c0_55 = arith.constant 0 : index
    %c0_56 = arith.constant 0 : index
    %86 = vector.load %arg5[%c5_54, %c0_55, %c0_56] : memref<12x1x32xf32, #tpu.memory_space<vmem>>, vector<1x1x32xf32>
    %87 = vector.shape_cast %86 : vector<1x1x32xf32> to vector<1x32xf32>
    %88 = arith.truncf %83 : vector<20x32xf32> to vector<20x32xbf16>
    %cst_57 = arith.constant dense<0.000000e+00> : vector<20x32xf32>
    %89 = tpu.matmul %0, %88, %cst_57 {dimension_numbers = #tpu.dot_dimension_numbers<[1], [0], [0], [1], [0, 0, 1, 1], [], []>} : vector<20x20xbf16>, vector<20x32xbf16>, vector<20x32xf32> -> vector<20x32xf32>
    %90 = tpu.concatenate %89, %83 in 1 : vector<20x32xf32>, vector<20x32xf32> -> vector<20x64xf32>
    %91 = arith.truncf %90 : vector<20x64xf32> to vector<20x64xbf16>
    %cst_58 = arith.constant dense<0.000000e+00> : vector<20x32xf32>
    %92 = tpu.matmul %91, %85, %cst_58 {dimension_numbers = #tpu.dot_dimension_numbers<[1], [0], [0], [1], [0, 0, 1, 1], [], []>} : vector<20x64xbf16>, vector<64x32xbf16>, vector<20x32xf32> -> vector<20x32xf32>
    %93 = vector.broadcast %87 : vector<1x32xf32> to vector<20x32xf32>
    %94 = arith.addf %92, %93 : vector<20x32xf32>
    %cst_59 = arith.constant 0.000000e+00 : f32
    %95 = vector.broadcast %cst_59 : f32 to vector<20x32xf32>
    %96 = arith.maximumf %94, %95 : vector<20x32xf32>
    %97 = arith.addf %70, %96 : vector<20x32xf32>
    %cst_60 = arith.constant 5.000000e-01 : f32
    %98 = vector.broadcast %cst_60 : f32 to vector<20x32xf32>
    %99 = arith.mulf %97, %98 : vector<20x32xf32>
    %c6 = arith.constant 6 : index
    %c0_61 = arith.constant 0 : index
    %c0_62 = arith.constant 0 : index
    %100 = vector.load %arg4[%c6, %c0_61, %c0_62] : memref<12x64x32xbf16, #tpu.memory_space<vmem>>, vector<1x64x32xbf16>
    %101 = vector.shape_cast %100 : vector<1x64x32xbf16> to vector<64x32xbf16>
    %c6_63 = arith.constant 6 : index
    %c0_64 = arith.constant 0 : index
    %c0_65 = arith.constant 0 : index
    %102 = vector.load %arg5[%c6_63, %c0_64, %c0_65] : memref<12x1x32xf32, #tpu.memory_space<vmem>>, vector<1x1x32xf32>
    %103 = vector.shape_cast %102 : vector<1x1x32xf32> to vector<1x32xf32>
    %104 = arith.truncf %99 : vector<20x32xf32> to vector<20x32xbf16>
    %cst_66 = arith.constant dense<0.000000e+00> : vector<20x32xf32>
    %105 = tpu.matmul %0, %104, %cst_66 {dimension_numbers = #tpu.dot_dimension_numbers<[1], [0], [0], [1], [0, 0, 1, 1], [], []>} : vector<20x20xbf16>, vector<20x32xbf16>, vector<20x32xf32> -> vector<20x32xf32>
    %106 = tpu.concatenate %105, %99 in 1 : vector<20x32xf32>, vector<20x32xf32> -> vector<20x64xf32>
    %107 = arith.truncf %106 : vector<20x64xf32> to vector<20x64xbf16>
    %cst_67 = arith.constant dense<0.000000e+00> : vector<20x32xf32>
    %108 = tpu.matmul %107, %101, %cst_67 {dimension_numbers = #tpu.dot_dimension_numbers<[1], [0], [0], [1], [0, 0, 1, 1], [], []>} : vector<20x64xbf16>, vector<64x32xbf16>, vector<20x32xf32> -> vector<20x32xf32>
    %109 = vector.broadcast %103 : vector<1x32xf32> to vector<20x32xf32>
    %110 = arith.addf %108, %109 : vector<20x32xf32>
    %cst_68 = arith.constant 0.000000e+00 : f32
    %111 = vector.broadcast %cst_68 : f32 to vector<20x32xf32>
    %112 = arith.maximumf %110, %111 : vector<20x32xf32>
    %c7 = arith.constant 7 : index
    %c0_69 = arith.constant 0 : index
    %c0_70 = arith.constant 0 : index
    %113 = vector.load %arg4[%c7, %c0_69, %c0_70] : memref<12x64x32xbf16, #tpu.memory_space<vmem>>, vector<1x64x32xbf16>
    %114 = vector.shape_cast %113 : vector<1x64x32xbf16> to vector<64x32xbf16>
    %c7_71 = arith.constant 7 : index
    %c0_72 = arith.constant 0 : index
    %c0_73 = arith.constant 0 : index
    %115 = vector.load %arg5[%c7_71, %c0_72, %c0_73] : memref<12x1x32xf32, #tpu.memory_space<vmem>>, vector<1x1x32xf32>
    %116 = vector.shape_cast %115 : vector<1x1x32xf32> to vector<1x32xf32>
    %117 = arith.truncf %112 : vector<20x32xf32> to vector<20x32xbf16>
    %cst_74 = arith.constant dense<0.000000e+00> : vector<20x32xf32>
    %118 = tpu.matmul %0, %117, %cst_74 {dimension_numbers = #tpu.dot_dimension_numbers<[1], [0], [0], [1], [0, 0, 1, 1], [], []>} : vector<20x20xbf16>, vector<20x32xbf16>, vector<20x32xf32> -> vector<20x32xf32>
    %119 = tpu.concatenate %118, %112 in 1 : vector<20x32xf32>, vector<20x32xf32> -> vector<20x64xf32>
    %120 = arith.truncf %119 : vector<20x64xf32> to vector<20x64xbf16>
    %cst_75 = arith.constant dense<0.000000e+00> : vector<20x32xf32>
    %121 = tpu.matmul %120, %114, %cst_75 {dimension_numbers = #tpu.dot_dimension_numbers<[1], [0], [0], [1], [0, 0, 1, 1], [], []>} : vector<20x64xbf16>, vector<64x32xbf16>, vector<20x32xf32> -> vector<20x32xf32>
    %122 = vector.broadcast %116 : vector<1x32xf32> to vector<20x32xf32>
    %123 = arith.addf %121, %122 : vector<20x32xf32>
    %cst_76 = arith.constant 0.000000e+00 : f32
    %124 = vector.broadcast %cst_76 : f32 to vector<20x32xf32>
    %125 = arith.maximumf %123, %124 : vector<20x32xf32>
    %126 = arith.addf %99, %125 : vector<20x32xf32>
    %cst_77 = arith.constant 5.000000e-01 : f32
    %127 = vector.broadcast %cst_77 : f32 to vector<20x32xf32>
    %128 = arith.mulf %126, %127 : vector<20x32xf32>
    %c8 = arith.constant 8 : index
    %c0_78 = arith.constant 0 : index
    %c0_79 = arith.constant 0 : index
    %129 = vector.load %arg4[%c8, %c0_78, %c0_79] : memref<12x64x32xbf16, #tpu.memory_space<vmem>>, vector<1x64x32xbf16>
    %130 = vector.shape_cast %129 : vector<1x64x32xbf16> to vector<64x32xbf16>
    %c8_80 = arith.constant 8 : index
    %c0_81 = arith.constant 0 : index
    %c0_82 = arith.constant 0 : index
    %131 = vector.load %arg5[%c8_80, %c0_81, %c0_82] : memref<12x1x32xf32, #tpu.memory_space<vmem>>, vector<1x1x32xf32>
    %132 = vector.shape_cast %131 : vector<1x1x32xf32> to vector<1x32xf32>
    %133 = arith.truncf %128 : vector<20x32xf32> to vector<20x32xbf16>
    %cst_83 = arith.constant dense<0.000000e+00> : vector<20x32xf32>
    %134 = tpu.matmul %0, %133, %cst_83 {dimension_numbers = #tpu.dot_dimension_numbers<[1], [0], [0], [1], [0, 0, 1, 1], [], []>} : vector<20x20xbf16>, vector<20x32xbf16>, vector<20x32xf32> -> vector<20x32xf32>
    %135 = tpu.concatenate %134, %128 in 1 : vector<20x32xf32>, vector<20x32xf32> -> vector<20x64xf32>
    %136 = arith.truncf %135 : vector<20x64xf32> to vector<20x64xbf16>
    %cst_84 = arith.constant dense<0.000000e+00> : vector<20x32xf32>
    %137 = tpu.matmul %136, %130, %cst_84 {dimension_numbers = #tpu.dot_dimension_numbers<[1], [0], [0], [1], [0, 0, 1, 1], [], []>} : vector<20x64xbf16>, vector<64x32xbf16>, vector<20x32xf32> -> vector<20x32xf32>
    %138 = vector.broadcast %132 : vector<1x32xf32> to vector<20x32xf32>
    %139 = arith.addf %137, %138 : vector<20x32xf32>
    %cst_85 = arith.constant 0.000000e+00 : f32
    %140 = vector.broadcast %cst_85 : f32 to vector<20x32xf32>
    %141 = arith.maximumf %139, %140 : vector<20x32xf32>
    %c9 = arith.constant 9 : index
    %c0_86 = arith.constant 0 : index
    %c0_87 = arith.constant 0 : index
    %142 = vector.load %arg4[%c9, %c0_86, %c0_87] : memref<12x64x32xbf16, #tpu.memory_space<vmem>>, vector<1x64x32xbf16>
    %143 = vector.shape_cast %142 : vector<1x64x32xbf16> to vector<64x32xbf16>
    %c9_88 = arith.constant 9 : index
    %c0_89 = arith.constant 0 : index
    %c0_90 = arith.constant 0 : index
    %144 = vector.load %arg5[%c9_88, %c0_89, %c0_90] : memref<12x1x32xf32, #tpu.memory_space<vmem>>, vector<1x1x32xf32>
    %145 = vector.shape_cast %144 : vector<1x1x32xf32> to vector<1x32xf32>
    %146 = arith.truncf %141 : vector<20x32xf32> to vector<20x32xbf16>
    %cst_91 = arith.constant dense<0.000000e+00> : vector<20x32xf32>
    %147 = tpu.matmul %0, %146, %cst_91 {dimension_numbers = #tpu.dot_dimension_numbers<[1], [0], [0], [1], [0, 0, 1, 1], [], []>} : vector<20x20xbf16>, vector<20x32xbf16>, vector<20x32xf32> -> vector<20x32xf32>
    %148 = tpu.concatenate %147, %141 in 1 : vector<20x32xf32>, vector<20x32xf32> -> vector<20x64xf32>
    %149 = arith.truncf %148 : vector<20x64xf32> to vector<20x64xbf16>
    %cst_92 = arith.constant dense<0.000000e+00> : vector<20x32xf32>
    %150 = tpu.matmul %149, %143, %cst_92 {dimension_numbers = #tpu.dot_dimension_numbers<[1], [0], [0], [1], [0, 0, 1, 1], [], []>} : vector<20x64xbf16>, vector<64x32xbf16>, vector<20x32xf32> -> vector<20x32xf32>
    %151 = vector.broadcast %145 : vector<1x32xf32> to vector<20x32xf32>
    %152 = arith.addf %150, %151 : vector<20x32xf32>
    %cst_93 = arith.constant 0.000000e+00 : f32
    %153 = vector.broadcast %cst_93 : f32 to vector<20x32xf32>
    %154 = arith.maximumf %152, %153 : vector<20x32xf32>
    %155 = arith.addf %128, %154 : vector<20x32xf32>
    %cst_94 = arith.constant 5.000000e-01 : f32
    %156 = vector.broadcast %cst_94 : f32 to vector<20x32xf32>
    %157 = arith.mulf %155, %156 : vector<20x32xf32>
    %c10 = arith.constant 10 : index
    %c0_95 = arith.constant 0 : index
    %c0_96 = arith.constant 0 : index
    %158 = vector.load %arg4[%c10, %c0_95, %c0_96] : memref<12x64x32xbf16, #tpu.memory_space<vmem>>, vector<1x64x32xbf16>
    %159 = vector.shape_cast %158 : vector<1x64x32xbf16> to vector<64x32xbf16>
    %c10_97 = arith.constant 10 : index
    %c0_98 = arith.constant 0 : index
    %c0_99 = arith.constant 0 : index
    %160 = vector.load %arg5[%c10_97, %c0_98, %c0_99] : memref<12x1x32xf32, #tpu.memory_space<vmem>>, vector<1x1x32xf32>
    %161 = vector.shape_cast %160 : vector<1x1x32xf32> to vector<1x32xf32>
    %162 = arith.truncf %157 : vector<20x32xf32> to vector<20x32xbf16>
    %cst_100 = arith.constant dense<0.000000e+00> : vector<20x32xf32>
    %163 = tpu.matmul %0, %162, %cst_100 {dimension_numbers = #tpu.dot_dimension_numbers<[1], [0], [0], [1], [0, 0, 1, 1], [], []>} : vector<20x20xbf16>, vector<20x32xbf16>, vector<20x32xf32> -> vector<20x32xf32>
    %164 = tpu.concatenate %163, %157 in 1 : vector<20x32xf32>, vector<20x32xf32> -> vector<20x64xf32>
    %165 = arith.truncf %164 : vector<20x64xf32> to vector<20x64xbf16>
    %cst_101 = arith.constant dense<0.000000e+00> : vector<20x32xf32>
    %166 = tpu.matmul %165, %159, %cst_101 {dimension_numbers = #tpu.dot_dimension_numbers<[1], [0], [0], [1], [0, 0, 1, 1], [], []>} : vector<20x64xbf16>, vector<64x32xbf16>, vector<20x32xf32> -> vector<20x32xf32>
    %167 = vector.broadcast %161 : vector<1x32xf32> to vector<20x32xf32>
    %168 = arith.addf %166, %167 : vector<20x32xf32>
    %cst_102 = arith.constant 0.000000e+00 : f32
    %169 = vector.broadcast %cst_102 : f32 to vector<20x32xf32>
    %170 = arith.maximumf %168, %169 : vector<20x32xf32>
    %c11 = arith.constant 11 : index
    %c0_103 = arith.constant 0 : index
    %c0_104 = arith.constant 0 : index
    %171 = vector.load %arg4[%c11, %c0_103, %c0_104] : memref<12x64x32xbf16, #tpu.memory_space<vmem>>, vector<1x64x32xbf16>
    %172 = vector.shape_cast %171 : vector<1x64x32xbf16> to vector<64x32xbf16>
    %c11_105 = arith.constant 11 : index
    %c0_106 = arith.constant 0 : index
    %c0_107 = arith.constant 0 : index
    %173 = vector.load %arg5[%c11_105, %c0_106, %c0_107] : memref<12x1x32xf32, #tpu.memory_space<vmem>>, vector<1x1x32xf32>
    %174 = vector.shape_cast %173 : vector<1x1x32xf32> to vector<1x32xf32>
    %175 = arith.truncf %170 : vector<20x32xf32> to vector<20x32xbf16>
    %cst_108 = arith.constant dense<0.000000e+00> : vector<20x32xf32>
    %176 = tpu.matmul %0, %175, %cst_108 {dimension_numbers = #tpu.dot_dimension_numbers<[1], [0], [0], [1], [0, 0, 1, 1], [], []>} : vector<20x20xbf16>, vector<20x32xbf16>, vector<20x32xf32> -> vector<20x32xf32>
    %177 = tpu.concatenate %176, %170 in 1 : vector<20x32xf32>, vector<20x32xf32> -> vector<20x64xf32>
    %178 = arith.truncf %177 : vector<20x64xf32> to vector<20x64xbf16>
    %cst_109 = arith.constant dense<0.000000e+00> : vector<20x32xf32>
    %179 = tpu.matmul %178, %172, %cst_109 {dimension_numbers = #tpu.dot_dimension_numbers<[1], [0], [0], [1], [0, 0, 1, 1], [], []>} : vector<20x64xbf16>, vector<64x32xbf16>, vector<20x32xf32> -> vector<20x32xf32>
    %180 = vector.broadcast %174 : vector<1x32xf32> to vector<20x32xf32>
    %181 = arith.addf %179, %180 : vector<20x32xf32>
    %cst_110 = arith.constant 0.000000e+00 : f32
    %182 = vector.broadcast %cst_110 : f32 to vector<20x32xf32>
    %183 = arith.maximumf %181, %182 : vector<20x32xf32>
    %184 = arith.addf %157, %183 : vector<20x32xf32>
    %cst_111 = arith.constant 5.000000e-01 : f32
    %185 = vector.broadcast %cst_111 : f32 to vector<20x32xf32>
    %186 = arith.mulf %184, %185 : vector<20x32xf32>
    %c0_112 = arith.constant 0 : index
    %c0_113 = arith.constant 0 : index
    %187 = vector.load %arg6[%c0_112, %c0_113] : memref<64x3xbf16, #tpu.memory_space<vmem>>, vector<64x3xbf16>
    %c0_114 = arith.constant 0 : index
    %c0_115 = arith.constant 0 : index
    %188 = vector.load %arg7[%c0_114, %c0_115] : memref<1x3xf32, #tpu.memory_space<vmem>>, vector<1x3xf32>
    %189 = arith.truncf %186 : vector<20x32xf32> to vector<20x32xbf16>
    %cst_116 = arith.constant dense<0.000000e+00> : vector<20x32xf32>
    %190 = tpu.matmul %0, %189, %cst_116 {dimension_numbers = #tpu.dot_dimension_numbers<[1], [0], [0], [1], [0, 0, 1, 1], [], []>} : vector<20x20xbf16>, vector<20x32xbf16>, vector<20x32xf32> -> vector<20x32xf32>
    %191 = tpu.concatenate %190, %186 in 1 : vector<20x32xf32>, vector<20x32xf32> -> vector<20x64xf32>
    %192 = arith.truncf %191 : vector<20x64xf32> to vector<20x64xbf16>
    %cst_117 = arith.constant dense<0.000000e+00> : vector<20x3xf32>
    %193 = tpu.matmul %192, %187, %cst_117 {dimension_numbers = #tpu.dot_dimension_numbers<[1], [0], [0], [1], [0, 0, 1, 1], [], []>} : vector<20x64xbf16>, vector<64x3xbf16>, vector<20x3xf32> -> vector<20x3xf32>
    %194 = vector.broadcast %188 : vector<1x3xf32> to vector<20x3xf32>
    %195 = arith.addf %193, %194 : vector<20x3xf32>
    %c0_118 = arith.constant 0 : index
    %c0_119 = arith.constant 0 : index
    %196 = vector.load %arg8[%c0_118, %c0_119] : memref<20x3xf32, #tpu.memory_space<vmem>>, vector<20x3xf32>
    tpu.vector_store %arg8[%c0_118, %c0_119], %195 {strides = array<i32>} : memref<20x3xf32, #tpu.memory_space<vmem>>, vector<20x3xf32>,
    %c0_120 = arith.constant 0 : index
    %c0_121 = arith.constant 0 : index
    %197 = vector.load %arg9[%c0_120, %c0_121] : memref<20x32xf32, #tpu.memory_space<vmem>>, vector<20x32xf32>
    tpu.vector_store %arg9[%c0_120, %c0_121], %186 {strides = array<i32>} : memref<20x32xf32, #tpu.memory_space<vmem>>, vector<20x32xf32>,
    return
  }
}

module attributes {stable_mosaic.version = 11 : i64} {
  func.func @_bottleneck_kernel(%arg0: memref<32x155xf32, #tpu.memory_space<vmem>>, %arg1: memref<32x32xbf16, #tpu.memory_space<vmem>>, %arg2: memref<310x32xbf16, #tpu.memory_space<vmem>>, %arg3: memref<1x32xf32, #tpu.memory_space<vmem>>, %arg4: memref<12x64x32xbf16, #tpu.memory_space<vmem>>, %arg5: memref<12x1x32xf32, #tpu.memory_space<vmem>>, %arg6: memref<64x3xbf16, #tpu.memory_space<vmem>>, %arg7: memref<1x3xf32, #tpu.memory_space<vmem>>, %arg8: memref<32x3xf32, #tpu.memory_space<vmem>>, %arg9: memref<32x32xf32, #tpu.memory_space<vmem>>) attributes {dimension_semantics = [], scalar_prefetch = 0 : i64, scratch_operands = 0 : i64, tpu.core_type = #tpu.core_type<tc>} {
    %c0 = arith.constant 0 : index
    %c0_0 = arith.constant 0 : index
    %0 = vector.load %arg1[%c0, %c0_0] : memref<32x32xbf16, #tpu.memory_space<vmem>>, vector<32x32xbf16>
    %c0_1 = arith.constant 0 : index
    %c0_2 = arith.constant 0 : index
    %1 = vector.load %arg0[%c0_1, %c0_2] : memref<32x155xf32, #tpu.memory_space<vmem>>, vector<32x155xf32>
    %c0_3 = arith.constant 0 : index
    %c0_4 = arith.constant 0 : index
    %2 = vector.load %arg2[%c0_3, %c0_4] : memref<310x32xbf16, #tpu.memory_space<vmem>>, vector<310x32xbf16>
    %c0_5 = arith.constant 0 : index
    %c0_6 = arith.constant 0 : index
    %3 = vector.load %arg3[%c0_5, %c0_6] : memref<1x32xf32, #tpu.memory_space<vmem>>, vector<1x32xf32>
    %4 = arith.truncf %1 : vector<32x155xf32> to vector<32x155xbf16>
    %cst = arith.constant dense<0.000000e+00> : vector<32x155xf32>
    %5 = tpu.matmul %0, %4, %cst {dimension_numbers = #tpu.dot_dimension_numbers<[1], [0], [0], [1], [0, 0, 1, 1], [], []>} : vector<32x32xbf16>, vector<32x155xbf16>, vector<32x155xf32> -> vector<32x155xf32>
    %6 = tpu.concatenate %5, %1 in 1 : vector<32x155xf32>, vector<32x155xf32> -> vector<32x310xf32>
    %7 = arith.truncf %6 : vector<32x310xf32> to vector<32x310xbf16>
    %cst_7 = arith.constant dense<0.000000e+00> : vector<32x32xf32>
    %8 = tpu.matmul %7, %2, %cst_7 {dimension_numbers = #tpu.dot_dimension_numbers<[1], [0], [0], [1], [0, 0, 1, 1], [], []>} : vector<32x310xbf16>, vector<310x32xbf16>, vector<32x32xf32> -> vector<32x32xf32>
    %9 = vector.broadcast %3 : vector<1x32xf32> to vector<32x32xf32>
    %10 = arith.addf %8, %9 : vector<32x32xf32>
    %cst_8 = arith.constant 0.000000e+00 : f32
    %11 = vector.broadcast %cst_8 : f32 to vector<32x32xf32>
    %12 = arith.maximumf %10, %11 : vector<32x32xf32>
    %c0_9 = arith.constant 0 : index
    %c0_10 = arith.constant 0 : index
    %c0_11 = arith.constant 0 : index
    %13 = vector.load %arg4[%c0_9, %c0_10, %c0_11] : memref<12x64x32xbf16, #tpu.memory_space<vmem>>, vector<1x64x32xbf16>
    %14 = vector.shape_cast %13 : vector<1x64x32xbf16> to vector<64x32xbf16>
    %c0_12 = arith.constant 0 : index
    %c0_13 = arith.constant 0 : index
    %c0_14 = arith.constant 0 : index
    %15 = vector.load %arg5[%c0_12, %c0_13, %c0_14] : memref<12x1x32xf32, #tpu.memory_space<vmem>>, vector<1x1x32xf32>
    %16 = vector.shape_cast %15 : vector<1x1x32xf32> to vector<1x32xf32>
    %17 = arith.truncf %12 : vector<32x32xf32> to vector<32x32xbf16>
    %cst_15 = arith.constant dense<0.000000e+00> : vector<32x32xf32>
    %18 = tpu.matmul %0, %17, %cst_15 {dimension_numbers = #tpu.dot_dimension_numbers<[1], [0], [0], [1], [0, 0, 1, 1], [], []>} : vector<32x32xbf16>, vector<32x32xbf16>, vector<32x32xf32> -> vector<32x32xf32>
    %19 = tpu.concatenate %18, %12 in 1 : vector<32x32xf32>, vector<32x32xf32> -> vector<32x64xf32>
    %20 = arith.truncf %19 : vector<32x64xf32> to vector<32x64xbf16>
    %cst_16 = arith.constant dense<0.000000e+00> : vector<32x32xf32>
    %21 = tpu.matmul %20, %14, %cst_16 {dimension_numbers = #tpu.dot_dimension_numbers<[1], [0], [0], [1], [0, 0, 1, 1], [], []>} : vector<32x64xbf16>, vector<64x32xbf16>, vector<32x32xf32> -> vector<32x32xf32>
    %22 = vector.broadcast %16 : vector<1x32xf32> to vector<32x32xf32>
    %23 = arith.addf %21, %22 : vector<32x32xf32>
    %cst_17 = arith.constant 0.000000e+00 : f32
    %24 = vector.broadcast %cst_17 : f32 to vector<32x32xf32>
    %25 = arith.maximumf %23, %24 : vector<32x32xf32>
    %c1 = arith.constant 1 : index
    %c0_18 = arith.constant 0 : index
    %c0_19 = arith.constant 0 : index
    %26 = vector.load %arg4[%c1, %c0_18, %c0_19] : memref<12x64x32xbf16, #tpu.memory_space<vmem>>, vector<1x64x32xbf16>
    %27 = vector.shape_cast %26 : vector<1x64x32xbf16> to vector<64x32xbf16>
    %c1_20 = arith.constant 1 : index
    %c0_21 = arith.constant 0 : index
    %c0_22 = arith.constant 0 : index
    %28 = vector.load %arg5[%c1_20, %c0_21, %c0_22] : memref<12x1x32xf32, #tpu.memory_space<vmem>>, vector<1x1x32xf32>
    %29 = vector.shape_cast %28 : vector<1x1x32xf32> to vector<1x32xf32>
    %30 = arith.truncf %25 : vector<32x32xf32> to vector<32x32xbf16>
    %cst_23 = arith.constant dense<0.000000e+00> : vector<32x32xf32>
    %31 = tpu.matmul %0, %30, %cst_23 {dimension_numbers = #tpu.dot_dimension_numbers<[1], [0], [0], [1], [0, 0, 1, 1], [], []>} : vector<32x32xbf16>, vector<32x32xbf16>, vector<32x32xf32> -> vector<32x32xf32>
    %32 = tpu.concatenate %31, %25 in 1 : vector<32x32xf32>, vector<32x32xf32> -> vector<32x64xf32>
    %33 = arith.truncf %32 : vector<32x64xf32> to vector<32x64xbf16>
    %cst_24 = arith.constant dense<0.000000e+00> : vector<32x32xf32>
    %34 = tpu.matmul %33, %27, %cst_24 {dimension_numbers = #tpu.dot_dimension_numbers<[1], [0], [0], [1], [0, 0, 1, 1], [], []>} : vector<32x64xbf16>, vector<64x32xbf16>, vector<32x32xf32> -> vector<32x32xf32>
    %35 = vector.broadcast %29 : vector<1x32xf32> to vector<32x32xf32>
    %36 = arith.addf %34, %35 : vector<32x32xf32>
    %cst_25 = arith.constant 0.000000e+00 : f32
    %37 = vector.broadcast %cst_25 : f32 to vector<32x32xf32>
    %38 = arith.maximumf %36, %37 : vector<32x32xf32>
    %39 = arith.addf %12, %38 : vector<32x32xf32>
    %cst_26 = arith.constant 5.000000e-01 : f32
    %40 = vector.broadcast %cst_26 : f32 to vector<32x32xf32>
    %41 = arith.mulf %39, %40 : vector<32x32xf32>
    %c2 = arith.constant 2 : index
    %c0_27 = arith.constant 0 : index
    %c0_28 = arith.constant 0 : index
    %42 = vector.load %arg4[%c2, %c0_27, %c0_28] : memref<12x64x32xbf16, #tpu.memory_space<vmem>>, vector<1x64x32xbf16>
    %43 = vector.shape_cast %42 : vector<1x64x32xbf16> to vector<64x32xbf16>
    %c2_29 = arith.constant 2 : index
    %c0_30 = arith.constant 0 : index
    %c0_31 = arith.constant 0 : index
    %44 = vector.load %arg5[%c2_29, %c0_30, %c0_31] : memref<12x1x32xf32, #tpu.memory_space<vmem>>, vector<1x1x32xf32>
    %45 = vector.shape_cast %44 : vector<1x1x32xf32> to vector<1x32xf32>
    %46 = arith.truncf %41 : vector<32x32xf32> to vector<32x32xbf16>
    %cst_32 = arith.constant dense<0.000000e+00> : vector<32x32xf32>
    %47 = tpu.matmul %0, %46, %cst_32 {dimension_numbers = #tpu.dot_dimension_numbers<[1], [0], [0], [1], [0, 0, 1, 1], [], []>} : vector<32x32xbf16>, vector<32x32xbf16>, vector<32x32xf32> -> vector<32x32xf32>
    %48 = tpu.concatenate %47, %41 in 1 : vector<32x32xf32>, vector<32x32xf32> -> vector<32x64xf32>
    %49 = arith.truncf %48 : vector<32x64xf32> to vector<32x64xbf16>
    %cst_33 = arith.constant dense<0.000000e+00> : vector<32x32xf32>
    %50 = tpu.matmul %49, %43, %cst_33 {dimension_numbers = #tpu.dot_dimension_numbers<[1], [0], [0], [1], [0, 0, 1, 1], [], []>} : vector<32x64xbf16>, vector<64x32xbf16>, vector<32x32xf32> -> vector<32x32xf32>
    %51 = vector.broadcast %45 : vector<1x32xf32> to vector<32x32xf32>
    %52 = arith.addf %50, %51 : vector<32x32xf32>
    %cst_34 = arith.constant 0.000000e+00 : f32
    %53 = vector.broadcast %cst_34 : f32 to vector<32x32xf32>
    %54 = arith.maximumf %52, %53 : vector<32x32xf32>
    %c3 = arith.constant 3 : index
    %c0_35 = arith.constant 0 : index
    %c0_36 = arith.constant 0 : index
    %55 = vector.load %arg4[%c3, %c0_35, %c0_36] : memref<12x64x32xbf16, #tpu.memory_space<vmem>>, vector<1x64x32xbf16>
    %56 = vector.shape_cast %55 : vector<1x64x32xbf16> to vector<64x32xbf16>
    %c3_37 = arith.constant 3 : index
    %c0_38 = arith.constant 0 : index
    %c0_39 = arith.constant 0 : index
    %57 = vector.load %arg5[%c3_37, %c0_38, %c0_39] : memref<12x1x32xf32, #tpu.memory_space<vmem>>, vector<1x1x32xf32>
    %58 = vector.shape_cast %57 : vector<1x1x32xf32> to vector<1x32xf32>
    %59 = arith.truncf %54 : vector<32x32xf32> to vector<32x32xbf16>
    %cst_40 = arith.constant dense<0.000000e+00> : vector<32x32xf32>
    %60 = tpu.matmul %0, %59, %cst_40 {dimension_numbers = #tpu.dot_dimension_numbers<[1], [0], [0], [1], [0, 0, 1, 1], [], []>} : vector<32x32xbf16>, vector<32x32xbf16>, vector<32x32xf32> -> vector<32x32xf32>
    %61 = tpu.concatenate %60, %54 in 1 : vector<32x32xf32>, vector<32x32xf32> -> vector<32x64xf32>
    %62 = arith.truncf %61 : vector<32x64xf32> to vector<32x64xbf16>
    %cst_41 = arith.constant dense<0.000000e+00> : vector<32x32xf32>
    %63 = tpu.matmul %62, %56, %cst_41 {dimension_numbers = #tpu.dot_dimension_numbers<[1], [0], [0], [1], [0, 0, 1, 1], [], []>} : vector<32x64xbf16>, vector<64x32xbf16>, vector<32x32xf32> -> vector<32x32xf32>
    %64 = vector.broadcast %58 : vector<1x32xf32> to vector<32x32xf32>
    %65 = arith.addf %63, %64 : vector<32x32xf32>
    %cst_42 = arith.constant 0.000000e+00 : f32
    %66 = vector.broadcast %cst_42 : f32 to vector<32x32xf32>
    %67 = arith.maximumf %65, %66 : vector<32x32xf32>
    %68 = arith.addf %41, %67 : vector<32x32xf32>
    %cst_43 = arith.constant 5.000000e-01 : f32
    %69 = vector.broadcast %cst_43 : f32 to vector<32x32xf32>
    %70 = arith.mulf %68, %69 : vector<32x32xf32>
    %c4 = arith.constant 4 : index
    %c0_44 = arith.constant 0 : index
    %c0_45 = arith.constant 0 : index
    %71 = vector.load %arg4[%c4, %c0_44, %c0_45] : memref<12x64x32xbf16, #tpu.memory_space<vmem>>, vector<1x64x32xbf16>
    %72 = vector.shape_cast %71 : vector<1x64x32xbf16> to vector<64x32xbf16>
    %c4_46 = arith.constant 4 : index
    %c0_47 = arith.constant 0 : index
    %c0_48 = arith.constant 0 : index
    %73 = vector.load %arg5[%c4_46, %c0_47, %c0_48] : memref<12x1x32xf32, #tpu.memory_space<vmem>>, vector<1x1x32xf32>
    %74 = vector.shape_cast %73 : vector<1x1x32xf32> to vector<1x32xf32>
    %75 = arith.truncf %70 : vector<32x32xf32> to vector<32x32xbf16>
    %cst_49 = arith.constant dense<0.000000e+00> : vector<32x32xf32>
    %76 = tpu.matmul %0, %75, %cst_49 {dimension_numbers = #tpu.dot_dimension_numbers<[1], [0], [0], [1], [0, 0, 1, 1], [], []>} : vector<32x32xbf16>, vector<32x32xbf16>, vector<32x32xf32> -> vector<32x32xf32>
    %77 = tpu.concatenate %76, %70 in 1 : vector<32x32xf32>, vector<32x32xf32> -> vector<32x64xf32>
    %78 = arith.truncf %77 : vector<32x64xf32> to vector<32x64xbf16>
    %cst_50 = arith.constant dense<0.000000e+00> : vector<32x32xf32>
    %79 = tpu.matmul %78, %72, %cst_50 {dimension_numbers = #tpu.dot_dimension_numbers<[1], [0], [0], [1], [0, 0, 1, 1], [], []>} : vector<32x64xbf16>, vector<64x32xbf16>, vector<32x32xf32> -> vector<32x32xf32>
    %80 = vector.broadcast %74 : vector<1x32xf32> to vector<32x32xf32>
    %81 = arith.addf %79, %80 : vector<32x32xf32>
    %cst_51 = arith.constant 0.000000e+00 : f32
    %82 = vector.broadcast %cst_51 : f32 to vector<32x32xf32>
    %83 = arith.maximumf %81, %82 : vector<32x32xf32>
    %c5 = arith.constant 5 : index
    %c0_52 = arith.constant 0 : index
    %c0_53 = arith.constant 0 : index
    %84 = vector.load %arg4[%c5, %c0_52, %c0_53] : memref<12x64x32xbf16, #tpu.memory_space<vmem>>, vector<1x64x32xbf16>
    %85 = vector.shape_cast %84 : vector<1x64x32xbf16> to vector<64x32xbf16>
    %c5_54 = arith.constant 5 : index
    %c0_55 = arith.constant 0 : index
    %c0_56 = arith.constant 0 : index
    %86 = vector.load %arg5[%c5_54, %c0_55, %c0_56] : memref<12x1x32xf32, #tpu.memory_space<vmem>>, vector<1x1x32xf32>
    %87 = vector.shape_cast %86 : vector<1x1x32xf32> to vector<1x32xf32>
    %88 = arith.truncf %83 : vector<32x32xf32> to vector<32x32xbf16>
    %cst_57 = arith.constant dense<0.000000e+00> : vector<32x32xf32>
    %89 = tpu.matmul %0, %88, %cst_57 {dimension_numbers = #tpu.dot_dimension_numbers<[1], [0], [0], [1], [0, 0, 1, 1], [], []>} : vector<32x32xbf16>, vector<32x32xbf16>, vector<32x32xf32> -> vector<32x32xf32>
    %90 = tpu.concatenate %89, %83 in 1 : vector<32x32xf32>, vector<32x32xf32> -> vector<32x64xf32>
    %91 = arith.truncf %90 : vector<32x64xf32> to vector<32x64xbf16>
    %cst_58 = arith.constant dense<0.000000e+00> : vector<32x32xf32>
    %92 = tpu.matmul %91, %85, %cst_58 {dimension_numbers = #tpu.dot_dimension_numbers<[1], [0], [0], [1], [0, 0, 1, 1], [], []>} : vector<32x64xbf16>, vector<64x32xbf16>, vector<32x32xf32> -> vector<32x32xf32>
    %93 = vector.broadcast %87 : vector<1x32xf32> to vector<32x32xf32>
    %94 = arith.addf %92, %93 : vector<32x32xf32>
    %cst_59 = arith.constant 0.000000e+00 : f32
    %95 = vector.broadcast %cst_59 : f32 to vector<32x32xf32>
    %96 = arith.maximumf %94, %95 : vector<32x32xf32>
    %97 = arith.addf %70, %96 : vector<32x32xf32>
    %cst_60 = arith.constant 5.000000e-01 : f32
    %98 = vector.broadcast %cst_60 : f32 to vector<32x32xf32>
    %99 = arith.mulf %97, %98 : vector<32x32xf32>
    %c6 = arith.constant 6 : index
    %c0_61 = arith.constant 0 : index
    %c0_62 = arith.constant 0 : index
    %100 = vector.load %arg4[%c6, %c0_61, %c0_62] : memref<12x64x32xbf16, #tpu.memory_space<vmem>>, vector<1x64x32xbf16>
    %101 = vector.shape_cast %100 : vector<1x64x32xbf16> to vector<64x32xbf16>
    %c6_63 = arith.constant 6 : index
    %c0_64 = arith.constant 0 : index
    %c0_65 = arith.constant 0 : index
    %102 = vector.load %arg5[%c6_63, %c0_64, %c0_65] : memref<12x1x32xf32, #tpu.memory_space<vmem>>, vector<1x1x32xf32>
    %103 = vector.shape_cast %102 : vector<1x1x32xf32> to vector<1x32xf32>
    %104 = arith.truncf %99 : vector<32x32xf32> to vector<32x32xbf16>
    %cst_66 = arith.constant dense<0.000000e+00> : vector<32x32xf32>
    %105 = tpu.matmul %0, %104, %cst_66 {dimension_numbers = #tpu.dot_dimension_numbers<[1], [0], [0], [1], [0, 0, 1, 1], [], []>} : vector<32x32xbf16>, vector<32x32xbf16>, vector<32x32xf32> -> vector<32x32xf32>
    %106 = tpu.concatenate %105, %99 in 1 : vector<32x32xf32>, vector<32x32xf32> -> vector<32x64xf32>
    %107 = arith.truncf %106 : vector<32x64xf32> to vector<32x64xbf16>
    %cst_67 = arith.constant dense<0.000000e+00> : vector<32x32xf32>
    %108 = tpu.matmul %107, %101, %cst_67 {dimension_numbers = #tpu.dot_dimension_numbers<[1], [0], [0], [1], [0, 0, 1, 1], [], []>} : vector<32x64xbf16>, vector<64x32xbf16>, vector<32x32xf32> -> vector<32x32xf32>
    %109 = vector.broadcast %103 : vector<1x32xf32> to vector<32x32xf32>
    %110 = arith.addf %108, %109 : vector<32x32xf32>
    %cst_68 = arith.constant 0.000000e+00 : f32
    %111 = vector.broadcast %cst_68 : f32 to vector<32x32xf32>
    %112 = arith.maximumf %110, %111 : vector<32x32xf32>
    %c7 = arith.constant 7 : index
    %c0_69 = arith.constant 0 : index
    %c0_70 = arith.constant 0 : index
    %113 = vector.load %arg4[%c7, %c0_69, %c0_70] : memref<12x64x32xbf16, #tpu.memory_space<vmem>>, vector<1x64x32xbf16>
    %114 = vector.shape_cast %113 : vector<1x64x32xbf16> to vector<64x32xbf16>
    %c7_71 = arith.constant 7 : index
    %c0_72 = arith.constant 0 : index
    %c0_73 = arith.constant 0 : index
    %115 = vector.load %arg5[%c7_71, %c0_72, %c0_73] : memref<12x1x32xf32, #tpu.memory_space<vmem>>, vector<1x1x32xf32>
    %116 = vector.shape_cast %115 : vector<1x1x32xf32> to vector<1x32xf32>
    %117 = arith.truncf %112 : vector<32x32xf32> to vector<32x32xbf16>
    %cst_74 = arith.constant dense<0.000000e+00> : vector<32x32xf32>
    %118 = tpu.matmul %0, %117, %cst_74 {dimension_numbers = #tpu.dot_dimension_numbers<[1], [0], [0], [1], [0, 0, 1, 1], [], []>} : vector<32x32xbf16>, vector<32x32xbf16>, vector<32x32xf32> -> vector<32x32xf32>
    %119 = tpu.concatenate %118, %112 in 1 : vector<32x32xf32>, vector<32x32xf32> -> vector<32x64xf32>
    %120 = arith.truncf %119 : vector<32x64xf32> to vector<32x64xbf16>
    %cst_75 = arith.constant dense<0.000000e+00> : vector<32x32xf32>
    %121 = tpu.matmul %120, %114, %cst_75 {dimension_numbers = #tpu.dot_dimension_numbers<[1], [0], [0], [1], [0, 0, 1, 1], [], []>} : vector<32x64xbf16>, vector<64x32xbf16>, vector<32x32xf32> -> vector<32x32xf32>
    %122 = vector.broadcast %116 : vector<1x32xf32> to vector<32x32xf32>
    %123 = arith.addf %121, %122 : vector<32x32xf32>
    %cst_76 = arith.constant 0.000000e+00 : f32
    %124 = vector.broadcast %cst_76 : f32 to vector<32x32xf32>
    %125 = arith.maximumf %123, %124 : vector<32x32xf32>
    %126 = arith.addf %99, %125 : vector<32x32xf32>
    %cst_77 = arith.constant 5.000000e-01 : f32
    %127 = vector.broadcast %cst_77 : f32 to vector<32x32xf32>
    %128 = arith.mulf %126, %127 : vector<32x32xf32>
    %c8 = arith.constant 8 : index
    %c0_78 = arith.constant 0 : index
    %c0_79 = arith.constant 0 : index
    %129 = vector.load %arg4[%c8, %c0_78, %c0_79] : memref<12x64x32xbf16, #tpu.memory_space<vmem>>, vector<1x64x32xbf16>
    %130 = vector.shape_cast %129 : vector<1x64x32xbf16> to vector<64x32xbf16>
    %c8_80 = arith.constant 8 : index
    %c0_81 = arith.constant 0 : index
    %c0_82 = arith.constant 0 : index
    %131 = vector.load %arg5[%c8_80, %c0_81, %c0_82] : memref<12x1x32xf32, #tpu.memory_space<vmem>>, vector<1x1x32xf32>
    %132 = vector.shape_cast %131 : vector<1x1x32xf32> to vector<1x32xf32>
    %133 = arith.truncf %128 : vector<32x32xf32> to vector<32x32xbf16>
    %cst_83 = arith.constant dense<0.000000e+00> : vector<32x32xf32>
    %134 = tpu.matmul %0, %133, %cst_83 {dimension_numbers = #tpu.dot_dimension_numbers<[1], [0], [0], [1], [0, 0, 1, 1], [], []>} : vector<32x32xbf16>, vector<32x32xbf16>, vector<32x32xf32> -> vector<32x32xf32>
    %135 = tpu.concatenate %134, %128 in 1 : vector<32x32xf32>, vector<32x32xf32> -> vector<32x64xf32>
    %136 = arith.truncf %135 : vector<32x64xf32> to vector<32x64xbf16>
    %cst_84 = arith.constant dense<0.000000e+00> : vector<32x32xf32>
    %137 = tpu.matmul %136, %130, %cst_84 {dimension_numbers = #tpu.dot_dimension_numbers<[1], [0], [0], [1], [0, 0, 1, 1], [], []>} : vector<32x64xbf16>, vector<64x32xbf16>, vector<32x32xf32> -> vector<32x32xf32>
    %138 = vector.broadcast %132 : vector<1x32xf32> to vector<32x32xf32>
    %139 = arith.addf %137, %138 : vector<32x32xf32>
    %cst_85 = arith.constant 0.000000e+00 : f32
    %140 = vector.broadcast %cst_85 : f32 to vector<32x32xf32>
    %141 = arith.maximumf %139, %140 : vector<32x32xf32>
    %c9 = arith.constant 9 : index
    %c0_86 = arith.constant 0 : index
    %c0_87 = arith.constant 0 : index
    %142 = vector.load %arg4[%c9, %c0_86, %c0_87] : memref<12x64x32xbf16, #tpu.memory_space<vmem>>, vector<1x64x32xbf16>
    %143 = vector.shape_cast %142 : vector<1x64x32xbf16> to vector<64x32xbf16>
    %c9_88 = arith.constant 9 : index
    %c0_89 = arith.constant 0 : index
    %c0_90 = arith.constant 0 : index
    %144 = vector.load %arg5[%c9_88, %c0_89, %c0_90] : memref<12x1x32xf32, #tpu.memory_space<vmem>>, vector<1x1x32xf32>
    %145 = vector.shape_cast %144 : vector<1x1x32xf32> to vector<1x32xf32>
    %146 = arith.truncf %141 : vector<32x32xf32> to vector<32x32xbf16>
    %cst_91 = arith.constant dense<0.000000e+00> : vector<32x32xf32>
    %147 = tpu.matmul %0, %146, %cst_91 {dimension_numbers = #tpu.dot_dimension_numbers<[1], [0], [0], [1], [0, 0, 1, 1], [], []>} : vector<32x32xbf16>, vector<32x32xbf16>, vector<32x32xf32> -> vector<32x32xf32>
    %148 = tpu.concatenate %147, %141 in 1 : vector<32x32xf32>, vector<32x32xf32> -> vector<32x64xf32>
    %149 = arith.truncf %148 : vector<32x64xf32> to vector<32x64xbf16>
    %cst_92 = arith.constant dense<0.000000e+00> : vector<32x32xf32>
    %150 = tpu.matmul %149, %143, %cst_92 {dimension_numbers = #tpu.dot_dimension_numbers<[1], [0], [0], [1], [0, 0, 1, 1], [], []>} : vector<32x64xbf16>, vector<64x32xbf16>, vector<32x32xf32> -> vector<32x32xf32>
    %151 = vector.broadcast %145 : vector<1x32xf32> to vector<32x32xf32>
    %152 = arith.addf %150, %151 : vector<32x32xf32>
    %cst_93 = arith.constant 0.000000e+00 : f32
    %153 = vector.broadcast %cst_93 : f32 to vector<32x32xf32>
    %154 = arith.maximumf %152, %153 : vector<32x32xf32>
    %155 = arith.addf %128, %154 : vector<32x32xf32>
    %cst_94 = arith.constant 5.000000e-01 : f32
    %156 = vector.broadcast %cst_94 : f32 to vector<32x32xf32>
    %157 = arith.mulf %155, %156 : vector<32x32xf32>
    %c10 = arith.constant 10 : index
    %c0_95 = arith.constant 0 : index
    %c0_96 = arith.constant 0 : index
    %158 = vector.load %arg4[%c10, %c0_95, %c0_96] : memref<12x64x32xbf16, #tpu.memory_space<vmem>>, vector<1x64x32xbf16>
    %159 = vector.shape_cast %158 : vector<1x64x32xbf16> to vector<64x32xbf16>
    %c10_97 = arith.constant 10 : index
    %c0_98 = arith.constant 0 : index
    %c0_99 = arith.constant 0 : index
    %160 = vector.load %arg5[%c10_97, %c0_98, %c0_99] : memref<12x1x32xf32, #tpu.memory_space<vmem>>, vector<1x1x32xf32>
    %161 = vector.shape_cast %160 : vector<1x1x32xf32> to vector<1x32xf32>
    %162 = arith.truncf %157 : vector<32x32xf32> to vector<32x32xbf16>
    %cst_100 = arith.constant dense<0.000000e+00> : vector<32x32xf32>
    %163 = tpu.matmul %0, %162, %cst_100 {dimension_numbers = #tpu.dot_dimension_numbers<[1], [0], [0], [1], [0, 0, 1, 1], [], []>} : vector<32x32xbf16>, vector<32x32xbf16>, vector<32x32xf32> -> vector<32x32xf32>
    %164 = tpu.concatenate %163, %157 in 1 : vector<32x32xf32>, vector<32x32xf32> -> vector<32x64xf32>
    %165 = arith.truncf %164 : vector<32x64xf32> to vector<32x64xbf16>
    %cst_101 = arith.constant dense<0.000000e+00> : vector<32x32xf32>
    %166 = tpu.matmul %165, %159, %cst_101 {dimension_numbers = #tpu.dot_dimension_numbers<[1], [0], [0], [1], [0, 0, 1, 1], [], []>} : vector<32x64xbf16>, vector<64x32xbf16>, vector<32x32xf32> -> vector<32x32xf32>
    %167 = vector.broadcast %161 : vector<1x32xf32> to vector<32x32xf32>
    %168 = arith.addf %166, %167 : vector<32x32xf32>
    %cst_102 = arith.constant 0.000000e+00 : f32
    %169 = vector.broadcast %cst_102 : f32 to vector<32x32xf32>
    %170 = arith.maximumf %168, %169 : vector<32x32xf32>
    %c11 = arith.constant 11 : index
    %c0_103 = arith.constant 0 : index
    %c0_104 = arith.constant 0 : index
    %171 = vector.load %arg4[%c11, %c0_103, %c0_104] : memref<12x64x32xbf16, #tpu.memory_space<vmem>>, vector<1x64x32xbf16>
    %172 = vector.shape_cast %171 : vector<1x64x32xbf16> to vector<64x32xbf16>
    %c11_105 = arith.constant 11 : index
    %c0_106 = arith.constant 0 : index
    %c0_107 = arith.constant 0 : index
    %173 = vector.load %arg5[%c11_105, %c0_106, %c0_107] : memref<12x1x32xf32, #tpu.memory_space<vmem>>, vector<1x1x32xf32>
    %174 = vector.shape_cast %173 : vector<1x1x32xf32> to vector<1x32xf32>
    %175 = arith.truncf %170 : vector<32x32xf32> to vector<32x32xbf16>
    %cst_108 = arith.constant dense<0.000000e+00> : vector<32x32xf32>
    %176 = tpu.matmul %0, %175, %cst_108 {dimension_numbers = #tpu.dot_dimension_numbers<[1], [0], [0], [1], [0, 0, 1, 1], [], []>} : vector<32x32xbf16>, vector<32x32xbf16>, vector<32x32xf32> -> vector<32x32xf32>
    %177 = tpu.concatenate %176, %170 in 1 : vector<32x32xf32>, vector<32x32xf32> -> vector<32x64xf32>
    %178 = arith.truncf %177 : vector<32x64xf32> to vector<32x64xbf16>
    %cst_109 = arith.constant dense<0.000000e+00> : vector<32x32xf32>
    %179 = tpu.matmul %178, %172, %cst_109 {dimension_numbers = #tpu.dot_dimension_numbers<[1], [0], [0], [1], [0, 0, 1, 1], [], []>} : vector<32x64xbf16>, vector<64x32xbf16>, vector<32x32xf32> -> vector<32x32xf32>
    %180 = vector.broadcast %174 : vector<1x32xf32> to vector<32x32xf32>
    %181 = arith.addf %179, %180 : vector<32x32xf32>
    %cst_110 = arith.constant 0.000000e+00 : f32
    %182 = vector.broadcast %cst_110 : f32 to vector<32x32xf32>
    %183 = arith.maximumf %181, %182 : vector<32x32xf32>
    %184 = arith.addf %157, %183 : vector<32x32xf32>
    %cst_111 = arith.constant 5.000000e-01 : f32
    %185 = vector.broadcast %cst_111 : f32 to vector<32x32xf32>
    %186 = arith.mulf %184, %185 : vector<32x32xf32>
    %c0_112 = arith.constant 0 : index
    %c0_113 = arith.constant 0 : index
    %187 = vector.load %arg6[%c0_112, %c0_113] : memref<64x3xbf16, #tpu.memory_space<vmem>>, vector<64x3xbf16>
    %c0_114 = arith.constant 0 : index
    %c0_115 = arith.constant 0 : index
    %188 = vector.load %arg7[%c0_114, %c0_115] : memref<1x3xf32, #tpu.memory_space<vmem>>, vector<1x3xf32>
    %189 = arith.truncf %186 : vector<32x32xf32> to vector<32x32xbf16>
    %cst_116 = arith.constant dense<0.000000e+00> : vector<32x32xf32>
    %190 = tpu.matmul %0, %189, %cst_116 {dimension_numbers = #tpu.dot_dimension_numbers<[1], [0], [0], [1], [0, 0, 1, 1], [], []>} : vector<32x32xbf16>, vector<32x32xbf16>, vector<32x32xf32> -> vector<32x32xf32>
    %191 = tpu.concatenate %190, %186 in 1 : vector<32x32xf32>, vector<32x32xf32> -> vector<32x64xf32>
    %192 = arith.truncf %191 : vector<32x64xf32> to vector<32x64xbf16>
    %cst_117 = arith.constant dense<0.000000e+00> : vector<32x3xf32>
    %193 = tpu.matmul %192, %187, %cst_117 {dimension_numbers = #tpu.dot_dimension_numbers<[1], [0], [0], [1], [0, 0, 1, 1], [], []>} : vector<32x64xbf16>, vector<64x3xbf16>, vector<32x3xf32> -> vector<32x3xf32>
    %194 = vector.broadcast %188 : vector<1x3xf32> to vector<32x3xf32>
    %195 = arith.addf %193, %194 : vector<32x3xf32>
    %c0_118 = arith.constant 0 : index
    %c0_119 = arith.constant 0 : index
    %196 = vector.load %arg8[%c0_118, %c0_119] : memref<32x3xf32, #tpu.memory_space<vmem>>, vector<32x3xf32>
    tpu.vector_store %arg8[%c0_118, %c0_119], %195 {strides = array<i32>} : memref<32x3xf32, #tpu.memory_space<vmem>>, vector<32x3xf32>,
    %c0_120 = arith.constant 0 : index
    %c0_121 = arith.constant 0 : index
    %197 = vector.load %arg9[%c0_120, %c0_121] : memref<32x32xf32, #tpu.memory_space<vmem>>, vector<32x32xf32>
    tpu.vector_store %arg9[%c0_120, %c0_121], %186 {strides = array<i32>} : memref<32x32xf32, #tpu.memory_space<vmem>>, vector<32x32xf32>,
    return
  }
}

module attributes {stable_mosaic.version = 11 : i64} {
  func.func @_bottleneck_kernel(%arg0: memref<48x155xf32, #tpu.memory_space<vmem>>, %arg1: memref<48x48xbf16, #tpu.memory_space<vmem>>, %arg2: memref<310x32xbf16, #tpu.memory_space<vmem>>, %arg3: memref<1x32xf32, #tpu.memory_space<vmem>>, %arg4: memref<12x64x32xbf16, #tpu.memory_space<vmem>>, %arg5: memref<12x1x32xf32, #tpu.memory_space<vmem>>, %arg6: memref<64x16xbf16, #tpu.memory_space<vmem>>, %arg7: memref<1x16xf32, #tpu.memory_space<vmem>>, %arg8: memref<48x16xf32, #tpu.memory_space<vmem>>, %arg9: memref<48x32xf32, #tpu.memory_space<vmem>>) attributes {dimension_semantics = [], scalar_prefetch = 0 : i64, scratch_operands = 0 : i64, tpu.core_type = #tpu.core_type<tc>} {
    %c0 = arith.constant 0 : index
    %c0_0 = arith.constant 0 : index
    %0 = vector.load %arg1[%c0, %c0_0] : memref<48x48xbf16, #tpu.memory_space<vmem>>, vector<48x48xbf16>
    %c0_1 = arith.constant 0 : index
    %c0_2 = arith.constant 0 : index
    %1 = vector.load %arg0[%c0_1, %c0_2] : memref<48x155xf32, #tpu.memory_space<vmem>>, vector<48x155xf32>
    %c0_3 = arith.constant 0 : index
    %c0_4 = arith.constant 0 : index
    %2 = vector.load %arg2[%c0_3, %c0_4] : memref<310x32xbf16, #tpu.memory_space<vmem>>, vector<310x32xbf16>
    %c0_5 = arith.constant 0 : index
    %c0_6 = arith.constant 0 : index
    %3 = vector.load %arg3[%c0_5, %c0_6] : memref<1x32xf32, #tpu.memory_space<vmem>>, vector<1x32xf32>
    %4 = arith.truncf %1 : vector<48x155xf32> to vector<48x155xbf16>
    %cst = arith.constant dense<0.000000e+00> : vector<48x155xf32>
    %5 = tpu.matmul %0, %4, %cst {dimension_numbers = #tpu.dot_dimension_numbers<[1], [0], [0], [1], [0, 0, 1, 1], [], []>} : vector<48x48xbf16>, vector<48x155xbf16>, vector<48x155xf32> -> vector<48x155xf32>
    %6 = tpu.concatenate %5, %1 in 1 : vector<48x155xf32>, vector<48x155xf32> -> vector<48x310xf32>
    %7 = arith.truncf %6 : vector<48x310xf32> to vector<48x310xbf16>
    %cst_7 = arith.constant dense<0.000000e+00> : vector<48x32xf32>
    %8 = tpu.matmul %7, %2, %cst_7 {dimension_numbers = #tpu.dot_dimension_numbers<[1], [0], [0], [1], [0, 0, 1, 1], [], []>} : vector<48x310xbf16>, vector<310x32xbf16>, vector<48x32xf32> -> vector<48x32xf32>
    %9 = vector.broadcast %3 : vector<1x32xf32> to vector<48x32xf32>
    %10 = arith.addf %8, %9 : vector<48x32xf32>
    %cst_8 = arith.constant 0.000000e+00 : f32
    %11 = vector.broadcast %cst_8 : f32 to vector<48x32xf32>
    %12 = arith.maximumf %10, %11 : vector<48x32xf32>
    %c0_9 = arith.constant 0 : index
    %c0_10 = arith.constant 0 : index
    %c0_11 = arith.constant 0 : index
    %13 = vector.load %arg4[%c0_9, %c0_10, %c0_11] : memref<12x64x32xbf16, #tpu.memory_space<vmem>>, vector<1x64x32xbf16>
    %14 = vector.shape_cast %13 : vector<1x64x32xbf16> to vector<64x32xbf16>
    %c0_12 = arith.constant 0 : index
    %c0_13 = arith.constant 0 : index
    %c0_14 = arith.constant 0 : index
    %15 = vector.load %arg5[%c0_12, %c0_13, %c0_14] : memref<12x1x32xf32, #tpu.memory_space<vmem>>, vector<1x1x32xf32>
    %16 = vector.shape_cast %15 : vector<1x1x32xf32> to vector<1x32xf32>
    %17 = arith.truncf %12 : vector<48x32xf32> to vector<48x32xbf16>
    %cst_15 = arith.constant dense<0.000000e+00> : vector<48x32xf32>
    %18 = tpu.matmul %0, %17, %cst_15 {dimension_numbers = #tpu.dot_dimension_numbers<[1], [0], [0], [1], [0, 0, 1, 1], [], []>} : vector<48x48xbf16>, vector<48x32xbf16>, vector<48x32xf32> -> vector<48x32xf32>
    %19 = tpu.concatenate %18, %12 in 1 : vector<48x32xf32>, vector<48x32xf32> -> vector<48x64xf32>
    %20 = arith.truncf %19 : vector<48x64xf32> to vector<48x64xbf16>
    %cst_16 = arith.constant dense<0.000000e+00> : vector<48x32xf32>
    %21 = tpu.matmul %20, %14, %cst_16 {dimension_numbers = #tpu.dot_dimension_numbers<[1], [0], [0], [1], [0, 0, 1, 1], [], []>} : vector<48x64xbf16>, vector<64x32xbf16>, vector<48x32xf32> -> vector<48x32xf32>
    %22 = vector.broadcast %16 : vector<1x32xf32> to vector<48x32xf32>
    %23 = arith.addf %21, %22 : vector<48x32xf32>
    %cst_17 = arith.constant 0.000000e+00 : f32
    %24 = vector.broadcast %cst_17 : f32 to vector<48x32xf32>
    %25 = arith.maximumf %23, %24 : vector<48x32xf32>
    %c1 = arith.constant 1 : index
    %c0_18 = arith.constant 0 : index
    %c0_19 = arith.constant 0 : index
    %26 = vector.load %arg4[%c1, %c0_18, %c0_19] : memref<12x64x32xbf16, #tpu.memory_space<vmem>>, vector<1x64x32xbf16>
    %27 = vector.shape_cast %26 : vector<1x64x32xbf16> to vector<64x32xbf16>
    %c1_20 = arith.constant 1 : index
    %c0_21 = arith.constant 0 : index
    %c0_22 = arith.constant 0 : index
    %28 = vector.load %arg5[%c1_20, %c0_21, %c0_22] : memref<12x1x32xf32, #tpu.memory_space<vmem>>, vector<1x1x32xf32>
    %29 = vector.shape_cast %28 : vector<1x1x32xf32> to vector<1x32xf32>
    %30 = arith.truncf %25 : vector<48x32xf32> to vector<48x32xbf16>
    %cst_23 = arith.constant dense<0.000000e+00> : vector<48x32xf32>
    %31 = tpu.matmul %0, %30, %cst_23 {dimension_numbers = #tpu.dot_dimension_numbers<[1], [0], [0], [1], [0, 0, 1, 1], [], []>} : vector<48x48xbf16>, vector<48x32xbf16>, vector<48x32xf32> -> vector<48x32xf32>
    %32 = tpu.concatenate %31, %25 in 1 : vector<48x32xf32>, vector<48x32xf32> -> vector<48x64xf32>
    %33 = arith.truncf %32 : vector<48x64xf32> to vector<48x64xbf16>
    %cst_24 = arith.constant dense<0.000000e+00> : vector<48x32xf32>
    %34 = tpu.matmul %33, %27, %cst_24 {dimension_numbers = #tpu.dot_dimension_numbers<[1], [0], [0], [1], [0, 0, 1, 1], [], []>} : vector<48x64xbf16>, vector<64x32xbf16>, vector<48x32xf32> -> vector<48x32xf32>
    %35 = vector.broadcast %29 : vector<1x32xf32> to vector<48x32xf32>
    %36 = arith.addf %34, %35 : vector<48x32xf32>
    %cst_25 = arith.constant 0.000000e+00 : f32
    %37 = vector.broadcast %cst_25 : f32 to vector<48x32xf32>
    %38 = arith.maximumf %36, %37 : vector<48x32xf32>
    %39 = arith.addf %12, %38 : vector<48x32xf32>
    %cst_26 = arith.constant 5.000000e-01 : f32
    %40 = vector.broadcast %cst_26 : f32 to vector<48x32xf32>
    %41 = arith.mulf %39, %40 : vector<48x32xf32>
    %c2 = arith.constant 2 : index
    %c0_27 = arith.constant 0 : index
    %c0_28 = arith.constant 0 : index
    %42 = vector.load %arg4[%c2, %c0_27, %c0_28] : memref<12x64x32xbf16, #tpu.memory_space<vmem>>, vector<1x64x32xbf16>
    %43 = vector.shape_cast %42 : vector<1x64x32xbf16> to vector<64x32xbf16>
    %c2_29 = arith.constant 2 : index
    %c0_30 = arith.constant 0 : index
    %c0_31 = arith.constant 0 : index
    %44 = vector.load %arg5[%c2_29, %c0_30, %c0_31] : memref<12x1x32xf32, #tpu.memory_space<vmem>>, vector<1x1x32xf32>
    %45 = vector.shape_cast %44 : vector<1x1x32xf32> to vector<1x32xf32>
    %46 = arith.truncf %41 : vector<48x32xf32> to vector<48x32xbf16>
    %cst_32 = arith.constant dense<0.000000e+00> : vector<48x32xf32>
    %47 = tpu.matmul %0, %46, %cst_32 {dimension_numbers = #tpu.dot_dimension_numbers<[1], [0], [0], [1], [0, 0, 1, 1], [], []>} : vector<48x48xbf16>, vector<48x32xbf16>, vector<48x32xf32> -> vector<48x32xf32>
    %48 = tpu.concatenate %47, %41 in 1 : vector<48x32xf32>, vector<48x32xf32> -> vector<48x64xf32>
    %49 = arith.truncf %48 : vector<48x64xf32> to vector<48x64xbf16>
    %cst_33 = arith.constant dense<0.000000e+00> : vector<48x32xf32>
    %50 = tpu.matmul %49, %43, %cst_33 {dimension_numbers = #tpu.dot_dimension_numbers<[1], [0], [0], [1], [0, 0, 1, 1], [], []>} : vector<48x64xbf16>, vector<64x32xbf16>, vector<48x32xf32> -> vector<48x32xf32>
    %51 = vector.broadcast %45 : vector<1x32xf32> to vector<48x32xf32>
    %52 = arith.addf %50, %51 : vector<48x32xf32>
    %cst_34 = arith.constant 0.000000e+00 : f32
    %53 = vector.broadcast %cst_34 : f32 to vector<48x32xf32>
    %54 = arith.maximumf %52, %53 : vector<48x32xf32>
    %c3 = arith.constant 3 : index
    %c0_35 = arith.constant 0 : index
    %c0_36 = arith.constant 0 : index
    %55 = vector.load %arg4[%c3, %c0_35, %c0_36] : memref<12x64x32xbf16, #tpu.memory_space<vmem>>, vector<1x64x32xbf16>
    %56 = vector.shape_cast %55 : vector<1x64x32xbf16> to vector<64x32xbf16>
    %c3_37 = arith.constant 3 : index
    %c0_38 = arith.constant 0 : index
    %c0_39 = arith.constant 0 : index
    %57 = vector.load %arg5[%c3_37, %c0_38, %c0_39] : memref<12x1x32xf32, #tpu.memory_space<vmem>>, vector<1x1x32xf32>
    %58 = vector.shape_cast %57 : vector<1x1x32xf32> to vector<1x32xf32>
    %59 = arith.truncf %54 : vector<48x32xf32> to vector<48x32xbf16>
    %cst_40 = arith.constant dense<0.000000e+00> : vector<48x32xf32>
    %60 = tpu.matmul %0, %59, %cst_40 {dimension_numbers = #tpu.dot_dimension_numbers<[1], [0], [0], [1], [0, 0, 1, 1], [], []>} : vector<48x48xbf16>, vector<48x32xbf16>, vector<48x32xf32> -> vector<48x32xf32>
    %61 = tpu.concatenate %60, %54 in 1 : vector<48x32xf32>, vector<48x32xf32> -> vector<48x64xf32>
    %62 = arith.truncf %61 : vector<48x64xf32> to vector<48x64xbf16>
    %cst_41 = arith.constant dense<0.000000e+00> : vector<48x32xf32>
    %63 = tpu.matmul %62, %56, %cst_41 {dimension_numbers = #tpu.dot_dimension_numbers<[1], [0], [0], [1], [0, 0, 1, 1], [], []>} : vector<48x64xbf16>, vector<64x32xbf16>, vector<48x32xf32> -> vector<48x32xf32>
    %64 = vector.broadcast %58 : vector<1x32xf32> to vector<48x32xf32>
    %65 = arith.addf %63, %64 : vector<48x32xf32>
    %cst_42 = arith.constant 0.000000e+00 : f32
    %66 = vector.broadcast %cst_42 : f32 to vector<48x32xf32>
    %67 = arith.maximumf %65, %66 : vector<48x32xf32>
    %68 = arith.addf %41, %67 : vector<48x32xf32>
    %cst_43 = arith.constant 5.000000e-01 : f32
    %69 = vector.broadcast %cst_43 : f32 to vector<48x32xf32>
    %70 = arith.mulf %68, %69 : vector<48x32xf32>
    %c4 = arith.constant 4 : index
    %c0_44 = arith.constant 0 : index
    %c0_45 = arith.constant 0 : index
    %71 = vector.load %arg4[%c4, %c0_44, %c0_45] : memref<12x64x32xbf16, #tpu.memory_space<vmem>>, vector<1x64x32xbf16>
    %72 = vector.shape_cast %71 : vector<1x64x32xbf16> to vector<64x32xbf16>
    %c4_46 = arith.constant 4 : index
    %c0_47 = arith.constant 0 : index
    %c0_48 = arith.constant 0 : index
    %73 = vector.load %arg5[%c4_46, %c0_47, %c0_48] : memref<12x1x32xf32, #tpu.memory_space<vmem>>, vector<1x1x32xf32>
    %74 = vector.shape_cast %73 : vector<1x1x32xf32> to vector<1x32xf32>
    %75 = arith.truncf %70 : vector<48x32xf32> to vector<48x32xbf16>
    %cst_49 = arith.constant dense<0.000000e+00> : vector<48x32xf32>
    %76 = tpu.matmul %0, %75, %cst_49 {dimension_numbers = #tpu.dot_dimension_numbers<[1], [0], [0], [1], [0, 0, 1, 1], [], []>} : vector<48x48xbf16>, vector<48x32xbf16>, vector<48x32xf32> -> vector<48x32xf32>
    %77 = tpu.concatenate %76, %70 in 1 : vector<48x32xf32>, vector<48x32xf32> -> vector<48x64xf32>
    %78 = arith.truncf %77 : vector<48x64xf32> to vector<48x64xbf16>
    %cst_50 = arith.constant dense<0.000000e+00> : vector<48x32xf32>
    %79 = tpu.matmul %78, %72, %cst_50 {dimension_numbers = #tpu.dot_dimension_numbers<[1], [0], [0], [1], [0, 0, 1, 1], [], []>} : vector<48x64xbf16>, vector<64x32xbf16>, vector<48x32xf32> -> vector<48x32xf32>
    %80 = vector.broadcast %74 : vector<1x32xf32> to vector<48x32xf32>
    %81 = arith.addf %79, %80 : vector<48x32xf32>
    %cst_51 = arith.constant 0.000000e+00 : f32
    %82 = vector.broadcast %cst_51 : f32 to vector<48x32xf32>
    %83 = arith.maximumf %81, %82 : vector<48x32xf32>
    %c5 = arith.constant 5 : index
    %c0_52 = arith.constant 0 : index
    %c0_53 = arith.constant 0 : index
    %84 = vector.load %arg4[%c5, %c0_52, %c0_53] : memref<12x64x32xbf16, #tpu.memory_space<vmem>>, vector<1x64x32xbf16>
    %85 = vector.shape_cast %84 : vector<1x64x32xbf16> to vector<64x32xbf16>
    %c5_54 = arith.constant 5 : index
    %c0_55 = arith.constant 0 : index
    %c0_56 = arith.constant 0 : index
    %86 = vector.load %arg5[%c5_54, %c0_55, %c0_56] : memref<12x1x32xf32, #tpu.memory_space<vmem>>, vector<1x1x32xf32>
    %87 = vector.shape_cast %86 : vector<1x1x32xf32> to vector<1x32xf32>
    %88 = arith.truncf %83 : vector<48x32xf32> to vector<48x32xbf16>
    %cst_57 = arith.constant dense<0.000000e+00> : vector<48x32xf32>
    %89 = tpu.matmul %0, %88, %cst_57 {dimension_numbers = #tpu.dot_dimension_numbers<[1], [0], [0], [1], [0, 0, 1, 1], [], []>} : vector<48x48xbf16>, vector<48x32xbf16>, vector<48x32xf32> -> vector<48x32xf32>
    %90 = tpu.concatenate %89, %83 in 1 : vector<48x32xf32>, vector<48x32xf32> -> vector<48x64xf32>
    %91 = arith.truncf %90 : vector<48x64xf32> to vector<48x64xbf16>
    %cst_58 = arith.constant dense<0.000000e+00> : vector<48x32xf32>
    %92 = tpu.matmul %91, %85, %cst_58 {dimension_numbers = #tpu.dot_dimension_numbers<[1], [0], [0], [1], [0, 0, 1, 1], [], []>} : vector<48x64xbf16>, vector<64x32xbf16>, vector<48x32xf32> -> vector<48x32xf32>
    %93 = vector.broadcast %87 : vector<1x32xf32> to vector<48x32xf32>
    %94 = arith.addf %92, %93 : vector<48x32xf32>
    %cst_59 = arith.constant 0.000000e+00 : f32
    %95 = vector.broadcast %cst_59 : f32 to vector<48x32xf32>
    %96 = arith.maximumf %94, %95 : vector<48x32xf32>
    %97 = arith.addf %70, %96 : vector<48x32xf32>
    %cst_60 = arith.constant 5.000000e-01 : f32
    %98 = vector.broadcast %cst_60 : f32 to vector<48x32xf32>
    %99 = arith.mulf %97, %98 : vector<48x32xf32>
    %c6 = arith.constant 6 : index
    %c0_61 = arith.constant 0 : index
    %c0_62 = arith.constant 0 : index
    %100 = vector.load %arg4[%c6, %c0_61, %c0_62] : memref<12x64x32xbf16, #tpu.memory_space<vmem>>, vector<1x64x32xbf16>
    %101 = vector.shape_cast %100 : vector<1x64x32xbf16> to vector<64x32xbf16>
    %c6_63 = arith.constant 6 : index
    %c0_64 = arith.constant 0 : index
    %c0_65 = arith.constant 0 : index
    %102 = vector.load %arg5[%c6_63, %c0_64, %c0_65] : memref<12x1x32xf32, #tpu.memory_space<vmem>>, vector<1x1x32xf32>
    %103 = vector.shape_cast %102 : vector<1x1x32xf32> to vector<1x32xf32>
    %104 = arith.truncf %99 : vector<48x32xf32> to vector<48x32xbf16>
    %cst_66 = arith.constant dense<0.000000e+00> : vector<48x32xf32>
    %105 = tpu.matmul %0, %104, %cst_66 {dimension_numbers = #tpu.dot_dimension_numbers<[1], [0], [0], [1], [0, 0, 1, 1], [], []>} : vector<48x48xbf16>, vector<48x32xbf16>, vector<48x32xf32> -> vector<48x32xf32>
    %106 = tpu.concatenate %105, %99 in 1 : vector<48x32xf32>, vector<48x32xf32> -> vector<48x64xf32>
    %107 = arith.truncf %106 : vector<48x64xf32> to vector<48x64xbf16>
    %cst_67 = arith.constant dense<0.000000e+00> : vector<48x32xf32>
    %108 = tpu.matmul %107, %101, %cst_67 {dimension_numbers = #tpu.dot_dimension_numbers<[1], [0], [0], [1], [0, 0, 1, 1], [], []>} : vector<48x64xbf16>, vector<64x32xbf16>, vector<48x32xf32> -> vector<48x32xf32>
    %109 = vector.broadcast %103 : vector<1x32xf32> to vector<48x32xf32>
    %110 = arith.addf %108, %109 : vector<48x32xf32>
    %cst_68 = arith.constant 0.000000e+00 : f32
    %111 = vector.broadcast %cst_68 : f32 to vector<48x32xf32>
    %112 = arith.maximumf %110, %111 : vector<48x32xf32>
    %c7 = arith.constant 7 : index
    %c0_69 = arith.constant 0 : index
    %c0_70 = arith.constant 0 : index
    %113 = vector.load %arg4[%c7, %c0_69, %c0_70] : memref<12x64x32xbf16, #tpu.memory_space<vmem>>, vector<1x64x32xbf16>
    %114 = vector.shape_cast %113 : vector<1x64x32xbf16> to vector<64x32xbf16>
    %c7_71 = arith.constant 7 : index
    %c0_72 = arith.constant 0 : index
    %c0_73 = arith.constant 0 : index
    %115 = vector.load %arg5[%c7_71, %c0_72, %c0_73] : memref<12x1x32xf32, #tpu.memory_space<vmem>>, vector<1x1x32xf32>
    %116 = vector.shape_cast %115 : vector<1x1x32xf32> to vector<1x32xf32>
    %117 = arith.truncf %112 : vector<48x32xf32> to vector<48x32xbf16>
    %cst_74 = arith.constant dense<0.000000e+00> : vector<48x32xf32>
    %118 = tpu.matmul %0, %117, %cst_74 {dimension_numbers = #tpu.dot_dimension_numbers<[1], [0], [0], [1], [0, 0, 1, 1], [], []>} : vector<48x48xbf16>, vector<48x32xbf16>, vector<48x32xf32> -> vector<48x32xf32>
    %119 = tpu.concatenate %118, %112 in 1 : vector<48x32xf32>, vector<48x32xf32> -> vector<48x64xf32>
    %120 = arith.truncf %119 : vector<48x64xf32> to vector<48x64xbf16>
    %cst_75 = arith.constant dense<0.000000e+00> : vector<48x32xf32>
    %121 = tpu.matmul %120, %114, %cst_75 {dimension_numbers = #tpu.dot_dimension_numbers<[1], [0], [0], [1], [0, 0, 1, 1], [], []>} : vector<48x64xbf16>, vector<64x32xbf16>, vector<48x32xf32> -> vector<48x32xf32>
    %122 = vector.broadcast %116 : vector<1x32xf32> to vector<48x32xf32>
    %123 = arith.addf %121, %122 : vector<48x32xf32>
    %cst_76 = arith.constant 0.000000e+00 : f32
    %124 = vector.broadcast %cst_76 : f32 to vector<48x32xf32>
    %125 = arith.maximumf %123, %124 : vector<48x32xf32>
    %126 = arith.addf %99, %125 : vector<48x32xf32>
    %cst_77 = arith.constant 5.000000e-01 : f32
    %127 = vector.broadcast %cst_77 : f32 to vector<48x32xf32>
    %128 = arith.mulf %126, %127 : vector<48x32xf32>
    %c8 = arith.constant 8 : index
    %c0_78 = arith.constant 0 : index
    %c0_79 = arith.constant 0 : index
    %129 = vector.load %arg4[%c8, %c0_78, %c0_79] : memref<12x64x32xbf16, #tpu.memory_space<vmem>>, vector<1x64x32xbf16>
    %130 = vector.shape_cast %129 : vector<1x64x32xbf16> to vector<64x32xbf16>
    %c8_80 = arith.constant 8 : index
    %c0_81 = arith.constant 0 : index
    %c0_82 = arith.constant 0 : index
    %131 = vector.load %arg5[%c8_80, %c0_81, %c0_82] : memref<12x1x32xf32, #tpu.memory_space<vmem>>, vector<1x1x32xf32>
    %132 = vector.shape_cast %131 : vector<1x1x32xf32> to vector<1x32xf32>
    %133 = arith.truncf %128 : vector<48x32xf32> to vector<48x32xbf16>
    %cst_83 = arith.constant dense<0.000000e+00> : vector<48x32xf32>
    %134 = tpu.matmul %0, %133, %cst_83 {dimension_numbers = #tpu.dot_dimension_numbers<[1], [0], [0], [1], [0, 0, 1, 1], [], []>} : vector<48x48xbf16>, vector<48x32xbf16>, vector<48x32xf32> -> vector<48x32xf32>
    %135 = tpu.concatenate %134, %128 in 1 : vector<48x32xf32>, vector<48x32xf32> -> vector<48x64xf32>
    %136 = arith.truncf %135 : vector<48x64xf32> to vector<48x64xbf16>
    %cst_84 = arith.constant dense<0.000000e+00> : vector<48x32xf32>
    %137 = tpu.matmul %136, %130, %cst_84 {dimension_numbers = #tpu.dot_dimension_numbers<[1], [0], [0], [1], [0, 0, 1, 1], [], []>} : vector<48x64xbf16>, vector<64x32xbf16>, vector<48x32xf32> -> vector<48x32xf32>
    %138 = vector.broadcast %132 : vector<1x32xf32> to vector<48x32xf32>
    %139 = arith.addf %137, %138 : vector<48x32xf32>
    %cst_85 = arith.constant 0.000000e+00 : f32
    %140 = vector.broadcast %cst_85 : f32 to vector<48x32xf32>
    %141 = arith.maximumf %139, %140 : vector<48x32xf32>
    %c9 = arith.constant 9 : index
    %c0_86 = arith.constant 0 : index
    %c0_87 = arith.constant 0 : index
    %142 = vector.load %arg4[%c9, %c0_86, %c0_87] : memref<12x64x32xbf16, #tpu.memory_space<vmem>>, vector<1x64x32xbf16>
    %143 = vector.shape_cast %142 : vector<1x64x32xbf16> to vector<64x32xbf16>
    %c9_88 = arith.constant 9 : index
    %c0_89 = arith.constant 0 : index
    %c0_90 = arith.constant 0 : index
    %144 = vector.load %arg5[%c9_88, %c0_89, %c0_90] : memref<12x1x32xf32, #tpu.memory_space<vmem>>, vector<1x1x32xf32>
    %145 = vector.shape_cast %144 : vector<1x1x32xf32> to vector<1x32xf32>
    %146 = arith.truncf %141 : vector<48x32xf32> to vector<48x32xbf16>
    %cst_91 = arith.constant dense<0.000000e+00> : vector<48x32xf32>
    %147 = tpu.matmul %0, %146, %cst_91 {dimension_numbers = #tpu.dot_dimension_numbers<[1], [0], [0], [1], [0, 0, 1, 1], [], []>} : vector<48x48xbf16>, vector<48x32xbf16>, vector<48x32xf32> -> vector<48x32xf32>
    %148 = tpu.concatenate %147, %141 in 1 : vector<48x32xf32>, vector<48x32xf32> -> vector<48x64xf32>
    %149 = arith.truncf %148 : vector<48x64xf32> to vector<48x64xbf16>
    %cst_92 = arith.constant dense<0.000000e+00> : vector<48x32xf32>
    %150 = tpu.matmul %149, %143, %cst_92 {dimension_numbers = #tpu.dot_dimension_numbers<[1], [0], [0], [1], [0, 0, 1, 1], [], []>} : vector<48x64xbf16>, vector<64x32xbf16>, vector<48x32xf32> -> vector<48x32xf32>
    %151 = vector.broadcast %145 : vector<1x32xf32> to vector<48x32xf32>
    %152 = arith.addf %150, %151 : vector<48x32xf32>
    %cst_93 = arith.constant 0.000000e+00 : f32
    %153 = vector.broadcast %cst_93 : f32 to vector<48x32xf32>
    %154 = arith.maximumf %152, %153 : vector<48x32xf32>
    %155 = arith.addf %128, %154 : vector<48x32xf32>
    %cst_94 = arith.constant 5.000000e-01 : f32
    %156 = vector.broadcast %cst_94 : f32 to vector<48x32xf32>
    %157 = arith.mulf %155, %156 : vector<48x32xf32>
    %c10 = arith.constant 10 : index
    %c0_95 = arith.constant 0 : index
    %c0_96 = arith.constant 0 : index
    %158 = vector.load %arg4[%c10, %c0_95, %c0_96] : memref<12x64x32xbf16, #tpu.memory_space<vmem>>, vector<1x64x32xbf16>
    %159 = vector.shape_cast %158 : vector<1x64x32xbf16> to vector<64x32xbf16>
    %c10_97 = arith.constant 10 : index
    %c0_98 = arith.constant 0 : index
    %c0_99 = arith.constant 0 : index
    %160 = vector.load %arg5[%c10_97, %c0_98, %c0_99] : memref<12x1x32xf32, #tpu.memory_space<vmem>>, vector<1x1x32xf32>
    %161 = vector.shape_cast %160 : vector<1x1x32xf32> to vector<1x32xf32>
    %162 = arith.truncf %157 : vector<48x32xf32> to vector<48x32xbf16>
    %cst_100 = arith.constant dense<0.000000e+00> : vector<48x32xf32>
    %163 = tpu.matmul %0, %162, %cst_100 {dimension_numbers = #tpu.dot_dimension_numbers<[1], [0], [0], [1], [0, 0, 1, 1], [], []>} : vector<48x48xbf16>, vector<48x32xbf16>, vector<48x32xf32> -> vector<48x32xf32>
    %164 = tpu.concatenate %163, %157 in 1 : vector<48x32xf32>, vector<48x32xf32> -> vector<48x64xf32>
    %165 = arith.truncf %164 : vector<48x64xf32> to vector<48x64xbf16>
    %cst_101 = arith.constant dense<0.000000e+00> : vector<48x32xf32>
    %166 = tpu.matmul %165, %159, %cst_101 {dimension_numbers = #tpu.dot_dimension_numbers<[1], [0], [0], [1], [0, 0, 1, 1], [], []>} : vector<48x64xbf16>, vector<64x32xbf16>, vector<48x32xf32> -> vector<48x32xf32>
    %167 = vector.broadcast %161 : vector<1x32xf32> to vector<48x32xf32>
    %168 = arith.addf %166, %167 : vector<48x32xf32>
    %cst_102 = arith.constant 0.000000e+00 : f32
    %169 = vector.broadcast %cst_102 : f32 to vector<48x32xf32>
    %170 = arith.maximumf %168, %169 : vector<48x32xf32>
    %c11 = arith.constant 11 : index
    %c0_103 = arith.constant 0 : index
    %c0_104 = arith.constant 0 : index
    %171 = vector.load %arg4[%c11, %c0_103, %c0_104] : memref<12x64x32xbf16, #tpu.memory_space<vmem>>, vector<1x64x32xbf16>
    %172 = vector.shape_cast %171 : vector<1x64x32xbf16> to vector<64x32xbf16>
    %c11_105 = arith.constant 11 : index
    %c0_106 = arith.constant 0 : index
    %c0_107 = arith.constant 0 : index
    %173 = vector.load %arg5[%c11_105, %c0_106, %c0_107] : memref<12x1x32xf32, #tpu.memory_space<vmem>>, vector<1x1x32xf32>
    %174 = vector.shape_cast %173 : vector<1x1x32xf32> to vector<1x32xf32>
    %175 = arith.truncf %170 : vector<48x32xf32> to vector<48x32xbf16>
    %cst_108 = arith.constant dense<0.000000e+00> : vector<48x32xf32>
    %176 = tpu.matmul %0, %175, %cst_108 {dimension_numbers = #tpu.dot_dimension_numbers<[1], [0], [0], [1], [0, 0, 1, 1], [], []>} : vector<48x48xbf16>, vector<48x32xbf16>, vector<48x32xf32> -> vector<48x32xf32>
    %177 = tpu.concatenate %176, %170 in 1 : vector<48x32xf32>, vector<48x32xf32> -> vector<48x64xf32>
    %178 = arith.truncf %177 : vector<48x64xf32> to vector<48x64xbf16>
    %cst_109 = arith.constant dense<0.000000e+00> : vector<48x32xf32>
    %179 = tpu.matmul %178, %172, %cst_109 {dimension_numbers = #tpu.dot_dimension_numbers<[1], [0], [0], [1], [0, 0, 1, 1], [], []>} : vector<48x64xbf16>, vector<64x32xbf16>, vector<48x32xf32> -> vector<48x32xf32>
    %180 = vector.broadcast %174 : vector<1x32xf32> to vector<48x32xf32>
    %181 = arith.addf %179, %180 : vector<48x32xf32>
    %cst_110 = arith.constant 0.000000e+00 : f32
    %182 = vector.broadcast %cst_110 : f32 to vector<48x32xf32>
    %183 = arith.maximumf %181, %182 : vector<48x32xf32>
    %184 = arith.addf %157, %183 : vector<48x32xf32>
    %cst_111 = arith.constant 5.000000e-01 : f32
    %185 = vector.broadcast %cst_111 : f32 to vector<48x32xf32>
    %186 = arith.mulf %184, %185 : vector<48x32xf32>
    %c0_112 = arith.constant 0 : index
    %c0_113 = arith.constant 0 : index
    %187 = vector.load %arg6[%c0_112, %c0_113] : memref<64x16xbf16, #tpu.memory_space<vmem>>, vector<64x16xbf16>
    %c0_114 = arith.constant 0 : index
    %c0_115 = arith.constant 0 : index
    %188 = vector.load %arg7[%c0_114, %c0_115] : memref<1x16xf32, #tpu.memory_space<vmem>>, vector<1x16xf32>
    %189 = arith.truncf %186 : vector<48x32xf32> to vector<48x32xbf16>
    %cst_116 = arith.constant dense<0.000000e+00> : vector<48x32xf32>
    %190 = tpu.matmul %0, %189, %cst_116 {dimension_numbers = #tpu.dot_dimension_numbers<[1], [0], [0], [1], [0, 0, 1, 1], [], []>} : vector<48x48xbf16>, vector<48x32xbf16>, vector<48x32xf32> -> vector<48x32xf32>
    %191 = tpu.concatenate %190, %186 in 1 : vector<48x32xf32>, vector<48x32xf32> -> vector<48x64xf32>
    %192 = arith.truncf %191 : vector<48x64xf32> to vector<48x64xbf16>
    %cst_117 = arith.constant dense<0.000000e+00> : vector<48x16xf32>
    %193 = tpu.matmul %192, %187, %cst_117 {dimension_numbers = #tpu.dot_dimension_numbers<[1], [0], [0], [1], [0, 0, 1, 1], [], []>} : vector<48x64xbf16>, vector<64x16xbf16>, vector<48x16xf32> -> vector<48x16xf32>
    %194 = vector.broadcast %188 : vector<1x16xf32> to vector<48x16xf32>
    %195 = arith.addf %193, %194 : vector<48x16xf32>
    %c0_118 = arith.constant 0 : index
    %c0_119 = arith.constant 0 : index
    %196 = vector.load %arg8[%c0_118, %c0_119] : memref<48x16xf32, #tpu.memory_space<vmem>>, vector<48x16xf32>
    tpu.vector_store %arg8[%c0_118, %c0_119], %195 {strides = array<i32>} : memref<48x16xf32, #tpu.memory_space<vmem>>, vector<48x16xf32>,
    %c0_120 = arith.constant 0 : index
    %c0_121 = arith.constant 0 : index
    %197 = vector.load %arg9[%c0_120, %c0_121] : memref<48x32xf32, #tpu.memory_space<vmem>>, vector<48x32xf32>
    tpu.vector_store %arg9[%c0_120, %c0_121], %186 {strides = array<i32>} : memref<48x32xf32, #tpu.memory_space<vmem>>, vector<48x32xf32>,
    return
  }
}

module attributes {stable_mosaic.version = 11 : i64} {
  func.func @_gconv_kernel(%arg0: memref<48x16xf32, #tpu.memory_space<vmem>>, %arg1: memref<48x48xbf16, #tpu.memory_space<vmem>>, %arg2: memref<32x3xbf16, #tpu.memory_space<vmem>>, %arg3: memref<1x3xf32, #tpu.memory_space<vmem>>, %arg4: memref<48x3xf32, #tpu.memory_space<vmem>>) attributes {dimension_semantics = [], scalar_prefetch = 0 : i64, scratch_operands = 0 : i64, tpu.core_type = #tpu.core_type<tc>} {
    %c0 = arith.constant 0 : index
    %c0_0 = arith.constant 0 : index
    %0 = vector.load %arg1[%c0, %c0_0] : memref<48x48xbf16, #tpu.memory_space<vmem>>, vector<48x48xbf16>
    %c0_1 = arith.constant 0 : index
    %c0_2 = arith.constant 0 : index
    %1 = vector.load %arg0[%c0_1, %c0_2] : memref<48x16xf32, #tpu.memory_space<vmem>>, vector<48x16xf32>
    %c0_3 = arith.constant 0 : index
    %c0_4 = arith.constant 0 : index
    %2 = vector.load %arg2[%c0_3, %c0_4] : memref<32x3xbf16, #tpu.memory_space<vmem>>, vector<32x3xbf16>
    %c0_5 = arith.constant 0 : index
    %c0_6 = arith.constant 0 : index
    %3 = vector.load %arg3[%c0_5, %c0_6] : memref<1x3xf32, #tpu.memory_space<vmem>>, vector<1x3xf32>
    %4 = arith.truncf %1 : vector<48x16xf32> to vector<48x16xbf16>
    %cst = arith.constant dense<0.000000e+00> : vector<48x16xf32>
    %5 = tpu.matmul %0, %4, %cst {dimension_numbers = #tpu.dot_dimension_numbers<[1], [0], [0], [1], [0, 0, 1, 1], [], []>} : vector<48x48xbf16>, vector<48x16xbf16>, vector<48x16xf32> -> vector<48x16xf32>
    %6 = tpu.concatenate %5, %1 in 1 : vector<48x16xf32>, vector<48x16xf32> -> vector<48x32xf32>
    %7 = arith.truncf %6 : vector<48x32xf32> to vector<48x32xbf16>
    %cst_7 = arith.constant dense<0.000000e+00> : vector<48x3xf32>
    %8 = tpu.matmul %7, %2, %cst_7 {dimension_numbers = #tpu.dot_dimension_numbers<[1], [0], [0], [1], [0, 0, 1, 1], [], []>} : vector<48x32xbf16>, vector<32x3xbf16>, vector<48x3xf32> -> vector<48x3xf32>
    %9 = vector.broadcast %3 : vector<1x3xf32> to vector<48x3xf32>
    %10 = arith.addf %8, %9 : vector<48x3xf32>
    %c0_8 = arith.constant 0 : index
    %c0_9 = arith.constant 0 : index
    %11 = vector.load %arg4[%c0_8, %c0_9] : memref<48x3xf32, #tpu.memory_space<vmem>>, vector<48x3xf32>
    tpu.vector_store %arg4[%c0_8, %c0_9], %10 {strides = array<i32>} : memref<48x3xf32, #tpu.memory_space<vmem>>, vector<48x3xf32>,
    return
  }
}

</mosaic_0001>

<llo_original>
// kernel: reconstruction3d_forward.9
$region0: #{reconstruction3d_forward.9}
  #allocation0 [shape = 'u32[]', space=smem, size = 0x4, offset = 0x4, fixed_abs, tag = 'smem constant byte address 0x4 - core index']
  #allocation1 [shape = 'u32[72,128]{1,0:T(1,128)}', space=vmem, size = 0x9000, scoped, tag = 'internal scratch']
  %s0 = inlined_call_operand.vmem [shape: bf16[128,72], index: 0, kind: input, shape index: {}]
  %s1 = inlined_call_operand.vmem [shape: bf16[72,16], index: 1, kind: input, shape index: {}]
  %s2 = inlined_call_operand.vmem [shape: f32[1,16], index: 2, kind: input, shape index: {}]
  %s3 = inlined_call_operand.vmem [shape: f32[128,16], index: 3, kind: output, shape index: {}]
  %s4 = sld [smem:[#allocation0]]
  $region22: #{reconstruction3d_forward.9} parent=0
    _
  %s6 = ssub.s32 1, %s4
  %s7 = scalar_select 0, %s6, %s4
  // Predicated region
  $region2: #{reconstruction3d_forward.9} parent=0 // pred_check
    _
  $region3: #{reconstruction3d_forward.9} parent=0 // pred_check_branch
    %9 = sbr.rel (0) target = $region5
  $region4: #{reconstruction3d_forward.9} parent=0 // pred_region
    _
  $region5: #{reconstruction3d_forward.9} parent=0 // pred_fallthru
    _
  // Predicated region
  $region6: #{reconstruction3d_forward.9} parent=0 // pred_check
    _
  $region7: #{reconstruction3d_forward.9} parent=0 // pred_check_branch
    %11 = sbr.rel (0) target = $region9
  $region8: #{reconstruction3d_forward.9} parent=0 // pred_region
    _
  $region9: #{reconstruction3d_forward.9} parent=0 // pred_fallthru
    _
  // Predicated region
  $region10: #{reconstruction3d_forward.9} parent=0 // pred_check
    _
  $region11: #{reconstruction3d_forward.9} parent=0 // pred_check_branch
    %13 = sbr.rel (0) target = $region13
  $region12: #{reconstruction3d_forward.9} parent=0 // pred_region
    _
  $region13: #{reconstruction3d_forward.9} parent=0 // pred_fallthru
    _
  %v15 = vld [vmem:[%s0] sm:$0xf]
  %v16 = vld [vmem:[%s0 + $0x4] sm:$0xf]
  %v17 = vld [vmem:[%s0 + $0x8] sm:$0xf]
  %v18 = vld [vmem:[%s0 + $0xc] sm:$0xf]
  %v19 = vld [vmem:[%s0 + $0x10] sm:$0xf]
  %v20 = vld [vmem:[%s0 + $0x14] sm:$0xf]
  %v21 = vld [vmem:[%s0 + $0x18] sm:$0xf]
  %v22 = vld [vmem:[%s0 + $0x1c] sm:$0xf]
  %v23 = vld [vmem:[%s0 + $0x20] sm:$0xf]
  %v24 = vld [vmem:[%s0 + $0x24] sm:$0xf]
  %v25 = vld [vmem:[%s0 + $0x28] sm:$0xf]
  %v26 = vld [vmem:[%s0 + $0x2c] sm:$0xf]
  %v27 = vld [vmem:[%s0 + $0x30] sm:$0xf]
  %v28 = vld [vmem:[%s0 + $0x34] sm:$0xf]
  %v29 = vld [vmem:[%s0 + $0x38] sm:$0xf]
  %v30 = vld [vmem:[%s0 + $0x3c] sm:$0xf]
  %v31 = vld [vmem:[%s1] sm:$0xf]
  %v32 = vld [vmem:[%s1 + $0x4] sm:$0xf]
  %v33 = vld [vmem:[%s1 + $0x8] sm:$0xf]
  %v34 = vld [vmem:[%s1 + $0xc] sm:$0xf]
  %v35 = vld [vmem:[%s1 + $0x10] sm:$0xf]
  %v36 = vld [vmem:[%s1 + $0x14] sm:$0xf]
  %v37 = vld [vmem:[%s1 + $0x18] sm:$0xf]
  %v38 = vld [vmem:[%s1 + $0x1c] sm:$0xf]
  %v39 = vld [vmem:[%s1 + $0x20] sm:$0xf]
  %v40 = vld [vmem:[%s2] sm:$0x1]
  %v42 = vperm.slane %v40, 0
  %v60 = vunpack.c.l.b16 %v15
  %v61 = vunpack.c.l.b16 %v16
  %v62 = vunpack.c.l.b16 %v17
  %v63 = vunpack.c.l.b16 %v18
  %v64 = vunpack.c.l.b16 %v19
  %v65 = vunpack.c.l.b16 %v20
  %v66 = vunpack.c.l.b16 %v21
  %v67 = vunpack.c.l.b16 %v22
  %v68 = vunpack.c.l.b16 %v23
  %v69 = vunpack.c.l.b16 %v24
  %v70 = vunpack.c.l.b16 %v25
  %v71 = vunpack.c.l.b16 %v26
  %v72 = vunpack.c.l.b16 %v27
  %v73 = vunpack.c.l.b16 %v28
  %v74 = vunpack.c.l.b16 %v29
  %v75 = vunpack.c.l.b16 %v30
  %v76 = vpack.c.b16 %v61, %v60
  %v77 = vpack.c.b16 %v63, %v62
  %v78 = vpack.c.b16 %v65, %v64
  %v79 = vpack.c.b16 %v67, %v66
  %v80 = vpack.c.b16 %v69, %v68
  %v81 = vpack.c.b16 %v71, %v70
  %v82 = vpack.c.b16 %v73, %v72
  %v83 = vpack.c.b16 %v75, %v74
  %v93 = vunpack.c.l.b16 %v31
  %v94 = vunpack.c.l.b16 %v32
  %v95 = vunpack.c.l.b16 %v33
  %v96 = vunpack.c.l.b16 %v34
  %v97 = vunpack.c.l.b16 %v35
  %v98 = vunpack.c.l.b16 %v36
  %v99 = vunpack.c.l.b16 %v37
  %v100 = vunpack.c.l.b16 %v38
  %v101 = vunpack.c.l.b16 %v39
  %v102 = vpack.c.b16 %v94, %v93
  %v103 = vpack.c.b16 %v96, %v95
  %v104 = vpack.c.b16 %v98, %v97
  %v105 = vpack.c.b16 %v100, %v99
  %v106 = vpack.c.b16 %v101, %v101
  %vm111 = vcmask 588800
  %v113 = vsel %vm111, %v76, 0
  %v116 = vsel %vm111, %v77, 0
  %v119 = vsel %vm111, %v78, 0
  %v122 = vsel %vm111, %v79, 0
  %v125 = vsel %vm111, %v80, 0
  %v128 = vsel %vm111, %v81, 0
  %v131 = vsel %vm111, %v82, 0
  %v134 = vsel %vm111, %v83, 0
  %vm136 = vcmask 1043456
  %v138 = vsel %vm136, %v106, 0
  %140 = vmatpush.bf16.msra.mxu0 0
  %141 = vmatpush.bf16.msra.mxu0 0
  %142 = vmatpush.bf16.msra.mxu0 0
  %143 = vmatpush.bf16.msra.mxu0 %v138
  %144 = vmatpush.bf16.msra.mxu0 %v105
  %145 = vmatpush.bf16.msra.mxu0 %v104
  %146 = vmatpush.bf16.msra.mxu0 %v103
  %147 = vmatpush.bf16.msra.mxu0 %v102
  %148 = vmatmul.bf16.gmra.mxu0 %v113
  %v149 = vpop.f32.mrf.mxu0
  %v150 = vadd.f32 %v42, %v149
  %v151 = vpop.f32.mrf.mxu0
  %v152 = vadd.f32 %v42, %v151
  %153 = vmatmul.bf16.gmra.mxu0 %v116
  %v154 = vpop.f32.mrf.mxu0
  %v155 = vadd.f32 %v42, %v154
  %v156 = vpop.f32.mrf.mxu0
  %v157 = vadd.f32 %v42, %v156
  %158 = vmatmul.bf16.gmra.mxu0 %v119
  %v159 = vpop.f32.mrf.mxu0
  %v160 = vadd.f32 %v42, %v159
  %v161 = vpop.f32.mrf.mxu0
  %v162 = vadd.f32 %v42, %v161
  %163 = vmatmul.bf16.gmra.mxu0 %v122
  %v164 = vpop.f32.mrf.mxu0
  %v165 = vadd.f32 %v42, %v164
  %v166 = vpop.f32.mrf.mxu0
  %v167 = vadd.f32 %v42, %v166
  %168 = vmatmul.bf16.gmra.mxu0 %v125
  %v169 = vpop.f32.mrf.mxu0
  %v170 = vadd.f32 %v42, %v169
  %v171 = vpop.f32.mrf.mxu0
  %v172 = vadd.f32 %v42, %v171
  %173 = vmatmul.bf16.gmra.mxu0 %v128
  %v174 = vpop.f32.mrf.mxu0
  %v175 = vadd.f32 %v42, %v174
  %v176 = vpop.f32.mrf.mxu0
  %v177 = vadd.f32 %v42, %v176
  %178 = vmatmul.bf16.gmra.mxu0 %v131
  %v179 = vpop.f32.mrf.mxu0
  %v180 = vadd.f32 %v42, %v179
  %v181 = vpop.f32.mrf.mxu0
  %v182 = vadd.f32 %v42, %v181
  %183 = vmatmul.bf16.gmra.mxu0 %v134
  %v184 = vpop.f32.mrf.mxu0
  %v185 = vadd.f32 %v42, %v184
  %v186 = vpop.f32.mrf.mxu0
  %v187 = vadd.f32 %v42, %v186
  %188 = vdwg.mxu0
  %v189 = vmax.f32 %v150, 0.0
  %v190 = vmax.f32 %v152, 0.0
  %v191 = vmax.f32 %v155, 0.0
  %v192 = vmax.f32 %v157, 0.0
  %v193 = vmax.f32 %v160, 0.0
  %v194 = vmax.f32 %v162, 0.0
  %v195 = vmax.f32 %v165, 0.0
  %v196 = vmax.f32 %v167, 0.0
  %v197 = vmax.f32 %v170, 0.0
  %v198 = vmax.f32 %v172, 0.0
  %v199 = vmax.f32 %v175, 0.0
  %v200 = vmax.f32 %v177, 0.0
  %v201 = vmax.f32 %v180, 0.0
  %v202 = vmax.f32 %v182, 0.0
  %v203 = vmax.f32 %v185, 0.0
  %v204 = vmax.f32 %v187, 0.0
  %vm205 = vcmask 130048
  %206 = vst.msk [vmem:[%s3] sm:$0xff] %vm205, %v189
  %207 = vst.msk [vmem:[%s3 + $0x8] sm:$0xff] %vm205, %v190
  %208 = vst.msk [vmem:[%s3 + $0x10] sm:$0xff] %vm205, %v191
  %209 = vst.msk [vmem:[%s3 + $0x18] sm:$0xff] %vm205, %v192
  %210 = vst.msk [vmem:[%s3 + $0x20] sm:$0xff] %vm205, %v193
  %211 = vst.msk [vmem:[%s3 + $0x28] sm:$0xff] %vm205, %v194
  %212 = vst.msk [vmem:[%s3 + $0x30] sm:$0xff] %vm205, %v195
  %213 = vst.msk [vmem:[%s3 + $0x38] sm:$0xff] %vm205, %v196
  %214 = vst.msk [vmem:[%s3 + $0x40] sm:$0xff] %vm205, %v197
  %215 = vst.msk [vmem:[%s3 + $0x48] sm:$0xff] %vm205, %v198
  %216 = vst.msk [vmem:[%s3 + $0x50] sm:$0xff] %vm205, %v199
  %217 = vst.msk [vmem:[%s3 + $0x58] sm:$0xff] %vm205, %v200
  %218 = vst.msk [vmem:[%s3 + $0x60] sm:$0xff] %vm205, %v201
  %219 = vst.msk [vmem:[%s3 + $0x68] sm:$0xff] %vm205, %v202
  %220 = vst.msk [vmem:[%s3 + $0x70] sm:$0xff] %vm205, %v203
  %221 = vst.msk [vmem:[%s3 + $0x78] sm:$0xff] %vm205, %v204
  // Predicated region
  $region14: #{reconstruction3d_forward.9} parent=0 // pred_check
    _
  $region15: #{reconstruction3d_forward.9} parent=0 // pred_check_branch
    %223 = sbr.rel (0) target = $region17
  $region16: #{reconstruction3d_forward.9} parent=0 // pred_region
    _
  $region17: #{reconstruction3d_forward.9} parent=0 // pred_fallthru
    _
  // Predicated region
  $region18: #{reconstruction3d_forward.9} parent=0 // pred_check
    _
  $region19: #{reconstruction3d_forward.9} parent=0 // pred_check_branch
    %225 = sbr.rel (0) target = $region21
  $region20: #{reconstruction3d_forward.9} parent=0 // pred_region
    _
  $region21: #{reconstruction3d_forward.9} parent=0 // pred_fallthru
    _

// kernel: reconstruction3d_forward.8
$region0: #{reconstruction3d_forward.8}
  #allocation0 [shape = 'u32[]', space=smem, size = 0x4, offset = 0x4, fixed_abs, tag = 'smem constant byte address 0x4 - core index']
  #allocation1 [shape = 'u32[72,128]{1,0:T(1,128)}', space=vmem, size = 0x9000, scoped, tag = 'internal scratch']
  %s0 = inlined_call_operand.vmem [shape: bf16[512,27], index: 0, kind: input, shape index: {}]
  %s1 = inlined_call_operand.vmem [shape: bf16[27,8], index: 1, kind: input, shape index: {}]
  %s2 = inlined_call_operand.vmem [shape: f32[1,8], index: 2, kind: input, shape index: {}]
  %s3 = inlined_call_operand.vmem [shape: f32[512,8], index: 3, kind: output, shape index: {}]
  %s4 = sld [smem:[#allocation0]]
  $region45: #{reconstruction3d_forward.8} parent=0
    _
  %s6 = ssub.s32 1, %s4
  %s7 = scalar_select 0, %s6, %s4
  loop: start=0, step=1, limit=4
  $region2: #{reconstruction3d_forward.8} parent=0 // loop_pre_header
    _
  $region3: #{reconstruction3d_forward.8} parent=0 // loop_header
    %s9 = sphi 0, %s13
    %p10 = scmp.ge.s32.totalorder %s9, 4
    %s19 = sphi 0, %s21
    %s22 = sphi 0, %s19
    %s23 = sphi 0, %s22
    %s39 = sphi 0, %s23
    %s43 = sphi 0, %s43
    %s45 = sphi 0, %s43
    %s46 = sphi 0, %s45
    %s60 = sphi 0, %s46
    %s64 = sphi 0, %s64
    %s66 = sphi 0, %s64
    %s67 = sphi 0, %s66
    %s81 = sphi 0, %s67
    %s87 = sphi 0, %s89
    %s90 = sphi 0, %s87
    %s91 = sphi 0, %s90
    %s107 = sphi 0, %s91
  $region4: #{reconstruction3d_forward.8} parent=0 // loop_header_branch
    %12 = sbr.rel (%p10) target = $region8
  $region5: #{reconstruction3d_forward.8} parent=0 // loop_body
    %s14 = ssub.s32 %s9, 1
    %s15 = ssub.s32 %s9, 2
    %s16 = sadd.s32 %s9, 1
    %s17 = ssub.s32 %s9, %s16
    %p18 = scmp.eq.s32.totalorder %s17, 0
    %s20 = sadd.s32 %s19, 1
    %s21 = scalar_select %p18, %s19, %s20
    %p24 = pneg %p18
    %p25 = scmp.eq.s32.totalorder %s9, 1
    %p26 = por %p24, %p25
    %p27 = scmp.ne.s32.totalorder %s19, %s22
    %p28 = scmp.eq.s32.totalorder %s9, 0
    %p29 = por %p27, %p28
    %p30 = scmp.ne.s32.totalorder %s19, %s22
    %p31 = scmp.eq.s32.totalorder %s14, 1
    %p32 = por %p30, %p31
    %p33 = scmp.ne.s32.totalorder %s22, %s23
    %p34 = scmp.eq.s32.totalorder %s14, 0
    %p35 = por %p33, %p34
    %p36 = scmp.ne.s32.totalorder %s22, %s23
    %p37 = scmp.eq.s32.totalorder %s15, 1
    %p38 = por %p36, %p37
    %p40 = scmp.ne.s32.totalorder %s23, %s39
    %p41 = scmp.eq.s32.totalorder %s15, 0
    %p42 = por %p40, %p41
    %s44 = sadd.s32 %s43, 1
    %p47 = scmp.eq.s32.totalorder %s9, 1
    %p48 = scmp.ne.s32.totalorder %s43, %s45
    %p49 = scmp.eq.s32.totalorder %s9, 0
    %p50 = por %p48, %p49
    %p51 = scmp.ne.s32.totalorder %s43, %s45
    %p52 = scmp.eq.s32.totalorder %s14, 1
    %p53 = por %p51, %p52
    %p54 = scmp.ne.s32.totalorder %s45, %s46
    %p55 = scmp.eq.s32.totalorder %s14, 0
    %p56 = por %p54, %p55
    %p57 = scmp.ne.s32.totalorder %s45, %s46
    %p58 = scmp.eq.s32.totalorder %s15, 1
    %p59 = por %p57, %p58
    %p61 = scmp.ne.s32.totalorder %s46, %s60
    %p62 = scmp.eq.s32.totalorder %s15, 0
    %p63 = por %p61, %p62
    %s65 = sadd.s32 %s64, 1
    %p68 = scmp.eq.s32.totalorder %s9, 1
    %p69 = scmp.ne.s32.totalorder %s64, %s66
    %p70 = scmp.eq.s32.totalorder %s9, 0
    %p71 = por %p69, %p70
    %p72 = scmp.ne.s32.totalorder %s64, %s66
    %p73 = scmp.eq.s32.totalorder %s14, 1
    %p74 = por %p72, %p73
    %p75 = scmp.ne.s32.totalorder %s66, %s67
    %p76 = scmp.eq.s32.totalorder %s14, 0
    %p77 = por %p75, %p76
    %p78 = scmp.ne.s32.totalorder %s66, %s67
    %p79 = scmp.eq.s32.totalorder %s15, 1
    %p80 = por %p78, %p79
    %p82 = scmp.ne.s32.totalorder %s67, %s81
    %p83 = scmp.eq.s32.totalorder %s15, 0
    %p84 = por %p82, %p83
    %s85 = ssub.s32 %s9, %s16
    %p86 = scmp.eq.s32.totalorder %s85, 0
    %s88 = sadd.s32 %s87, 1
    %s89 = scalar_select %p86, %s87, %s88
    %p92 = pneg %p86
    %p93 = scmp.eq.s32.totalorder %s9, 1
    %p94 = por %p92, %p93
    %p95 = scmp.ne.s32.totalorder %s87, %s90
    %p96 = scmp.eq.s32.totalorder %s9, 0
    %p97 = por %p95, %p96
    %p98 = scmp.ne.s32.totalorder %s87, %s90
    %p99 = scmp.eq.s32.totalorder %s14, 1
    %p100 = por %p98, %p99
    %p101 = scmp.ne.s32.totalorder %s90, %s91
    %p102 = scmp.eq.s32.totalorder %s14, 0
    %p103 = por %p101, %p102
    %p104 = scmp.ne.s32.totalorder %s90, %s91
    %p105 = scmp.eq.s32.totalorder %s15, 1
    %p106 = por %p104, %p105
    %p108 = scmp.ne.s32.totalorder %s91, %s107
    %p109 = scmp.eq.s32.totalorder %s15, 0
    %p110 = por %p108, %p109
    %p111 = scmp.le.s32.totalorder 1, %s9
    %p112 = scmp.lt.s32.totalorder %s9, 3
    %p113 = pnand %p111, %p112
    %p114 = pneg %p113
    // Predicated region
    $region9: #{reconstruction3d_forward.8} parent=5 // pred_check
      _
    $region10: #{reconstruction3d_forward.8} parent=5 // pred_check_branch
      %116 = sbr.rel (%p113) target = $region12
    $region11: #{reconstruction3d_forward.8} parent=5 // pred_region
      %s117 = ssub.s32 %s9, 1
      // Predicated region
      $region13: #{reconstruction3d_forward.8} parent=11 // pred_check
        %p118 = pneg %p56
      $region14: #{reconstruction3d_forward.8} parent=11 // pred_check_branch
        %120 = sbr.rel (%p118) target = $region16
      $region15: #{reconstruction3d_forward.8} parent=11 // pred_region
        _
      $region16: #{reconstruction3d_forward.8} parent=11 // pred_fallthru
        _
      // Predicated region
      $region17: #{reconstruction3d_forward.8} parent=11 // pred_check
        %p121 = pneg %p77
      $region18: #{reconstruction3d_forward.8} parent=11 // pred_check_branch
        %123 = sbr.rel (%p121) target = $region20
      $region19: #{reconstruction3d_forward.8} parent=11 // pred_region
        _
      $region20: #{reconstruction3d_forward.8} parent=11 // pred_fallthru
        _
    $region12: #{reconstruction3d_forward.8} parent=5 // pred_fallthru
      _
    %p124 = scmp.lt.s32.totalorder %s9, 2
    // Predicated region
    $region21: #{reconstruction3d_forward.8} parent=5 // pred_check
      %p125 = pneg %p124
    $region22: #{reconstruction3d_forward.8} parent=5 // pred_check_branch
      %127 = sbr.rel (%p125) target = $region24
    $region23: #{reconstruction3d_forward.8} parent=5 // pred_region
      // Predicated region
      $region25: #{reconstruction3d_forward.8} parent=23 // pred_check
        %p128 = pneg %p29
      $region26: #{reconstruction3d_forward.8} parent=23 // pred_check_branch
        %130 = sbr.rel (%p128) target = $region28
      $region27: #{reconstruction3d_forward.8} parent=23 // pred_region
        %s131 = smul.u32 32, %s9
        %p132 = scmp.lt.s32.totalorder %s131, 63
        %s133 = scalar_select %p132, %s131, 63
        %s134 = smul.addr %s133, 4
        %s135 = scalar_lea.vmem %s0, %s134
        %s136 = smul.u32 32, %s9
      $region28: #{reconstruction3d_forward.8} parent=23 // pred_fallthru
        _
    $region24: #{reconstruction3d_forward.8} parent=5 // pred_fallthru
      _
    %p137 = scmp.le.s32.totalorder 1, %s9
    %p138 = scmp.lt.s32.totalorder %s9, 3
    %p139 = pnand %p137, %p138
    %p140 = pneg %p139
    // Predicated region
    $region29: #{reconstruction3d_forward.8} parent=5 // pred_check
      _
    $region30: #{reconstruction3d_forward.8} parent=5 // pred_check_branch
      %142 = sbr.rel (%p139) target = $region32
    $region31: #{reconstruction3d_forward.8} parent=5 // pred_region
      %s143 = ssub.s32 %s9, 1
      %s144 = smul.u32 32, %s14
      %p145 = scmp.lt.s32.totalorder %s144, 63
      %s146 = scalar_select %p145, %s144, 63
      %s147 = smul.addr %s146, 4
      %s148 = scalar_lea.vmem %s0, %s147
      %p149 = pneg %p35
      %p150 = pneg %p32
      %p151 = pneg %p56
      %p152 = pneg %p53
      %p153 = pneg %p77
      %p154 = pneg %p74
      %p155 = pneg %p103
      %p156 = pneg %p100
      %s157 = smul.u32 32, %s14
      %p158 = scmp.lt.s32.totalorder %s157, 63
      %s159 = scalar_select %p158, %s157, 63
      %s160 = smul.addr %s159, 8
      %s161 = scalar_lea.vmem %s3, %s160
      %s162 = smul.u32 32, %s14
      %p163 = scmp.lt.s32.totalorder %s162, 63
      %s164 = scalar_select %p163, %s162, 63
      %s165 = smul.addr %s164, 4
      %s166 = scalar_lea.vmem %s0, %s165
      %s167 = smul.u32 32, %s14
      %s168 = smul.u32 32, %s14
      %p169 = scmp.lt.s32.totalorder %s168, 63
      %s170 = scalar_select %p169, %s168, 63
      %s171 = smul.addr %s170, 8
      %s172 = scalar_lea.vmem %s3, %s171
      %s173 = smul.u32 32, %s14
      %v175 = vld [vmem:[%s166] sm:$0xf]
      %v176 = vld [vmem:[%s166 + $0x4] sm:$0xf]
      %v177 = vld [vmem:[%s166 + $0x8] sm:$0xf]
      %v178 = vld [vmem:[%s166 + $0xc] sm:$0xf]
      %v179 = vld [vmem:[%s166 + $0x10] sm:$0xf]
      %v180 = vld [vmem:[%s166 + $0x14] sm:$0xf]
      %v181 = vld [vmem:[%s166 + $0x18] sm:$0xf]
      %v182 = vld [vmem:[%s166 + $0x1c] sm:$0xf]
      %v183 = vld [vmem:[%s166 + $0x20] sm:$0xf]
      %v184 = vld [vmem:[%s166 + $0x24] sm:$0xf]
      %v185 = vld [vmem:[%s166 + $0x28] sm:$0xf]
      %v186 = vld [vmem:[%s166 + $0x2c] sm:$0xf]
      %v187 = vld [vmem:[%s166 + $0x30] sm:$0xf]
      %v188 = vld [vmem:[%s166 + $0x34] sm:$0xf]
      %v189 = vld [vmem:[%s166 + $0x38] sm:$0xf]
      %v190 = vld [vmem:[%s166 + $0x3c] sm:$0xf]
      %v191 = vld [vmem:[%s166 + $0x40] sm:$0xf]
      %v192 = vld [vmem:[%s166 + $0x44] sm:$0xf]
      %v193 = vld [vmem:[%s166 + $0x48] sm:$0xf]
      %v194 = vld [vmem:[%s166 + $0x4c] sm:$0xf]
      %v195 = vld [vmem:[%s166 + $0x50] sm:$0xf]
      %v196 = vld [vmem:[%s166 + $0x54] sm:$0xf]
      %v197 = vld [vmem:[%s166 + $0x58] sm:$0xf]
      %v198 = vld [vmem:[%s166 + $0x5c] sm:$0xf]
      %v199 = vld [vmem:[%s166 + $0x60] sm:$0xf]
      %v200 = vld [vmem:[%s166 + $0x64] sm:$0xf]
      %v201 = vld [vmem:[%s166 + $0x68] sm:$0xf]
      %v202 = vld [vmem:[%s166 + $0x6c] sm:$0xf]
      %v203 = vld [vmem:[%s166 + $0x70] sm:$0xf]
      %v204 = vld [vmem:[%s166 + $0x74] sm:$0xf]
      %v205 = vld [vmem:[%s166 + $0x78] sm:$0xf]
      %v206 = vld [vmem:[%s166 + $0x7c] sm:$0xf]
      %v207 = vld [vmem:[%s1] sm:$0xf]
      %v208 = vld [vmem:[%s1 + $0x4] sm:$0xf]
      %v209 = vld [vmem:[%s1 + $0x8] sm:$0xf]
      %v210 = vld [vmem:[%s1 + $0xc] sm:$0x3]
      %v211 = vld [vmem:[%s2] sm:$0x1]
      %v213 = vperm.slane %v211, 0
      %v247 = vunpack.c.l.b16 %v175
      %v248 = vunpack.c.l.b16 %v176
      %v249 = vunpack.c.l.b16 %v177
      %v250 = vunpack.c.l.b16 %v178
      %v251 = vunpack.c.l.b16 %v179
      %v252 = vunpack.c.l.b16 %v180
      %v253 = vunpack.c.l.b16 %v181
      %v254 = vunpack.c.l.b16 %v182
      %v255 = vunpack.c.l.b16 %v183
      %v256 = vunpack.c.l.b16 %v184
      %v257 = vunpack.c.l.b16 %v185
      %v258 = vunpack.c.l.b16 %v186
      %v259 = vunpack.c.l.b16 %v187
      %v260 = vunpack.c.l.b16 %v188
      %v261 = vunpack.c.l.b16 %v189
      %v262 = vunpack.c.l.b16 %v190
      %v263 = vunpack.c.l.b16 %v191
      %v264 = vunpack.c.l.b16 %v192
      %v265 = vunpack.c.l.b16 %v193
      %v266 = vunpack.c.l.b16 %v194
      %v267 = vunpack.c.l.b16 %v195
      %v268 = vunpack.c.l.b16 %v196
      %v269 = vunpack.c.l.b16 %v197
      %v270 = vunpack.c.l.b16 %v198
      %v271 = vunpack.c.l.b16 %v199
      %v272 = vunpack.c.l.b16 %v200
      %v273 = vunpack.c.l.b16 %v201
      %v274 = vunpack.c.l.b16 %v202
      %v275 = vunpack.c.l.b16 %v203
      %v276 = vunpack.c.l.b16 %v204
      %v277 = vunpack.c.l.b16 %v205
      %v278 = vunpack.c.l.b16 %v206
      %v279 = vpack.c.b16 %v248, %v247
      %v280 = vpack.c.b16 %v250, %v249
      %v281 = vpack.c.b16 %v252, %v251
      %v282 = vpack.c.b16 %v254, %v253
      %v283 = vpack.c.b16 %v256, %v255
      %v284 = vpack.c.b16 %v258, %v257
      %v285 = vpack.c.b16 %v260, %v259
      %v286 = vpack.c.b16 %v262, %v261
      %v287 = vpack.c.b16 %v264, %v263
      %v288 = vpack.c.b16 %v266, %v265
      %v289 = vpack.c.b16 %v268, %v267
      %v290 = vpack.c.b16 %v270, %v269
      %v291 = vpack.c.b16 %v272, %v271
      %v292 = vpack.c.b16 %v274, %v273
      %v293 = vpack.c.b16 %v276, %v275
      %v294 = vpack.c.b16 %v278, %v277
      %v299 = vunpack.c.l.b16 %v207
      %v300 = vunpack.c.l.b16 %v208
      %v301 = vunpack.c.l.b16 %v209
      %v302 = vunpack.c.l.b16 %v210
      %v303 = vpack.c.b16 %v300, %v299
      %v304 = vpack.c.b16 %v302, %v301
      %vm306 = vcmask 220160
      %v308 = vsel %vm306, %v279, 0
      %v311 = vsel %vm306, %v280, 0
      %v314 = vsel %vm306, %v281, 0
      %v317 = vsel %vm306, %v282, 0
      %v320 = vsel %vm306, %v283, 0
      %v323 = vsel %vm306, %v284, 0
      %v326 = vsel %vm306, %v285, 0
      %v329 = vsel %vm306, %v286, 0
      %v332 = vsel %vm306, %v287, 0
      %v335 = vsel %vm306, %v288, 0
      %v338 = vsel %vm306, %v289, 0
      %v341 = vsel %vm306, %v290, 0
      %v344 = vsel %vm306, %v291, 0
      %v347 = vsel %vm306, %v292, 0
      %v350 = vsel %vm306, %v293, 0
      %v353 = vsel %vm306, %v294, 0
      %vm355 = vcmask 1044480
      %vm356 = vcmask 1045504
      %v357 = vsel %vm355, 4294967295, 65535
      %v358 = vsel %vm356, %v357, 0
      %v360 = vand.u32 %v304, %v358
      %362 = vmatpush.bf16.msra.mxu0 0
      %363 = vmatpush.bf16.msra.mxu0 0
      %364 = vmatpush.bf16.msra.mxu0 0
      %365 = vmatpush.bf16.msra.mxu0 0
      %366 = vmatpush.bf16.msra.mxu0 0
      %367 = vmatpush.bf16.msra.mxu0 0
      %368 = vmatpush.bf16.msra.mxu0 %v360
      %369 = vmatpush.bf16.msra.mxu0 %v303
      %370 = vmatmul.bf16.gmra.mxu0 %v308
      %v371 = vpop.f32.mrf.mxu0
      %v372 = vadd.f32 %v213, %v371
      %v373 = vpop.f32.mrf.mxu0
      %v374 = vadd.f32 %v213, %v373
      %375 = vmatmul.bf16.gmra.mxu0 %v311
      %v376 = vpop.f32.mrf.mxu0
      %v377 = vadd.f32 %v213, %v376
      %v378 = vpop.f32.mrf.mxu0
      %v379 = vadd.f32 %v213, %v378
      %380 = vmatmul.bf16.gmra.mxu0 %v314
      %v381 = vpop.f32.mrf.mxu0
      %v382 = vadd.f32 %v213, %v381
      %v383 = vpop.f32.mrf.mxu0
      %v384 = vadd.f32 %v213, %v383
      %385 = vmatmul.bf16.gmra.mxu0 %v317
      %v386 = vpop.f32.mrf.mxu0
      %v387 = vadd.f32 %v213, %v386
      %v388 = vpop.f32.mrf.mxu0
      %v389 = vadd.f32 %v213, %v388
      %390 = vmatmul.bf16.gmra.mxu0 %v320
      %v391 = vpop.f32.mrf.mxu0
      %v392 = vadd.f32 %v213, %v391
      %v393 = vpop.f32.mrf.mxu0
      %v394 = vadd.f32 %v213, %v393
      %395 = vmatmul.bf16.gmra.mxu0 %v323
      %v396 = vpop.f32.mrf.mxu0
      %v397 = vadd.f32 %v213, %v396
      %v398 = vpop.f32.mrf.mxu0
      %v399 = vadd.f32 %v213, %v398
      %400 = vmatmul.bf16.gmra.mxu0 %v326
      %v401 = vpop.f32.mrf.mxu0
      %v402 = vadd.f32 %v213, %v401
      %v403 = vpop.f32.mrf.mxu0
      %v404 = vadd.f32 %v213, %v403
      %405 = vmatmul.bf16.gmra.mxu0 %v329
      %v406 = vpop.f32.mrf.mxu0
      %v407 = vadd.f32 %v213, %v406
      %v408 = vpop.f32.mrf.mxu0
      %v409 = vadd.f32 %v213, %v408
      %410 = vmatmul.bf16.gmra.mxu0 %v332
      %v411 = vpop.f32.mrf.mxu0
      %v412 = vadd.f32 %v213, %v411
      %v413 = vpop.f32.mrf.mxu0
      %v414 = vadd.f32 %v213, %v413
      %415 = vmatmul.bf16.gmra.mxu0 %v335
      %v416 = vpop.f32.mrf.mxu0
      %v417 = vadd.f32 %v213, %v416
      %v418 = vpop.f32.mrf.mxu0
      %v419 = vadd.f32 %v213, %v418
      %420 = vmatmul.bf16.gmra.mxu0 %v338
      %v421 = vpop.f32.mrf.mxu0
      %v422 = vadd.f32 %v213, %v421
      %v423 = vpop.f32.mrf.mxu0
      %v424 = vadd.f32 %v213, %v423
      %425 = vmatmul.bf16.gmra.mxu0 %v341
      %v426 = vpop.f32.mrf.mxu0
      %v427 = vadd.f32 %v213, %v426
      %v428 = vpop.f32.mrf.mxu0
      %v429 = vadd.f32 %v213, %v428
      %430 = vmatmul.bf16.gmra.mxu0 %v344
      %v431 = vpop.f32.mrf.mxu0
      %v432 = vadd.f32 %v213, %v431
      %v433 = vpop.f32.mrf.mxu0
      %v434 = vadd.f32 %v213, %v433
      %435 = vmatmul.bf16.gmra.mxu0 %v347
      %v436 = vpop.f32.mrf.mxu0
      %v437 = vadd.f32 %v213, %v436
      %v438 = vpop.f32.mrf.mxu0
      %v439 = vadd.f32 %v213, %v438
      %440 = vmatmul.bf16.gmra.mxu0 %v350
      %v441 = vpop.f32.mrf.mxu0
      %v442 = vadd.f32 %v213, %v441
      %v443 = vpop.f32.mrf.mxu0
      %v444 = vadd.f32 %v213, %v443
      %445 = vmatmul.bf16.gmra.mxu0 %v353
      %v446 = vpop.f32.mrf.mxu0
      %v447 = vadd.f32 %v213, %v446
      %v448 = vpop.f32.mrf.mxu0
      %v449 = vadd.f32 %v213, %v448
      %450 = vdwg.mxu0
      %v451 = vmax.f32 %v372, 0.0
      %v452 = vmax.f32 %v374, 0.0
      %v453 = vmax.f32 %v377, 0.0
      %v454 = vmax.f32 %v379, 0.0
      %v455 = vmax.f32 %v382, 0.0
      %v456 = vmax.f32 %v384, 0.0
      %v457 = vmax.f32 %v387, 0.0
      %v458 = vmax.f32 %v389, 0.0
      %v459 = vmax.f32 %v392, 0.0
      %v460 = vmax.f32 %v394, 0.0
      %v461 = vmax.f32 %v397, 0.0
      %v462 = vmax.f32 %v399, 0.0
      %v463 = vmax.f32 %v402, 0.0
      %v464 = vmax.f32 %v404, 0.0
      %v465 = vmax.f32 %v407, 0.0
      %v466 = vmax.f32 %v409, 0.0
      %v467 = vmax.f32 %v412, 0.0
      %v468 = vmax.f32 %v414, 0.0
      %v469 = vmax.f32 %v417, 0.0
      %v470 = vmax.f32 %v419, 0.0
      %v471 = vmax.f32 %v422, 0.0
      %v472 = vmax.f32 %v424, 0.0
      %v473 = vmax.f32 %v427, 0.0
      %v474 = vmax.f32 %v429, 0.0
      %v475 = vmax.f32 %v432, 0.0
      %v476 = vmax.f32 %v434, 0.0
      %v477 = vmax.f32 %v437, 0.0
      %v478 = vmax.f32 %v439, 0.0
      %v479 = vmax.f32 %v442, 0.0
      %v480 = vmax.f32 %v444, 0.0
      %v481 = vmax.f32 %v447, 0.0
      %v482 = vmax.f32 %v449, 0.0
      %vm483 = vcmask 64512
      %484 = vst.msk [vmem:[%s172] sm:$0xff] %vm483, %v451
      %485 = vst.msk [vmem:[%s172 + $0x8] sm:$0xff] %vm483, %v452
      %486 = vst.msk [vmem:[%s172 + $0x10] sm:$0xff] %vm483, %v453
      %487 = vst.msk [vmem:[%s172 + $0x18] sm:$0xff] %vm483, %v454
      %488 = vst.msk [vmem:[%s172 + $0x20] sm:$0xff] %vm483, %v455
      %489 = vst.msk [vmem:[%s172 + $0x28] sm:$0xff] %vm483, %v456
      %490 = vst.msk [vmem:[%s172 + $0x30] sm:$0xff] %vm483, %v457
      %491 = vst.msk [vmem:[%s172 + $0x38] sm:$0xff] %vm483, %v458
      %492 = vst.msk [vmem:[%s172 + $0x40] sm:$0xff] %vm483, %v459
      %493 = vst.msk [vmem:[%s172 + $0x48] sm:$0xff] %vm483, %v460
      %494 = vst.msk [vmem:[%s172 + $0x50] sm:$0xff] %vm483, %v461
      %495 = vst.msk [vmem:[%s172 + $0x58] sm:$0xff] %vm483, %v462
      %496 = vst.msk [vmem:[%s172 + $0x60] sm:$0xff] %vm483, %v463
      %497 = vst.msk [vmem:[%s172 + $0x68] sm:$0xff] %vm483, %v464
      %498 = vst.msk [vmem:[%s172 + $0x70] sm:$0xff] %vm483, %v465
      %499 = vst.msk [vmem:[%s172 + $0x78] sm:$0xff] %vm483, %v466
      %500 = vst.msk [vmem:[%s172 + $0x80] sm:$0xff] %vm483, %v467
      %501 = vst.msk [vmem:[%s172 + $0x88] sm:$0xff] %vm483, %v468
      %502 = vst.msk [vmem:[%s172 + $0x90] sm:$0xff] %vm483, %v469
      %503 = vst.msk [vmem:[%s172 + $0x98] sm:$0xff] %vm483, %v470
      %504 = vst.msk [vmem:[%s172 + $0xa0] sm:$0xff] %vm483, %v471
      %505 = vst.msk [vmem:[%s172 + $0xa8] sm:$0xff] %vm483, %v472
      %506 = vst.msk [vmem:[%s172 + $0xb0] sm:$0xff] %vm483, %v473
      %507 = vst.msk [vmem:[%s172 + $0xb8] sm:$0xff] %vm483, %v474
      %508 = vst.msk [vmem:[%s172 + $0xc0] sm:$0xff] %vm483, %v475
      %509 = vst.msk [vmem:[%s172 + $0xc8] sm:$0xff] %vm483, %v476
      %510 = vst.msk [vmem:[%s172 + $0xd0] sm:$0xff] %vm483, %v477
      %511 = vst.msk [vmem:[%s172 + $0xd8] sm:$0xff] %vm483, %v478
      %512 = vst.msk [vmem:[%s172 + $0xe0] sm:$0xff] %vm483, %v479
      %513 = vst.msk [vmem:[%s172 + $0xe8] sm:$0xff] %vm483, %v480
      %514 = vst.msk [vmem:[%s172 + $0xf0] sm:$0xff] %vm483, %v481
      %515 = vst.msk [vmem:[%s172 + $0xf8] sm:$0xff] %vm483, %v482
      %s516 = smul.u32 32, %s14
      %p517 = scmp.lt.s32.totalorder %s516, 63
      %s518 = scalar_select %p517, %s516, 63
      %s519 = smul.addr %s518, 8
      %s520 = scalar_lea.vmem %s3, %s519
      // Predicated region
      $region33: #{reconstruction3d_forward.8} parent=31 // pred_check
        %p521 = pneg %p100
      $region34: #{reconstruction3d_forward.8} parent=31 // pred_check_branch
        %523 = sbr.rel (%p521) target = $region36
      $region35: #{reconstruction3d_forward.8} parent=31 // pred_region
        %s524 = smul.u32 32, %s14
      $region36: #{reconstruction3d_forward.8} parent=31 // pred_fallthru
        _
    $region32: #{reconstruction3d_forward.8} parent=5 // pred_fallthru
      _
    %p525 = scmp.le.s32.totalorder 2, %s9
    // Predicated region
    $region37: #{reconstruction3d_forward.8} parent=5 // pred_check
      %p526 = pneg %p525
    $region38: #{reconstruction3d_forward.8} parent=5 // pred_check_branch
      %528 = sbr.rel (%p526) target = $region40
    $region39: #{reconstruction3d_forward.8} parent=5 // pred_region
      %s529 = ssub.s32 %s9, 2
      // Predicated region
      $region41: #{reconstruction3d_forward.8} parent=39 // pred_check
        %p530 = pneg %p106
      $region42: #{reconstruction3d_forward.8} parent=39 // pred_check_branch
        %532 = sbr.rel (%p530) target = $region44
      $region43: #{reconstruction3d_forward.8} parent=39 // pred_region
        %s533 = smul.u32 32, %s15
        %p534 = scmp.lt.s32.totalorder %s533, 63
        %s535 = scalar_select %p534, %s533, 63
        %s536 = smul.addr %s535, 8
        %s537 = scalar_lea.vmem %s3, %s536
      $region44: #{reconstruction3d_forward.8} parent=39 // pred_fallthru
        _
    $region40: #{reconstruction3d_forward.8} parent=5 // pred_fallthru
      _
  $region6: #{reconstruction3d_forward.8} parent=0 // loop_footer
    %s13 = sadd.s32 1, %s9
  $region7: #{reconstruction3d_forward.8} parent=0 // loop_footer_branch
    %8 = sbr.rel target = $region3
  $region8: #{reconstruction3d_forward.8} parent=0 // loop_exit
    _

// kernel: reconstruction3d_forward.10
$region0: #{reconstruction3d_forward.10}
  #allocation0 [shape = 'u32[]', space=smem, size = 0x4, offset = 0x4, fixed_abs, tag = 'smem constant byte address 0x4 - core index']
  #allocation1 [shape = 'u32[72,128]{1,0:T(1,128)}', space=vmem, size = 0x9000, scoped, tag = 'internal scratch']
  %s0 = inlined_call_operand.vmem [shape: bf16[32,144], index: 0, kind: input, shape index: {}]
  %s1 = inlined_call_operand.vmem [shape: bf16[144,32], index: 1, kind: input, shape index: {}]
  %s2 = inlined_call_operand.vmem [shape: f32[1,32], index: 2, kind: input, shape index: {}]
  %s3 = inlined_call_operand.vmem [shape: f32[32,32], index: 3, kind: output, shape index: {}]
  %s4 = sld [smem:[#allocation0]]
  $region22: #{reconstruction3d_forward.10} parent=0
    _
  %s6 = ssub.s32 1, %s4
  %s7 = scalar_select 0, %s6, %s4
  // Predicated region
  $region2: #{reconstruction3d_forward.10} parent=0 // pred_check
    _
  $region3: #{reconstruction3d_forward.10} parent=0 // pred_check_branch
    %9 = sbr.rel (0) target = $region5
  $region4: #{reconstruction3d_forward.10} parent=0 // pred_region
    _
  $region5: #{reconstruction3d_forward.10} parent=0 // pred_fallthru
    _
  // Predicated region
  $region6: #{reconstruction3d_forward.10} parent=0 // pred_check
    _
  $region7: #{reconstruction3d_forward.10} parent=0 // pred_check_branch
    %11 = sbr.rel (0) target = $region9
  $region8: #{reconstruction3d_forward.10} parent=0 // pred_region
    _
  $region9: #{reconstruction3d_forward.10} parent=0 // pred_fallthru
    _
  // Predicated region
  $region10: #{reconstruction3d_forward.10} parent=0 // pred_check
    _
  $region11: #{reconstruction3d_forward.10} parent=0 // pred_check_branch
    %13 = sbr.rel (0) target = $region13
  $region12: #{reconstruction3d_forward.10} parent=0 // pred_region
    _
  $region13: #{reconstruction3d_forward.10} parent=0 // pred_fallthru
    _
  %v15 = vld [vmem:[%s0] sm:$0xff]
  %v16 = vld [vmem:[%s0 + $0x8] sm:$0xff]
  %v17 = vld [vmem:[%s0 + $0x10] sm:$0xff]
  %v18 = vld [vmem:[%s0 + $0x18] sm:$0xff]
  %v19 = vld [vmem:[%s1] sm:$0xf]
  %v20 = vld [vmem:[%s1 + $0x4] sm:$0xf]
  %v21 = vld [vmem:[%s1 + $0x8] sm:$0xf]
  %v22 = vld [vmem:[%s1 + $0xc] sm:$0xf]
  %v23 = vld [vmem:[%s1 + $0x10] sm:$0xf]
  %v24 = vld [vmem:[%s1 + $0x14] sm:$0xf]
  %v25 = vld [vmem:[%s1 + $0x18] sm:$0xf]
  %v26 = vld [vmem:[%s1 + $0x1c] sm:$0xf]
  %v27 = vld [vmem:[%s1 + $0x20] sm:$0xf]
  %v28 = vld [vmem:[%s1 + $0x24] sm:$0xf]
  %v29 = vld [vmem:[%s1 + $0x28] sm:$0xf]
  %v30 = vld [vmem:[%s1 + $0x2c] sm:$0xf]
  %v31 = vld [vmem:[%s1 + $0x30] sm:$0xf]
  %v32 = vld [vmem:[%s1 + $0x34] sm:$0xf]
  %v33 = vld [vmem:[%s1 + $0x38] sm:$0xf]
  %v34 = vld [vmem:[%s1 + $0x3c] sm:$0xf]
  %v35 = vld [vmem:[%s1 + $0x40] sm:$0xf]
  %v36 = vld [vmem:[%s1 + $0x44] sm:$0xf]
  %v37 = vld [vmem:[%s2] sm:$0x1]
  %v39 = vperm.slane %v37, 0
  %v45 = vunpack.c.l.b16 %v15
  %v46 = vunpack.c.h.b16 %v15
  %v47 = vunpack.c.l.b16 %v16
  %v48 = vunpack.c.h.b16 %v16
  %v49 = vunpack.c.l.b16 %v17
  %v50 = vunpack.c.h.b16 %v17
  %v51 = vunpack.c.l.b16 %v18
  %v52 = vunpack.c.h.b16 %v18
  %v53 = vpack.c.b16 %v47, %v45
  %v54 = vpack.c.b16 %v48, %v46
  %v55 = vpack.c.b16 %v51, %v49
  %v56 = vpack.c.b16 %v52, %v50
  %v77 = vunpack.c.l.b16 %v19
  %v78 = vunpack.c.l.b16 %v20
  %v79 = vunpack.c.l.b16 %v21
  %v80 = vunpack.c.l.b16 %v22
  %v81 = vunpack.c.l.b16 %v23
  %v82 = vunpack.c.l.b16 %v24
  %v83 = vunpack.c.l.b16 %v25
  %v84 = vunpack.c.l.b16 %v26
  %v85 = vunpack.c.l.b16 %v27
  %v86 = vunpack.c.l.b16 %v28
  %v87 = vunpack.c.l.b16 %v29
  %v88 = vunpack.c.l.b16 %v30
  %v89 = vunpack.c.l.b16 %v31
  %v90 = vunpack.c.l.b16 %v32
  %v91 = vunpack.c.l.b16 %v33
  %v92 = vunpack.c.l.b16 %v34
  %v93 = vunpack.c.l.b16 %v35
  %v94 = vunpack.c.l.b16 %v36
  %v95 = vpack.c.b16 %v78, %v77
  %v96 = vpack.c.b16 %v80, %v79
  %v97 = vpack.c.b16 %v82, %v81
  %v98 = vpack.c.b16 %v84, %v83
  %v99 = vpack.c.b16 %v86, %v85
  %v100 = vpack.c.b16 %v88, %v87
  %v101 = vpack.c.b16 %v90, %v89
  %v102 = vpack.c.b16 %v92, %v91
  %v103 = vpack.c.b16 %v94, %v93
  %vm113 = vcmask 130048
  %v115 = vsel %vm113, %v54, 0
  %v118 = vsel %vm113, %v56, 0
  %120 = vmatpush.bf16.msra.mxu0 %v102
  %121 = vmatpush.bf16.msra.mxu0 %v101
  %122 = vmatpush.bf16.msra.mxu0 %v100
  %123 = vmatpush.bf16.msra.mxu0 %v99
  %124 = vmatpush.bf16.msra.mxu0 %v98
  %125 = vmatpush.bf16.msra.mxu0 %v97
  %126 = vmatpush.bf16.msra.mxu0 %v96
  %127 = vmatpush.bf16.msra.mxu0 %v95
  %128 = vmatmul.bf16.gmra.mxu0 %v53
  %v129 = vpop.f32.mrf.mxu0
  %v130 = vadd.f32 %v39, %v129
  %v131 = vpop.f32.mrf.mxu0
  %v132 = vadd.f32 %v39, %v131
  %133 = vmatmul.bf16.gmra.mxu0 %v55
  %v134 = vpop.f32.mrf.mxu0
  %v135 = vadd.f32 %v39, %v134
  %v136 = vpop.f32.mrf.mxu0
  %v137 = vadd.f32 %v39, %v136
  %138 = vdwg.mxu0
  %139 = vmatpush.bf16.msra.mxu0 0
  %140 = vmatpush.bf16.msra.mxu0 0
  %141 = vmatpush.bf16.msra.mxu0 0
  %142 = vmatpush.bf16.msra.mxu0 0
  %143 = vmatpush.bf16.msra.mxu0 0
  %144 = vmatpush.bf16.msra.mxu0 0
  %145 = vmatpush.bf16.msra.mxu0 0
  %146 = vmatpush.bf16.msra.mxu0 %v103
  %147 = vmatmul.bf16.gmra.mxu0 %v115
  %v148 = vpop.f32.mrf.mxu0
  %v149 = vadd.f32 %v130, %v148
  %v150 = vpop.f32.mrf.mxu0
  %v151 = vadd.f32 %v132, %v150
  %152 = vmatmul.bf16.gmra.mxu0 %v118
  %v153 = vpop.f32.mrf.mxu0
  %v154 = vadd.f32 %v135, %v153
  %v155 = vpop.f32.mrf.mxu0
  %v156 = vadd.f32 %v137, %v155
  %157 = vdwg.mxu0
  %v158 = vmax.f32 %v149, 0.0
  %v159 = vmax.f32 %v151, 0.0
  %v160 = vmax.f32 %v154, 0.0
  %v161 = vmax.f32 %v156, 0.0
  %vm162 = vcmask 261120
  %163 = vst.msk [vmem:[%s3] sm:$0xff] %vm162, %v158
  %164 = vst.msk [vmem:[%s3 + $0x8] sm:$0xff] %vm162, %v159
  %165 = vst.msk [vmem:[%s3 + $0x10] sm:$0xff] %vm162, %v160
  %166 = vst.msk [vmem:[%s3 + $0x18] sm:$0xff] %vm162, %v161
  // Predicated region
  $region14: #{reconstruction3d_forward.10} parent=0 // pred_check
    _
  $region15: #{reconstruction3d_forward.10} parent=0 // pred_check_branch
    %168 = sbr.rel (0) target = $region17
  $region16: #{reconstruction3d_forward.10} parent=0 // pred_region
    _
  $region17: #{reconstruction3d_forward.10} parent=0 // pred_fallthru
    _
  // Predicated region
  $region18: #{reconstruction3d_forward.10} parent=0 // pred_check
    _
  $region19: #{reconstruction3d_forward.10} parent=0 // pred_check_branch
    %170 = sbr.rel (0) target = $region21
  $region20: #{reconstruction3d_forward.10} parent=0 // pred_region
    _
  $region21: #{reconstruction3d_forward.10} parent=0 // pred_fallthru
    _

// kernel: reconstruction3d_forward.11
$region0: #{reconstruction3d_forward.11}
  #allocation0 [shape = 'u32[]', space=smem, size = 0x4, offset = 0x4, fixed_abs, tag = 'smem constant byte address 0x4 - core index']
  #allocation1 [shape = 'u32[72,128]{1,0:T(1,128)}', space=vmem, size = 0x9000, scoped, tag = 'internal scratch']
  %s0 = inlined_call_operand.vmem [shape: bf16[8,288], index: 0, kind: input, shape index: {}]
  %s1 = inlined_call_operand.vmem [shape: bf16[288,64], index: 1, kind: input, shape index: {}]
  %s2 = inlined_call_operand.vmem [shape: f32[1,64], index: 2, kind: input, shape index: {}]
  %s3 = inlined_call_operand.vmem [shape: f32[8,64], index: 3, kind: output, shape index: {}]
  %s4 = sld [smem:[#allocation0]]
  $region22: #{reconstruction3d_forward.11} parent=0
    _
  %s6 = ssub.s32 1, %s4
  %s7 = scalar_select 0, %s6, %s4
  // Predicated region
  $region2: #{reconstruction3d_forward.11} parent=0 // pred_check
    _
  $region3: #{reconstruction3d_forward.11} parent=0 // pred_check_branch
    %9 = sbr.rel (0) target = $region5
  $region4: #{reconstruction3d_forward.11} parent=0 // pred_region
    _
  $region5: #{reconstruction3d_forward.11} parent=0 // pred_fallthru
    _
  // Predicated region
  $region6: #{reconstruction3d_forward.11} parent=0 // pred_check
    _
  $region7: #{reconstruction3d_forward.11} parent=0 // pred_check_branch
    %11 = sbr.rel (0) target = $region9
  $region8: #{reconstruction3d_forward.11} parent=0 // pred_region
    _
  $region9: #{reconstruction3d_forward.11} parent=0 // pred_fallthru
    _
  // Predicated region
  $region10: #{reconstruction3d_forward.11} parent=0 // pred_check
    _
  $region11: #{reconstruction3d_forward.11} parent=0 // pred_check_branch
    %13 = sbr.rel (0) target = $region13
  $region12: #{reconstruction3d_forward.11} parent=0 // pred_region
    _
  $region13: #{reconstruction3d_forward.11} parent=0 // pred_fallthru
    _
  %v15 = vld [vmem:[%s0] sm:$0xff]
  %v16 = vld [vmem:[%s0 + $0x8] sm:$0xf]
  %v17 = vld [vmem:[%s1] sm:$0xf]
  %v18 = vld [vmem:[%s1 + $0x4] sm:$0xf]
  %v19 = vld [vmem:[%s1 + $0x8] sm:$0xf]
  %v20 = vld [vmem:[%s1 + $0xc] sm:$0xf]
  %v21 = vld [vmem:[%s1 + $0x10] sm:$0xf]
  %v22 = vld [vmem:[%s1 + $0x14] sm:$0xf]
  %v23 = vld [vmem:[%s1 + $0x18] sm:$0xf]
  %v24 = vld [vmem:[%s1 + $0x1c] sm:$0xf]
  %v25 = vld [vmem:[%s1 + $0x20] sm:$0xf]
  %v26 = vld [vmem:[%s1 + $0x24] sm:$0xf]
  %v27 = vld [vmem:[%s1 + $0x28] sm:$0xf]
  %v28 = vld [vmem:[%s1 + $0x2c] sm:$0xf]
  %v29 = vld [vmem:[%s1 + $0x30] sm:$0xf]
  %v30 = vld [vmem:[%s1 + $0x34] sm:$0xf]
  %v31 = vld [vmem:[%s1 + $0x38] sm:$0xf]
  %v32 = vld [vmem:[%s1 + $0x3c] sm:$0xf]
  %v33 = vld [vmem:[%s1 + $0x40] sm:$0xf]
  %v34 = vld [vmem:[%s1 + $0x44] sm:$0xf]
  %v35 = vld [vmem:[%s1 + $0x48] sm:$0xf]
  %v36 = vld [vmem:[%s1 + $0x4c] sm:$0xf]
  %v37 = vld [vmem:[%s1 + $0x50] sm:$0xf]
  %v38 = vld [vmem:[%s1 + $0x54] sm:$0xf]
  %v39 = vld [vmem:[%s1 + $0x58] sm:$0xf]
  %v40 = vld [vmem:[%s1 + $0x5c] sm:$0xf]
  %v41 = vld [vmem:[%s1 + $0x60] sm:$0xf]
  %v42 = vld [vmem:[%s1 + $0x64] sm:$0xf]
  %v43 = vld [vmem:[%s1 + $0x68] sm:$0xf]
  %v44 = vld [vmem:[%s1 + $0x6c] sm:$0xf]
  %v45 = vld [vmem:[%s1 + $0x70] sm:$0xf]
  %v46 = vld [vmem:[%s1 + $0x74] sm:$0xf]
  %v47 = vld [vmem:[%s1 + $0x78] sm:$0xf]
  %v48 = vld [vmem:[%s1 + $0x7c] sm:$0xf]
  %v49 = vld [vmem:[%s1 + $0x80] sm:$0xf]
  %v50 = vld [vmem:[%s1 + $0x84] sm:$0xf]
  %v51 = vld [vmem:[%s1 + $0x88] sm:$0xf]
  %v52 = vld [vmem:[%s1 + $0x8c] sm:$0xf]
  %v53 = vld [vmem:[%s2] sm:$0x1]
  %v55 = vperm.slane %v53, 0
  %v59 = vunpack.c.l.b16 %v15
  %v60 = vunpack.c.h.b16 %v15
  %v61 = vunpack.c.l.b16 %v16
  %v62 = vpack.c.b16 %v59, %v59
  %v63 = vpack.c.b16 %v60, %v60
  %v64 = vpack.c.b16 %v61, %v61
  %v103 = vunpack.c.l.b16 %v17
  %v104 = vunpack.c.l.b16 %v18
  %v105 = vunpack.c.l.b16 %v19
  %v106 = vunpack.c.l.b16 %v20
  %v107 = vunpack.c.l.b16 %v21
  %v108 = vunpack.c.l.b16 %v22
  %v109 = vunpack.c.l.b16 %v23
  %v110 = vunpack.c.l.b16 %v24
  %v111 = vunpack.c.l.b16 %v25
  %v112 = vunpack.c.l.b16 %v26
  %v113 = vunpack.c.l.b16 %v27
  %v114 = vunpack.c.l.b16 %v28
  %v115 = vunpack.c.l.b16 %v29
  %v116 = vunpack.c.l.b16 %v30
  %v117 = vunpack.c.l.b16 %v31
  %v118 = vunpack.c.l.b16 %v32
  %v119 = vunpack.c.l.b16 %v33
  %v120 = vunpack.c.l.b16 %v34
  %v121 = vunpack.c.l.b16 %v35
  %v122 = vunpack.c.l.b16 %v36
  %v123 = vunpack.c.l.b16 %v37
  %v124 = vunpack.c.l.b16 %v38
  %v125 = vunpack.c.l.b16 %v39
  %v126 = vunpack.c.l.b16 %v40
  %v127 = vunpack.c.l.b16 %v41
  %v128 = vunpack.c.l.b16 %v42
  %v129 = vunpack.c.l.b16 %v43
  %v130 = vunpack.c.l.b16 %v44
  %v131 = vunpack.c.l.b16 %v45
  %v132 = vunpack.c.l.b16 %v46
  %v133 = vunpack.c.l.b16 %v47
  %v134 = vunpack.c.l.b16 %v48
  %v135 = vunpack.c.l.b16 %v49
  %v136 = vunpack.c.l.b16 %v50
  %v137 = vunpack.c.l.b16 %v51
  %v138 = vunpack.c.l.b16 %v52
  %v139 = vpack.c.b16 %v104, %v103
  %v140 = vpack.c.b16 %v106, %v105
  %v141 = vpack.c.b16 %v108, %v107
  %v142 = vpack.c.b16 %v110, %v109
  %v143 = vpack.c.b16 %v112, %v111
  %v144 = vpack.c.b16 %v114, %v113
  %v145 = vpack.c.b16 %v116, %v115
  %v146 = vpack.c.b16 %v118, %v117
  %v147 = vpack.c.b16 %v120, %v119
  %v148 = vpack.c.b16 %v122, %v121
  %v149 = vpack.c.b16 %v124, %v123
  %v150 = vpack.c.b16 %v126, %v125
  %v151 = vpack.c.b16 %v128, %v127
  %v152 = vpack.c.b16 %v130, %v129
  %v153 = vpack.c.b16 %v132, %v131
  %v154 = vpack.c.b16 %v134, %v133
  %v155 = vpack.c.b16 %v136, %v135
  %v156 = vpack.c.b16 %v138, %v137
  %vm175 = vcmask 261120
  %v177 = vsel %vm175, %v64, 0
  %179 = vmatpush.bf16.msra.mxu0 %v146
  %180 = vmatpush.bf16.msra.mxu0 %v145
  %181 = vmatpush.bf16.msra.mxu0 %v144
  %182 = vmatpush.bf16.msra.mxu0 %v143
  %183 = vmatpush.bf16.msra.mxu0 %v142
  %184 = vmatpush.bf16.msra.mxu0 %v141
  %185 = vmatpush.bf16.msra.mxu0 %v140
  %186 = vmatpush.bf16.msra.mxu0 %v139
  %187 = vmatmul.bf16.gmra.mxu0 %v62
  %v188 = vpop.f32.mrf.mxu0
  %v189 = vadd.f32 %v55, %v188
  %v190 = vpop.f32.mrf.mxu0
  %191 = vdwg.mxu0
  %192 = vmatpush.bf16.msra.mxu0 %v154
  %193 = vmatpush.bf16.msra.mxu0 %v153
  %194 = vmatpush.bf16.msra.mxu0 %v152
  %195 = vmatpush.bf16.msra.mxu0 %v151
  %196 = vmatpush.bf16.msra.mxu0 %v150
  %197 = vmatpush.bf16.msra.mxu0 %v149
  %198 = vmatpush.bf16.msra.mxu0 %v148
  %199 = vmatpush.bf16.msra.mxu0 %v147
  %200 = vmatmul.bf16.gmra.mxu0 %v63
  %v201 = vpop.f32.mrf.mxu0
  %v202 = vadd.f32 %v189, %v201
  %v203 = vpop.f32.mrf.mxu0
  %204 = vdwg.mxu0
  %205 = vmatpush.bf16.msra.mxu0 0
  %206 = vmatpush.bf16.msra.mxu0 0
  %207 = vmatpush.bf16.msra.mxu0 0
  %208 = vmatpush.bf16.msra.mxu0 0
  %209 = vmatpush.bf16.msra.mxu0 0
  %210 = vmatpush.bf16.msra.mxu0 0
  %211 = vmatpush.bf16.msra.mxu0 %v156
  %212 = vmatpush.bf16.msra.mxu0 %v155
  %213 = vmatmul.bf16.gmra.mxu0 %v177
  %v214 = vpop.f32.mrf.mxu0
  %v215 = vadd.f32 %v202, %v214
  %v216 = vpop.f32.mrf.mxu0
  %217 = vdwg.mxu0
  %v218 = vmax.f32 %v215, 0.0
  %vm219 = vcmask 523264
  %220 = vst.msk [vmem:[%s3] sm:$0xff] %vm219, %v218
  // Predicated region
  $region14: #{reconstruction3d_forward.11} parent=0 // pred_check
    _
  $region15: #{reconstruction3d_forward.11} parent=0 // pred_check_branch
    %222 = sbr.rel (0) target = $region17
  $region16: #{reconstruction3d_forward.11} parent=0 // pred_region
    _
  $region17: #{reconstruction3d_forward.11} parent=0 // pred_fallthru
    _
  // Predicated region
  $region18: #{reconstruction3d_forward.11} parent=0 // pred_check
    _
  $region19: #{reconstruction3d_forward.11} parent=0 // pred_check_branch
    %224 = sbr.rel (0) target = $region21
  $region20: #{reconstruction3d_forward.11} parent=0 // pred_region
    _
  $region21: #{reconstruction3d_forward.11} parent=0 // pred_fallthru
    _

// kernel: reconstruction3d_forward.12
$region0: #{reconstruction3d_forward.12}
  #allocation0 [shape = 'u32[]', space=smem, size = 0x4, offset = 0x4, fixed_abs, tag = 'smem constant byte address 0x4 - core index']
  #allocation1 [shape = 'u32[72,128]{1,0:T(1,128)}', space=vmem, size = 0x9000, scoped, tag = 'internal scratch']
  %s0 = inlined_call_operand.vmem [shape: f32[20,123], index: 0, kind: input, shape index: {}]
  %s1 = inlined_call_operand.vmem [shape: bf16[20,20], index: 1, kind: input, shape index: {}]
  %s2 = inlined_call_operand.vmem [shape: bf16[246,32], index: 2, kind: input, shape index: {}]
  %s3 = inlined_call_operand.vmem [shape: f32[1,32], index: 3, kind: input, shape index: {}]
  %s4 = inlined_call_operand.vmem [shape: bf16[12,64,32], index: 4, kind: input, shape index: {}]
  %s5 = inlined_call_operand.vmem [shape: f32[12,1,32], index: 5, kind: input, shape index: {}]
  %s6 = inlined_call_operand.vmem [shape: bf16[64,3], index: 6, kind: input, shape index: {}]
  %s7 = inlined_call_operand.vmem [shape: f32[1,3], index: 7, kind: input, shape index: {}]
  %s8 = inlined_call_operand.vmem [shape: f32[20,3], index: 8, kind: output, shape index: {0}]
  %s9 = inlined_call_operand.vmem [shape: f32[20,32], index: 9, kind: output, shape index: {1}]
  %10 = xla_tuple %s8, %s9
  %s11 = sld [smem:[#allocation0]]
  $region50: #{reconstruction3d_forward.12} parent=0
    _
  %s13 = ssub.s32 1, %s11
  %s14 = scalar_select 0, %s13, %s11
  // Predicated region
  $region2: #{reconstruction3d_forward.12} parent=0 // pred_check
    _
  $region3: #{reconstruction3d_forward.12} parent=0 // pred_check_branch
    %16 = sbr.rel (0) target = $region5
  $region4: #{reconstruction3d_forward.12} parent=0 // pred_region
    _
  $region5: #{reconstruction3d_forward.12} parent=0 // pred_fallthru
    _
  // Predicated region
  $region6: #{reconstruction3d_forward.12} parent=0 // pred_check
    _
  $region7: #{reconstruction3d_forward.12} parent=0 // pred_check_branch
    %18 = sbr.rel (0) target = $region9
  $region8: #{reconstruction3d_forward.12} parent=0 // pred_region
    _
  $region9: #{reconstruction3d_forward.12} parent=0 // pred_fallthru
    _
  // Predicated region
  $region10: #{reconstruction3d_forward.12} parent=0 // pred_check
    _
  $region11: #{reconstruction3d_forward.12} parent=0 // pred_check_branch
    %20 = sbr.rel (0) target = $region13
  $region12: #{reconstruction3d_forward.12} parent=0 // pred_region
    _
  $region13: #{reconstruction3d_forward.12} parent=0 // pred_fallthru
    _
  // Predicated region
  $region14: #{reconstruction3d_forward.12} parent=0 // pred_check
    _
  $region15: #{reconstruction3d_forward.12} parent=0 // pred_check_branch
    %22 = sbr.rel (0) target = $region17
  $region16: #{reconstruction3d_forward.12} parent=0 // pred_region
    _
  $region17: #{reconstruction3d_forward.12} parent=0 // pred_fallthru
    _
  // Predicated region
  $region18: #{reconstruction3d_forward.12} parent=0 // pred_check
    _
  $region19: #{reconstruction3d_forward.12} parent=0 // pred_check_branch
    %24 = sbr.rel (0) target = $region21
  $region20: #{reconstruction3d_forward.12} parent=0 // pred_region
    _
  $region21: #{reconstruction3d_forward.12} parent=0 // pred_fallthru
    _
  // Predicated region
  $region22: #{reconstruction3d_forward.12} parent=0 // pred_check
    _
  $region23: #{reconstruction3d_forward.12} parent=0 // pred_check_branch
    %26 = sbr.rel (0) target = $region25
  $region24: #{reconstruction3d_forward.12} parent=0 // pred_region
    _
  $region25: #{reconstruction3d_forward.12} parent=0 // pred_fallthru
    _
  // Predicated region
  $region26: #{reconstruction3d_forward.12} parent=0 // pred_check
    _
  $region27: #{reconstruction3d_forward.12} parent=0 // pred_check_branch
    %28 = sbr.rel (0) target = $region29
  $region28: #{reconstruction3d_forward.12} parent=0 // pred_region
    _
  $region29: #{reconstruction3d_forward.12} parent=0 // pred_fallthru
    _
  // Predicated region
  $region30: #{reconstruction3d_forward.12} parent=0 // pred_check
    _
  $region31: #{reconstruction3d_forward.12} parent=0 // pred_check_branch
    %30 = sbr.rel (0) target = $region33
  $region32: #{reconstruction3d_forward.12} parent=0 // pred_region
    _
  $region33: #{reconstruction3d_forward.12} parent=0 // pred_fallthru
    _
  %v32 = vld [vmem:[%s1] sm:$0xf]
  %v33 = vld [vmem:[%s1 + $0x4] sm:$0xf]
  %v34 = vld [vmem:[%s1 + $0x8] sm:$0x3]
  %v35 = vld [vmem:[%s0] sm:$0xff]
  %v36 = vld [vmem:[%s0 + $0x8] sm:$0xff]
  %v37 = vld [vmem:[%s0 + $0x10] sm:$0xf]
  %v38 = vld [vmem:[%s2] sm:$0xf]
  %v39 = vld [vmem:[%s2 + $0x4] sm:$0xf]
  %v40 = vld [vmem:[%s2 + $0x8] sm:$0xf]
  %v41 = vld [vmem:[%s2 + $0xc] sm:$0xf]
  %v42 = vld [vmem:[%s2 + $0x10] sm:$0xf]
  %v43 = vld [vmem:[%s2 + $0x14] sm:$0xf]
  %v44 = vld [vmem:[%s2 + $0x18] sm:$0xf]
  %v45 = vld [vmem:[%s2 + $0x1c] sm:$0xf]
  %v46 = vld [vmem:[%s2 + $0x20] sm:$0xf]
  %v47 = vld [vmem:[%s2 + $0x24] sm:$0xf]
  %v48 = vld [vmem:[%s2 + $0x28] sm:$0xf]
  %v49 = vld [vmem:[%s2 + $0x2c] sm:$0xf]
  %v50 = vld [vmem:[%s2 + $0x30] sm:$0xf]
  %v51 = vld [vmem:[%s2 + $0x34] sm:$0xf]
  %v52 = vld [vmem:[%s2 + $0x38] sm:$0xf]
  %v53 = vld [vmem:[%s2 + $0x3c] sm:$0xf]
  %v54 = vld [vmem:[%s2 + $0x40] sm:$0xf]
  %v55 = vld [vmem:[%s2 + $0x44] sm:$0xf]
  %v56 = vld [vmem:[%s2 + $0x48] sm:$0xf]
  %v57 = vld [vmem:[%s2 + $0x4c] sm:$0xf]
  %v58 = vld [vmem:[%s2 + $0x50] sm:$0xf]
  %v59 = vld [vmem:[%s2 + $0x54] sm:$0xf]
  %v60 = vld [vmem:[%s2 + $0x58] sm:$0xf]
  %v61 = vld [vmem:[%s2 + $0x5c] sm:$0xf]
  %v62 = vld [vmem:[%s2 + $0x60] sm:$0xf]
  %v63 = vld [vmem:[%s2 + $0x64] sm:$0xf]
  %v64 = vld [vmem:[%s2 + $0x68] sm:$0xf]
  %v65 = vld [vmem:[%s2 + $0x6c] sm:$0xf]
  %v66 = vld [vmem:[%s2 + $0x70] sm:$0xf]
  %v67 = vld [vmem:[%s2 + $0x74] sm:$0xf]
  %v68 = vld [vmem:[%s2 + $0x78] sm:$0x7]
  %v69 = vld [vmem:[%s3] sm:$0x1]
  %v70 = vpack.c.bf16 %v36, %v35
  %v71 = vpack.c.bf16 %v37, %v37
  %v75 = vunpack.c.l.b16 %v32
  %v76 = vunpack.c.l.b16 %v33
  %v77 = vunpack.c.l.b16 %v34
  %v78 = vpack.c.b16 %v76, %v75
  %v79 = vpack.c.b16 %v77, %v77
  %vm80 = vcmask 162816
  %v82 = vsel %vm80, %v78, 0
  %v85 = vsel %vm80, %v79, 0
  %vm87 = vcmask 1041408
  %v89 = vsel %vm87, %v71, 0
  %91 = vmatpush.bf16.msra.mxu0 0
  %92 = vmatpush.bf16.msra.mxu0 0
  %93 = vmatpush.bf16.msra.mxu0 0
  %94 = vmatpush.bf16.msra.mxu0 0
  %95 = vmatpush.bf16.msra.mxu0 0
  %96 = vmatpush.bf16.msra.mxu0 0
  %97 = vmatpush.bf16.msra.mxu0 %v89
  %98 = vmatpush.bf16.msra.mxu0 %v70
  %99 = vmatmul.bf16.gmra.mxu0 %v82
  %v100 = vpop.f32.mrf.mxu0
  %v101 = vadd.f32 0.0, %v100
  %v102 = vpop.f32.mrf.mxu0
  %v103 = vadd.f32 0.0, %v102
  %104 = vmatmul.bf16.gmra.mxu0 %v85
  %v105 = vpop.f32.mrf.mxu0
  %v106 = vadd.f32 0.0, %v105
  %v107 = vpop.f32.mrf.mxu0
  %108 = vdwg.mxu0
  %112 = vrot.lane.b32.xlu0 %v35, 123
  %v113 = vpop.permute.xlu0 %112
  %114 = vrot.lane.b32.xlu0 %v36, 123
  %v115 = vpop.permute.xlu0 %114
  %116 = vrot.lane.b32.xlu0 %v37, 123
  %v117 = vpop.permute.xlu0 %116
  %vm121 = vcmask 1006592
  %v122 = vsel %vm121, %v101, %v113
  %v123 = vsel %vm121, %v103, %v115
  %v124 = vsel %vm121, %v106, %v117
  %v125 = vpack.c.bf16 %v123, %v122
  %v126 = vpack.c.bf16 %v115, %v113
  %v127 = vpack.c.bf16 %v124, %v124
  %v128 = vpack.c.bf16 %v117, %v117
  %v130 = vperm.slane %v69, 0
  %v163 = vunpack.c.l.b16 %v38
  %v164 = vunpack.c.l.b16 %v39
  %v165 = vunpack.c.l.b16 %v40
  %v166 = vunpack.c.l.b16 %v41
  %v167 = vunpack.c.l.b16 %v42
  %v168 = vunpack.c.l.b16 %v43
  %v169 = vunpack.c.l.b16 %v44
  %v170 = vunpack.c.l.b16 %v45
  %v171 = vunpack.c.l.b16 %v46
  %v172 = vunpack.c.l.b16 %v47
  %v173 = vunpack.c.l.b16 %v48
  %v174 = vunpack.c.l.b16 %v49
  %v175 = vunpack.c.l.b16 %v50
  %v176 = vunpack.c.l.b16 %v51
  %v177 = vunpack.c.l.b16 %v52
  %v178 = vunpack.c.l.b16 %v53
  %v179 = vunpack.c.l.b16 %v54
  %v180 = vunpack.c.l.b16 %v55
  %v181 = vunpack.c.l.b16 %v56
  %v182 = vunpack.c.l.b16 %v57
  %v183 = vunpack.c.l.b16 %v58
  %v184 = vunpack.c.l.b16 %v59
  %v185 = vunpack.c.l.b16 %v60
  %v186 = vunpack.c.l.b16 %v61
  %v187 = vunpack.c.l.b16 %v62
  %v188 = vunpack.c.l.b16 %v63
  %v189 = vunpack.c.l.b16 %v64
  %v190 = vunpack.c.l.b16 %v65
  %v191 = vunpack.c.l.b16 %v66
  %v192 = vunpack.c.l.b16 %v67
  %v193 = vunpack.c.l.b16 %v68
  %v194 = vpack.c.b16 %v164, %v163
  %v195 = vpack.c.b16 %v166, %v165
  %v196 = vpack.c.b16 %v168, %v167
  %v197 = vpack.c.b16 %v170, %v169
  %v198 = vpack.c.b16 %v172, %v171
  %v199 = vpack.c.b16 %v174, %v173
  %v200 = vpack.c.b16 %v176, %v175
  %v201 = vpack.c.b16 %v178, %v177
  %v202 = vpack.c.b16 %v180, %v179
  %v203 = vpack.c.b16 %v182, %v181
  %v204 = vpack.c.b16 %v184, %v183
  %v205 = vpack.c.b16 %v186, %v185
  %v206 = vpack.c.b16 %v188, %v187
  %v207 = vpack.c.b16 %v190, %v189
  %v208 = vpack.c.b16 %v192, %v191
  %v209 = vpack.c.b16 %v193, %v193
  %vm225 = vcmask 965632
  %v227 = vsel %vm225, %v126, 0
  %v230 = vsel %vm225, %v128, 0
  %vm232 = vcmask 1042432
  %v234 = vsel %vm232, %v209, 0
  %236 = vmatpush.bf16.msra.mxu0 %v201
  %237 = vmatpush.bf16.msra.mxu0 %v200
  %238 = vmatpush.bf16.msra.mxu0 %v199
  %239 = vmatpush.bf16.msra.mxu0 %v198
  %240 = vmatpush.bf16.msra.mxu0 %v197
  %241 = vmatpush.bf16.msra.mxu0 %v196
  %242 = vmatpush.bf16.msra.mxu0 %v195
  %243 = vmatpush.bf16.msra.mxu0 %v194
  %244 = vmatmul.bf16.gmra.mxu0 %v125
  %v245 = vpop.f32.mrf.mxu0
  %v246 = vadd.f32 %v130, %v245
  %v247 = vpop.f32.mrf.mxu0
  %v248 = vadd.f32 %v130, %v247
  %249 = vmatmul.bf16.gmra.mxu0 %v127
  %v250 = vpop.f32.mrf.mxu0
  %v251 = vadd.f32 %v130, %v250
  %v252 = vpop.f32.mrf.mxu0
  %253 = vdwg.mxu0
  %254 = vmatpush.bf16.msra.mxu0 %v234
  %255 = vmatpush.bf16.msra.mxu0 %v208
  %256 = vmatpush.bf16.msra.mxu0 %v207
  %257 = vmatpush.bf16.msra.mxu0 %v206
  %258 = vmatpush.bf16.msra.mxu0 %v205
  %259 = vmatpush.bf16.msra.mxu0 %v204
  %260 = vmatpush.bf16.msra.mxu0 %v203
  %261 = vmatpush.bf16.msra.mxu0 %v202
  %262 = vmatmul.bf16.gmra.mxu0 %v227
  %v263 = vpop.f32.mrf.mxu0
  %v264 = vadd.f32 %v246, %v263
  %v265 = vpop.f32.mrf.mxu0
  %v266 = vadd.f32 %v248, %v265
  %267 = vmatmul.bf16.gmra.mxu0 %v230
  %v268 = vpop.f32.mrf.mxu0
  %v269 = vadd.f32 %v251, %v268
  %v270 = vpop.f32.mrf.mxu0
  %271 = vdwg.mxu0
  %v272 = vmax.f32 %v264, 0.0
  %v273 = vmax.f32 %v266, 0.0
  %v274 = vmax.f32 %v269, 0.0
  %v275 = vld [vmem:[%s4] sm:$0xf]
  %v276 = vld [vmem:[%s4 + $0x4] sm:$0xf]
  %v277 = vld [vmem:[%s4 + $0x8] sm:$0xf]
  %v278 = vld [vmem:[%s4 + $0xc] sm:$0xf]
  %v279 = vld [vmem:[%s4 + $0x10] sm:$0xf]
  %v280 = vld [vmem:[%s4 + $0x14] sm:$0xf]
  %v281 = vld [vmem:[%s4 + $0x18] sm:$0xf]
  %v282 = vld [vmem:[%s4 + $0x1c] sm:$0xf]
  %v283 = vld [vmem:[%s5] sm:$0x1]
  %v284 = vpack.c.bf16 %v273, %v272
  %v285 = vpack.c.bf16 %v274, %v274
  %v287 = vsel %vm87, %v285, 0
  %289 = vmatpush.bf16.msra.mxu0 0
  %290 = vmatpush.bf16.msra.mxu0 0
  %291 = vmatpush.bf16.msra.mxu0 0
  %292 = vmatpush.bf16.msra.mxu0 0
  %293 = vmatpush.bf16.msra.mxu0 0
  %294 = vmatpush.bf16.msra.mxu0 0
  %295 = vmatpush.bf16.msra.mxu0 %v287
  %296 = vmatpush.bf16.msra.mxu0 %v284
  %297 = vmatmul.bf16.gmra.mxu0 %v82
  %v298 = vpop.f32.mrf.mxu0
  %v299 = vadd.f32 0.0, %v298
  %v300 = vpop.f32.mrf.mxu0
  %v301 = vadd.f32 0.0, %v300
  %302 = vmatmul.bf16.gmra.mxu0 %v85
  %v303 = vpop.f32.mrf.mxu0
  %v304 = vadd.f32 0.0, %v303
  %v305 = vpop.f32.mrf.mxu0
  %306 = vdwg.mxu0
  %310 = vrot.lane.b32.xlu0 %v272, 32
  %v311 = vpop.permute.xlu0 %310
  %312 = vrot.lane.b32.xlu0 %v273, 32
  %v313 = vpop.permute.xlu0 %312
  %314 = vrot.lane.b32.xlu0 %v274, 32
  %v315 = vpop.permute.xlu0 %314
  %vm319 = vcmask 261120
  %v320 = vsel %vm319, %v299, %v311
  %v321 = vsel %vm319, %v301, %v313
  %v322 = vsel %vm319, %v304, %v315
  %v323 = vpack.c.bf16 %v321, %v320
  %v324 = vpack.c.bf16 %v322, %v322
  %v326 = vperm.slane %v283, 0
  %v336 = vunpack.c.l.b16 %v275
  %v337 = vunpack.c.l.b16 %v276
  %v338 = vunpack.c.l.b16 %v277
  %v339 = vunpack.c.l.b16 %v278
  %v340 = vunpack.c.l.b16 %v279
  %v341 = vunpack.c.l.b16 %v280
  %v342 = vunpack.c.l.b16 %v281
  %v343 = vunpack.c.l.b16 %v282
  %v344 = vpack.c.b16 %v337, %v336
  %v345 = vpack.c.b16 %v339, %v338
  %v346 = vpack.c.b16 %v341, %v340
  %v347 = vpack.c.b16 %v343, %v342
  %vm352 = vcmask 523264
  %v354 = vsel %vm352, %v323, 0
  %v357 = vsel %vm352, %v324, 0
  %359 = vmatpush.bf16.msra.mxu0 0
  %360 = vmatpush.bf16.msra.mxu0 0
  %361 = vmatpush.bf16.msra.mxu0 0
  %362 = vmatpush.bf16.msra.mxu0 0
  %363 = vmatpush.bf16.msra.mxu0 %v347
  %364 = vmatpush.bf16.msra.mxu0 %v346
  %365 = vmatpush.bf16.msra.mxu0 %v345
  %366 = vmatpush.bf16.msra.mxu0 %v344
  %367 = vmatmul.bf16.gmra.mxu0 %v354
  %v368 = vpop.f32.mrf.mxu0
  %v369 = vadd.f32 %v326, %v368
  %v370 = vpop.f32.mrf.mxu0
  %v371 = vadd.f32 %v326, %v370
  %372 = vmatmul.bf16.gmra.mxu0 %v357
  %v373 = vpop.f32.mrf.mxu0
  %v374 = vadd.f32 %v326, %v373
  %v375 = vpop.f32.mrf.mxu0
  %376 = vdwg.mxu0
  %v377 = vmax.f32 %v369, 0.0
  %v378 = vmax.f32 %v371, 0.0
  %v379 = vmax.f32 %v374, 0.0
  %s380 = scalar_lea.vmem %s4, 32
  %v381 = vld [vmem:[%s380] sm:$0xf]
  %v382 = vld [vmem:[%s380 + $0x4] sm:$0xf]
  %v383 = vld [vmem:[%s380 + $0x8] sm:$0xf]
  %v384 = vld [vmem:[%s380 + $0xc] sm:$0xf]
  %v385 = vld [vmem:[%s380 + $0x10] sm:$0xf]
  %v386 = vld [vmem:[%s380 + $0x14] sm:$0xf]
  %v387 = vld [vmem:[%s380 + $0x18] sm:$0xf]
  %v388 = vld [vmem:[%s380 + $0x1c] sm:$0xf]
  %s389 = scalar_lea.vmem %s5, 1
  %v390 = vld [vmem:[%s389] sm:$0x1]
  %v391 = vpack.c.bf16 %v378, %v377
  %v392 = vpack.c.bf16 %v379, %v379
  %v394 = vsel %vm87, %v392, 0
  %396 = vmatpush.bf16.msra.mxu0 0
  %397 = vmatpush.bf16.msra.mxu0 0
  %398 = vmatpush.bf16.msra.mxu0 0
  %399 = vmatpush.bf16.msra.mxu0 0
  %400 = vmatpush.bf16.msra.mxu0 0
  %401 = vmatpush.bf16.msra.mxu0 0
  %402 = vmatpush.bf16.msra.mxu0 %v394
  %403 = vmatpush.bf16.msra.mxu0 %v391
  %404 = vmatmul.bf16.gmra.mxu0 %v82
  %v405 = vpop.f32.mrf.mxu0
  %v406 = vadd.f32 0.0, %v405
  %v407 = vpop.f32.mrf.mxu0
  %v408 = vadd.f32 0.0, %v407
  %409 = vmatmul.bf16.gmra.mxu0 %v85
  %v410 = vpop.f32.mrf.mxu0
  %v411 = vadd.f32 0.0, %v410
  %v412 = vpop.f32.mrf.mxu0
  %413 = vdwg.mxu0
  %417 = vrot.lane.b32.xlu0 %v377, 32
  %v418 = vpop.permute.xlu0 %417
  %419 = vrot.lane.b32.xlu0 %v378, 32
  %v420 = vpop.permute.xlu0 %419
  %421 = vrot.lane.b32.xlu0 %v379, 32
  %v422 = vpop.permute.xlu0 %421
  %v426 = vsel %vm319, %v406, %v418
  %v427 = vsel %vm319, %v408, %v420
  %v428 = vsel %vm319, %v411, %v422
  %v429 = vpack.c.bf16 %v427, %v426
  %v430 = vpack.c.bf16 %v428, %v428
  %v432 = vperm.slane %v390, 0
  %v442 = vunpack.c.l.b16 %v381
  %v443 = vunpack.c.l.b16 %v382
  %v444 = vunpack.c.l.b16 %v383
  %v445 = vunpack.c.l.b16 %v384
  %v446 = vunpack.c.l.b16 %v385
  %v447 = vunpack.c.l.b16 %v386
  %v448 = vunpack.c.l.b16 %v387
  %v449 = vunpack.c.l.b16 %v388
  %v450 = vpack.c.b16 %v443, %v442
  %v451 = vpack.c.b16 %v445, %v444
  %v452 = vpack.c.b16 %v447, %v446
  %v453 = vpack.c.b16 %v449, %v448
  %v459 = vsel %vm352, %v429, 0
  %v462 = vsel %vm352, %v430, 0
  %464 = vmatpush.bf16.msra.mxu0 0
  %465 = vmatpush.bf16.msra.mxu0 0
  %466 = vmatpush.bf16.msra.mxu0 0
  %467 = vmatpush.bf16.msra.mxu0 0
  %468 = vmatpush.bf16.msra.mxu0 %v453
  %469 = vmatpush.bf16.msra.mxu0 %v452
  %470 = vmatpush.bf16.msra.mxu0 %v451
  %471 = vmatpush.bf16.msra.mxu0 %v450
  %472 = vmatmul.bf16.gmra.mxu0 %v459
  %v473 = vpop.f32.mrf.mxu0
  %v474 = vadd.f32 %v432, %v473
  %v475 = vpop.f32.mrf.mxu0
  %v476 = vadd.f32 %v432, %v475
  %477 = vmatmul.bf16.gmra.mxu0 %v462
  %v478 = vpop.f32.mrf.mxu0
  %v479 = vadd.f32 %v432, %v478
  %v480 = vpop.f32.mrf.mxu0
  %481 = vdwg.mxu0
  %v482 = vmax.f32 %v474, 0.0
  %v483 = vmax.f32 %v476, 0.0
  %v484 = vmax.f32 %v479, 0.0
  %v485 = vadd.f32 %v272, %v482
  %v486 = vadd.f32 %v273, %v483
  %v487 = vadd.f32 %v274, %v484
  %v488 = vmul.f32 %v485, 0.5
  %v489 = vmul.f32 %v486, 0.5
  %v490 = vmul.f32 %v487, 0.5
  %s491 = scalar_lea.vmem %s4, 64
  %v492 = vld [vmem:[%s491] sm:$0xf]
  %v493 = vld [vmem:[%s491 + $0x4] sm:$0xf]
  %v494 = vld [vmem:[%s491 + $0x8] sm:$0xf]
  %v495 = vld [vmem:[%s491 + $0xc] sm:$0xf]
  %v496 = vld [vmem:[%s491 + $0x10] sm:$0xf]
  %v497 = vld [vmem:[%s491 + $0x14] sm:$0xf]
  %v498 = vld [vmem:[%s491 + $0x18] sm:$0xf]
  %v499 = vld [vmem:[%s491 + $0x1c] sm:$0xf]
  %s500 = scalar_lea.vmem %s5, 2
  %v501 = vld [vmem:[%s500] sm:$0x1]
  %v502 = vpack.c.bf16 %v489, %v488
  %v503 = vpack.c.bf16 %v490, %v490
  %v505 = vsel %vm87, %v503, 0
  %507 = vmatpush.bf16.msra.mxu0 0
  %508 = vmatpush.bf16.msra.mxu0 0
  %509 = vmatpush.bf16.msra.mxu0 0
  %510 = vmatpush.bf16.msra.mxu0 0
  %511 = vmatpush.bf16.msra.mxu0 0
  %512 = vmatpush.bf16.msra.mxu0 0
  %513 = vmatpush.bf16.msra.mxu0 %v505
  %514 = vmatpush.bf16.msra.mxu0 %v502
  %515 = vmatmul.bf16.gmra.mxu0 %v82
  %v516 = vpop.f32.mrf.mxu0
  %v517 = vadd.f32 0.0, %v516
  %v518 = vpop.f32.mrf.mxu0
  %v519 = vadd.f32 0.0, %v518
  %520 = vmatmul.bf16.gmra.mxu0 %v85
  %v521 = vpop.f32.mrf.mxu0
  %v522 = vadd.f32 0.0, %v521
  %v523 = vpop.f32.mrf.mxu0
  %524 = vdwg.mxu0
  %528 = vrot.lane.b32.xlu0 %v488, 32
  %v529 = vpop.permute.xlu0 %528
  %530 = vrot.lane.b32.xlu0 %v489, 32
  %v531 = vpop.permute.xlu0 %530
  %532 = vrot.lane.b32.xlu0 %v490, 32
  %v533 = vpop.permute.xlu0 %532
  %v537 = vsel %vm319, %v517, %v529
  %v538 = vsel %vm319, %v519, %v531
  %v539 = vsel %vm319, %v522, %v533
  %v540 = vpack.c.bf16 %v538, %v537
  %v541 = vpack.c.bf16 %v539, %v539
  %v543 = vperm.slane %v501, 0
  %v553 = vunpack.c.l.b16 %v492
  %v554 = vunpack.c.l.b16 %v493
  %v555 = vunpack.c.l.b16 %v494
  %v556 = vunpack.c.l.b16 %v495
  %v557 = vunpack.c.l.b16 %v496
  %v558 = vunpack.c.l.b16 %v497
  %v559 = vunpack.c.l.b16 %v498
  %v560 = vunpack.c.l.b16 %v499
  %v561 = vpack.c.b16 %v554, %v553
  %v562 = vpack.c.b16 %v556, %v555
  %v563 = vpack.c.b16 %v558, %v557
  %v564 = vpack.c.b16 %v560, %v559
  %v570 = vsel %vm352, %v540, 0
  %v573 = vsel %vm352, %v541, 0
  %575 = vmatpush.bf16.msra.mxu0 0
  %576 = vmatpush.bf16.msra.mxu0 0
  %577 = vmatpush.bf16.msra.mxu0 0
  %578 = vmatpush.bf16.msra.mxu0 0
  %579 = vmatpush.bf16.msra.mxu0 %v564
  %580 = vmatpush.bf16.msra.mxu0 %v563
  %581 = vmatpush.bf16.msra.mxu0 %v562
  %582 = vmatpush.bf16.msra.mxu0 %v561
  %583 = vmatmul.bf16.gmra.mxu0 %v570
  %v584 = vpop.f32.mrf.mxu0
  %v585 = vadd.f32 %v543, %v584
  %v586 = vpop.f32.mrf.mxu0
  %v587 = vadd.f32 %v543, %v586
  %588 = vmatmul.bf16.gmra.mxu0 %v573
  %v589 = vpop.f32.mrf.mxu0
  %v590 = vadd.f32 %v543, %v589
  %v591 = vpop.f32.mrf.mxu0
  %592 = vdwg.mxu0
  %v593 = vmax.f32 %v585, 0.0
  %v594 = vmax.f32 %v587, 0.0
  %v595 = vmax.f32 %v590, 0.0
  %s596 = scalar_lea.vmem %s4, 96
  %v597 = vld [vmem:[%s596] sm:$0xf]
  %v598 = vld [vmem:[%s596 + $0x4] sm:$0xf]
  %v599 = vld [vmem:[%s596 + $0x8] sm:$0xf]
  %v600 = vld [vmem:[%s596 + $0xc] sm:$0xf]
  %v601 = vld [vmem:[%s596 + $0x10] sm:$0xf]
  %v602 = vld [vmem:[%s596 + $0x14] sm:$0xf]
  %v603 = vld [vmem:[%s596 + $0x18] sm:$0xf]
  %v604 = vld [vmem:[%s596 + $0x1c] sm:$0xf]
  %s605 = scalar_lea.vmem %s5, 3
  %v606 = vld [vmem:[%s605] sm:$0x1]
  %v607 = vpack.c.bf16 %v594, %v593
  %v608 = vpack.c.bf16 %v595, %v595
  %v610 = vsel %vm87, %v608, 0
  %612 = vmatpush.bf16.msra.mxu0 0
  %613 = vmatpush.bf16.msra.mxu0 0
  %614 = vmatpush.bf16.msra.mxu0 0
  %615 = vmatpush.bf16.msra.mxu0 0
  %616 = vmatpush.bf16.msra.mxu0 0
  %617 = vmatpush.bf16.msra.mxu0 0
  %618 = vmatpush.bf16.msra.mxu0 %v610
  %619 = vmatpush.bf16.msra.mxu0 %v607
  %620 = vmatmul.bf16.gmra.mxu0 %v82
  %v621 = vpop.f32.mrf.mxu0
  %v622 = vadd.f32 0.0, %v621
  %v623 = vpop.f32.mrf.mxu0
  %v624 = vadd.f32 0.0, %v623
  %625 = vmatmul.bf16.gmra.mxu0 %v85
  %v626 = vpop.f32.mrf.mxu0
  %v627 = vadd.f32 0.0, %v626
  %v628 = vpop.f32.mrf.mxu0
  %629 = vdwg.mxu0
  %633 = vrot.lane.b32.xlu0 %v593, 32
  %v634 = vpop.permute.xlu0 %633
  %635 = vrot.lane.b32.xlu0 %v594, 32
  %v636 = vpop.permute.xlu0 %635
  %637 = vrot.lane.b32.xlu0 %v595, 32
  %v638 = vpop.permute.xlu0 %637
  %v642 = vsel %vm319, %v622, %v634
  %v643 = vsel %vm319, %v624, %v636
  %v644 = vsel %vm319, %v627, %v638
  %v645 = vpack.c.bf16 %v643, %v642
  %v646 = vpack.c.bf16 %v644, %v644
  %v648 = vperm.slane %v606, 0
  %v658 = vunpack.c.l.b16 %v597
  %v659 = vunpack.c.l.b16 %v598
  %v660 = vunpack.c.l.b16 %v599
  %v661 = vunpack.c.l.b16 %v600
  %v662 = vunpack.c.l.b16 %v601
  %v663 = vunpack.c.l.b16 %v602
  %v664 = vunpack.c.l.b16 %v603
  %v665 = vunpack.c.l.b16 %v604
  %v666 = vpack.c.b16 %v659, %v658
  %v667 = vpack.c.b16 %v661, %v660
  %v668 = vpack.c.b16 %v663, %v662
  %v669 = vpack.c.b16 %v665, %v664
  %v675 = vsel %vm352, %v645, 0
  %v678 = vsel %vm352, %v646, 0
  %680 = vmatpush.bf16.msra.mxu0 0
  %681 = vmatpush.bf16.msra.mxu0 0
  %682 = vmatpush.bf16.msra.mxu0 0
  %683 = vmatpush.bf16.msra.mxu0 0
  %684 = vmatpush.bf16.msra.mxu0 %v669
  %685 = vmatpush.bf16.msra.mxu0 %v668
  %686 = vmatpush.bf16.msra.mxu0 %v667
  %687 = vmatpush.bf16.msra.mxu0 %v666
  %688 = vmatmul.bf16.gmra.mxu0 %v675
  %v689 = vpop.f32.mrf.mxu0
  %v690 = vadd.f32 %v648, %v689
  %v691 = vpop.f32.mrf.mxu0
  %v692 = vadd.f32 %v648, %v691
  %693 = vmatmul.bf16.gmra.mxu0 %v678
  %v694 = vpop.f32.mrf.mxu0
  %v695 = vadd.f32 %v648, %v694
  %v696 = vpop.f32.mrf.mxu0
  %697 = vdwg.mxu0
  %v698 = vmax.f32 %v690, 0.0
  %v699 = vmax.f32 %v692, 0.0
  %v700 = vmax.f32 %v695, 0.0
  %v701 = vadd.f32 %v488, %v698
  %v702 = vadd.f32 %v489, %v699
  %v703 = vadd.f32 %v490, %v700
  %v704 = vmul.f32 %v701, 0.5
  %v705 = vmul.f32 %v702, 0.5
  %v706 = vmul.f32 %v703, 0.5
  %s707 = scalar_lea.vmem %s4, 128
  %v708 = vld [vmem:[%s707] sm:$0xf]
  %v709 = vld [vmem:[%s707 + $0x4] sm:$0xf]
  %v710 = vld [vmem:[%s707 + $0x8] sm:$0xf]
  %v711 = vld [vmem:[%s707 + $0xc] sm:$0xf]
  %v712 = vld [vmem:[%s707 + $0x10] sm:$0xf]
  %v713 = vld [vmem:[%s707 + $0x14] sm:$0xf]
  %v714 = vld [vmem:[%s707 + $0x18] sm:$0xf]
  %v715 = vld [vmem:[%s707 + $0x1c] sm:$0xf]
  %s716 = scalar_lea.vmem %s5, 4
  %v717 = vld [vmem:[%s716] sm:$0x1]
  %v718 = vpack.c.bf16 %v705, %v704
  %v719 = vpack.c.bf16 %v706, %v706
  %v721 = vsel %vm87, %v719, 0
  %723 = vmatpush.bf16.msra.mxu0 0
  %724 = vmatpush.bf16.msra.mxu0 0
  %725 = vmatpush.bf16.msra.mxu0 0
  %726 = vmatpush.bf16.msra.mxu0 0
  %727 = vmatpush.bf16.msra.mxu0 0
  %728 = vmatpush.bf16.msra.mxu0 0
  %729 = vmatpush.bf16.msra.mxu0 %v721
  %730 = vmatpush.bf16.msra.mxu0 %v718
  %731 = vmatmul.bf16.gmra.mxu0 %v82
  %v732 = vpop.f32.mrf.mxu0
  %v733 = vadd.f32 0.0, %v732
  %v734 = vpop.f32.mrf.mxu0
  %v735 = vadd.f32 0.0, %v734
  %736 = vmatmul.bf16.gmra.mxu0 %v85
  %v737 = vpop.f32.mrf.mxu0
  %v738 = vadd.f32 0.0, %v737
  %v739 = vpop.f32.mrf.mxu0
  %740 = vdwg.mxu0
  %744 = vrot.lane.b32.xlu0 %v704, 32
  %v745 = vpop.permute.xlu0 %744
  %746 = vrot.lane.b32.xlu0 %v705, 32
  %v747 = vpop.permute.xlu0 %746
  %748 = vrot.lane.b32.xlu0 %v706, 32
  %v749 = vpop.permute.xlu0 %748
  %v753 = vsel %vm319, %v733, %v745
  %v754 = vsel %vm319, %v735, %v747
  %v755 = vsel %vm319, %v738, %v749
  %v756 = vpack.c.bf16 %v754, %v753
  %v757 = vpack.c.bf16 %v755, %v755
  %v759 = vperm.slane %v717, 0
  %v769 = vunpack.c.l.b16 %v708
  %v770 = vunpack.c.l.b16 %v709
  %v771 = vunpack.c.l.b16 %v710
  %v772 = vunpack.c.l.b16 %v711
  %v773 = vunpack.c.l.b16 %v712
  %v774 = vunpack.c.l.b16 %v713
  %v775 = vunpack.c.l.b16 %v714
  %v776 = vunpack.c.l.b16 %v715
  %v777 = vpack.c.b16 %v770, %v769
  %v778 = vpack.c.b16 %v772, %v771
  %v779 = vpack.c.b16 %v774, %v773
  %v780 = vpack.c.b16 %v776, %v775
  %v786 = vsel %vm352, %v756, 0
  %v789 = vsel %vm352, %v757, 0
  %791 = vmatpush.bf16.msra.mxu0 0
  %792 = vmatpush.bf16.msra.mxu0 0
  %793 = vmatpush.bf16.msra.mxu0 0
  %794 = vmatpush.bf16.msra.mxu0 0
  %795 = vmatpush.bf16.msra.mxu0 %v780
  %796 = vmatpush.bf16.msra.mxu0 %v779
  %797 = vmatpush.bf16.msra.mxu0 %v778
  %798 = vmatpush.bf16.msra.mxu0 %v777
  %799 = vmatmul.bf16.gmra.mxu0 %v786
  %v800 = vpop.f32.mrf.mxu0
  %v801 = vadd.f32 %v759, %v800
  %v802 = vpop.f32.mrf.mxu0
  %v803 = vadd.f32 %v759, %v802
  %804 = vmatmul.bf16.gmra.mxu0 %v789
  %v805 = vpop.f32.mrf.mxu0
  %v806 = vadd.f32 %v759, %v805
  %v807 = vpop.f32.mrf.mxu0
  %808 = vdwg.mxu0
  %v809 = vmax.f32 %v801, 0.0
  %v810 = vmax.f32 %v803, 0.0
  %v811 = vmax.f32 %v806, 0.0
  %s812 = scalar_lea.vmem %s4, 160
  %v813 = vld [vmem:[%s812] sm:$0xf]
  %v814 = vld [vmem:[%s812 + $0x4] sm:$0xf]
  %v815 = vld [vmem:[%s812 + $0x8] sm:$0xf]
  %v816 = vld [vmem:[%s812 + $0xc] sm:$0xf]
  %v817 = vld [vmem:[%s812 + $0x10] sm:$0xf]
  %v818 = vld [vmem:[%s812 + $0x14] sm:$0xf]
  %v819 = vld [vmem:[%s812 + $0x18] sm:$0xf]
  %v820 = vld [vmem:[%s812 + $0x1c] sm:$0xf]
  %s821 = scalar_lea.vmem %s5, 5
  %v822 = vld [vmem:[%s821] sm:$0x1]
  %v823 = vpack.c.bf16 %v810, %v809
  %v824 = vpack.c.bf16 %v811, %v811
  %v826 = vsel %vm87, %v824, 0
  %828 = vmatpush.bf16.msra.mxu0 0
  %829 = vmatpush.bf16.msra.mxu0 0
  %830 = vmatpush.bf16.msra.mxu0 0
  %831 = vmatpush.bf16.msra.mxu0 0
  %832 = vmatpush.bf16.msra.mxu0 0
  %833 = vmatpush.bf16.msra.mxu0 0
  %834 = vmatpush.bf16.msra.mxu0 %v826
  %835 = vmatpush.bf16.msra.mxu0 %v823
  %836 = vmatmul.bf16.gmra.mxu0 %v82
  %v837 = vpop.f32.mrf.mxu0
  %v838 = vadd.f32 0.0, %v837
  %v839 = vpop.f32.mrf.mxu0
  %v840 = vadd.f32 0.0, %v839
  %841 = vmatmul.bf16.gmra.mxu0 %v85
  %v842 = vpop.f32.mrf.mxu0
  %v843 = vadd.f32 0.0, %v842
  %v844 = vpop.f32.mrf.mxu0
  %845 = vdwg.mxu0
  %849 = vrot.lane.b32.xlu0 %v809, 32
  %v850 = vpop.permute.xlu0 %849
  %851 = vrot.lane.b32.xlu0 %v810, 32
  %v852 = vpop.permute.xlu0 %851
  %853 = vrot.lane.b32.xlu0 %v811, 32
  %v854 = vpop.permute.xlu0 %853
  %v858 = vsel %vm319, %v838, %v850
  %v859 = vsel %vm319, %v840, %v852
  %v860 = vsel %vm319, %v843, %v854
  %v861 = vpack.c.bf16 %v859, %v858
  %v862 = vpack.c.bf16 %v860, %v860
  %v864 = vperm.slane %v822, 0
  %v874 = vunpack.c.l.b16 %v813
  %v875 = vunpack.c.l.b16 %v814
  %v876 = vunpack.c.l.b16 %v815
  %v877 = vunpack.c.l.b16 %v816
  %v878 = vunpack.c.l.b16 %v817
  %v879 = vunpack.c.l.b16 %v818
  %v880 = vunpack.c.l.b16 %v819
  %v881 = vunpack.c.l.b16 %v820
  %v882 = vpack.c.b16 %v875, %v874
  %v883 = vpack.c.b16 %v877, %v876
  %v884 = vpack.c.b16 %v879, %v878
  %v885 = vpack.c.b16 %v881, %v880
  %v891 = vsel %vm352, %v861, 0
  %v894 = vsel %vm352, %v862, 0
  %896 = vmatpush.bf16.msra.mxu0 0
  %897 = vmatpush.bf16.msra.mxu0 0
  %898 = vmatpush.bf16.msra.mxu0 0
  %899 = vmatpush.bf16.msra.mxu0 0
  %900 = vmatpush.bf16.msra.mxu0 %v885
  %901 = vmatpush.bf16.msra.mxu0 %v884
  %902 = vmatpush.bf16.msra.mxu0 %v883
  %903 = vmatpush.bf16.msra.mxu0 %v882
  %904 = vmatmul.bf16.gmra.mxu0 %v891
  %v905 = vpop.f32.mrf.mxu0
  %v906 = vadd.f32 %v864, %v905
  %v907 = vpop.f32.mrf.mxu0
  %v908 = vadd.f32 %v864, %v907
  %909 = vmatmul.bf16.gmra.mxu0 %v894
  %v910 = vpop.f32.mrf.mxu0
  %v911 = vadd.f32 %v864, %v910
  %v912 = vpop.f32.mrf.mxu0
  %913 = vdwg.mxu0
  %v914 = vmax.f32 %v906, 0.0
  %v915 = vmax.f32 %v908, 0.0
  %v916 = vmax.f32 %v911, 0.0
  %v917 = vadd.f32 %v704, %v914
  %v918 = vadd.f32 %v705, %v915
  %v919 = vadd.f32 %v706, %v916
  %v920 = vmul.f32 %v917, 0.5
  %v921 = vmul.f32 %v918, 0.5
  %v922 = vmul.f32 %v919, 0.5
  %s923 = scalar_lea.vmem %s4, 192
  %v924 = vld [vmem:[%s923] sm:$0xf]
  %v925 = vld [vmem:[%s923 + $0x4] sm:$0xf]
  %v926 = vld [vmem:[%s923 + $0x8] sm:$0xf]
  %v927 = vld [vmem:[%s923 + $0xc] sm:$0xf]
  %v928 = vld [vmem:[%s923 + $0x10] sm:$0xf]
  %v929 = vld [vmem:[%s923 + $0x14] sm:$0xf]
  %v930 = vld [vmem:[%s923 + $0x18] sm:$0xf]
  %v931 = vld [vmem:[%s923 + $0x1c] sm:$0xf]
  %s932 = scalar_lea.vmem %s5, 6
  %v933 = vld [vmem:[%s932] sm:$0x1]
  %v934 = vpack.c.bf16 %v921, %v920
  %v935 = vpack.c.bf16 %v922, %v922
  %v937 = vsel %vm87, %v935, 0
  %939 = vmatpush.bf16.msra.mxu0 0
  %940 = vmatpush.bf16.msra.mxu0 0
  %941 = vmatpush.bf16.msra.mxu0 0
  %942 = vmatpush.bf16.msra.mxu0 0
  %943 = vmatpush.bf16.msra.mxu0 0
  %944 = vmatpush.bf16.msra.mxu0 0
  %945 = vmatpush.bf16.msra.mxu0 %v937
  %946 = vmatpush.bf16.msra.mxu0 %v934
  %947 = vmatmul.bf16.gmra.mxu0 %v82
  %v948 = vpop.f32.mrf.mxu0
  %v949 = vadd.f32 0.0, %v948
  %v950 = vpop.f32.mrf.mxu0
  %v951 = vadd.f32 0.0, %v950
  %952 = vmatmul.bf16.gmra.mxu0 %v85
  %v953 = vpop.f32.mrf.mxu0
  %v954 = vadd.f32 0.0, %v953
  %v955 = vpop.f32.mrf.mxu0
  %956 = vdwg.mxu0
  %960 = vrot.lane.b32.xlu0 %v920, 32
  %v961 = vpop.permute.xlu0 %960
  %962 = vrot.lane.b32.xlu0 %v921, 32
  %v963 = vpop.permute.xlu0 %962
  %964 = vrot.lane.b32.xlu0 %v922, 32
  %v965 = vpop.permute.xlu0 %964
  %v969 = vsel %vm319, %v949, %v961
  %v970 = vsel %vm319, %v951, %v963
  %v971 = vsel %vm319, %v954, %v965
  %v972 = vpack.c.bf16 %v970, %v969
  %v973 = vpack.c.bf16 %v971, %v971
  %v975 = vperm.slane %v933, 0
  %v985 = vunpack.c.l.b16 %v924
  %v986 = vunpack.c.l.b16 %v925
  %v987 = vunpack.c.l.b16 %v926
  %v988 = vunpack.c.l.b16 %v927
  %v989 = vunpack.c.l.b16 %v928
  %v990 = vunpack.c.l.b16 %v929
  %v991 = vunpack.c.l.b16 %v930
  %v992 = vunpack.c.l.b16 %v931
  %v993 = vpack.c.b16 %v986, %v985
  %v994 = vpack.c.b16 %v988, %v987
  %v995 = vpack.c.b16 %v990, %v989
  %v996 = vpack.c.b16 %v992, %v991
  %v1002 = vsel %vm352, %v972, 0
  %v1005 = vsel %vm352, %v973, 0
  %1007 = vmatpush.bf16.msra.mxu0 0
  %1008 = vmatpush.bf16.msra.mxu0 0
  %1009 = vmatpush.bf16.msra.mxu0 0
  %1010 = vmatpush.bf16.msra.mxu0 0
  %1011 = vmatpush.bf16.msra.mxu0 %v996
  %1012 = vmatpush.bf16.msra.mxu0 %v995
  %1013 = vmatpush.bf16.msra.mxu0 %v994
  %1014 = vmatpush.bf16.msra.mxu0 %v993
  %1015 = vmatmul.bf16.gmra.mxu0 %v1002
  %v1016 = vpop.f32.mrf.mxu0
  %v1017 = vadd.f32 %v975, %v1016
  %v1018 = vpop.f32.mrf.mxu0
  %v1019 = vadd.f32 %v975, %v1018
  %1020 = vmatmul.bf16.gmra.mxu0 %v1005
  %v1021 = vpop.f32.mrf.mxu0
  %v1022 = vadd.f32 %v975, %v1021
  %v1023 = vpop.f32.mrf.mxu0
  %1024 = vdwg.mxu0
  %v1025 = vmax.f32 %v1017, 0.0
  %v1026 = vmax.f32 %v1019, 0.0
  %v1027 = vmax.f32 %v1022, 0.0
  %s1028 = scalar_lea.vmem %s4, 224
  %v1029 = vld [vmem:[%s1028] sm:$0xf]
  %v1030 = vld [vmem:[%s1028 + $0x4] sm:$0xf]
  %v1031 = vld [vmem:[%s1028 + $0x8] sm:$0xf]
  %v1032 = vld [vmem:[%s1028 + $0xc] sm:$0xf]
  %v1033 = vld [vmem:[%s1028 + $0x10] sm:$0xf]
  %v1034 = vld [vmem:[%s1028 + $0x14] sm:$0xf]
  %v1035 = vld [vmem:[%s1028 + $0x18] sm:$0xf]
  %v1036 = vld [vmem:[%s1028 + $0x1c] sm:$0xf]
  %s1037 = scalar_lea.vmem %s5, 7
  %v1038 = vld [vmem:[%s1037] sm:$0x1]
  %v1039 = vpack.c.bf16 %v1026, %v1025
  %v1040 = vpack.c.bf16 %v1027, %v1027
  %v1042 = vsel %vm87, %v1040, 0
  %1044 = vmatpush.bf16.msra.mxu0 0
  %1045 = vmatpush.bf16.msra.mxu0 0
  %1046 = vmatpush.bf16.msra.mxu0 0
  %1047 = vmatpush.bf16.msra.mxu0 0
  %1048 = vmatpush.bf16.msra.mxu0 0
  %1049 = vmatpush.bf16.msra.mxu0 0
  %1050 = vmatpush.bf16.msra.mxu0 %v1042
  %1051 = vmatpush.bf16.msra.mxu0 %v1039
  %1052 = vmatmul.bf16.gmra.mxu0 %v82
  %v1053 = vpop.f32.mrf.mxu0
  %v1054 = vadd.f32 0.0, %v1053
  %v1055 = vpop.f32.mrf.mxu0
  %v1056 = vadd.f32 0.0, %v1055
  %1057 = vmatmul.bf16.gmra.mxu0 %v85
  %v1058 = vpop.f32.mrf.mxu0
  %v1059 = vadd.f32 0.0, %v1058
  %v1060 = vpop.f32.mrf.mxu0
  %1061 = vdwg.mxu0
  %1065 = vrot.lane.b32.xlu0 %v1025, 32
  %v1066 = vpop.permute.xlu0 %1065
  %1067 = vrot.lane.b32.xlu0 %v1026, 32
  %v1068 = vpop.permute.xlu0 %1067
  %1069 = vrot.lane.b32.xlu0 %v1027, 32
  %v1070 = vpop.permute.xlu0 %1069
  %v1074 = vsel %vm319, %v1054, %v1066
  %v1075 = vsel %vm319, %v1056, %v1068
  %v1076 = vsel %vm319, %v1059, %v1070
  %v1077 = vpack.c.bf16 %v1075, %v1074
  %v1078 = vpack.c.bf16 %v1076, %v1076
  %v1080 = vperm.slane %v1038, 0
  %v1090 = vunpack.c.l.b16 %v1029
  %v1091 = vunpack.c.l.b16 %v1030
  %v1092 = vunpack.c.l.b16 %v1031
  %v1093 = vunpack.c.l.b16 %v1032
  %v1094 = vunpack.c.l.b16 %v1033
  %v1095 = vunpack.c.l.b16 %v1034
  %v1096 = vunpack.c.l.b16 %v1035
  %v1097 = vunpack.c.l.b16 %v1036
  %v1098 = vpack.c.b16 %v1091, %v1090
  %v1099 = vpack.c.b16 %v1093, %v1092
  %v1100 = vpack.c.b16 %v1095, %v1094
  %v1101 = vpack.c.b16 %v1097, %v1096
  %v1107 = vsel %vm352, %v1077, 0
  %v1110 = vsel %vm352, %v1078, 0
  %1112 = vmatpush.bf16.msra.mxu0 0
  %1113 = vmatpush.bf16.msra.mxu0 0
  %1114 = vmatpush.bf16.msra.mxu0 0
  %1115 = vmatpush.bf16.msra.mxu0 0
  %1116 = vmatpush.bf16.msra.mxu0 %v1101
  %1117 = vmatpush.bf16.msra.mxu0 %v1100
  %1118 = vmatpush.bf16.msra.mxu0 %v1099
  %1119 = vmatpush.bf16.msra.mxu0 %v1098
  %1120 = vmatmul.bf16.gmra.mxu0 %v1107
  %v1121 = vpop.f32.mrf.mxu0
  %v1122 = vadd.f32 %v1080, %v1121
  %v1123 = vpop.f32.mrf.mxu0
  %v1124 = vadd.f32 %v1080, %v1123
  %1125 = vmatmul.bf16.gmra.mxu0 %v1110
  %v1126 = vpop.f32.mrf.mxu0
  %v1127 = vadd.f32 %v1080, %v1126
  %v1128 = vpop.f32.mrf.mxu0
  %1129 = vdwg.mxu0
  %v1130 = vmax.f32 %v1122, 0.0
  %v1131 = vmax.f32 %v1124, 0.0
  %v1132 = vmax.f32 %v1127, 0.0
  %v1133 = vadd.f32 %v920, %v1130
  %v1134 = vadd.f32 %v921, %v1131
  %v1135 = vadd.f32 %v922, %v1132
  %v1136 = vmul.f32 %v1133, 0.5
  %v1137 = vmul.f32 %v1134, 0.5
  %v1138 = vmul.f32 %v1135, 0.5
  %s1139 = scalar_lea.vmem %s4, 256
  %v1140 = vld [vmem:[%s1139] sm:$0xf]
  %v1141 = vld [vmem:[%s1139 + $0x4] sm:$0xf]
  %v1142 = vld [vmem:[%s1139 + $0x8] sm:$0xf]
  %v1143 = vld [vmem:[%s1139 + $0xc] sm:$0xf]
  %v1144 = vld [vmem:[%s1139 + $0x10] sm:$0xf]
  %v1145 = vld [vmem:[%s1139 + $0x14] sm:$0xf]
  %v1146 = vld [vmem:[%s1139 + $0x18] sm:$0xf]
  %v1147 = vld [vmem:[%s1139 + $0x1c] sm:$0xf]
  %s1148 = scalar_lea.vmem %s5, 8
  %v1149 = vld [vmem:[%s1148] sm:$0x1]
  %v1150 = vpack.c.bf16 %v1137, %v1136
  %v1151 = vpack.c.bf16 %v1138, %v1138
  %v1153 = vsel %vm87, %v1151, 0
  %1155 = vmatpush.bf16.msra.mxu0 0
  %1156 = vmatpush.bf16.msra.mxu0 0
  %1157 = vmatpush.bf16.msra.mxu0 0
  %1158 = vmatpush.bf16.msra.mxu0 0
  %1159 = vmatpush.bf16.msra.mxu0 0
  %1160 = vmatpush.bf16.msra.mxu0 0
  %1161 = vmatpush.bf16.msra.mxu0 %v1153
  %1162 = vmatpush.bf16.msra.mxu0 %v1150
  %1163 = vmatmul.bf16.gmra.mxu0 %v82
  %v1164 = vpop.f32.mrf.mxu0
  %v1165 = vadd.f32 0.0, %v1164
  %v1166 = vpop.f32.mrf.mxu0
  %v1167 = vadd.f32 0.0, %v1166
  %1168 = vmatmul.bf16.gmra.mxu0 %v85
  %v1169 = vpop.f32.mrf.mxu0
  %v1170 = vadd.f32 0.0, %v1169
  %v1171 = vpop.f32.mrf.mxu0
  %1172 = vdwg.mxu0
  %1176 = vrot.lane.b32.xlu0 %v1136, 32
  %v1177 = vpop.permute.xlu0 %1176
  %1178 = vrot.lane.b32.xlu0 %v1137, 32
  %v1179 = vpop.permute.xlu0 %1178
  %1180 = vrot.lane.b32.xlu0 %v1138, 32
  %v1181 = vpop.permute.xlu0 %1180
  %v1185 = vsel %vm319, %v1165, %v1177
  %v1186 = vsel %vm319, %v1167, %v1179
  %v1187 = vsel %vm319, %v1170, %v1181
  %v1188 = vpack.c.bf16 %v1186, %v1185
  %v1189 = vpack.c.bf16 %v1187, %v1187
  %v1191 = vperm.slane %v1149, 0
  %v1201 = vunpack.c.l.b16 %v1140
  %v1202 = vunpack.c.l.b16 %v1141
  %v1203 = vunpack.c.l.b16 %v1142
  %v1204 = vunpack.c.l.b16 %v1143
  %v1205 = vunpack.c.l.b16 %v1144
  %v1206 = vunpack.c.l.b16 %v1145
  %v1207 = vunpack.c.l.b16 %v1146
  %v1208 = vunpack.c.l.b16 %v1147
  %v1209 = vpack.c.b16 %v1202, %v1201
  %v1210 = vpack.c.b16 %v1204, %v1203
  %v1211 = vpack.c.b16 %v1206, %v1205
  %v1212 = vpack.c.b16 %v1208, %v1207
  %v1218 = vsel %vm352, %v1188, 0
  %v1221 = vsel %vm352, %v1189, 0
  %1223 = vmatpush.bf16.msra.mxu0 0
  %1224 = vmatpush.bf16.msra.mxu0 0
  %1225 = vmatpush.bf16.msra.mxu0 0
  %1226 = vmatpush.bf16.msra.mxu0 0
  %1227 = vmatpush.bf16.msra.mxu0 %v1212
  %1228 = vmatpush.bf16.msra.mxu0 %v1211
  %1229 = vmatpush.bf16.msra.mxu0 %v1210
  %1230 = vmatpush.bf16.msra.mxu0 %v1209
  %1231 = vmatmul.bf16.gmra.mxu0 %v1218
  %v1232 = vpop.f32.mrf.mxu0
  %v1233 = vadd.f32 %v1191, %v1232
  %v1234 = vpop.f32.mrf.mxu0
  %v1235 = vadd.f32 %v1191, %v1234
  %1236 = vmatmul.bf16.gmra.mxu0 %v1221
  %v1237 = vpop.f32.mrf.mxu0
  %v1238 = vadd.f32 %v1191, %v1237
  %v1239 = vpop.f32.mrf.mxu0
  %1240 = vdwg.mxu0
  %v1241 = vmax.f32 %v1233, 0.0
  %v1242 = vmax.f32 %v1235, 0.0
  %v1243 = vmax.f32 %v1238, 0.0
  %s1244 = scalar_lea.vmem %s4, 288
  %v1245 = vld [vmem:[%s1244] sm:$0xf]
  %v1246 = vld [vmem:[%s1244 + $0x4] sm:$0xf]
  %v1247 = vld [vmem:[%s1244 + $0x8] sm:$0xf]
  %v1248 = vld [vmem:[%s1244 + $0xc] sm:$0xf]
  %v1249 = vld [vmem:[%s1244 + $0x10] sm:$0xf]
  %v1250 = vld [vmem:[%s1244 + $0x14] sm:$0xf]
  %v1251 = vld [vmem:[%s1244 + $0x18] sm:$0xf]
  %v1252 = vld [vmem:[%s1244 + $0x1c] sm:$0xf]
  %s1253 = scalar_lea.vmem %s5, 9
  %v1254 = vld [vmem:[%s1253] sm:$0x1]
  %v1255 = vpack.c.bf16 %v1242, %v1241
  %v1256 = vpack.c.bf16 %v1243, %v1243
  %v1258 = vsel %vm87, %v1256, 0
  %1260 = vmatpush.bf16.msra.mxu0 0
  %1261 = vmatpush.bf16.msra.mxu0 0
  %1262 = vmatpush.bf16.msra.mxu0 0
  %1263 = vmatpush.bf16.msra.mxu0 0
  %1264 = vmatpush.bf16.msra.mxu0 0
  %1265 = vmatpush.bf16.msra.mxu0 0
  %1266 = vmatpush.bf16.msra.mxu0 %v1258
  %1267 = vmatpush.bf16.msra.mxu0 %v1255
  %1268 = vmatmul.bf16.gmra.mxu0 %v82
  %v1269 = vpop.f32.mrf.mxu0
  %v1270 = vadd.f32 0.0, %v1269
  %v1271 = vpop.f32.mrf.mxu0
  %v1272 = vadd.f32 0.0, %v1271
  %1273 = vmatmul.bf16.gmra.mxu0 %v85
  %v1274 = vpop.f32.mrf.mxu0
  %v1275 = vadd.f32 0.0, %v1274
  %v1276 = vpop.f32.mrf.mxu0
  %1277 = vdwg.mxu0
  %1281 = vrot.lane.b32.xlu0 %v1241, 32
  %v1282 = vpop.permute.xlu0 %1281
  %1283 = vrot.lane.b32.xlu0 %v1242, 32
  %v1284 = vpop.permute.xlu0 %1283
  %1285 = vrot.lane.b32.xlu0 %v1243, 32
  %v1286 = vpop.permute.xlu0 %1285
  %v1290 = vsel %vm319, %v1270, %v1282
  %v1291 = vsel %vm319, %v1272, %v1284
  %v1292 = vsel %vm319, %v1275, %v1286
  %v1293 = vpack.c.bf16 %v1291, %v1290
  %v1294 = vpack.c.bf16 %v1292, %v1292
  %v1296 = vperm.slane %v1254, 0
  %v1306 = vunpack.c.l.b16 %v1245
  %v1307 = vunpack.c.l.b16 %v1246
  %v1308 = vunpack.c.l.b16 %v1247
  %v1309 = vunpack.c.l.b16 %v1248
  %v1310 = vunpack.c.l.b16 %v1249
  %v1311 = vunpack.c.l.b16 %v1250
  %v1312 = vunpack.c.l.b16 %v1251
  %v1313 = vunpack.c.l.b16 %v1252
  %v1314 = vpack.c.b16 %v1307, %v1306
  %v1315 = vpack.c.b16 %v1309, %v1308
  %v1316 = vpack.c.b16 %v1311, %v1310
  %v1317 = vpack.c.b16 %v1313, %v1312
  %v1323 = vsel %vm352, %v1293, 0
  %v1326 = vsel %vm352, %v1294, 0
  %1328 = vmatpush.bf16.msra.mxu0 0
  %1329 = vmatpush.bf16.msra.mxu0 0
  %1330 = vmatpush.bf16.msra.mxu0 0
  %1331 = vmatpush.bf16.msra.mxu0 0
  %1332 = vmatpush.bf16.msra.mxu0 %v1317
  %1333 = vmatpush.bf16.msra.mxu0 %v1316
  %1334 = vmatpush.bf16.msra.mxu0 %v1315
  %1335 = vmatpush.bf16.msra.mxu0 %v1314
  %1336 = vmatmul.bf16.gmra.mxu0 %v1323
  %v1337 = vpop.f32.mrf.mxu0
  %v1338 = vadd.f32 %v1296, %v1337
  %v1339 = vpop.f32.mrf.mxu0
  %v1340 = vadd.f32 %v1296, %v1339
  %1341 = vmatmul.bf16.gmra.mxu0 %v1326
  %v1342 = vpop.f32.mrf.mxu0
  %v1343 = vadd.f32 %v1296, %v1342
  %v1344 = vpop.f32.mrf.mxu0
  %1345 = vdwg.mxu0
  %v1346 = vmax.f32 %v1338, 0.0
  %v1347 = vmax.f32 %v1340, 0.0
  %v1348 = vmax.f32 %v1343, 0.0
  %v1349 = vadd.f32 %v1136, %v1346
  %v1350 = vadd.f32 %v1137, %v1347
  %v1351 = vadd.f32 %v1138, %v1348
  %v1352 = vmul.f32 %v1349, 0.5
  %v1353 = vmul.f32 %v1350, 0.5
  %v1354 = vmul.f32 %v1351, 0.5
  %s1355 = scalar_lea.vmem %s4, 320
  %v1356 = vld [vmem:[%s1355] sm:$0xf]
  %v1357 = vld [vmem:[%s1355 + $0x4] sm:$0xf]
  %v1358 = vld [vmem:[%s1355 + $0x8] sm:$0xf]
  %v1359 = vld [vmem:[%s1355 + $0xc] sm:$0xf]
  %v1360 = vld [vmem:[%s1355 + $0x10] sm:$0xf]
  %v1361 = vld [vmem:[%s1355 + $0x14] sm:$0xf]
  %v1362 = vld [vmem:[%s1355 + $0x18] sm:$0xf]
  %v1363 = vld [vmem:[%s1355 + $0x1c] sm:$0xf]
  %s1364 = scalar_lea.vmem %s5, 10
  %v1365 = vld [vmem:[%s1364] sm:$0x1]
  %v1366 = vpack.c.bf16 %v1353, %v1352
  %v1367 = vpack.c.bf16 %v1354, %v1354
  %v1369 = vsel %vm87, %v1367, 0
  %1371 = vmatpush.bf16.msra.mxu0 0
  %1372 = vmatpush.bf16.msra.mxu0 0
  %1373 = vmatpush.bf16.msra.mxu0 0
  %1374 = vmatpush.bf16.msra.mxu0 0
  %1375 = vmatpush.bf16.msra.mxu0 0
  %1376 = vmatpush.bf16.msra.mxu0 0
  %1377 = vmatpush.bf16.msra.mxu0 %v1369
  %1378 = vmatpush.bf16.msra.mxu0 %v1366
  %1379 = vmatmul.bf16.gmra.mxu0 %v82
  %v1380 = vpop.f32.mrf.mxu0
  %v1381 = vadd.f32 0.0, %v1380
  %v1382 = vpop.f32.mrf.mxu0
  %v1383 = vadd.f32 0.0, %v1382
  %1384 = vmatmul.bf16.gmra.mxu0 %v85
  %v1385 = vpop.f32.mrf.mxu0
  %v1386 = vadd.f32 0.0, %v1385
  %v1387 = vpop.f32.mrf.mxu0
  %1388 = vdwg.mxu0
  %1392 = vrot.lane.b32.xlu0 %v1352, 32
  %v1393 = vpop.permute.xlu0 %1392
  %1394 = vrot.lane.b32.xlu0 %v1353, 32
  %v1395 = vpop.permute.xlu0 %1394
  %1396 = vrot.lane.b32.xlu0 %v1354, 32
  %v1397 = vpop.permute.xlu0 %1396
  %v1401 = vsel %vm319, %v1381, %v1393
  %v1402 = vsel %vm319, %v1383, %v1395
  %v1403 = vsel %vm319, %v1386, %v1397
  %v1404 = vpack.c.bf16 %v1402, %v1401
  %v1405 = vpack.c.bf16 %v1403, %v1403
  %v1407 = vperm.slane %v1365, 0
  %v1417 = vunpack.c.l.b16 %v1356
  %v1418 = vunpack.c.l.b16 %v1357
  %v1419 = vunpack.c.l.b16 %v1358
  %v1420 = vunpack.c.l.b16 %v1359
  %v1421 = vunpack.c.l.b16 %v1360
  %v1422 = vunpack.c.l.b16 %v1361
  %v1423 = vunpack.c.l.b16 %v1362
  %v1424 = vunpack.c.l.b16 %v1363
  %v1425 = vpack.c.b16 %v1418, %v1417
  %v1426 = vpack.c.b16 %v1420, %v1419
  %v1427 = vpack.c.b16 %v1422, %v1421
  %v1428 = vpack.c.b16 %v1424, %v1423
  %v1434 = vsel %vm352, %v1404, 0
  %v1437 = vsel %vm352, %v1405, 0
  %1439 = vmatpush.bf16.msra.mxu0 0
  %1440 = vmatpush.bf16.msra.mxu0 0
  %1441 = vmatpush.bf16.msra.mxu0 0
  %1442 = vmatpush.bf16.msra.mxu0 0
  %1443 = vmatpush.bf16.msra.mxu0 %v1428
  %1444 = vmatpush.bf16.msra.mxu0 %v1427
  %1445 = vmatpush.bf16.msra.mxu0 %v1426
  %1446 = vmatpush.bf16.msra.mxu0 %v1425
  %1447 = vmatmul.bf16.gmra.mxu0 %v1434
  %v1448 = vpop.f32.mrf.mxu0
  %v1449 = vadd.f32 %v1407, %v1448
  %v1450 = vpop.f32.mrf.mxu0
  %v1451 = vadd.f32 %v1407, %v1450
  %1452 = vmatmul.bf16.gmra.mxu0 %v1437
  %v1453 = vpop.f32.mrf.mxu0
  %v1454 = vadd.f32 %v1407, %v1453
  %v1455 = vpop.f32.mrf.mxu0
  %1456 = vdwg.mxu0
  %v1457 = vmax.f32 %v1449, 0.0
  %v1458 = vmax.f32 %v1451, 0.0
  %v1459 = vmax.f32 %v1454, 0.0
  %s1460 = scalar_lea.vmem %s4, 352
  %v1461 = vld [vmem:[%s1460] sm:$0xf]
  %v1462 = vld [vmem:[%s1460 + $0x4] sm:$0xf]
  %v1463 = vld [vmem:[%s1460 + $0x8] sm:$0xf]
  %v1464 = vld [vmem:[%s1460 + $0xc] sm:$0xf]
  %v1465 = vld [vmem:[%s1460 + $0x10] sm:$0xf]
  %v1466 = vld [vmem:[%s1460 + $0x14] sm:$0xf]
  %v1467 = vld [vmem:[%s1460 + $0x18] sm:$0xf]
  %v1468 = vld [vmem:[%s1460 + $0x1c] sm:$0xf]
  %s1469 = scalar_lea.vmem %s5, 11
  %v1470 = vld [vmem:[%s1469] sm:$0x1]
  %v1471 = vpack.c.bf16 %v1458, %v1457
  %v1472 = vpack.c.bf16 %v1459, %v1459
  %v1474 = vsel %vm87, %v1472, 0
  %1476 = vmatpush.bf16.msra.mxu0 0
  %1477 = vmatpush.bf16.msra.mxu0 0
  %1478 = vmatpush.bf16.msra.mxu0 0
  %1479 = vmatpush.bf16.msra.mxu0 0
  %1480 = vmatpush.bf16.msra.mxu0 0
  %1481 = vmatpush.bf16.msra.mxu0 0
  %1482 = vmatpush.bf16.msra.mxu0 %v1474
  %1483 = vmatpush.bf16.msra.mxu0 %v1471
  %1484 = vmatmul.bf16.gmra.mxu0 %v82
  %v1485 = vpop.f32.mrf.mxu0
  %v1486 = vadd.f32 0.0, %v1485
  %v1487 = vpop.f32.mrf.mxu0
  %v1488 = vadd.f32 0.0, %v1487
  %1489 = vmatmul.bf16.gmra.mxu0 %v85
  %v1490 = vpop.f32.mrf.mxu0
  %v1491 = vadd.f32 0.0, %v1490
  %v1492 = vpop.f32.mrf.mxu0
  %1493 = vdwg.mxu0
  %1497 = vrot.lane.b32.xlu0 %v1457, 32
  %v1498 = vpop.permute.xlu0 %1497
  %1499 = vrot.lane.b32.xlu0 %v1458, 32
  %v1500 = vpop.permute.xlu0 %1499
  %1501 = vrot.lane.b32.xlu0 %v1459, 32
  %v1502 = vpop.permute.xlu0 %1501
  %v1506 = vsel %vm319, %v1486, %v1498
  %v1507 = vsel %vm319, %v1488, %v1500
  %v1508 = vsel %vm319, %v1491, %v1502
  %v1509 = vpack.c.bf16 %v1507, %v1506
  %v1510 = vpack.c.bf16 %v1508, %v1508
  %v1512 = vperm.slane %v1470, 0
  %v1522 = vunpack.c.l.b16 %v1461
  %v1523 = vunpack.c.l.b16 %v1462
  %v1524 = vunpack.c.l.b16 %v1463
  %v1525 = vunpack.c.l.b16 %v1464
  %v1526 = vunpack.c.l.b16 %v1465
  %v1527 = vunpack.c.l.b16 %v1466
  %v1528 = vunpack.c.l.b16 %v1467
  %v1529 = vunpack.c.l.b16 %v1468
  %v1530 = vpack.c.b16 %v1523, %v1522
  %v1531 = vpack.c.b16 %v1525, %v1524
  %v1532 = vpack.c.b16 %v1527, %v1526
  %v1533 = vpack.c.b16 %v1529, %v1528
  %v1539 = vsel %vm352, %v1509, 0
  %v1542 = vsel %vm352, %v1510, 0
  %1544 = vmatpush.bf16.msra.mxu0 0
  %1545 = vmatpush.bf16.msra.mxu0 0
  %1546 = vmatpush.bf16.msra.mxu0 0
  %1547 = vmatpush.bf16.msra.mxu0 0
  %1548 = vmatpush.bf16.msra.mxu0 %v1533
  %1549 = vmatpush.bf16.msra.mxu0 %v1532
  %1550 = vmatpush.bf16.msra.mxu0 %v1531
  %1551 = vmatpush.bf16.msra.mxu0 %v1530
  %1552 = vmatmul.bf16.gmra.mxu0 %v1539
  %v1553 = vpop.f32.mrf.mxu0
  %v1554 = vadd.f32 %v1512, %v1553
  %v1555 = vpop.f32.mrf.mxu0
  %v1556 = vadd.f32 %v1512, %v1555
  %1557 = vmatmul.bf16.gmra.mxu0 %v1542
  %v1558 = vpop.f32.mrf.mxu0
  %v1559 = vadd.f32 %v1512, %v1558
  %v1560 = vpop.f32.mrf.mxu0
  %1561 = vdwg.mxu0
  %v1562 = vmax.f32 %v1554, 0.0
  %v1563 = vmax.f32 %v1556, 0.0
  %v1564 = vmax.f32 %v1559, 0.0
  %v1565 = vadd.f32 %v1352, %v1562
  %v1566 = vadd.f32 %v1353, %v1563
  %v1567 = vadd.f32 %v1354, %v1564
  %v1568 = vmul.f32 %v1565, 0.5
  %v1569 = vmul.f32 %v1566, 0.5
  %v1570 = vmul.f32 %v1567, 0.5
  %v1571 = vld [vmem:[%s6] sm:$0xf]
  %v1572 = vld [vmem:[%s6 + $0x4] sm:$0xf]
  %v1573 = vld [vmem:[%s6 + $0x8] sm:$0xf]
  %v1574 = vld [vmem:[%s6 + $0xc] sm:$0xf]
  %v1575 = vld [vmem:[%s6 + $0x10] sm:$0xf]
  %v1576 = vld [vmem:[%s6 + $0x14] sm:$0xf]
  %v1577 = vld [vmem:[%s6 + $0x18] sm:$0xf]
  %v1578 = vld [vmem:[%s6 + $0x1c] sm:$0xf]
  %v1579 = vld [vmem:[%s7] sm:$0x1]
  %v1580 = vpack.c.bf16 %v1569, %v1568
  %v1581 = vpack.c.bf16 %v1570, %v1570
  %v1583 = vsel %vm87, %v1581, 0
  %1585 = vmatpush.bf16.msra.mxu0 0
  %1586 = vmatpush.bf16.msra.mxu0 0
  %1587 = vmatpush.bf16.msra.mxu0 0
  %1588 = vmatpush.bf16.msra.mxu0 0
  %1589 = vmatpush.bf16.msra.mxu0 0
  %1590 = vmatpush.bf16.msra.mxu0 0
  %1591 = vmatpush.bf16.msra.mxu0 %v1583
  %1592 = vmatpush.bf16.msra.mxu0 %v1580
  %1593 = vmatmul.bf16.gmra.mxu0 %v82
  %v1594 = vpop.f32.mrf.mxu0
  %v1595 = vadd.f32 0.0, %v1594
  %v1596 = vpop.f32.mrf.mxu0
  %v1597 = vadd.f32 0.0, %v1596
  %1598 = vmatmul.bf16.gmra.mxu0 %v85
  %v1599 = vpop.f32.mrf.mxu0
  %v1600 = vadd.f32 0.0, %v1599
  %v1601 = vpop.f32.mrf.mxu0
  %1602 = vdwg.mxu0
  %1606 = vrot.lane.b32.xlu0 %v1568, 32
  %v1607 = vpop.permute.xlu0 %1606
  %1608 = vrot.lane.b32.xlu0 %v1569, 32
  %v1609 = vpop.permute.xlu0 %1608
  %1610 = vrot.lane.b32.xlu0 %v1570, 32
  %v1611 = vpop.permute.xlu0 %1610
  %v1615 = vsel %vm319, %v1595, %v1607
  %v1616 = vsel %vm319, %v1597, %v1609
  %v1617 = vsel %vm319, %v1600, %v1611
  %v1618 = vpack.c.bf16 %v1616, %v1615
  %v1619 = vpack.c.bf16 %v1617, %v1617
  %v1621 = vperm.slane %v1579, 0
  %v1631 = vunpack.c.l.b16 %v1571
  %v1632 = vunpack.c.l.b16 %v1572
  %v1633 = vunpack.c.l.b16 %v1573
  %v1634 = vunpack.c.l.b16 %v1574
  %v1635 = vunpack.c.l.b16 %v1575
  %v1636 = vunpack.c.l.b16 %v1576
  %v1637 = vunpack.c.l.b16 %v1577
  %v1638 = vunpack.c.l.b16 %v1578
  %v1639 = vpack.c.b16 %v1632, %v1631
  %v1640 = vpack.c.b16 %v1634, %v1633
  %v1641 = vpack.c.b16 %v1636, %v1635
  %v1642 = vpack.c.b16 %v1638, %v1637
  %v1648 = vsel %vm352, %v1618, 0
  %v1651 = vsel %vm352, %v1619, 0
  %1653 = vmatpush.bf16.msra.mxu0 0
  %1654 = vmatpush.bf16.msra.mxu0 0
  %1655 = vmatpush.bf16.msra.mxu0 0
  %1656 = vmatpush.bf16.msra.mxu0 0
  %1657 = vmatpush.bf16.msra.mxu0 %v1642
  %1658 = vmatpush.bf16.msra.mxu0 %v1641
  %1659 = vmatpush.bf16.msra.mxu0 %v1640
  %1660 = vmatpush.bf16.msra.mxu0 %v1639
  %1661 = vmatmul.bf16.gmra.mxu0 %v1648
  %v1662 = vpop.f32.mrf.mxu0
  %v1663 = vadd.f32 %v1621, %v1662
  %v1664 = vpop.f32.mrf.mxu0
  %v1665 = vadd.f32 %v1621, %v1664
  %1666 = vmatmul.bf16.gmra.mxu0 %v1651
  %v1667 = vpop.f32.mrf.mxu0
  %v1668 = vadd.f32 %v1621, %v1667
  %v1669 = vpop.f32.mrf.mxu0
  %1670 = vdwg.mxu0
  %vm1671 = vcmask 23552
  %1672 = vst.msk [vmem:[%s8] sm:$0xff] %vm1671, %v1663
  %1673 = vst.msk [vmem:[%s8 + $0x8] sm:$0xff] %vm1671, %v1665
  %vm1674 = vcmask 19456
  %1675 = vst.msk [vmem:[%s8 + $0x10] sm:$0xf] %vm1674, %v1668
  %1676 = vst.msk [vmem:[%s9] sm:$0xff] %vm319, %v1568
  %1677 = vst.msk [vmem:[%s9 + $0x8] sm:$0xff] %vm319, %v1569
  %vm1678 = vcmask 257024
  %1679 = vst.msk [vmem:[%s9 + $0x10] sm:$0xf] %vm1678, %v1570
  // Predicated region
  $region34: #{reconstruction3d_forward.12} parent=0 // pred_check
    _
  $region35: #{reconstruction3d_forward.12} parent=0 // pred_check_branch
    %1681 = sbr.rel (0) target = $region37
  $region36: #{reconstruction3d_forward.12} parent=0 // pred_region
    _
  $region37: #{reconstruction3d_forward.12} parent=0 // pred_fallthru
    _
  // Predicated region
  $region38: #{reconstruction3d_forward.12} parent=0 // pred_check
    _
  $region39: #{reconstruction3d_forward.12} parent=0 // pred_check_branch
    %1683 = sbr.rel (0) target = $region41
  $region40: #{reconstruction3d_forward.12} parent=0 // pred_region
    _
  $region41: #{reconstruction3d_forward.12} parent=0 // pred_fallthru
    _
  // Predicated region
  $region42: #{reconstruction3d_forward.12} parent=0 // pred_check
    _
  $region43: #{reconstruction3d_forward.12} parent=0 // pred_check_branch
    %1685 = sbr.rel (0) target = $region45
  $region44: #{reconstruction3d_forward.12} parent=0 // pred_region
    _
  $region45: #{reconstruction3d_forward.12} parent=0 // pred_fallthru
    _
  // Predicated region
  $region46: #{reconstruction3d_forward.12} parent=0 // pred_check
    _
  $region47: #{reconstruction3d_forward.12} parent=0 // pred_check_branch
    %1687 = sbr.rel (0) target = $region49
  $region48: #{reconstruction3d_forward.12} parent=0 // pred_region
    _
  $region49: #{reconstruction3d_forward.12} parent=0 // pred_fallthru
    _

// kernel: reconstruction3d_forward.13
$region0: #{reconstruction3d_forward.13}
  #allocation0 [shape = 'u32[]', space=smem, size = 0x4, offset = 0x4, fixed_abs, tag = 'smem constant byte address 0x4 - core index']
  #allocation1 [shape = 'u32[72,128]{1,0:T(1,128)}', space=vmem, size = 0x9000, scoped, tag = 'internal scratch']
  %s0 = inlined_call_operand.vmem [shape: f32[32,155], index: 0, kind: input, shape index: {}]
  %s1 = inlined_call_operand.vmem [shape: bf16[32,32], index: 1, kind: input, shape index: {}]
  %s2 = inlined_call_operand.vmem [shape: bf16[310,32], index: 2, kind: input, shape index: {}]
  %s3 = inlined_call_operand.vmem [shape: f32[1,32], index: 3, kind: input, shape index: {}]
  %s4 = inlined_call_operand.vmem [shape: bf16[12,64,32], index: 4, kind: input, shape index: {}]
  %s5 = inlined_call_operand.vmem [shape: f32[12,1,32], index: 5, kind: input, shape index: {}]
  %s6 = inlined_call_operand.vmem [shape: bf16[64,3], index: 6, kind: input, shape index: {}]
  %s7 = inlined_call_operand.vmem [shape: f32[1,3], index: 7, kind: input, shape index: {}]
  %s8 = inlined_call_operand.vmem [shape: f32[32,3], index: 8, kind: output, shape index: {0}]
  %s9 = inlined_call_operand.vmem [shape: f32[32,32], index: 9, kind: output, shape index: {1}]
  %10 = xla_tuple %s8, %s9
  %s11 = sld [smem:[#allocation0]]
  $region50: #{reconstruction3d_forward.13} parent=0
    _
  %s13 = ssub.s32 1, %s11
  %s14 = scalar_select 0, %s13, %s11
  // Predicated region
  $region2: #{reconstruction3d_forward.13} parent=0 // pred_check
    _
  $region3: #{reconstruction3d_forward.13} parent=0 // pred_check_branch
    %16 = sbr.rel (0) target = $region5
  $region4: #{reconstruction3d_forward.13} parent=0 // pred_region
    _
  $region5: #{reconstruction3d_forward.13} parent=0 // pred_fallthru
    _
  // Predicated region
  $region6: #{reconstruction3d_forward.13} parent=0 // pred_check
    _
  $region7: #{reconstruction3d_forward.13} parent=0 // pred_check_branch
    %18 = sbr.rel (0) target = $region9
  $region8: #{reconstruction3d_forward.13} parent=0 // pred_region
    _
  $region9: #{reconstruction3d_forward.13} parent=0 // pred_fallthru
    _
  // Predicated region
  $region10: #{reconstruction3d_forward.13} parent=0 // pred_check
    _
  $region11: #{reconstruction3d_forward.13} parent=0 // pred_check_branch
    %20 = sbr.rel (0) target = $region13
  $region12: #{reconstruction3d_forward.13} parent=0 // pred_region
    _
  $region13: #{reconstruction3d_forward.13} parent=0 // pred_fallthru
    _
  // Predicated region
  $region14: #{reconstruction3d_forward.13} parent=0 // pred_check
    _
  $region15: #{reconstruction3d_forward.13} parent=0 // pred_check_branch
    %22 = sbr.rel (0) target = $region17
  $region16: #{reconstruction3d_forward.13} parent=0 // pred_region
    _
  $region17: #{reconstruction3d_forward.13} parent=0 // pred_fallthru
    _
  // Predicated region
  $region18: #{reconstruction3d_forward.13} parent=0 // pred_check
    _
  $region19: #{reconstruction3d_forward.13} parent=0 // pred_check_branch
    %24 = sbr.rel (0) target = $region21
  $region20: #{reconstruction3d_forward.13} parent=0 // pred_region
    _
  $region21: #{reconstruction3d_forward.13} parent=0 // pred_fallthru
    _
  // Predicated region
  $region22: #{reconstruction3d_forward.13} parent=0 // pred_check
    _
  $region23: #{reconstruction3d_forward.13} parent=0 // pred_check_branch
    %26 = sbr.rel (0) target = $region25
  $region24: #{reconstruction3d_forward.13} parent=0 // pred_region
    _
  $region25: #{reconstruction3d_forward.13} parent=0 // pred_fallthru
    _
  // Predicated region
  $region26: #{reconstruction3d_forward.13} parent=0 // pred_check
    _
  $region27: #{reconstruction3d_forward.13} parent=0 // pred_check_branch
    %28 = sbr.rel (0) target = $region29
  $region28: #{reconstruction3d_forward.13} parent=0 // pred_region
    _
  $region29: #{reconstruction3d_forward.13} parent=0 // pred_fallthru
    _
  // Predicated region
  $region30: #{reconstruction3d_forward.13} parent=0 // pred_check
    _
  $region31: #{reconstruction3d_forward.13} parent=0 // pred_check_branch
    %30 = sbr.rel (0) target = $region33
  $region32: #{reconstruction3d_forward.13} parent=0 // pred_region
    _
  $region33: #{reconstruction3d_forward.13} parent=0 // pred_fallthru
    _
  %v32 = vld [vmem:[%s1] sm:$0xf]
  %v33 = vld [vmem:[%s1 + $0x4] sm:$0xf]
  %v34 = vld [vmem:[%s1 + $0x8] sm:$0xf]
  %v35 = vld [vmem:[%s1 + $0xc] sm:$0xf]
  %v36 = vld [vmem:[%s0] sm:$0xff]
  %v37 = vld [vmem:[%s0 + $0x8] sm:$0xff]
  %v38 = vld [vmem:[%s0 + $0x10] sm:$0xff]
  %v39 = vld [vmem:[%s0 + $0x18] sm:$0xff]
  %v40 = vld [vmem:[%s0 + $0x20] sm:$0xff]
  %v41 = vld [vmem:[%s0 + $0x28] sm:$0xff]
  %v42 = vld [vmem:[%s0 + $0x30] sm:$0xff]
  %v43 = vld [vmem:[%s0 + $0x38] sm:$0xff]
  %v44 = vld [vmem:[%s2] sm:$0xf]
  %v45 = vld [vmem:[%s2 + $0x4] sm:$0xf]
  %v46 = vld [vmem:[%s2 + $0x8] sm:$0xf]
  %v47 = vld [vmem:[%s2 + $0xc] sm:$0xf]
  %v48 = vld [vmem:[%s2 + $0x10] sm:$0xf]
  %v49 = vld [vmem:[%s2 + $0x14] sm:$0xf]
  %v50 = vld [vmem:[%s2 + $0x18] sm:$0xf]
  %v51 = vld [vmem:[%s2 + $0x1c] sm:$0xf]
  %v52 = vld [vmem:[%s2 + $0x20] sm:$0xf]
  %v53 = vld [vmem:[%s2 + $0x24] sm:$0xf]
  %v54 = vld [vmem:[%s2 + $0x28] sm:$0xf]
  %v55 = vld [vmem:[%s2 + $0x2c] sm:$0xf]
  %v56 = vld [vmem:[%s2 + $0x30] sm:$0xf]
  %v57 = vld [vmem:[%s2 + $0x34] sm:$0xf]
  %v58 = vld [vmem:[%s2 + $0x38] sm:$0xf]
  %v59 = vld [vmem:[%s2 + $0x3c] sm:$0xf]
  %v60 = vld [vmem:[%s2 + $0x40] sm:$0xf]
  %v61 = vld [vmem:[%s2 + $0x44] sm:$0xf]
  %v62 = vld [vmem:[%s2 + $0x48] sm:$0xf]
  %v63 = vld [vmem:[%s2 + $0x4c] sm:$0xf]
  %v64 = vld [vmem:[%s2 + $0x50] sm:$0xf]
  %v65 = vld [vmem:[%s2 + $0x54] sm:$0xf]
  %v66 = vld [vmem:[%s2 + $0x58] sm:$0xf]
  %v67 = vld [vmem:[%s2 + $0x5c] sm:$0xf]
  %v68 = vld [vmem:[%s2 + $0x60] sm:$0xf]
  %v69 = vld [vmem:[%s2 + $0x64] sm:$0xf]
  %v70 = vld [vmem:[%s2 + $0x68] sm:$0xf]
  %v71 = vld [vmem:[%s2 + $0x6c] sm:$0xf]
  %v72 = vld [vmem:[%s2 + $0x70] sm:$0xf]
  %v73 = vld [vmem:[%s2 + $0x74] sm:$0xf]
  %v74 = vld [vmem:[%s2 + $0x78] sm:$0xf]
  %v75 = vld [vmem:[%s2 + $0x7c] sm:$0xf]
  %v76 = vld [vmem:[%s2 + $0x80] sm:$0xf]
  %v77 = vld [vmem:[%s2 + $0x84] sm:$0xf]
  %v78 = vld [vmem:[%s2 + $0x88] sm:$0xf]
  %v79 = vld [vmem:[%s2 + $0x8c] sm:$0xf]
  %v80 = vld [vmem:[%s2 + $0x90] sm:$0xf]
  %v81 = vld [vmem:[%s2 + $0x94] sm:$0xf]
  %v82 = vld [vmem:[%s2 + $0x98] sm:$0x7]
  %v83 = vld [vmem:[%s3] sm:$0x1]
  %v84 = vpack.c.bf16 %v38, %v36
  %v85 = vpack.c.bf16 %v39, %v37
  %v86 = vpack.c.bf16 %v42, %v40
  %v87 = vpack.c.bf16 %v43, %v41
  %v92 = vunpack.c.l.b16 %v32
  %v93 = vunpack.c.l.b16 %v33
  %v94 = vunpack.c.l.b16 %v34
  %v95 = vunpack.c.l.b16 %v35
  %v96 = vpack.c.b16 %v93, %v92
  %v97 = vpack.c.b16 %v95, %v94
  %vm98 = vcmask 261120
  %v100 = vsel %vm98, %v96, 0
  %v103 = vsel %vm98, %v97, 0
  %105 = vmatpush.bf16.msra.mxu0 0
  %106 = vmatpush.bf16.msra.mxu0 0
  %107 = vmatpush.bf16.msra.mxu0 0
  %108 = vmatpush.bf16.msra.mxu0 0
  %109 = vmatpush.bf16.msra.mxu0 0
  %110 = vmatpush.bf16.msra.mxu0 0
  %111 = vmatpush.bf16.msra.mxu0 %v86
  %112 = vmatpush.bf16.msra.mxu0 %v84
  %113 = vmatmul.bf16.gmra.mxu0 %v100
  %v114 = vpop.f32.mrf.mxu0
  %v115 = vadd.f32 0.0, %v114
  %v116 = vpop.f32.mrf.mxu0
  %v117 = vadd.f32 0.0, %v116
  %118 = vmatmul.bf16.gmra.mxu0 %v103
  %v119 = vpop.f32.mrf.mxu0
  %v120 = vadd.f32 0.0, %v119
  %v121 = vpop.f32.mrf.mxu0
  %v122 = vadd.f32 0.0, %v121
  %123 = vdwg.mxu0
  %124 = vmatpush.bf16.msra.mxu0 0
  %125 = vmatpush.bf16.msra.mxu0 0
  %126 = vmatpush.bf16.msra.mxu0 0
  %127 = vmatpush.bf16.msra.mxu0 0
  %128 = vmatpush.bf16.msra.mxu0 0
  %129 = vmatpush.bf16.msra.mxu0 0
  %130 = vmatpush.bf16.msra.mxu0 %v87
  %131 = vmatpush.bf16.msra.mxu0 %v85
  %132 = vmatmul.bf16.gmra.mxu0 %v100
  %v133 = vpop.f32.mrf.mxu0
  %v134 = vadd.f32 0.0, %v133
  %v135 = vpop.f32.mrf.mxu0
  %v136 = vadd.f32 0.0, %v135
  %137 = vmatmul.bf16.gmra.mxu0 %v103
  %v138 = vpop.f32.mrf.mxu0
  %v139 = vadd.f32 0.0, %v138
  %v140 = vpop.f32.mrf.mxu0
  %v141 = vadd.f32 0.0, %v140
  %142 = vdwg.mxu0
  %151 = vrot.lane.b32.xlu0 %v36, 27
  %v152 = vpop.permute.xlu0 %151
  %153 = vrot.lane.b32.xlu0 %v37, 27
  %v154 = vpop.permute.xlu0 %153
  %155 = vrot.lane.b32.xlu0 %v38, 27
  %v156 = vpop.permute.xlu0 %155
  %157 = vrot.lane.b32.xlu0 %v39, 27
  %v158 = vpop.permute.xlu0 %157
  %159 = vrot.lane.b32.xlu0 %v40, 27
  %v160 = vpop.permute.xlu0 %159
  %161 = vrot.lane.b32.xlu0 %v41, 27
  %v162 = vpop.permute.xlu0 %161
  %163 = vrot.lane.b32.xlu0 %v42, 27
  %v164 = vpop.permute.xlu0 %163
  %165 = vrot.lane.b32.xlu0 %v43, 27
  %v166 = vpop.permute.xlu0 %165
  %vm167 = vcmask 220160
  %v168 = vsel %vm167, %v152, %v154
  %v169 = vsel %vm167, %v156, %v158
  %v170 = vsel %vm167, %v160, %v162
  %v171 = vsel %vm167, %v164, %v166
  %v180 = vsel %vm167, %v134, %v152
  %v181 = vsel %vm167, %v136, %v156
  %v182 = vsel %vm167, %v139, %v160
  %v183 = vsel %vm167, %v141, %v164
  %v184 = vpack.c.bf16 %v117, %v115
  %v185 = vpack.c.bf16 %v181, %v180
  %v186 = vpack.c.bf16 %v169, %v168
  %v187 = vpack.c.bf16 %v122, %v120
  %v188 = vpack.c.bf16 %v183, %v182
  %v189 = vpack.c.bf16 %v171, %v170
  %v191 = vperm.slane %v83, 0
  %v232 = vunpack.c.l.b16 %v44
  %v233 = vunpack.c.l.b16 %v45
  %v234 = vunpack.c.l.b16 %v46
  %v235 = vunpack.c.l.b16 %v47
  %v236 = vunpack.c.l.b16 %v48
  %v237 = vunpack.c.l.b16 %v49
  %v238 = vunpack.c.l.b16 %v50
  %v239 = vunpack.c.l.b16 %v51
  %v240 = vunpack.c.l.b16 %v52
  %v241 = vunpack.c.l.b16 %v53
  %v242 = vunpack.c.l.b16 %v54
  %v243 = vunpack.c.l.b16 %v55
  %v244 = vunpack.c.l.b16 %v56
  %v245 = vunpack.c.l.b16 %v57
  %v246 = vunpack.c.l.b16 %v58
  %v247 = vunpack.c.l.b16 %v59
  %v248 = vunpack.c.l.b16 %v60
  %v249 = vunpack.c.l.b16 %v61
  %v250 = vunpack.c.l.b16 %v62
  %v251 = vunpack.c.l.b16 %v63
  %v252 = vunpack.c.l.b16 %v64
  %v253 = vunpack.c.l.b16 %v65
  %v254 = vunpack.c.l.b16 %v66
  %v255 = vunpack.c.l.b16 %v67
  %v256 = vunpack.c.l.b16 %v68
  %v257 = vunpack.c.l.b16 %v69
  %v258 = vunpack.c.l.b16 %v70
  %v259 = vunpack.c.l.b16 %v71
  %v260 = vunpack.c.l.b16 %v72
  %v261 = vunpack.c.l.b16 %v73
  %v262 = vunpack.c.l.b16 %v74
  %v263 = vunpack.c.l.b16 %v75
  %v264 = vunpack.c.l.b16 %v76
  %v265 = vunpack.c.l.b16 %v77
  %v266 = vunpack.c.l.b16 %v78
  %v267 = vunpack.c.l.b16 %v79
  %v268 = vunpack.c.l.b16 %v80
  %v269 = vunpack.c.l.b16 %v81
  %v270 = vunpack.c.l.b16 %v82
  %v271 = vpack.c.b16 %v233, %v232
  %v272 = vpack.c.b16 %v235, %v234
  %v273 = vpack.c.b16 %v237, %v236
  %v274 = vpack.c.b16 %v239, %v238
  %v275 = vpack.c.b16 %v241, %v240
  %v276 = vpack.c.b16 %v243, %v242
  %v277 = vpack.c.b16 %v245, %v244
  %v278 = vpack.c.b16 %v247, %v246
  %v279 = vpack.c.b16 %v249, %v248
  %v280 = vpack.c.b16 %v251, %v250
  %v281 = vpack.c.b16 %v253, %v252
  %v282 = vpack.c.b16 %v255, %v254
  %v283 = vpack.c.b16 %v257, %v256
  %v284 = vpack.c.b16 %v259, %v258
  %v285 = vpack.c.b16 %v261, %v260
  %v286 = vpack.c.b16 %v263, %v262
  %v287 = vpack.c.b16 %v265, %v264
  %v288 = vpack.c.b16 %v267, %v266
  %v289 = vpack.c.b16 %v269, %v268
  %v290 = vpack.c.b16 %v270, %v270
  %vm310 = vcmask 441344
  %v312 = vsel %vm310, %v186, 0
  %v315 = vsel %vm310, %v189, 0
  %vm317 = vcmask 1042432
  %v319 = vsel %vm317, %v290, 0
  %321 = vmatpush.bf16.msra.mxu0 %v278
  %322 = vmatpush.bf16.msra.mxu0 %v277
  %323 = vmatpush.bf16.msra.mxu0 %v276
  %324 = vmatpush.bf16.msra.mxu0 %v275
  %325 = vmatpush.bf16.msra.mxu0 %v274
  %326 = vmatpush.bf16.msra.mxu0 %v273
  %327 = vmatpush.bf16.msra.mxu0 %v272
  %328 = vmatpush.bf16.msra.mxu0 %v271
  %329 = vmatmul.bf16.gmra.mxu0 %v184
  %v330 = vpop.f32.mrf.mxu0
  %v331 = vadd.f32 %v191, %v330
  %v332 = vpop.f32.mrf.mxu0
  %v333 = vadd.f32 %v191, %v332
  %334 = vmatmul.bf16.gmra.mxu0 %v187
  %v335 = vpop.f32.mrf.mxu0
  %v336 = vadd.f32 %v191, %v335
  %v337 = vpop.f32.mrf.mxu0
  %v338 = vadd.f32 %v191, %v337
  %339 = vdwg.mxu0
  %340 = vmatpush.bf16.msra.mxu0 %v286
  %341 = vmatpush.bf16.msra.mxu0 %v285
  %342 = vmatpush.bf16.msra.mxu0 %v284
  %343 = vmatpush.bf16.msra.mxu0 %v283
  %344 = vmatpush.bf16.msra.mxu0 %v282
  %345 = vmatpush.bf16.msra.mxu0 %v281
  %346 = vmatpush.bf16.msra.mxu0 %v280
  %347 = vmatpush.bf16.msra.mxu0 %v279
  %348 = vmatmul.bf16.gmra.mxu0 %v185
  %v349 = vpop.f32.mrf.mxu0
  %v350 = vadd.f32 %v331, %v349
  %v351 = vpop.f32.mrf.mxu0
  %v352 = vadd.f32 %v333, %v351
  %353 = vmatmul.bf16.gmra.mxu0 %v188
  %v354 = vpop.f32.mrf.mxu0
  %v355 = vadd.f32 %v336, %v354
  %v356 = vpop.f32.mrf.mxu0
  %v357 = vadd.f32 %v338, %v356
  %358 = vdwg.mxu0
  %359 = vmatpush.bf16.msra.mxu0 0
  %360 = vmatpush.bf16.msra.mxu0 0
  %361 = vmatpush.bf16.msra.mxu0 0
  %362 = vmatpush.bf16.msra.mxu0 0
  %363 = vmatpush.bf16.msra.mxu0 %v319
  %364 = vmatpush.bf16.msra.mxu0 %v289
  %365 = vmatpush.bf16.msra.mxu0 %v288
  %366 = vmatpush.bf16.msra.mxu0 %v287
  %367 = vmatmul.bf16.gmra.mxu0 %v312
  %v368 = vpop.f32.mrf.mxu0
  %v369 = vadd.f32 %v350, %v368
  %v370 = vpop.f32.mrf.mxu0
  %v371 = vadd.f32 %v352, %v370
  %372 = vmatmul.bf16.gmra.mxu0 %v315
  %v373 = vpop.f32.mrf.mxu0
  %v374 = vadd.f32 %v355, %v373
  %v375 = vpop.f32.mrf.mxu0
  %v376 = vadd.f32 %v357, %v375
  %377 = vdwg.mxu0
  %v378 = vmax.f32 %v369, 0.0
  %v379 = vmax.f32 %v371, 0.0
  %v380 = vmax.f32 %v374, 0.0
  %v381 = vmax.f32 %v376, 0.0
  %v382 = vld [vmem:[%s4] sm:$0xf]
  %v383 = vld [vmem:[%s4 + $0x4] sm:$0xf]
  %v384 = vld [vmem:[%s4 + $0x8] sm:$0xf]
  %v385 = vld [vmem:[%s4 + $0xc] sm:$0xf]
  %v386 = vld [vmem:[%s4 + $0x10] sm:$0xf]
  %v387 = vld [vmem:[%s4 + $0x14] sm:$0xf]
  %v388 = vld [vmem:[%s4 + $0x18] sm:$0xf]
  %v389 = vld [vmem:[%s4 + $0x1c] sm:$0xf]
  %v390 = vld [vmem:[%s5] sm:$0x1]
  %v391 = vpack.c.bf16 %v379, %v378
  %v392 = vpack.c.bf16 %v381, %v380
  %393 = vmatpush.bf16.msra.mxu0 0
  %394 = vmatpush.bf16.msra.mxu0 0
  %395 = vmatpush.bf16.msra.mxu0 0
  %396 = vmatpush.bf16.msra.mxu0 0
  %397 = vmatpush.bf16.msra.mxu0 0
  %398 = vmatpush.bf16.msra.mxu0 0
  %399 = vmatpush.bf16.msra.mxu0 %v392
  %400 = vmatpush.bf16.msra.mxu0 %v391
  %401 = vmatmul.bf16.gmra.mxu0 %v100
  %v402 = vpop.f32.mrf.mxu0
  %v403 = vadd.f32 0.0, %v402
  %v404 = vpop.f32.mrf.mxu0
  %v405 = vadd.f32 0.0, %v404
  %406 = vmatmul.bf16.gmra.mxu0 %v103
  %v407 = vpop.f32.mrf.mxu0
  %v408 = vadd.f32 0.0, %v407
  %v409 = vpop.f32.mrf.mxu0
  %v410 = vadd.f32 0.0, %v409
  %411 = vdwg.mxu0
  %416 = vrot.lane.b32.xlu0 %v378, 32
  %v417 = vpop.permute.xlu0 %416
  %418 = vrot.lane.b32.xlu0 %v379, 32
  %v419 = vpop.permute.xlu0 %418
  %420 = vrot.lane.b32.xlu0 %v380, 32
  %v421 = vpop.permute.xlu0 %420
  %422 = vrot.lane.b32.xlu0 %v381, 32
  %v423 = vpop.permute.xlu0 %422
  %v428 = vsel %vm98, %v403, %v417
  %v429 = vsel %vm98, %v405, %v419
  %v430 = vsel %vm98, %v408, %v421
  %v431 = vsel %vm98, %v410, %v423
  %v432 = vpack.c.bf16 %v429, %v428
  %v433 = vpack.c.bf16 %v431, %v430
  %v435 = vperm.slane %v390, 0
  %v445 = vunpack.c.l.b16 %v382
  %v446 = vunpack.c.l.b16 %v383
  %v447 = vunpack.c.l.b16 %v384
  %v448 = vunpack.c.l.b16 %v385
  %v449 = vunpack.c.l.b16 %v386
  %v450 = vunpack.c.l.b16 %v387
  %v451 = vunpack.c.l.b16 %v388
  %v452 = vunpack.c.l.b16 %v389
  %v453 = vpack.c.b16 %v446, %v445
  %v454 = vpack.c.b16 %v448, %v447
  %v455 = vpack.c.b16 %v450, %v449
  %v456 = vpack.c.b16 %v452, %v451
  %vm461 = vcmask 523264
  %v463 = vsel %vm461, %v432, 0
  %v466 = vsel %vm461, %v433, 0
  %468 = vmatpush.bf16.msra.mxu0 0
  %469 = vmatpush.bf16.msra.mxu0 0
  %470 = vmatpush.bf16.msra.mxu0 0
  %471 = vmatpush.bf16.msra.mxu0 0
  %472 = vmatpush.bf16.msra.mxu0 %v456
  %473 = vmatpush.bf16.msra.mxu0 %v455
  %474 = vmatpush.bf16.msra.mxu0 %v454
  %475 = vmatpush.bf16.msra.mxu0 %v453
  %476 = vmatmul.bf16.gmra.mxu0 %v463
  %v477 = vpop.f32.mrf.mxu0
  %v478 = vadd.f32 %v435, %v477
  %v479 = vpop.f32.mrf.mxu0
  %v480 = vadd.f32 %v435, %v479
  %481 = vmatmul.bf16.gmra.mxu0 %v466
  %v482 = vpop.f32.mrf.mxu0
  %v483 = vadd.f32 %v435, %v482
  %v484 = vpop.f32.mrf.mxu0
  %v485 = vadd.f32 %v435, %v484
  %486 = vdwg.mxu0
  %v487 = vmax.f32 %v478, 0.0
  %v488 = vmax.f32 %v480, 0.0
  %v489 = vmax.f32 %v483, 0.0
  %v490 = vmax.f32 %v485, 0.0
  %s491 = scalar_lea.vmem %s4, 32
  %v492 = vld [vmem:[%s491] sm:$0xf]
  %v493 = vld [vmem:[%s491 + $0x4] sm:$0xf]
  %v494 = vld [vmem:[%s491 + $0x8] sm:$0xf]
  %v495 = vld [vmem:[%s491 + $0xc] sm:$0xf]
  %v496 = vld [vmem:[%s491 + $0x10] sm:$0xf]
  %v497 = vld [vmem:[%s491 + $0x14] sm:$0xf]
  %v498 = vld [vmem:[%s491 + $0x18] sm:$0xf]
  %v499 = vld [vmem:[%s491 + $0x1c] sm:$0xf]
  %s500 = scalar_lea.vmem %s5, 1
  %v501 = vld [vmem:[%s500] sm:$0x1]
  %v502 = vpack.c.bf16 %v488, %v487
  %v503 = vpack.c.bf16 %v490, %v489
  %504 = vmatpush.bf16.msra.mxu0 0
  %505 = vmatpush.bf16.msra.mxu0 0
  %506 = vmatpush.bf16.msra.mxu0 0
  %507 = vmatpush.bf16.msra.mxu0 0
  %508 = vmatpush.bf16.msra.mxu0 0
  %509 = vmatpush.bf16.msra.mxu0 0
  %510 = vmatpush.bf16.msra.mxu0 %v503
  %511 = vmatpush.bf16.msra.mxu0 %v502
  %512 = vmatmul.bf16.gmra.mxu0 %v100
  %v513 = vpop.f32.mrf.mxu0
  %v514 = vadd.f32 0.0, %v513
  %v515 = vpop.f32.mrf.mxu0
  %v516 = vadd.f32 0.0, %v515
  %517 = vmatmul.bf16.gmra.mxu0 %v103
  %v518 = vpop.f32.mrf.mxu0
  %v519 = vadd.f32 0.0, %v518
  %v520 = vpop.f32.mrf.mxu0
  %v521 = vadd.f32 0.0, %v520
  %522 = vdwg.mxu0
  %527 = vrot.lane.b32.xlu0 %v487, 32
  %v528 = vpop.permute.xlu0 %527
  %529 = vrot.lane.b32.xlu0 %v488, 32
  %v530 = vpop.permute.xlu0 %529
  %531 = vrot.lane.b32.xlu0 %v489, 32
  %v532 = vpop.permute.xlu0 %531
  %533 = vrot.lane.b32.xlu0 %v490, 32
  %v534 = vpop.permute.xlu0 %533
  %v539 = vsel %vm98, %v514, %v528
  %v540 = vsel %vm98, %v516, %v530
  %v541 = vsel %vm98, %v519, %v532
  %v542 = vsel %vm98, %v521, %v534
  %v543 = vpack.c.bf16 %v540, %v539
  %v544 = vpack.c.bf16 %v542, %v541
  %v546 = vperm.slane %v501, 0
  %v556 = vunpack.c.l.b16 %v492
  %v557 = vunpack.c.l.b16 %v493
  %v558 = vunpack.c.l.b16 %v494
  %v559 = vunpack.c.l.b16 %v495
  %v560 = vunpack.c.l.b16 %v496
  %v561 = vunpack.c.l.b16 %v497
  %v562 = vunpack.c.l.b16 %v498
  %v563 = vunpack.c.l.b16 %v499
  %v564 = vpack.c.b16 %v557, %v556
  %v565 = vpack.c.b16 %v559, %v558
  %v566 = vpack.c.b16 %v561, %v560
  %v567 = vpack.c.b16 %v563, %v562
  %v573 = vsel %vm461, %v543, 0
  %v576 = vsel %vm461, %v544, 0
  %578 = vmatpush.bf16.msra.mxu0 0
  %579 = vmatpush.bf16.msra.mxu0 0
  %580 = vmatpush.bf16.msra.mxu0 0
  %581 = vmatpush.bf16.msra.mxu0 0
  %582 = vmatpush.bf16.msra.mxu0 %v567
  %583 = vmatpush.bf16.msra.mxu0 %v566
  %584 = vmatpush.bf16.msra.mxu0 %v565
  %585 = vmatpush.bf16.msra.mxu0 %v564
  %586 = vmatmul.bf16.gmra.mxu0 %v573
  %v587 = vpop.f32.mrf.mxu0
  %v588 = vadd.f32 %v546, %v587
  %v589 = vpop.f32.mrf.mxu0
  %v590 = vadd.f32 %v546, %v589
  %591 = vmatmul.bf16.gmra.mxu0 %v576
  %v592 = vpop.f32.mrf.mxu0
  %v593 = vadd.f32 %v546, %v592
  %v594 = vpop.f32.mrf.mxu0
  %v595 = vadd.f32 %v546, %v594
  %596 = vdwg.mxu0
  %v597 = vmax.f32 %v588, 0.0
  %v598 = vmax.f32 %v590, 0.0
  %v599 = vmax.f32 %v593, 0.0
  %v600 = vmax.f32 %v595, 0.0
  %v601 = vadd.f32 %v378, %v597
  %v602 = vadd.f32 %v379, %v598
  %v603 = vadd.f32 %v380, %v599
  %v604 = vadd.f32 %v381, %v600
  %v605 = vmul.f32 %v601, 0.5
  %v606 = vmul.f32 %v602, 0.5
  %v607 = vmul.f32 %v603, 0.5
  %v608 = vmul.f32 %v604, 0.5
  %s609 = scalar_lea.vmem %s4, 64
  %v610 = vld [vmem:[%s609] sm:$0xf]
  %v611 = vld [vmem:[%s609 + $0x4] sm:$0xf]
  %v612 = vld [vmem:[%s609 + $0x8] sm:$0xf]
  %v613 = vld [vmem:[%s609 + $0xc] sm:$0xf]
  %v614 = vld [vmem:[%s609 + $0x10] sm:$0xf]
  %v615 = vld [vmem:[%s609 + $0x14] sm:$0xf]
  %v616 = vld [vmem:[%s609 + $0x18] sm:$0xf]
  %v617 = vld [vmem:[%s609 + $0x1c] sm:$0xf]
  %s618 = scalar_lea.vmem %s5, 2
  %v619 = vld [vmem:[%s618] sm:$0x1]
  %v620 = vpack.c.bf16 %v606, %v605
  %v621 = vpack.c.bf16 %v608, %v607
  %622 = vmatpush.bf16.msra.mxu0 0
  %623 = vmatpush.bf16.msra.mxu0 0
  %624 = vmatpush.bf16.msra.mxu0 0
  %625 = vmatpush.bf16.msra.mxu0 0
  %626 = vmatpush.bf16.msra.mxu0 0
  %627 = vmatpush.bf16.msra.mxu0 0
  %628 = vmatpush.bf16.msra.mxu0 %v621
  %629 = vmatpush.bf16.msra.mxu0 %v620
  %630 = vmatmul.bf16.gmra.mxu0 %v100
  %v631 = vpop.f32.mrf.mxu0
  %v632 = vadd.f32 0.0, %v631
  %v633 = vpop.f32.mrf.mxu0
  %v634 = vadd.f32 0.0, %v633
  %635 = vmatmul.bf16.gmra.mxu0 %v103
  %v636 = vpop.f32.mrf.mxu0
  %v637 = vadd.f32 0.0, %v636
  %v638 = vpop.f32.mrf.mxu0
  %v639 = vadd.f32 0.0, %v638
  %640 = vdwg.mxu0
  %645 = vrot.lane.b32.xlu0 %v605, 32
  %v646 = vpop.permute.xlu0 %645
  %647 = vrot.lane.b32.xlu0 %v606, 32
  %v648 = vpop.permute.xlu0 %647
  %649 = vrot.lane.b32.xlu0 %v607, 32
  %v650 = vpop.permute.xlu0 %649
  %651 = vrot.lane.b32.xlu0 %v608, 32
  %v652 = vpop.permute.xlu0 %651
  %v657 = vsel %vm98, %v632, %v646
  %v658 = vsel %vm98, %v634, %v648
  %v659 = vsel %vm98, %v637, %v650
  %v660 = vsel %vm98, %v639, %v652
  %v661 = vpack.c.bf16 %v658, %v657
  %v662 = vpack.c.bf16 %v660, %v659
  %v664 = vperm.slane %v619, 0
  %v674 = vunpack.c.l.b16 %v610
  %v675 = vunpack.c.l.b16 %v611
  %v676 = vunpack.c.l.b16 %v612
  %v677 = vunpack.c.l.b16 %v613
  %v678 = vunpack.c.l.b16 %v614
  %v679 = vunpack.c.l.b16 %v615
  %v680 = vunpack.c.l.b16 %v616
  %v681 = vunpack.c.l.b16 %v617
  %v682 = vpack.c.b16 %v675, %v674
  %v683 = vpack.c.b16 %v677, %v676
  %v684 = vpack.c.b16 %v679, %v678
  %v685 = vpack.c.b16 %v681, %v680
  %v691 = vsel %vm461, %v661, 0
  %v694 = vsel %vm461, %v662, 0
  %696 = vmatpush.bf16.msra.mxu0 0
  %697 = vmatpush.bf16.msra.mxu0 0
  %698 = vmatpush.bf16.msra.mxu0 0
  %699 = vmatpush.bf16.msra.mxu0 0
  %700 = vmatpush.bf16.msra.mxu0 %v685
  %701 = vmatpush.bf16.msra.mxu0 %v684
  %702 = vmatpush.bf16.msra.mxu0 %v683
  %703 = vmatpush.bf16.msra.mxu0 %v682
  %704 = vmatmul.bf16.gmra.mxu0 %v691
  %v705 = vpop.f32.mrf.mxu0
  %v706 = vadd.f32 %v664, %v705
  %v707 = vpop.f32.mrf.mxu0
  %v708 = vadd.f32 %v664, %v707
  %709 = vmatmul.bf16.gmra.mxu0 %v694
  %v710 = vpop.f32.mrf.mxu0
  %v711 = vadd.f32 %v664, %v710
  %v712 = vpop.f32.mrf.mxu0
  %v713 = vadd.f32 %v664, %v712
  %714 = vdwg.mxu0
  %v715 = vmax.f32 %v706, 0.0
  %v716 = vmax.f32 %v708, 0.0
  %v717 = vmax.f32 %v711, 0.0
  %v718 = vmax.f32 %v713, 0.0
  %s719 = scalar_lea.vmem %s4, 96
  %v720 = vld [vmem:[%s719] sm:$0xf]
  %v721 = vld [vmem:[%s719 + $0x4] sm:$0xf]
  %v722 = vld [vmem:[%s719 + $0x8] sm:$0xf]
  %v723 = vld [vmem:[%s719 + $0xc] sm:$0xf]
  %v724 = vld [vmem:[%s719 + $0x10] sm:$0xf]
  %v725 = vld [vmem:[%s719 + $0x14] sm:$0xf]
  %v726 = vld [vmem:[%s719 + $0x18] sm:$0xf]
  %v727 = vld [vmem:[%s719 + $0x1c] sm:$0xf]
  %s728 = scalar_lea.vmem %s5, 3
  %v729 = vld [vmem:[%s728] sm:$0x1]
  %v730 = vpack.c.bf16 %v716, %v715
  %v731 = vpack.c.bf16 %v718, %v717
  %732 = vmatpush.bf16.msra.mxu0 0
  %733 = vmatpush.bf16.msra.mxu0 0
  %734 = vmatpush.bf16.msra.mxu0 0
  %735 = vmatpush.bf16.msra.mxu0 0
  %736 = vmatpush.bf16.msra.mxu0 0
  %737 = vmatpush.bf16.msra.mxu0 0
  %738 = vmatpush.bf16.msra.mxu0 %v731
  %739 = vmatpush.bf16.msra.mxu0 %v730
  %740 = vmatmul.bf16.gmra.mxu0 %v100
  %v741 = vpop.f32.mrf.mxu0
  %v742 = vadd.f32 0.0, %v741
  %v743 = vpop.f32.mrf.mxu0
  %v744 = vadd.f32 0.0, %v743
  %745 = vmatmul.bf16.gmra.mxu0 %v103
  %v746 = vpop.f32.mrf.mxu0
  %v747 = vadd.f32 0.0, %v746
  %v748 = vpop.f32.mrf.mxu0
  %v749 = vadd.f32 0.0, %v748
  %750 = vdwg.mxu0
  %755 = vrot.lane.b32.xlu0 %v715, 32
  %v756 = vpop.permute.xlu0 %755
  %757 = vrot.lane.b32.xlu0 %v716, 32
  %v758 = vpop.permute.xlu0 %757
  %759 = vrot.lane.b32.xlu0 %v717, 32
  %v760 = vpop.permute.xlu0 %759
  %761 = vrot.lane.b32.xlu0 %v718, 32
  %v762 = vpop.permute.xlu0 %761
  %v767 = vsel %vm98, %v742, %v756
  %v768 = vsel %vm98, %v744, %v758
  %v769 = vsel %vm98, %v747, %v760
  %v770 = vsel %vm98, %v749, %v762
  %v771 = vpack.c.bf16 %v768, %v767
  %v772 = vpack.c.bf16 %v770, %v769
  %v774 = vperm.slane %v729, 0
  %v784 = vunpack.c.l.b16 %v720
  %v785 = vunpack.c.l.b16 %v721
  %v786 = vunpack.c.l.b16 %v722
  %v787 = vunpack.c.l.b16 %v723
  %v788 = vunpack.c.l.b16 %v724
  %v789 = vunpack.c.l.b16 %v725
  %v790 = vunpack.c.l.b16 %v726
  %v791 = vunpack.c.l.b16 %v727
  %v792 = vpack.c.b16 %v785, %v784
  %v793 = vpack.c.b16 %v787, %v786
  %v794 = vpack.c.b16 %v789, %v788
  %v795 = vpack.c.b16 %v791, %v790
  %v801 = vsel %vm461, %v771, 0
  %v804 = vsel %vm461, %v772, 0
  %806 = vmatpush.bf16.msra.mxu0 0
  %807 = vmatpush.bf16.msra.mxu0 0
  %808 = vmatpush.bf16.msra.mxu0 0
  %809 = vmatpush.bf16.msra.mxu0 0
  %810 = vmatpush.bf16.msra.mxu0 %v795
  %811 = vmatpush.bf16.msra.mxu0 %v794
  %812 = vmatpush.bf16.msra.mxu0 %v793
  %813 = vmatpush.bf16.msra.mxu0 %v792
  %814 = vmatmul.bf16.gmra.mxu0 %v801
  %v815 = vpop.f32.mrf.mxu0
  %v816 = vadd.f32 %v774, %v815
  %v817 = vpop.f32.mrf.mxu0
  %v818 = vadd.f32 %v774, %v817
  %819 = vmatmul.bf16.gmra.mxu0 %v804
  %v820 = vpop.f32.mrf.mxu0
  %v821 = vadd.f32 %v774, %v820
  %v822 = vpop.f32.mrf.mxu0
  %v823 = vadd.f32 %v774, %v822
  %824 = vdwg.mxu0
  %v825 = vmax.f32 %v816, 0.0
  %v826 = vmax.f32 %v818, 0.0
  %v827 = vmax.f32 %v821, 0.0
  %v828 = vmax.f32 %v823, 0.0
  %v829 = vadd.f32 %v605, %v825
  %v830 = vadd.f32 %v606, %v826
  %v831 = vadd.f32 %v607, %v827
  %v832 = vadd.f32 %v608, %v828
  %v833 = vmul.f32 %v829, 0.5
  %v834 = vmul.f32 %v830, 0.5
  %v835 = vmul.f32 %v831, 0.5
  %v836 = vmul.f32 %v832, 0.5
  %s837 = scalar_lea.vmem %s4, 128
  %v838 = vld [vmem:[%s837] sm:$0xf]
  %v839 = vld [vmem:[%s837 + $0x4] sm:$0xf]
  %v840 = vld [vmem:[%s837 + $0x8] sm:$0xf]
  %v841 = vld [vmem:[%s837 + $0xc] sm:$0xf]
  %v842 = vld [vmem:[%s837 + $0x10] sm:$0xf]
  %v843 = vld [vmem:[%s837 + $0x14] sm:$0xf]
  %v844 = vld [vmem:[%s837 + $0x18] sm:$0xf]
  %v845 = vld [vmem:[%s837 + $0x1c] sm:$0xf]
  %s846 = scalar_lea.vmem %s5, 4
  %v847 = vld [vmem:[%s846] sm:$0x1]
  %v848 = vpack.c.bf16 %v834, %v833
  %v849 = vpack.c.bf16 %v836, %v835
  %850 = vmatpush.bf16.msra.mxu0 0
  %851 = vmatpush.bf16.msra.mxu0 0
  %852 = vmatpush.bf16.msra.mxu0 0
  %853 = vmatpush.bf16.msra.mxu0 0
  %854 = vmatpush.bf16.msra.mxu0 0
  %855 = vmatpush.bf16.msra.mxu0 0
  %856 = vmatpush.bf16.msra.mxu0 %v849
  %857 = vmatpush.bf16.msra.mxu0 %v848
  %858 = vmatmul.bf16.gmra.mxu0 %v100
  %v859 = vpop.f32.mrf.mxu0
  %v860 = vadd.f32 0.0, %v859
  %v861 = vpop.f32.mrf.mxu0
  %v862 = vadd.f32 0.0, %v861
  %863 = vmatmul.bf16.gmra.mxu0 %v103
  %v864 = vpop.f32.mrf.mxu0
  %v865 = vadd.f32 0.0, %v864
  %v866 = vpop.f32.mrf.mxu0
  %v867 = vadd.f32 0.0, %v866
  %868 = vdwg.mxu0
  %873 = vrot.lane.b32.xlu0 %v833, 32
  %v874 = vpop.permute.xlu0 %873
  %875 = vrot.lane.b32.xlu0 %v834, 32
  %v876 = vpop.permute.xlu0 %875
  %877 = vrot.lane.b32.xlu0 %v835, 32
  %v878 = vpop.permute.xlu0 %877
  %879 = vrot.lane.b32.xlu0 %v836, 32
  %v880 = vpop.permute.xlu0 %879
  %v885 = vsel %vm98, %v860, %v874
  %v886 = vsel %vm98, %v862, %v876
  %v887 = vsel %vm98, %v865, %v878
  %v888 = vsel %vm98, %v867, %v880
  %v889 = vpack.c.bf16 %v886, %v885
  %v890 = vpack.c.bf16 %v888, %v887
  %v892 = vperm.slane %v847, 0
  %v902 = vunpack.c.l.b16 %v838
  %v903 = vunpack.c.l.b16 %v839
  %v904 = vunpack.c.l.b16 %v840
  %v905 = vunpack.c.l.b16 %v841
  %v906 = vunpack.c.l.b16 %v842
  %v907 = vunpack.c.l.b16 %v843
  %v908 = vunpack.c.l.b16 %v844
  %v909 = vunpack.c.l.b16 %v845
  %v910 = vpack.c.b16 %v903, %v902
  %v911 = vpack.c.b16 %v905, %v904
  %v912 = vpack.c.b16 %v907, %v906
  %v913 = vpack.c.b16 %v909, %v908
  %v919 = vsel %vm461, %v889, 0
  %v922 = vsel %vm461, %v890, 0
  %924 = vmatpush.bf16.msra.mxu0 0
  %925 = vmatpush.bf16.msra.mxu0 0
  %926 = vmatpush.bf16.msra.mxu0 0
  %927 = vmatpush.bf16.msra.mxu0 0
  %928 = vmatpush.bf16.msra.mxu0 %v913
  %929 = vmatpush.bf16.msra.mxu0 %v912
  %930 = vmatpush.bf16.msra.mxu0 %v911
  %931 = vmatpush.bf16.msra.mxu0 %v910
  %932 = vmatmul.bf16.gmra.mxu0 %v919
  %v933 = vpop.f32.mrf.mxu0
  %v934 = vadd.f32 %v892, %v933
  %v935 = vpop.f32.mrf.mxu0
  %v936 = vadd.f32 %v892, %v935
  %937 = vmatmul.bf16.gmra.mxu0 %v922
  %v938 = vpop.f32.mrf.mxu0
  %v939 = vadd.f32 %v892, %v938
  %v940 = vpop.f32.mrf.mxu0
  %v941 = vadd.f32 %v892, %v940
  %942 = vdwg.mxu0
  %v943 = vmax.f32 %v934, 0.0
  %v944 = vmax.f32 %v936, 0.0
  %v945 = vmax.f32 %v939, 0.0
  %v946 = vmax.f32 %v941, 0.0
  %s947 = scalar_lea.vmem %s4, 160
  %v948 = vld [vmem:[%s947] sm:$0xf]
  %v949 = vld [vmem:[%s947 + $0x4] sm:$0xf]
  %v950 = vld [vmem:[%s947 + $0x8] sm:$0xf]
  %v951 = vld [vmem:[%s947 + $0xc] sm:$0xf]
  %v952 = vld [vmem:[%s947 + $0x10] sm:$0xf]
  %v953 = vld [vmem:[%s947 + $0x14] sm:$0xf]
  %v954 = vld [vmem:[%s947 + $0x18] sm:$0xf]
  %v955 = vld [vmem:[%s947 + $0x1c] sm:$0xf]
  %s956 = scalar_lea.vmem %s5, 5
  %v957 = vld [vmem:[%s956] sm:$0x1]
  %v958 = vpack.c.bf16 %v944, %v943
  %v959 = vpack.c.bf16 %v946, %v945
  %960 = vmatpush.bf16.msra.mxu0 0
  %961 = vmatpush.bf16.msra.mxu0 0
  %962 = vmatpush.bf16.msra.mxu0 0
  %963 = vmatpush.bf16.msra.mxu0 0
  %964 = vmatpush.bf16.msra.mxu0 0
  %965 = vmatpush.bf16.msra.mxu0 0
  %966 = vmatpush.bf16.msra.mxu0 %v959
  %967 = vmatpush.bf16.msra.mxu0 %v958
  %968 = vmatmul.bf16.gmra.mxu0 %v100
  %v969 = vpop.f32.mrf.mxu0
  %v970 = vadd.f32 0.0, %v969
  %v971 = vpop.f32.mrf.mxu0
  %v972 = vadd.f32 0.0, %v971
  %973 = vmatmul.bf16.gmra.mxu0 %v103
  %v974 = vpop.f32.mrf.mxu0
  %v975 = vadd.f32 0.0, %v974
  %v976 = vpop.f32.mrf.mxu0
  %v977 = vadd.f32 0.0, %v976
  %978 = vdwg.mxu0
  %983 = vrot.lane.b32.xlu0 %v943, 32
  %v984 = vpop.permute.xlu0 %983
  %985 = vrot.lane.b32.xlu0 %v944, 32
  %v986 = vpop.permute.xlu0 %985
  %987 = vrot.lane.b32.xlu0 %v945, 32
  %v988 = vpop.permute.xlu0 %987
  %989 = vrot.lane.b32.xlu0 %v946, 32
  %v990 = vpop.permute.xlu0 %989
  %v995 = vsel %vm98, %v970, %v984
  %v996 = vsel %vm98, %v972, %v986
  %v997 = vsel %vm98, %v975, %v988
  %v998 = vsel %vm98, %v977, %v990
  %v999 = vpack.c.bf16 %v996, %v995
  %v1000 = vpack.c.bf16 %v998, %v997
  %v1002 = vperm.slane %v957, 0
  %v1012 = vunpack.c.l.b16 %v948
  %v1013 = vunpack.c.l.b16 %v949
  %v1014 = vunpack.c.l.b16 %v950
  %v1015 = vunpack.c.l.b16 %v951
  %v1016 = vunpack.c.l.b16 %v952
  %v1017 = vunpack.c.l.b16 %v953
  %v1018 = vunpack.c.l.b16 %v954
  %v1019 = vunpack.c.l.b16 %v955
  %v1020 = vpack.c.b16 %v1013, %v1012
  %v1021 = vpack.c.b16 %v1015, %v1014
  %v1022 = vpack.c.b16 %v1017, %v1016
  %v1023 = vpack.c.b16 %v1019, %v1018
  %v1029 = vsel %vm461, %v999, 0
  %v1032 = vsel %vm461, %v1000, 0
  %1034 = vmatpush.bf16.msra.mxu0 0
  %1035 = vmatpush.bf16.msra.mxu0 0
  %1036 = vmatpush.bf16.msra.mxu0 0
  %1037 = vmatpush.bf16.msra.mxu0 0
  %1038 = vmatpush.bf16.msra.mxu0 %v1023
  %1039 = vmatpush.bf16.msra.mxu0 %v1022
  %1040 = vmatpush.bf16.msra.mxu0 %v1021
  %1041 = vmatpush.bf16.msra.mxu0 %v1020
  %1042 = vmatmul.bf16.gmra.mxu0 %v1029
  %v1043 = vpop.f32.mrf.mxu0
  %v1044 = vadd.f32 %v1002, %v1043
  %v1045 = vpop.f32.mrf.mxu0
  %v1046 = vadd.f32 %v1002, %v1045
  %1047 = vmatmul.bf16.gmra.mxu0 %v1032
  %v1048 = vpop.f32.mrf.mxu0
  %v1049 = vadd.f32 %v1002, %v1048
  %v1050 = vpop.f32.mrf.mxu0
  %v1051 = vadd.f32 %v1002, %v1050
  %1052 = vdwg.mxu0
  %v1053 = vmax.f32 %v1044, 0.0
  %v1054 = vmax.f32 %v1046, 0.0
  %v1055 = vmax.f32 %v1049, 0.0
  %v1056 = vmax.f32 %v1051, 0.0
  %v1057 = vadd.f32 %v833, %v1053
  %v1058 = vadd.f32 %v834, %v1054
  %v1059 = vadd.f32 %v835, %v1055
  %v1060 = vadd.f32 %v836, %v1056
  %v1061 = vmul.f32 %v1057, 0.5
  %v1062 = vmul.f32 %v1058, 0.5
  %v1063 = vmul.f32 %v1059, 0.5
  %v1064 = vmul.f32 %v1060, 0.5
  %s1065 = scalar_lea.vmem %s4, 192
  %v1066 = vld [vmem:[%s1065] sm:$0xf]
  %v1067 = vld [vmem:[%s1065 + $0x4] sm:$0xf]
  %v1068 = vld [vmem:[%s1065 + $0x8] sm:$0xf]
  %v1069 = vld [vmem:[%s1065 + $0xc] sm:$0xf]
  %v1070 = vld [vmem:[%s1065 + $0x10] sm:$0xf]
  %v1071 = vld [vmem:[%s1065 + $0x14] sm:$0xf]
  %v1072 = vld [vmem:[%s1065 + $0x18] sm:$0xf]
  %v1073 = vld [vmem:[%s1065 + $0x1c] sm:$0xf]
  %s1074 = scalar_lea.vmem %s5, 6
  %v1075 = vld [vmem:[%s1074] sm:$0x1]
  %v1076 = vpack.c.bf16 %v1062, %v1061
  %v1077 = vpack.c.bf16 %v1064, %v1063
  %1078 = vmatpush.bf16.msra.mxu0 0
  %1079 = vmatpush.bf16.msra.mxu0 0
  %1080 = vmatpush.bf16.msra.mxu0 0
  %1081 = vmatpush.bf16.msra.mxu0 0
  %1082 = vmatpush.bf16.msra.mxu0 0
  %1083 = vmatpush.bf16.msra.mxu0 0
  %1084 = vmatpush.bf16.msra.mxu0 %v1077
  %1085 = vmatpush.bf16.msra.mxu0 %v1076
  %1086 = vmatmul.bf16.gmra.mxu0 %v100
  %v1087 = vpop.f32.mrf.mxu0
  %v1088 = vadd.f32 0.0, %v1087
  %v1089 = vpop.f32.mrf.mxu0
  %v1090 = vadd.f32 0.0, %v1089
  %1091 = vmatmul.bf16.gmra.mxu0 %v103
  %v1092 = vpop.f32.mrf.mxu0
  %v1093 = vadd.f32 0.0, %v1092
  %v1094 = vpop.f32.mrf.mxu0
  %v1095 = vadd.f32 0.0, %v1094
  %1096 = vdwg.mxu0
  %1101 = vrot.lane.b32.xlu0 %v1061, 32
  %v1102 = vpop.permute.xlu0 %1101
  %1103 = vrot.lane.b32.xlu0 %v1062, 32
  %v1104 = vpop.permute.xlu0 %1103
  %1105 = vrot.lane.b32.xlu0 %v1063, 32
  %v1106 = vpop.permute.xlu0 %1105
  %1107 = vrot.lane.b32.xlu0 %v1064, 32
  %v1108 = vpop.permute.xlu0 %1107
  %v1113 = vsel %vm98, %v1088, %v1102
  %v1114 = vsel %vm98, %v1090, %v1104
  %v1115 = vsel %vm98, %v1093, %v1106
  %v1116 = vsel %vm98, %v1095, %v1108
  %v1117 = vpack.c.bf16 %v1114, %v1113
  %v1118 = vpack.c.bf16 %v1116, %v1115
  %v1120 = vperm.slane %v1075, 0
  %v1130 = vunpack.c.l.b16 %v1066
  %v1131 = vunpack.c.l.b16 %v1067
  %v1132 = vunpack.c.l.b16 %v1068
  %v1133 = vunpack.c.l.b16 %v1069
  %v1134 = vunpack.c.l.b16 %v1070
  %v1135 = vunpack.c.l.b16 %v1071
  %v1136 = vunpack.c.l.b16 %v1072
  %v1137 = vunpack.c.l.b16 %v1073
  %v1138 = vpack.c.b16 %v1131, %v1130
  %v1139 = vpack.c.b16 %v1133, %v1132
  %v1140 = vpack.c.b16 %v1135, %v1134
  %v1141 = vpack.c.b16 %v1137, %v1136
  %v1147 = vsel %vm461, %v1117, 0
  %v1150 = vsel %vm461, %v1118, 0
  %1152 = vmatpush.bf16.msra.mxu0 0
  %1153 = vmatpush.bf16.msra.mxu0 0
  %1154 = vmatpush.bf16.msra.mxu0 0
  %1155 = vmatpush.bf16.msra.mxu0 0
  %1156 = vmatpush.bf16.msra.mxu0 %v1141
  %1157 = vmatpush.bf16.msra.mxu0 %v1140
  %1158 = vmatpush.bf16.msra.mxu0 %v1139
  %1159 = vmatpush.bf16.msra.mxu0 %v1138
  %1160 = vmatmul.bf16.gmra.mxu0 %v1147
  %v1161 = vpop.f32.mrf.mxu0
  %v1162 = vadd.f32 %v1120, %v1161
  %v1163 = vpop.f32.mrf.mxu0
  %v1164 = vadd.f32 %v1120, %v1163
  %1165 = vmatmul.bf16.gmra.mxu0 %v1150
  %v1166 = vpop.f32.mrf.mxu0
  %v1167 = vadd.f32 %v1120, %v1166
  %v1168 = vpop.f32.mrf.mxu0
  %v1169 = vadd.f32 %v1120, %v1168
  %1170 = vdwg.mxu0
  %v1171 = vmax.f32 %v1162, 0.0
  %v1172 = vmax.f32 %v1164, 0.0
  %v1173 = vmax.f32 %v1167, 0.0
  %v1174 = vmax.f32 %v1169, 0.0
  %s1175 = scalar_lea.vmem %s4, 224
  %v1176 = vld [vmem:[%s1175] sm:$0xf]
  %v1177 = vld [vmem:[%s1175 + $0x4] sm:$0xf]
  %v1178 = vld [vmem:[%s1175 + $0x8] sm:$0xf]
  %v1179 = vld [vmem:[%s1175 + $0xc] sm:$0xf]
  %v1180 = vld [vmem:[%s1175 + $0x10] sm:$0xf]
  %v1181 = vld [vmem:[%s1175 + $0x14] sm:$0xf]
  %v1182 = vld [vmem:[%s1175 + $0x18] sm:$0xf]
  %v1183 = vld [vmem:[%s1175 + $0x1c] sm:$0xf]
  %s1184 = scalar_lea.vmem %s5, 7
  %v1185 = vld [vmem:[%s1184] sm:$0x1]
  %v1186 = vpack.c.bf16 %v1172, %v1171
  %v1187 = vpack.c.bf16 %v1174, %v1173
  %1188 = vmatpush.bf16.msra.mxu0 0
  %1189 = vmatpush.bf16.msra.mxu0 0
  %1190 = vmatpush.bf16.msra.mxu0 0
  %1191 = vmatpush.bf16.msra.mxu0 0
  %1192 = vmatpush.bf16.msra.mxu0 0
  %1193 = vmatpush.bf16.msra.mxu0 0
  %1194 = vmatpush.bf16.msra.mxu0 %v1187
  %1195 = vmatpush.bf16.msra.mxu0 %v1186
  %1196 = vmatmul.bf16.gmra.mxu0 %v100
  %v1197 = vpop.f32.mrf.mxu0
  %v1198 = vadd.f32 0.0, %v1197
  %v1199 = vpop.f32.mrf.mxu0
  %v1200 = vadd.f32 0.0, %v1199
  %1201 = vmatmul.bf16.gmra.mxu0 %v103
  %v1202 = vpop.f32.mrf.mxu0
  %v1203 = vadd.f32 0.0, %v1202
  %v1204 = vpop.f32.mrf.mxu0
  %v1205 = vadd.f32 0.0, %v1204
  %1206 = vdwg.mxu0
  %1211 = vrot.lane.b32.xlu0 %v1171, 32
  %v1212 = vpop.permute.xlu0 %1211
  %1213 = vrot.lane.b32.xlu0 %v1172, 32
  %v1214 = vpop.permute.xlu0 %1213
  %1215 = vrot.lane.b32.xlu0 %v1173, 32
  %v1216 = vpop.permute.xlu0 %1215
  %1217 = vrot.lane.b32.xlu0 %v1174, 32
  %v1218 = vpop.permute.xlu0 %1217
  %v1223 = vsel %vm98, %v1198, %v1212
  %v1224 = vsel %vm98, %v1200, %v1214
  %v1225 = vsel %vm98, %v1203, %v1216
  %v1226 = vsel %vm98, %v1205, %v1218
  %v1227 = vpack.c.bf16 %v1224, %v1223
  %v1228 = vpack.c.bf16 %v1226, %v1225
  %v1230 = vperm.slane %v1185, 0
  %v1240 = vunpack.c.l.b16 %v1176
  %v1241 = vunpack.c.l.b16 %v1177
  %v1242 = vunpack.c.l.b16 %v1178
  %v1243 = vunpack.c.l.b16 %v1179
  %v1244 = vunpack.c.l.b16 %v1180
  %v1245 = vunpack.c.l.b16 %v1181
  %v1246 = vunpack.c.l.b16 %v1182
  %v1247 = vunpack.c.l.b16 %v1183
  %v1248 = vpack.c.b16 %v1241, %v1240
  %v1249 = vpack.c.b16 %v1243, %v1242
  %v1250 = vpack.c.b16 %v1245, %v1244
  %v1251 = vpack.c.b16 %v1247, %v1246
  %v1257 = vsel %vm461, %v1227, 0
  %v1260 = vsel %vm461, %v1228, 0
  %1262 = vmatpush.bf16.msra.mxu0 0
  %1263 = vmatpush.bf16.msra.mxu0 0
  %1264 = vmatpush.bf16.msra.mxu0 0
  %1265 = vmatpush.bf16.msra.mxu0 0
  %1266 = vmatpush.bf16.msra.mxu0 %v1251
  %1267 = vmatpush.bf16.msra.mxu0 %v1250
  %1268 = vmatpush.bf16.msra.mxu0 %v1249
  %1269 = vmatpush.bf16.msra.mxu0 %v1248
  %1270 = vmatmul.bf16.gmra.mxu0 %v1257
  %v1271 = vpop.f32.mrf.mxu0
  %v1272 = vadd.f32 %v1230, %v1271
  %v1273 = vpop.f32.mrf.mxu0
  %v1274 = vadd.f32 %v1230, %v1273
  %1275 = vmatmul.bf16.gmra.mxu0 %v1260
  %v1276 = vpop.f32.mrf.mxu0
  %v1277 = vadd.f32 %v1230, %v1276
  %v1278 = vpop.f32.mrf.mxu0
  %v1279 = vadd.f32 %v1230, %v1278
  %1280 = vdwg.mxu0
  %v1281 = vmax.f32 %v1272, 0.0
  %v1282 = vmax.f32 %v1274, 0.0
  %v1283 = vmax.f32 %v1277, 0.0
  %v1284 = vmax.f32 %v1279, 0.0
  %v1285 = vadd.f32 %v1061, %v1281
  %v1286 = vadd.f32 %v1062, %v1282
  %v1287 = vadd.f32 %v1063, %v1283
  %v1288 = vadd.f32 %v1064, %v1284
  %v1289 = vmul.f32 %v1285, 0.5
  %v1290 = vmul.f32 %v1286, 0.5
  %v1291 = vmul.f32 %v1287, 0.5
  %v1292 = vmul.f32 %v1288, 0.5
  %s1293 = scalar_lea.vmem %s4, 256
  %v1294 = vld [vmem:[%s1293] sm:$0xf]
  %v1295 = vld [vmem:[%s1293 + $0x4] sm:$0xf]
  %v1296 = vld [vmem:[%s1293 + $0x8] sm:$0xf]
  %v1297 = vld [vmem:[%s1293 + $0xc] sm:$0xf]
  %v1298 = vld [vmem:[%s1293 + $0x10] sm:$0xf]
  %v1299 = vld [vmem:[%s1293 + $0x14] sm:$0xf]
  %v1300 = vld [vmem:[%s1293 + $0x18] sm:$0xf]
  %v1301 = vld [vmem:[%s1293 + $0x1c] sm:$0xf]
  %s1302 = scalar_lea.vmem %s5, 8
  %v1303 = vld [vmem:[%s1302] sm:$0x1]
  %v1304 = vpack.c.bf16 %v1290, %v1289
  %v1305 = vpack.c.bf16 %v1292, %v1291
  %1306 = vmatpush.bf16.msra.mxu0 0
  %1307 = vmatpush.bf16.msra.mxu0 0
  %1308 = vmatpush.bf16.msra.mxu0 0
  %1309 = vmatpush.bf16.msra.mxu0 0
  %1310 = vmatpush.bf16.msra.mxu0 0
  %1311 = vmatpush.bf16.msra.mxu0 0
  %1312 = vmatpush.bf16.msra.mxu0 %v1305
  %1313 = vmatpush.bf16.msra.mxu0 %v1304
  %1314 = vmatmul.bf16.gmra.mxu0 %v100
  %v1315 = vpop.f32.mrf.mxu0
  %v1316 = vadd.f32 0.0, %v1315
  %v1317 = vpop.f32.mrf.mxu0
  %v1318 = vadd.f32 0.0, %v1317
  %1319 = vmatmul.bf16.gmra.mxu0 %v103
  %v1320 = vpop.f32.mrf.mxu0
  %v1321 = vadd.f32 0.0, %v1320
  %v1322 = vpop.f32.mrf.mxu0
  %v1323 = vadd.f32 0.0, %v1322
  %1324 = vdwg.mxu0
  %1329 = vrot.lane.b32.xlu0 %v1289, 32
  %v1330 = vpop.permute.xlu0 %1329
  %1331 = vrot.lane.b32.xlu0 %v1290, 32
  %v1332 = vpop.permute.xlu0 %1331
  %1333 = vrot.lane.b32.xlu0 %v1291, 32
  %v1334 = vpop.permute.xlu0 %1333
  %1335 = vrot.lane.b32.xlu0 %v1292, 32
  %v1336 = vpop.permute.xlu0 %1335
  %v1341 = vsel %vm98, %v1316, %v1330
  %v1342 = vsel %vm98, %v1318, %v1332
  %v1343 = vsel %vm98, %v1321, %v1334
  %v1344 = vsel %vm98, %v1323, %v1336
  %v1345 = vpack.c.bf16 %v1342, %v1341
  %v1346 = vpack.c.bf16 %v1344, %v1343
  %v1348 = vperm.slane %v1303, 0
  %v1358 = vunpack.c.l.b16 %v1294
  %v1359 = vunpack.c.l.b16 %v1295
  %v1360 = vunpack.c.l.b16 %v1296
  %v1361 = vunpack.c.l.b16 %v1297
  %v1362 = vunpack.c.l.b16 %v1298
  %v1363 = vunpack.c.l.b16 %v1299
  %v1364 = vunpack.c.l.b16 %v1300
  %v1365 = vunpack.c.l.b16 %v1301
  %v1366 = vpack.c.b16 %v1359, %v1358
  %v1367 = vpack.c.b16 %v1361, %v1360
  %v1368 = vpack.c.b16 %v1363, %v1362
  %v1369 = vpack.c.b16 %v1365, %v1364
  %v1375 = vsel %vm461, %v1345, 0
  %v1378 = vsel %vm461, %v1346, 0
  %1380 = vmatpush.bf16.msra.mxu0 0
  %1381 = vmatpush.bf16.msra.mxu0 0
  %1382 = vmatpush.bf16.msra.mxu0 0
  %1383 = vmatpush.bf16.msra.mxu0 0
  %1384 = vmatpush.bf16.msra.mxu0 %v1369
  %1385 = vmatpush.bf16.msra.mxu0 %v1368
  %1386 = vmatpush.bf16.msra.mxu0 %v1367
  %1387 = vmatpush.bf16.msra.mxu0 %v1366
  %1388 = vmatmul.bf16.gmra.mxu0 %v1375
  %v1389 = vpop.f32.mrf.mxu0
  %v1390 = vadd.f32 %v1348, %v1389
  %v1391 = vpop.f32.mrf.mxu0
  %v1392 = vadd.f32 %v1348, %v1391
  %1393 = vmatmul.bf16.gmra.mxu0 %v1378
  %v1394 = vpop.f32.mrf.mxu0
  %v1395 = vadd.f32 %v1348, %v1394
  %v1396 = vpop.f32.mrf.mxu0
  %v1397 = vadd.f32 %v1348, %v1396
  %1398 = vdwg.mxu0
  %v1399 = vmax.f32 %v1390, 0.0
  %v1400 = vmax.f32 %v1392, 0.0
  %v1401 = vmax.f32 %v1395, 0.0
  %v1402 = vmax.f32 %v1397, 0.0
  %s1403 = scalar_lea.vmem %s4, 288
  %v1404 = vld [vmem:[%s1403] sm:$0xf]
  %v1405 = vld [vmem:[%s1403 + $0x4] sm:$0xf]
  %v1406 = vld [vmem:[%s1403 + $0x8] sm:$0xf]
  %v1407 = vld [vmem:[%s1403 + $0xc] sm:$0xf]
  %v1408 = vld [vmem:[%s1403 + $0x10] sm:$0xf]
  %v1409 = vld [vmem:[%s1403 + $0x14] sm:$0xf]
  %v1410 = vld [vmem:[%s1403 + $0x18] sm:$0xf]
  %v1411 = vld [vmem:[%s1403 + $0x1c] sm:$0xf]
  %s1412 = scalar_lea.vmem %s5, 9
  %v1413 = vld [vmem:[%s1412] sm:$0x1]
  %v1414 = vpack.c.bf16 %v1400, %v1399
  %v1415 = vpack.c.bf16 %v1402, %v1401
  %1416 = vmatpush.bf16.msra.mxu0 0
  %1417 = vmatpush.bf16.msra.mxu0 0
  %1418 = vmatpush.bf16.msra.mxu0 0
  %1419 = vmatpush.bf16.msra.mxu0 0
  %1420 = vmatpush.bf16.msra.mxu0 0
  %1421 = vmatpush.bf16.msra.mxu0 0
  %1422 = vmatpush.bf16.msra.mxu0 %v1415
  %1423 = vmatpush.bf16.msra.mxu0 %v1414
  %1424 = vmatmul.bf16.gmra.mxu0 %v100
  %v1425 = vpop.f32.mrf.mxu0
  %v1426 = vadd.f32 0.0, %v1425
  %v1427 = vpop.f32.mrf.mxu0
  %v1428 = vadd.f32 0.0, %v1427
  %1429 = vmatmul.bf16.gmra.mxu0 %v103
  %v1430 = vpop.f32.mrf.mxu0
  %v1431 = vadd.f32 0.0, %v1430
  %v1432 = vpop.f32.mrf.mxu0
  %v1433 = vadd.f32 0.0, %v1432
  %1434 = vdwg.mxu0
  %1439 = vrot.lane.b32.xlu0 %v1399, 32
  %v1440 = vpop.permute.xlu0 %1439
  %1441 = vrot.lane.b32.xlu0 %v1400, 32
  %v1442 = vpop.permute.xlu0 %1441
  %1443 = vrot.lane.b32.xlu0 %v1401, 32
  %v1444 = vpop.permute.xlu0 %1443
  %1445 = vrot.lane.b32.xlu0 %v1402, 32
  %v1446 = vpop.permute.xlu0 %1445
  %v1451 = vsel %vm98, %v1426, %v1440
  %v1452 = vsel %vm98, %v1428, %v1442
  %v1453 = vsel %vm98, %v1431, %v1444
  %v1454 = vsel %vm98, %v1433, %v1446
  %v1455 = vpack.c.bf16 %v1452, %v1451
  %v1456 = vpack.c.bf16 %v1454, %v1453
  %v1458 = vperm.slane %v1413, 0
  %v1468 = vunpack.c.l.b16 %v1404
  %v1469 = vunpack.c.l.b16 %v1405
  %v1470 = vunpack.c.l.b16 %v1406
  %v1471 = vunpack.c.l.b16 %v1407
  %v1472 = vunpack.c.l.b16 %v1408
  %v1473 = vunpack.c.l.b16 %v1409
  %v1474 = vunpack.c.l.b16 %v1410
  %v1475 = vunpack.c.l.b16 %v1411
  %v1476 = vpack.c.b16 %v1469, %v1468
  %v1477 = vpack.c.b16 %v1471, %v1470
  %v1478 = vpack.c.b16 %v1473, %v1472
  %v1479 = vpack.c.b16 %v1475, %v1474
  %v1485 = vsel %vm461, %v1455, 0
  %v1488 = vsel %vm461, %v1456, 0
  %1490 = vmatpush.bf16.msra.mxu0 0
  %1491 = vmatpush.bf16.msra.mxu0 0
  %1492 = vmatpush.bf16.msra.mxu0 0
  %1493 = vmatpush.bf16.msra.mxu0 0
  %1494 = vmatpush.bf16.msra.mxu0 %v1479
  %1495 = vmatpush.bf16.msra.mxu0 %v1478
  %1496 = vmatpush.bf16.msra.mxu0 %v1477
  %1497 = vmatpush.bf16.msra.mxu0 %v1476
  %1498 = vmatmul.bf16.gmra.mxu0 %v1485
  %v1499 = vpop.f32.mrf.mxu0
  %v1500 = vadd.f32 %v1458, %v1499
  %v1501 = vpop.f32.mrf.mxu0
  %v1502 = vadd.f32 %v1458, %v1501
  %1503 = vmatmul.bf16.gmra.mxu0 %v1488
  %v1504 = vpop.f32.mrf.mxu0
  %v1505 = vadd.f32 %v1458, %v1504
  %v1506 = vpop.f32.mrf.mxu0
  %v1507 = vadd.f32 %v1458, %v1506
  %1508 = vdwg.mxu0
  %v1509 = vmax.f32 %v1500, 0.0
  %v1510 = vmax.f32 %v1502, 0.0
  %v1511 = vmax.f32 %v1505, 0.0
  %v1512 = vmax.f32 %v1507, 0.0
  %v1513 = vadd.f32 %v1289, %v1509
  %v1514 = vadd.f32 %v1290, %v1510
  %v1515 = vadd.f32 %v1291, %v1511
  %v1516 = vadd.f32 %v1292, %v1512
  %v1517 = vmul.f32 %v1513, 0.5
  %v1518 = vmul.f32 %v1514, 0.5
  %v1519 = vmul.f32 %v1515, 0.5
  %v1520 = vmul.f32 %v1516, 0.5
  %s1521 = scalar_lea.vmem %s4, 320
  %v1522 = vld [vmem:[%s1521] sm:$0xf]
  %v1523 = vld [vmem:[%s1521 + $0x4] sm:$0xf]
  %v1524 = vld [vmem:[%s1521 + $0x8] sm:$0xf]
  %v1525 = vld [vmem:[%s1521 + $0xc] sm:$0xf]
  %v1526 = vld [vmem:[%s1521 + $0x10] sm:$0xf]
  %v1527 = vld [vmem:[%s1521 + $0x14] sm:$0xf]
  %v1528 = vld [vmem:[%s1521 + $0x18] sm:$0xf]
  %v1529 = vld [vmem:[%s1521 + $0x1c] sm:$0xf]
  %s1530 = scalar_lea.vmem %s5, 10
  %v1531 = vld [vmem:[%s1530] sm:$0x1]
  %v1532 = vpack.c.bf16 %v1518, %v1517
  %v1533 = vpack.c.bf16 %v1520, %v1519
  %1534 = vmatpush.bf16.msra.mxu0 0
  %1535 = vmatpush.bf16.msra.mxu0 0
  %1536 = vmatpush.bf16.msra.mxu0 0
  %1537 = vmatpush.bf16.msra.mxu0 0
  %1538 = vmatpush.bf16.msra.mxu0 0
  %1539 = vmatpush.bf16.msra.mxu0 0
  %1540 = vmatpush.bf16.msra.mxu0 %v1533
  %1541 = vmatpush.bf16.msra.mxu0 %v1532
  %1542 = vmatmul.bf16.gmra.mxu0 %v100
  %v1543 = vpop.f32.mrf.mxu0
  %v1544 = vadd.f32 0.0, %v1543
  %v1545 = vpop.f32.mrf.mxu0
  %v1546 = vadd.f32 0.0, %v1545
  %1547 = vmatmul.bf16.gmra.mxu0 %v103
  %v1548 = vpop.f32.mrf.mxu0
  %v1549 = vadd.f32 0.0, %v1548
  %v1550 = vpop.f32.mrf.mxu0
  %v1551 = vadd.f32 0.0, %v1550
  %1552 = vdwg.mxu0
  %1557 = vrot.lane.b32.xlu0 %v1517, 32
  %v1558 = vpop.permute.xlu0 %1557
  %1559 = vrot.lane.b32.xlu0 %v1518, 32
  %v1560 = vpop.permute.xlu0 %1559
  %1561 = vrot.lane.b32.xlu0 %v1519, 32
  %v1562 = vpop.permute.xlu0 %1561
  %1563 = vrot.lane.b32.xlu0 %v1520, 32
  %v1564 = vpop.permute.xlu0 %1563
  %v1569 = vsel %vm98, %v1544, %v1558
  %v1570 = vsel %vm98, %v1546, %v1560
  %v1571 = vsel %vm98, %v1549, %v1562
  %v1572 = vsel %vm98, %v1551, %v1564
  %v1573 = vpack.c.bf16 %v1570, %v1569
  %v1574 = vpack.c.bf16 %v1572, %v1571
  %v1576 = vperm.slane %v1531, 0
  %v1586 = vunpack.c.l.b16 %v1522
  %v1587 = vunpack.c.l.b16 %v1523
  %v1588 = vunpack.c.l.b16 %v1524
  %v1589 = vunpack.c.l.b16 %v1525
  %v1590 = vunpack.c.l.b16 %v1526
  %v1591 = vunpack.c.l.b16 %v1527
  %v1592 = vunpack.c.l.b16 %v1528
  %v1593 = vunpack.c.l.b16 %v1529
  %v1594 = vpack.c.b16 %v1587, %v1586
  %v1595 = vpack.c.b16 %v1589, %v1588
  %v1596 = vpack.c.b16 %v1591, %v1590
  %v1597 = vpack.c.b16 %v1593, %v1592
  %v1603 = vsel %vm461, %v1573, 0
  %v1606 = vsel %vm461, %v1574, 0
  %1608 = vmatpush.bf16.msra.mxu0 0
  %1609 = vmatpush.bf16.msra.mxu0 0
  %1610 = vmatpush.bf16.msra.mxu0 0
  %1611 = vmatpush.bf16.msra.mxu0 0
  %1612 = vmatpush.bf16.msra.mxu0 %v1597
  %1613 = vmatpush.bf16.msra.mxu0 %v1596
  %1614 = vmatpush.bf16.msra.mxu0 %v1595
  %1615 = vmatpush.bf16.msra.mxu0 %v1594
  %1616 = vmatmul.bf16.gmra.mxu0 %v1603
  %v1617 = vpop.f32.mrf.mxu0
  %v1618 = vadd.f32 %v1576, %v1617
  %v1619 = vpop.f32.mrf.mxu0
  %v1620 = vadd.f32 %v1576, %v1619
  %1621 = vmatmul.bf16.gmra.mxu0 %v1606
  %v1622 = vpop.f32.mrf.mxu0
  %v1623 = vadd.f32 %v1576, %v1622
  %v1624 = vpop.f32.mrf.mxu0
  %v1625 = vadd.f32 %v1576, %v1624
  %1626 = vdwg.mxu0
  %v1627 = vmax.f32 %v1618, 0.0
  %v1628 = vmax.f32 %v1620, 0.0
  %v1629 = vmax.f32 %v1623, 0.0
  %v1630 = vmax.f32 %v1625, 0.0
  %s1631 = scalar_lea.vmem %s4, 352
  %v1632 = vld [vmem:[%s1631] sm:$0xf]
  %v1633 = vld [vmem:[%s1631 + $0x4] sm:$0xf]
  %v1634 = vld [vmem:[%s1631 + $0x8] sm:$0xf]
  %v1635 = vld [vmem:[%s1631 + $0xc] sm:$0xf]
  %v1636 = vld [vmem:[%s1631 + $0x10] sm:$0xf]
  %v1637 = vld [vmem:[%s1631 + $0x14] sm:$0xf]
  %v1638 = vld [vmem:[%s1631 + $0x18] sm:$0xf]
  %v1639 = vld [vmem:[%s1631 + $0x1c] sm:$0xf]
  %s1640 = scalar_lea.vmem %s5, 11
  %v1641 = vld [vmem:[%s1640] sm:$0x1]
  %v1642 = vpack.c.bf16 %v1628, %v1627
  %v1643 = vpack.c.bf16 %v1630, %v1629
  %1644 = vmatpush.bf16.msra.mxu0 0
  %1645 = vmatpush.bf16.msra.mxu0 0
  %1646 = vmatpush.bf16.msra.mxu0 0
  %1647 = vmatpush.bf16.msra.mxu0 0
  %1648 = vmatpush.bf16.msra.mxu0 0
  %1649 = vmatpush.bf16.msra.mxu0 0
  %1650 = vmatpush.bf16.msra.mxu0 %v1643
  %1651 = vmatpush.bf16.msra.mxu0 %v1642
  %1652 = vmatmul.bf16.gmra.mxu0 %v100
  %v1653 = vpop.f32.mrf.mxu0
  %v1654 = vadd.f32 0.0, %v1653
  %v1655 = vpop.f32.mrf.mxu0
  %v1656 = vadd.f32 0.0, %v1655
  %1657 = vmatmul.bf16.gmra.mxu0 %v103
  %v1658 = vpop.f32.mrf.mxu0
  %v1659 = vadd.f32 0.0, %v1658
  %v1660 = vpop.f32.mrf.mxu0
  %v1661 = vadd.f32 0.0, %v1660
  %1662 = vdwg.mxu0
  %1667 = vrot.lane.b32.xlu0 %v1627, 32
  %v1668 = vpop.permute.xlu0 %1667
  %1669 = vrot.lane.b32.xlu0 %v1628, 32
  %v1670 = vpop.permute.xlu0 %1669
  %1671 = vrot.lane.b32.xlu0 %v1629, 32
  %v1672 = vpop.permute.xlu0 %1671
  %1673 = vrot.lane.b32.xlu0 %v1630, 32
  %v1674 = vpop.permute.xlu0 %1673
  %v1679 = vsel %vm98, %v1654, %v1668
  %v1680 = vsel %vm98, %v1656, %v1670
  %v1681 = vsel %vm98, %v1659, %v1672
  %v1682 = vsel %vm98, %v1661, %v1674
  %v1683 = vpack.c.bf16 %v1680, %v1679
  %v1684 = vpack.c.bf16 %v1682, %v1681
  %v1686 = vperm.slane %v1641, 0
  %v1696 = vunpack.c.l.b16 %v1632
  %v1697 = vunpack.c.l.b16 %v1633
  %v1698 = vunpack.c.l.b16 %v1634
  %v1699 = vunpack.c.l.b16 %v1635
  %v1700 = vunpack.c.l.b16 %v1636
  %v1701 = vunpack.c.l.b16 %v1637
  %v1702 = vunpack.c.l.b16 %v1638
  %v1703 = vunpack.c.l.b16 %v1639
  %v1704 = vpack.c.b16 %v1697, %v1696
  %v1705 = vpack.c.b16 %v1699, %v1698
  %v1706 = vpack.c.b16 %v1701, %v1700
  %v1707 = vpack.c.b16 %v1703, %v1702
  %v1713 = vsel %vm461, %v1683, 0
  %v1716 = vsel %vm461, %v1684, 0
  %1718 = vmatpush.bf16.msra.mxu0 0
  %1719 = vmatpush.bf16.msra.mxu0 0
  %1720 = vmatpush.bf16.msra.mxu0 0
  %1721 = vmatpush.bf16.msra.mxu0 0
  %1722 = vmatpush.bf16.msra.mxu0 %v1707
  %1723 = vmatpush.bf16.msra.mxu0 %v1706
  %1724 = vmatpush.bf16.msra.mxu0 %v1705
  %1725 = vmatpush.bf16.msra.mxu0 %v1704
  %1726 = vmatmul.bf16.gmra.mxu0 %v1713
  %v1727 = vpop.f32.mrf.mxu0
  %v1728 = vadd.f32 %v1686, %v1727
  %v1729 = vpop.f32.mrf.mxu0
  %v1730 = vadd.f32 %v1686, %v1729
  %1731 = vmatmul.bf16.gmra.mxu0 %v1716
  %v1732 = vpop.f32.mrf.mxu0
  %v1733 = vadd.f32 %v1686, %v1732
  %v1734 = vpop.f32.mrf.mxu0
  %v1735 = vadd.f32 %v1686, %v1734
  %1736 = vdwg.mxu0
  %v1737 = vmax.f32 %v1728, 0.0
  %v1738 = vmax.f32 %v1730, 0.0
  %v1739 = vmax.f32 %v1733, 0.0
  %v1740 = vmax.f32 %v1735, 0.0
  %v1741 = vadd.f32 %v1517, %v1737
  %v1742 = vadd.f32 %v1518, %v1738
  %v1743 = vadd.f32 %v1519, %v1739
  %v1744 = vadd.f32 %v1520, %v1740
  %v1745 = vmul.f32 %v1741, 0.5
  %v1746 = vmul.f32 %v1742, 0.5
  %v1747 = vmul.f32 %v1743, 0.5
  %v1748 = vmul.f32 %v1744, 0.5
  %v1749 = vld [vmem:[%s6] sm:$0xf]
  %v1750 = vld [vmem:[%s6 + $0x4] sm:$0xf]
  %v1751 = vld [vmem:[%s6 + $0x8] sm:$0xf]
  %v1752 = vld [vmem:[%s6 + $0xc] sm:$0xf]
  %v1753 = vld [vmem:[%s6 + $0x10] sm:$0xf]
  %v1754 = vld [vmem:[%s6 + $0x14] sm:$0xf]
  %v1755 = vld [vmem:[%s6 + $0x18] sm:$0xf]
  %v1756 = vld [vmem:[%s6 + $0x1c] sm:$0xf]
  %v1757 = vld [vmem:[%s7] sm:$0x1]
  %v1758 = vpack.c.bf16 %v1746, %v1745
  %v1759 = vpack.c.bf16 %v1748, %v1747
  %1760 = vmatpush.bf16.msra.mxu0 0
  %1761 = vmatpush.bf16.msra.mxu0 0
  %1762 = vmatpush.bf16.msra.mxu0 0
  %1763 = vmatpush.bf16.msra.mxu0 0
  %1764 = vmatpush.bf16.msra.mxu0 0
  %1765 = vmatpush.bf16.msra.mxu0 0
  %1766 = vmatpush.bf16.msra.mxu0 %v1759
  %1767 = vmatpush.bf16.msra.mxu0 %v1758
  %1768 = vmatmul.bf16.gmra.mxu0 %v100
  %v1769 = vpop.f32.mrf.mxu0
  %v1770 = vadd.f32 0.0, %v1769
  %v1771 = vpop.f32.mrf.mxu0
  %v1772 = vadd.f32 0.0, %v1771
  %1773 = vmatmul.bf16.gmra.mxu0 %v103
  %v1774 = vpop.f32.mrf.mxu0
  %v1775 = vadd.f32 0.0, %v1774
  %v1776 = vpop.f32.mrf.mxu0
  %v1777 = vadd.f32 0.0, %v1776
  %1778 = vdwg.mxu0
  %1783 = vrot.lane.b32.xlu0 %v1745, 32
  %v1784 = vpop.permute.xlu0 %1783
  %1785 = vrot.lane.b32.xlu0 %v1746, 32
  %v1786 = vpop.permute.xlu0 %1785
  %1787 = vrot.lane.b32.xlu0 %v1747, 32
  %v1788 = vpop.permute.xlu0 %1787
  %1789 = vrot.lane.b32.xlu0 %v1748, 32
  %v1790 = vpop.permute.xlu0 %1789
  %v1795 = vsel %vm98, %v1770, %v1784
  %v1796 = vsel %vm98, %v1772, %v1786
  %v1797 = vsel %vm98, %v1775, %v1788
  %v1798 = vsel %vm98, %v1777, %v1790
  %v1799 = vpack.c.bf16 %v1796, %v1795
  %v1800 = vpack.c.bf16 %v1798, %v1797
  %v1802 = vperm.slane %v1757, 0
  %v1812 = vunpack.c.l.b16 %v1749
  %v1813 = vunpack.c.l.b16 %v1750
  %v1814 = vunpack.c.l.b16 %v1751
  %v1815 = vunpack.c.l.b16 %v1752
  %v1816 = vunpack.c.l.b16 %v1753
  %v1817 = vunpack.c.l.b16 %v1754
  %v1818 = vunpack.c.l.b16 %v1755
  %v1819 = vunpack.c.l.b16 %v1756
  %v1820 = vpack.c.b16 %v1813, %v1812
  %v1821 = vpack.c.b16 %v1815, %v1814
  %v1822 = vpack.c.b16 %v1817, %v1816
  %v1823 = vpack.c.b16 %v1819, %v1818
  %v1829 = vsel %vm461, %v1799, 0
  %v1832 = vsel %vm461, %v1800, 0
  %1834 = vmatpush.bf16.msra.mxu0 0
  %1835 = vmatpush.bf16.msra.mxu0 0
  %1836 = vmatpush.bf16.msra.mxu0 0
  %1837 = vmatpush.bf16.msra.mxu0 0
  %1838 = vmatpush.bf16.msra.mxu0 %v1823
  %1839 = vmatpush.bf16.msra.mxu0 %v1822
  %1840 = vmatpush.bf16.msra.mxu0 %v1821
  %1841 = vmatpush.bf16.msra.mxu0 %v1820
  %1842 = vmatmul.bf16.gmra.mxu0 %v1829
  %v1843 = vpop.f32.mrf.mxu0
  %v1844 = vadd.f32 %v1802, %v1843
  %v1845 = vpop.f32.mrf.mxu0
  %v1846 = vadd.f32 %v1802, %v1845
  %1847 = vmatmul.bf16.gmra.mxu0 %v1832
  %v1848 = vpop.f32.mrf.mxu0
  %v1849 = vadd.f32 %v1802, %v1848
  %v1850 = vpop.f32.mrf.mxu0
  %v1851 = vadd.f32 %v1802, %v1850
  %1852 = vdwg.mxu0
  %vm1853 = vcmask 23552
  %1854 = vst.msk [vmem:[%s8] sm:$0xff] %vm1853, %v1844
  %1855 = vst.msk [vmem:[%s8 + $0x8] sm:$0xff] %vm1853, %v1846
  %1856 = vst.msk [vmem:[%s8 + $0x10] sm:$0xff] %vm1853, %v1849
  %1857 = vst.msk [vmem:[%s8 + $0x18] sm:$0xff] %vm1853, %v1851
  %1858 = vst.msk [vmem:[%s9] sm:$0xff] %vm98, %v1745
  %1859 = vst.msk [vmem:[%s9 + $0x8] sm:$0xff] %vm98, %v1746
  %1860 = vst.msk [vmem:[%s9 + $0x10] sm:$0xff] %vm98, %v1747
  %1861 = vst.msk [vmem:[%s9 + $0x18] sm:$0xff] %vm98, %v1748
  // Predicated region
  $region34: #{reconstruction3d_forward.13} parent=0 // pred_check
    _
  $region35: #{reconstruction3d_forward.13} parent=0 // pred_check_branch
    %1863 = sbr.rel (0) target = $region37
  $region36: #{reconstruction3d_forward.13} parent=0 // pred_region
    _
  $region37: #{reconstruction3d_forward.13} parent=0 // pred_fallthru
    _
  // Predicated region
  $region38: #{reconstruction3d_forward.13} parent=0 // pred_check
    _
  $region39: #{reconstruction3d_forward.13} parent=0 // pred_check_branch
    %1865 = sbr.rel (0) target = $region41
  $region40: #{reconstruction3d_forward.13} parent=0 // pred_region
    _
  $region41: #{reconstruction3d_forward.13} parent=0 // pred_fallthru
    _
  // Predicated region
  $region42: #{reconstruction3d_forward.13} parent=0 // pred_check
    _
  $region43: #{reconstruction3d_forward.13} parent=0 // pred_check_branch
    %1867 = sbr.rel (0) target = $region45
  $region44: #{reconstruction3d_forward.13} parent=0 // pred_region
    _
  $region45: #{reconstruction3d_forward.13} parent=0 // pred_fallthru
    _
  // Predicated region
  $region46: #{reconstruction3d_forward.13} parent=0 // pred_check
    _
  $region47: #{reconstruction3d_forward.13} parent=0 // pred_check_branch
    %1869 = sbr.rel (0) target = $region49
  $region48: #{reconstruction3d_forward.13} parent=0 // pred_region
    _
  $region49: #{reconstruction3d_forward.13} parent=0 // pred_fallthru
    _

// kernel: reconstruction3d_forward.15
$region0: #{reconstruction3d_forward.15}
  #allocation0 [shape = 'u32[]', space=smem, size = 0x4, offset = 0x4, fixed_abs, tag = 'smem constant byte address 0x4 - core index']
  #allocation1 [shape = 'u32[72,128]{1,0:T(1,128)}', space=vmem, size = 0x9000, scoped, tag = 'internal scratch']
  %s0 = inlined_call_operand.vmem [shape: f32[48,16], index: 0, kind: input, shape index: {}]
  %s1 = inlined_call_operand.vmem [shape: bf16[48,48], index: 1, kind: input, shape index: {}]
  %s2 = inlined_call_operand.vmem [shape: bf16[32,3], index: 2, kind: input, shape index: {}]
  %s3 = inlined_call_operand.vmem [shape: f32[1,3], index: 3, kind: input, shape index: {}]
  %s4 = inlined_call_operand.vmem [shape: f32[48,3], index: 4, kind: output, shape index: {}]
  %s5 = sld [smem:[#allocation0]]
  $region26: #{reconstruction3d_forward.15} parent=0
    _
  %s7 = ssub.s32 1, %s5
  %s8 = scalar_select 0, %s7, %s5
  // Predicated region
  $region2: #{reconstruction3d_forward.15} parent=0 // pred_check
    _
  $region3: #{reconstruction3d_forward.15} parent=0 // pred_check_branch
    %10 = sbr.rel (0) target = $region5
  $region4: #{reconstruction3d_forward.15} parent=0 // pred_region
    _
  $region5: #{reconstruction3d_forward.15} parent=0 // pred_fallthru
    _
  // Predicated region
  $region6: #{reconstruction3d_forward.15} parent=0 // pred_check
    _
  $region7: #{reconstruction3d_forward.15} parent=0 // pred_check_branch
    %12 = sbr.rel (0) target = $region9
  $region8: #{reconstruction3d_forward.15} parent=0 // pred_region
    _
  $region9: #{reconstruction3d_forward.15} parent=0 // pred_fallthru
    _
  // Predicated region
  $region10: #{reconstruction3d_forward.15} parent=0 // pred_check
    _
  $region11: #{reconstruction3d_forward.15} parent=0 // pred_check_branch
    %14 = sbr.rel (0) target = $region13
  $region12: #{reconstruction3d_forward.15} parent=0 // pred_region
    _
  $region13: #{reconstruction3d_forward.15} parent=0 // pred_fallthru
    _
  // Predicated region
  $region14: #{reconstruction3d_forward.15} parent=0 // pred_check
    _
  $region15: #{reconstruction3d_forward.15} parent=0 // pred_check_branch
    %16 = sbr.rel (0) target = $region17
  $region16: #{reconstruction3d_forward.15} parent=0 // pred_region
    _
  $region17: #{reconstruction3d_forward.15} parent=0 // pred_fallthru
    _
  %v18 = vld [vmem:[%s1] sm:$0xf]
  %v19 = vld [vmem:[%s1 + $0x4] sm:$0xf]
  %v20 = vld [vmem:[%s1 + $0x8] sm:$0xf]
  %v21 = vld [vmem:[%s1 + $0xc] sm:$0xf]
  %v22 = vld [vmem:[%s1 + $0x10] sm:$0xf]
  %v23 = vld [vmem:[%s1 + $0x14] sm:$0xf]
  %v24 = vld [vmem:[%s0] sm:$0xff]
  %v25 = vld [vmem:[%s0 + $0x8] sm:$0xff]
  %v26 = vld [vmem:[%s0 + $0x10] sm:$0xff]
  %v27 = vld [vmem:[%s0 + $0x18] sm:$0xff]
  %v28 = vld [vmem:[%s0 + $0x20] sm:$0xff]
  %v29 = vld [vmem:[%s0 + $0x28] sm:$0xff]
  %v30 = vld [vmem:[%s2] sm:$0xf]
  %v31 = vld [vmem:[%s2 + $0x4] sm:$0xf]
  %v32 = vld [vmem:[%s2 + $0x8] sm:$0xf]
  %v33 = vld [vmem:[%s2 + $0xc] sm:$0xf]
  %v34 = vld [vmem:[%s3] sm:$0x1]
  %v35 = vpack.c.bf16 %v25, %v24
  %v36 = vpack.c.bf16 %v27, %v26
  %v37 = vpack.c.bf16 %v29, %v28
  %v44 = vunpack.c.l.b16 %v18
  %v45 = vunpack.c.l.b16 %v19
  %v46 = vunpack.c.l.b16 %v20
  %v47 = vunpack.c.l.b16 %v21
  %v48 = vunpack.c.l.b16 %v22
  %v49 = vunpack.c.l.b16 %v23
  %v50 = vpack.c.b16 %v45, %v44
  %v51 = vpack.c.b16 %v47, %v46
  %v52 = vpack.c.b16 %v49, %v48
  %vm53 = vcmask 392192
  %v55 = vsel %vm53, %v50, 0
  %v58 = vsel %vm53, %v51, 0
  %v61 = vsel %vm53, %v52, 0
  %63 = vmatpush.bf16.msra.mxu0 0
  %64 = vmatpush.bf16.msra.mxu0 0
  %65 = vmatpush.bf16.msra.mxu0 0
  %66 = vmatpush.bf16.msra.mxu0 0
  %67 = vmatpush.bf16.msra.mxu0 0
  %68 = vmatpush.bf16.msra.mxu0 %v37
  %69 = vmatpush.bf16.msra.mxu0 %v36
  %70 = vmatpush.bf16.msra.mxu0 %v35
  %71 = vmatmul.bf16.gmra.mxu0 %v55
  %v72 = vpop.f32.mrf.mxu0
  %v73 = vadd.f32 0.0, %v72
  %v74 = vpop.f32.mrf.mxu0
  %v75 = vadd.f32 0.0, %v74
  %76 = vmatmul.bf16.gmra.mxu0 %v58
  %v77 = vpop.f32.mrf.mxu0
  %v78 = vadd.f32 0.0, %v77
  %v79 = vpop.f32.mrf.mxu0
  %v80 = vadd.f32 0.0, %v79
  %81 = vmatmul.bf16.gmra.mxu0 %v61
  %v82 = vpop.f32.mrf.mxu0
  %v83 = vadd.f32 0.0, %v82
  %v84 = vpop.f32.mrf.mxu0
  %v85 = vadd.f32 0.0, %v84
  %86 = vdwg.mxu0
  %93 = vrot.lane.b32.xlu0 %v24, 16
  %v94 = vpop.permute.xlu0 %93
  %95 = vrot.lane.b32.xlu0 %v25, 16
  %v96 = vpop.permute.xlu0 %95
  %97 = vrot.lane.b32.xlu0 %v26, 16
  %v98 = vpop.permute.xlu0 %97
  %99 = vrot.lane.b32.xlu0 %v27, 16
  %v100 = vpop.permute.xlu0 %99
  %101 = vrot.lane.b32.xlu0 %v28, 16
  %v102 = vpop.permute.xlu0 %101
  %103 = vrot.lane.b32.xlu0 %v29, 16
  %v104 = vpop.permute.xlu0 %103
  %vm111 = vcmask 130048
  %v112 = vsel %vm111, %v73, %v94
  %v113 = vsel %vm111, %v75, %v96
  %v114 = vsel %vm111, %v78, %v98
  %v115 = vsel %vm111, %v80, %v100
  %v116 = vsel %vm111, %v83, %v102
  %v117 = vsel %vm111, %v85, %v104
  %v118 = vpack.c.bf16 %v113, %v112
  %v119 = vpack.c.bf16 %v115, %v114
  %v120 = vpack.c.bf16 %v117, %v116
  %v122 = vperm.slane %v34, 0
  %v128 = vunpack.c.l.b16 %v30
  %v129 = vunpack.c.l.b16 %v31
  %v130 = vunpack.c.l.b16 %v32
  %v131 = vunpack.c.l.b16 %v33
  %v132 = vpack.c.b16 %v129, %v128
  %v133 = vpack.c.b16 %v131, %v130
  %vm136 = vcmask 261120
  %v138 = vsel %vm136, %v118, 0
  %v141 = vsel %vm136, %v119, 0
  %v144 = vsel %vm136, %v120, 0
  %146 = vmatpush.bf16.msra.mxu0 0
  %147 = vmatpush.bf16.msra.mxu0 0
  %148 = vmatpush.bf16.msra.mxu0 0
  %149 = vmatpush.bf16.msra.mxu0 0
  %150 = vmatpush.bf16.msra.mxu0 0
  %151 = vmatpush.bf16.msra.mxu0 0
  %152 = vmatpush.bf16.msra.mxu0 %v133
  %153 = vmatpush.bf16.msra.mxu0 %v132
  %154 = vmatmul.bf16.gmra.mxu0 %v138
  %v155 = vpop.f32.mrf.mxu0
  %v156 = vadd.f32 %v122, %v155
  %v157 = vpop.f32.mrf.mxu0
  %v158 = vadd.f32 %v122, %v157
  %159 = vmatmul.bf16.gmra.mxu0 %v141
  %v160 = vpop.f32.mrf.mxu0
  %v161 = vadd.f32 %v122, %v160
  %v162 = vpop.f32.mrf.mxu0
  %v163 = vadd.f32 %v122, %v162
  %164 = vmatmul.bf16.gmra.mxu0 %v144
  %v165 = vpop.f32.mrf.mxu0
  %v166 = vadd.f32 %v122, %v165
  %v167 = vpop.f32.mrf.mxu0
  %v168 = vadd.f32 %v122, %v167
  %169 = vdwg.mxu0
  %vm170 = vcmask 23552
  %171 = vst.msk [vmem:[%s4] sm:$0xff] %vm170, %v156
  %172 = vst.msk [vmem:[%s4 + $0x8] sm:$0xff] %vm170, %v158
  %173 = vst.msk [vmem:[%s4 + $0x10] sm:$0xff] %vm170, %v161
  %174 = vst.msk [vmem:[%s4 + $0x18] sm:$0xff] %vm170, %v163
  %175 = vst.msk [vmem:[%s4 + $0x20] sm:$0xff] %vm170, %v166
  %176 = vst.msk [vmem:[%s4 + $0x28] sm:$0xff] %vm170, %v168
  // Predicated region
  $region18: #{reconstruction3d_forward.15} parent=0 // pred_check
    _
  $region19: #{reconstruction3d_forward.15} parent=0 // pred_check_branch
    %178 = sbr.rel (0) target = $region21
  $region20: #{reconstruction3d_forward.15} parent=0 // pred_region
    _
  $region21: #{reconstruction3d_forward.15} parent=0 // pred_fallthru
    _
  // Predicated region
  $region22: #{reconstruction3d_forward.15} parent=0 // pred_check
    _
  $region23: #{reconstruction3d_forward.15} parent=0 // pred_check_branch
    %180 = sbr.rel (0) target = $region25
  $region24: #{reconstruction3d_forward.15} parent=0 // pred_region
    _
  $region25: #{reconstruction3d_forward.15} parent=0 // pred_fallthru
    _

// kernel: reconstruction3d_forward.14
$region0: #{reconstruction3d_forward.14}
  #allocation0 [shape = 'u32[]', space=smem, size = 0x4, offset = 0x4, fixed_abs, tag = 'smem constant byte address 0x4 - core index']
  #allocation1 [shape = 'u32[72,128]{1,0:T(1,128)}', space=vmem, size = 0x9000, scoped, tag = 'internal scratch']
  %s0 = inlined_call_operand.vmem [shape: f32[48,155], index: 0, kind: input, shape index: {}]
  %s1 = inlined_call_operand.vmem [shape: bf16[48,48], index: 1, kind: input, shape index: {}]
  %s2 = inlined_call_operand.vmem [shape: bf16[310,32], index: 2, kind: input, shape index: {}]
  %s3 = inlined_call_operand.vmem [shape: f32[1,32], index: 3, kind: input, shape index: {}]
  %s4 = inlined_call_operand.vmem [shape: bf16[12,64,32], index: 4, kind: input, shape index: {}]
  %s5 = inlined_call_operand.vmem [shape: f32[12,1,32], index: 5, kind: input, shape index: {}]
  %s6 = inlined_call_operand.vmem [shape: bf16[64,16], index: 6, kind: input, shape index: {}]
  %s7 = inlined_call_operand.vmem [shape: f32[1,16], index: 7, kind: input, shape index: {}]
  %s8 = inlined_call_operand.vmem [shape: f32[48,16], index: 8, kind: output, shape index: {0}]
  %s9 = inlined_call_operand.hbm [shape: f32[48,32], index: 9, kind: output, shape index: {1}]
  %10 = xla_tuple %s8, %s9
  %s11 = sld [smem:[#allocation0]]
  $region50: #{reconstruction3d_forward.14} parent=0
    _
  %s13 = ssub.s32 1, %s11
  %s14 = scalar_select 0, %s13, %s11
  $region1: #{reconstruction3d_forward.14} parent=0
    #allocation2 [shape = 'u8[24576]{0}', space=vmem, size = 0x6000, scoped, tag = 'output window, operand 1, single buffered']
    #allocation3 [shape = 's32[1]{0}', space=sflag, size = 0x4, scoped, tag = 'scoped memory for reconstruction3d_forward.14']
    %15 = vsyncpa [#allocation3], 0
    // Predicated region
    $region2: #{reconstruction3d_forward.14} parent=1 // pred_check
      _
    $region3: #{reconstruction3d_forward.14} parent=1 // pred_check_branch
      %17 = sbr.rel (0) target = $region5
    $region4: #{reconstruction3d_forward.14} parent=1 // pred_region
      _
    $region5: #{reconstruction3d_forward.14} parent=1 // pred_fallthru
      _
    // Predicated region
    $region6: #{reconstruction3d_forward.14} parent=1 // pred_check
      _
    $region7: #{reconstruction3d_forward.14} parent=1 // pred_check_branch
      %19 = sbr.rel (0) target = $region9
    $region8: #{reconstruction3d_forward.14} parent=1 // pred_region
      _
    $region9: #{reconstruction3d_forward.14} parent=1 // pred_fallthru
      _
    // Predicated region
    $region10: #{reconstruction3d_forward.14} parent=1 // pred_check
      _
    $region11: #{reconstruction3d_forward.14} parent=1 // pred_check_branch
      %21 = sbr.rel (0) target = $region13
    $region12: #{reconstruction3d_forward.14} parent=1 // pred_region
      _
    $region13: #{reconstruction3d_forward.14} parent=1 // pred_fallthru
      _
    // Predicated region
    $region14: #{reconstruction3d_forward.14} parent=1 // pred_check
      _
    $region15: #{reconstruction3d_forward.14} parent=1 // pred_check_branch
      %23 = sbr.rel (0) target = $region17
    $region16: #{reconstruction3d_forward.14} parent=1 // pred_region
      _
    $region17: #{reconstruction3d_forward.14} parent=1 // pred_fallthru
      _
    // Predicated region
    $region18: #{reconstruction3d_forward.14} parent=1 // pred_check
      _
    $region19: #{reconstruction3d_forward.14} parent=1 // pred_check_branch
      %25 = sbr.rel (0) target = $region21
    $region20: #{reconstruction3d_forward.14} parent=1 // pred_region
      _
    $region21: #{reconstruction3d_forward.14} parent=1 // pred_fallthru
      _
    // Predicated region
    $region22: #{reconstruction3d_forward.14} parent=1 // pred_check
      _
    $region23: #{reconstruction3d_forward.14} parent=1 // pred_check_branch
      %27 = sbr.rel (0) target = $region25
    $region24: #{reconstruction3d_forward.14} parent=1 // pred_region
      _
    $region25: #{reconstruction3d_forward.14} parent=1 // pred_fallthru
      _
    // Predicated region
    $region26: #{reconstruction3d_forward.14} parent=1 // pred_check
      _
    $region27: #{reconstruction3d_forward.14} parent=1 // pred_check_branch
      %29 = sbr.rel (0) target = $region29
    $region28: #{reconstruction3d_forward.14} parent=1 // pred_region
      _
    $region29: #{reconstruction3d_forward.14} parent=1 // pred_fallthru
      _
    // Predicated region
    $region30: #{reconstruction3d_forward.14} parent=1 // pred_check
      _
    $region31: #{reconstruction3d_forward.14} parent=1 // pred_check_branch
      %31 = sbr.rel (0) target = $region33
    $region32: #{reconstruction3d_forward.14} parent=1 // pred_region
      _
    $region33: #{reconstruction3d_forward.14} parent=1 // pred_fallthru
      _
    %v33 = vld [vmem:[%s1] sm:$0xf]
    %v34 = vld [vmem:[%s1 + $0x4] sm:$0xf]
    %v35 = vld [vmem:[%s1 + $0x8] sm:$0xf]
    %v36 = vld [vmem:[%s1 + $0xc] sm:$0xf]
    %v37 = vld [vmem:[%s1 + $0x10] sm:$0xf]
    %v38 = vld [vmem:[%s1 + $0x14] sm:$0xf]
    %v39 = vld [vmem:[%s0] sm:$0xff]
    %v40 = vld [vmem:[%s0 + $0x8] sm:$0xff]
    %v41 = vld [vmem:[%s0 + $0x10] sm:$0xff]
    %v42 = vld [vmem:[%s0 + $0x18] sm:$0xff]
    %v43 = vld [vmem:[%s0 + $0x20] sm:$0xff]
    %v44 = vld [vmem:[%s0 + $0x28] sm:$0xff]
    %v45 = vld [vmem:[%s0 + $0x30] sm:$0xff]
    %v46 = vld [vmem:[%s0 + $0x38] sm:$0xff]
    %v47 = vld [vmem:[%s0 + $0x40] sm:$0xff]
    %v48 = vld [vmem:[%s0 + $0x48] sm:$0xff]
    %v49 = vld [vmem:[%s0 + $0x50] sm:$0xff]
    %v50 = vld [vmem:[%s0 + $0x58] sm:$0xff]
    %v51 = vld [vmem:[%s2] sm:$0xf]
    %v52 = vld [vmem:[%s2 + $0x4] sm:$0xf]
    %v53 = vld [vmem:[%s2 + $0x8] sm:$0xf]
    %v54 = vld [vmem:[%s2 + $0xc] sm:$0xf]
    %v55 = vld [vmem:[%s2 + $0x10] sm:$0xf]
    %v56 = vld [vmem:[%s2 + $0x14] sm:$0xf]
    %v57 = vld [vmem:[%s2 + $0x18] sm:$0xf]
    %v58 = vld [vmem:[%s2 + $0x1c] sm:$0xf]
    %v59 = vld [vmem:[%s2 + $0x20] sm:$0xf]
    %v60 = vld [vmem:[%s2 + $0x24] sm:$0xf]
    %v61 = vld [vmem:[%s2 + $0x28] sm:$0xf]
    %v62 = vld [vmem:[%s2 + $0x2c] sm:$0xf]
    %v63 = vld [vmem:[%s2 + $0x30] sm:$0xf]
    %v64 = vld [vmem:[%s2 + $0x34] sm:$0xf]
    %v65 = vld [vmem:[%s2 + $0x38] sm:$0xf]
    %v66 = vld [vmem:[%s2 + $0x3c] sm:$0xf]
    %v67 = vld [vmem:[%s2 + $0x40] sm:$0xf]
    %v68 = vld [vmem:[%s2 + $0x44] sm:$0xf]
    %v69 = vld [vmem:[%s2 + $0x48] sm:$0xf]
    %v70 = vld [vmem:[%s2 + $0x4c] sm:$0xf]
    %v71 = vld [vmem:[%s2 + $0x50] sm:$0xf]
    %v72 = vld [vmem:[%s2 + $0x54] sm:$0xf]
    %v73 = vld [vmem:[%s2 + $0x58] sm:$0xf]
    %v74 = vld [vmem:[%s2 + $0x5c] sm:$0xf]
    %v75 = vld [vmem:[%s2 + $0x60] sm:$0xf]
    %v76 = vld [vmem:[%s2 + $0x64] sm:$0xf]
    %v77 = vld [vmem:[%s2 + $0x68] sm:$0xf]
    %v78 = vld [vmem:[%s2 + $0x6c] sm:$0xf]
    %v79 = vld [vmem:[%s2 + $0x70] sm:$0xf]
    %v80 = vld [vmem:[%s2 + $0x74] sm:$0xf]
    %v81 = vld [vmem:[%s2 + $0x78] sm:$0xf]
    %v82 = vld [vmem:[%s2 + $0x7c] sm:$0xf]
    %v83 = vld [vmem:[%s2 + $0x80] sm:$0xf]
    %v84 = vld [vmem:[%s2 + $0x84] sm:$0xf]
    %v85 = vld [vmem:[%s2 + $0x88] sm:$0xf]
    %v86 = vld [vmem:[%s2 + $0x8c] sm:$0xf]
    %v87 = vld [vmem:[%s2 + $0x90] sm:$0xf]
    %v88 = vld [vmem:[%s2 + $0x94] sm:$0xf]
    %v89 = vld [vmem:[%s2 + $0x98] sm:$0x7]
    %v90 = vld [vmem:[%s3] sm:$0x1]
    %v91 = vpack.c.bf16 %v41, %v39
    %v92 = vpack.c.bf16 %v42, %v40
    %v93 = vpack.c.bf16 %v45, %v43
    %v94 = vpack.c.bf16 %v46, %v44
    %v95 = vpack.c.bf16 %v49, %v47
    %v96 = vpack.c.bf16 %v50, %v48
    %v103 = vunpack.c.l.b16 %v33
    %v104 = vunpack.c.l.b16 %v34
    %v105 = vunpack.c.l.b16 %v35
    %v106 = vunpack.c.l.b16 %v36
    %v107 = vunpack.c.l.b16 %v37
    %v108 = vunpack.c.l.b16 %v38
    %v109 = vpack.c.b16 %v104, %v103
    %v110 = vpack.c.b16 %v106, %v105
    %v111 = vpack.c.b16 %v108, %v107
    %vm112 = vcmask 392192
    %v114 = vsel %vm112, %v109, 0
    %v117 = vsel %vm112, %v110, 0
    %v120 = vsel %vm112, %v111, 0
    %122 = vmatpush.bf16.msra.mxu0 0
    %123 = vmatpush.bf16.msra.mxu0 0
    %124 = vmatpush.bf16.msra.mxu0 0
    %125 = vmatpush.bf16.msra.mxu0 0
    %126 = vmatpush.bf16.msra.mxu0 0
    %127 = vmatpush.bf16.msra.mxu0 %v95
    %128 = vmatpush.bf16.msra.mxu0 %v93
    %129 = vmatpush.bf16.msra.mxu0 %v91
    %130 = vmatmul.bf16.gmra.mxu0 %v114
    %v131 = vpop.f32.mrf.mxu0
    %v132 = vadd.f32 0.0, %v131
    %v133 = vpop.f32.mrf.mxu0
    %v134 = vadd.f32 0.0, %v133
    %135 = vmatmul.bf16.gmra.mxu0 %v117
    %v136 = vpop.f32.mrf.mxu0
    %v137 = vadd.f32 0.0, %v136
    %v138 = vpop.f32.mrf.mxu0
    %v139 = vadd.f32 0.0, %v138
    %140 = vmatmul.bf16.gmra.mxu0 %v120
    %v141 = vpop.f32.mrf.mxu0
    %v142 = vadd.f32 0.0, %v141
    %v143 = vpop.f32.mrf.mxu0
    %v144 = vadd.f32 0.0, %v143
    %145 = vdwg.mxu0
    %146 = vmatpush.bf16.msra.mxu0 0
    %147 = vmatpush.bf16.msra.mxu0 0
    %148 = vmatpush.bf16.msra.mxu0 0
    %149 = vmatpush.bf16.msra.mxu0 0
    %150 = vmatpush.bf16.msra.mxu0 0
    %151 = vmatpush.bf16.msra.mxu0 %v96
    %152 = vmatpush.bf16.msra.mxu0 %v94
    %153 = vmatpush.bf16.msra.mxu0 %v92
    %154 = vmatmul.bf16.gmra.mxu0 %v114
    %v155 = vpop.f32.mrf.mxu0
    %v156 = vadd.f32 0.0, %v155
    %v157 = vpop.f32.mrf.mxu0
    %v158 = vadd.f32 0.0, %v157
    %159 = vmatmul.bf16.gmra.mxu0 %v117
    %v160 = vpop.f32.mrf.mxu0
    %v161 = vadd.f32 0.0, %v160
    %v162 = vpop.f32.mrf.mxu0
    %v163 = vadd.f32 0.0, %v162
    %164 = vmatmul.bf16.gmra.mxu0 %v120
    %v165 = vpop.f32.mrf.mxu0
    %v166 = vadd.f32 0.0, %v165
    %v167 = vpop.f32.mrf.mxu0
    %v168 = vadd.f32 0.0, %v167
    %169 = vdwg.mxu0
    %182 = vrot.lane.b32.xlu0 %v39, 27
    %v183 = vpop.permute.xlu0 %182
    %184 = vrot.lane.b32.xlu0 %v40, 27
    %v185 = vpop.permute.xlu0 %184
    %186 = vrot.lane.b32.xlu0 %v41, 27
    %v187 = vpop.permute.xlu0 %186
    %188 = vrot.lane.b32.xlu0 %v42, 27
    %v189 = vpop.permute.xlu0 %188
    %190 = vrot.lane.b32.xlu0 %v43, 27
    %v191 = vpop.permute.xlu0 %190
    %192 = vrot.lane.b32.xlu0 %v44, 27
    %v193 = vpop.permute.xlu0 %192
    %194 = vrot.lane.b32.xlu0 %v45, 27
    %v195 = vpop.permute.xlu0 %194
    %196 = vrot.lane.b32.xlu0 %v46, 27
    %v197 = vpop.permute.xlu0 %196
    %198 = vrot.lane.b32.xlu0 %v47, 27
    %v199 = vpop.permute.xlu0 %198
    %200 = vrot.lane.b32.xlu0 %v48, 27
    %v201 = vpop.permute.xlu0 %200
    %202 = vrot.lane.b32.xlu0 %v49, 27
    %v203 = vpop.permute.xlu0 %202
    %204 = vrot.lane.b32.xlu0 %v50, 27
    %v205 = vpop.permute.xlu0 %204
    %vm206 = vcmask 220160
    %v207 = vsel %vm206, %v183, %v185
    %v208 = vsel %vm206, %v187, %v189
    %v209 = vsel %vm206, %v191, %v193
    %v210 = vsel %vm206, %v195, %v197
    %v211 = vsel %vm206, %v199, %v201
    %v212 = vsel %vm206, %v203, %v205
    %v225 = vsel %vm206, %v156, %v183
    %v226 = vsel %vm206, %v158, %v187
    %v227 = vsel %vm206, %v161, %v191
    %v228 = vsel %vm206, %v163, %v195
    %v229 = vsel %vm206, %v166, %v199
    %v230 = vsel %vm206, %v168, %v203
    %v231 = vpack.c.bf16 %v134, %v132
    %v232 = vpack.c.bf16 %v226, %v225
    %v233 = vpack.c.bf16 %v208, %v207
    %v234 = vpack.c.bf16 %v139, %v137
    %v235 = vpack.c.bf16 %v228, %v227
    %v236 = vpack.c.bf16 %v210, %v209
    %v237 = vpack.c.bf16 %v144, %v142
    %v238 = vpack.c.bf16 %v230, %v229
    %v239 = vpack.c.bf16 %v212, %v211
    %v241 = vperm.slane %v90, 0
    %v282 = vunpack.c.l.b16 %v51
    %v283 = vunpack.c.l.b16 %v52
    %v284 = vunpack.c.l.b16 %v53
    %v285 = vunpack.c.l.b16 %v54
    %v286 = vunpack.c.l.b16 %v55
    %v287 = vunpack.c.l.b16 %v56
    %v288 = vunpack.c.l.b16 %v57
    %v289 = vunpack.c.l.b16 %v58
    %v290 = vunpack.c.l.b16 %v59
    %v291 = vunpack.c.l.b16 %v60
    %v292 = vunpack.c.l.b16 %v61
    %v293 = vunpack.c.l.b16 %v62
    %v294 = vunpack.c.l.b16 %v63
    %v295 = vunpack.c.l.b16 %v64
    %v296 = vunpack.c.l.b16 %v65
    %v297 = vunpack.c.l.b16 %v66
    %v298 = vunpack.c.l.b16 %v67
    %v299 = vunpack.c.l.b16 %v68
    %v300 = vunpack.c.l.b16 %v69
    %v301 = vunpack.c.l.b16 %v70
    %v302 = vunpack.c.l.b16 %v71
    %v303 = vunpack.c.l.b16 %v72
    %v304 = vunpack.c.l.b16 %v73
    %v305 = vunpack.c.l.b16 %v74
    %v306 = vunpack.c.l.b16 %v75
    %v307 = vunpack.c.l.b16 %v76
    %v308 = vunpack.c.l.b16 %v77
    %v309 = vunpack.c.l.b16 %v78
    %v310 = vunpack.c.l.b16 %v79
    %v311 = vunpack.c.l.b16 %v80
    %v312 = vunpack.c.l.b16 %v81
    %v313 = vunpack.c.l.b16 %v82
    %v314 = vunpack.c.l.b16 %v83
    %v315 = vunpack.c.l.b16 %v84
    %v316 = vunpack.c.l.b16 %v85
    %v317 = vunpack.c.l.b16 %v86
    %v318 = vunpack.c.l.b16 %v87
    %v319 = vunpack.c.l.b16 %v88
    %v320 = vunpack.c.l.b16 %v89
    %v321 = vpack.c.b16 %v283, %v282
    %v322 = vpack.c.b16 %v285, %v284
    %v323 = vpack.c.b16 %v287, %v286
    %v324 = vpack.c.b16 %v289, %v288
    %v325 = vpack.c.b16 %v291, %v290
    %v326 = vpack.c.b16 %v293, %v292
    %v327 = vpack.c.b16 %v295, %v294
    %v328 = vpack.c.b16 %v297, %v296
    %v329 = vpack.c.b16 %v299, %v298
    %v330 = vpack.c.b16 %v301, %v300
    %v331 = vpack.c.b16 %v303, %v302
    %v332 = vpack.c.b16 %v305, %v304
    %v333 = vpack.c.b16 %v307, %v306
    %v334 = vpack.c.b16 %v309, %v308
    %v335 = vpack.c.b16 %v311, %v310
    %v336 = vpack.c.b16 %v313, %v312
    %v337 = vpack.c.b16 %v315, %v314
    %v338 = vpack.c.b16 %v317, %v316
    %v339 = vpack.c.b16 %v319, %v318
    %v340 = vpack.c.b16 %v320, %v320
    %vm360 = vcmask 441344
    %v362 = vsel %vm360, %v233, 0
    %v365 = vsel %vm360, %v236, 0
    %v368 = vsel %vm360, %v239, 0
    %vm370 = vcmask 1042432
    %v372 = vsel %vm370, %v340, 0
    %374 = vmatpush.bf16.msra.mxu0 %v328
    %375 = vmatpush.bf16.msra.mxu0 %v327
    %376 = vmatpush.bf16.msra.mxu0 %v326
    %377 = vmatpush.bf16.msra.mxu0 %v325
    %378 = vmatpush.bf16.msra.mxu0 %v324
    %379 = vmatpush.bf16.msra.mxu0 %v323
    %380 = vmatpush.bf16.msra.mxu0 %v322
    %381 = vmatpush.bf16.msra.mxu0 %v321
    %382 = vmatmul.bf16.gmra.mxu0 %v231
    %v383 = vpop.f32.mrf.mxu0
    %v384 = vadd.f32 %v241, %v383
    %v385 = vpop.f32.mrf.mxu0
    %v386 = vadd.f32 %v241, %v385
    %387 = vmatmul.bf16.gmra.mxu0 %v234
    %v388 = vpop.f32.mrf.mxu0
    %v389 = vadd.f32 %v241, %v388
    %v390 = vpop.f32.mrf.mxu0
    %v391 = vadd.f32 %v241, %v390
    %392 = vmatmul.bf16.gmra.mxu0 %v237
    %v393 = vpop.f32.mrf.mxu0
    %v394 = vadd.f32 %v241, %v393
    %v395 = vpop.f32.mrf.mxu0
    %v396 = vadd.f32 %v241, %v395
    %397 = vdwg.mxu0
    %398 = vmatpush.bf16.msra.mxu0 %v336
    %399 = vmatpush.bf16.msra.mxu0 %v335
    %400 = vmatpush.bf16.msra.mxu0 %v334
    %401 = vmatpush.bf16.msra.mxu0 %v333
    %402 = vmatpush.bf16.msra.mxu0 %v332
    %403 = vmatpush.bf16.msra.mxu0 %v331
    %404 = vmatpush.bf16.msra.mxu0 %v330
    %405 = vmatpush.bf16.msra.mxu0 %v329
    %406 = vmatmul.bf16.gmra.mxu0 %v232
    %v407 = vpop.f32.mrf.mxu0
    %v408 = vadd.f32 %v384, %v407
    %v409 = vpop.f32.mrf.mxu0
    %v410 = vadd.f32 %v386, %v409
    %411 = vmatmul.bf16.gmra.mxu0 %v235
    %v412 = vpop.f32.mrf.mxu0
    %v413 = vadd.f32 %v389, %v412
    %v414 = vpop.f32.mrf.mxu0
    %v415 = vadd.f32 %v391, %v414
    %416 = vmatmul.bf16.gmra.mxu0 %v238
    %v417 = vpop.f32.mrf.mxu0
    %v418 = vadd.f32 %v394, %v417
    %v419 = vpop.f32.mrf.mxu0
    %v420 = vadd.f32 %v396, %v419
    %421 = vdwg.mxu0
    %422 = vmatpush.bf16.msra.mxu0 0
    %423 = vmatpush.bf16.msra.mxu0 0
    %424 = vmatpush.bf16.msra.mxu0 0
    %425 = vmatpush.bf16.msra.mxu0 0
    %426 = vmatpush.bf16.msra.mxu0 %v372
    %427 = vmatpush.bf16.msra.mxu0 %v339
    %428 = vmatpush.bf16.msra.mxu0 %v338
    %429 = vmatpush.bf16.msra.mxu0 %v337
    %430 = vmatmul.bf16.gmra.mxu0 %v362
    %v431 = vpop.f32.mrf.mxu0
    %v432 = vadd.f32 %v408, %v431
    %v433 = vpop.f32.mrf.mxu0
    %v434 = vadd.f32 %v410, %v433
    %435 = vmatmul.bf16.gmra.mxu0 %v365
    %v436 = vpop.f32.mrf.mxu0
    %v437 = vadd.f32 %v413, %v436
    %v438 = vpop.f32.mrf.mxu0
    %v439 = vadd.f32 %v415, %v438
    %440 = vmatmul.bf16.gmra.mxu0 %v368
    %v441 = vpop.f32.mrf.mxu0
    %v442 = vadd.f32 %v418, %v441
    %v443 = vpop.f32.mrf.mxu0
    %v444 = vadd.f32 %v420, %v443
    %445 = vdwg.mxu0
    %v446 = vmax.f32 %v432, 0.0
    %v447 = vmax.f32 %v434, 0.0
    %v448 = vmax.f32 %v437, 0.0
    %v449 = vmax.f32 %v439, 0.0
    %v450 = vmax.f32 %v442, 0.0
    %v451 = vmax.f32 %v444, 0.0
    %v452 = vld [vmem:[%s4] sm:$0xf]
    %v453 = vld [vmem:[%s4 + $0x4] sm:$0xf]
    %v454 = vld [vmem:[%s4 + $0x8] sm:$0xf]
    %v455 = vld [vmem:[%s4 + $0xc] sm:$0xf]
    %v456 = vld [vmem:[%s4 + $0x10] sm:$0xf]
    %v457 = vld [vmem:[%s4 + $0x14] sm:$0xf]
    %v458 = vld [vmem:[%s4 + $0x18] sm:$0xf]
    %v459 = vld [vmem:[%s4 + $0x1c] sm:$0xf]
    %v460 = vld [vmem:[%s5] sm:$0x1]
    %v461 = vpack.c.bf16 %v447, %v446
    %v462 = vpack.c.bf16 %v449, %v448
    %v463 = vpack.c.bf16 %v451, %v450
    %464 = vmatpush.bf16.msra.mxu0 0
    %465 = vmatpush.bf16.msra.mxu0 0
    %466 = vmatpush.bf16.msra.mxu0 0
    %467 = vmatpush.bf16.msra.mxu0 0
    %468 = vmatpush.bf16.msra.mxu0 0
    %469 = vmatpush.bf16.msra.mxu0 %v463
    %470 = vmatpush.bf16.msra.mxu0 %v462
    %471 = vmatpush.bf16.msra.mxu0 %v461
    %472 = vmatmul.bf16.gmra.mxu0 %v114
    %v473 = vpop.f32.mrf.mxu0
    %v474 = vadd.f32 0.0, %v473
    %v475 = vpop.f32.mrf.mxu0
    %v476 = vadd.f32 0.0, %v475
    %477 = vmatmul.bf16.gmra.mxu0 %v117
    %v478 = vpop.f32.mrf.mxu0
    %v479 = vadd.f32 0.0, %v478
    %v480 = vpop.f32.mrf.mxu0
    %v481 = vadd.f32 0.0, %v480
    %482 = vmatmul.bf16.gmra.mxu0 %v120
    %v483 = vpop.f32.mrf.mxu0
    %v484 = vadd.f32 0.0, %v483
    %v485 = vpop.f32.mrf.mxu0
    %v486 = vadd.f32 0.0, %v485
    %487 = vdwg.mxu0
    %494 = vrot.lane.b32.xlu0 %v446, 32
    %v495 = vpop.permute.xlu0 %494
    %496 = vrot.lane.b32.xlu0 %v447, 32
    %v497 = vpop.permute.xlu0 %496
    %498 = vrot.lane.b32.xlu0 %v448, 32
    %v499 = vpop.permute.xlu0 %498
    %500 = vrot.lane.b32.xlu0 %v449, 32
    %v501 = vpop.permute.xlu0 %500
    %502 = vrot.lane.b32.xlu0 %v450, 32
    %v503 = vpop.permute.xlu0 %502
    %504 = vrot.lane.b32.xlu0 %v451, 32
    %v505 = vpop.permute.xlu0 %504
    %vm512 = vcmask 261120
    %v513 = vsel %vm512, %v474, %v495
    %v514 = vsel %vm512, %v476, %v497
    %v515 = vsel %vm512, %v479, %v499
    %v516 = vsel %vm512, %v481, %v501
    %v517 = vsel %vm512, %v484, %v503
    %v518 = vsel %vm512, %v486, %v505
    %v519 = vpack.c.bf16 %v514, %v513
    %v520 = vpack.c.bf16 %v516, %v515
    %v521 = vpack.c.bf16 %v518, %v517
    %v523 = vperm.slane %v460, 0
    %v533 = vunpack.c.l.b16 %v452
    %v534 = vunpack.c.l.b16 %v453
    %v535 = vunpack.c.l.b16 %v454
    %v536 = vunpack.c.l.b16 %v455
    %v537 = vunpack.c.l.b16 %v456
    %v538 = vunpack.c.l.b16 %v457
    %v539 = vunpack.c.l.b16 %v458
    %v540 = vunpack.c.l.b16 %v459
    %v541 = vpack.c.b16 %v534, %v533
    %v542 = vpack.c.b16 %v536, %v535
    %v543 = vpack.c.b16 %v538, %v537
    %v544 = vpack.c.b16 %v540, %v539
    %vm549 = vcmask 523264
    %v551 = vsel %vm549, %v519, 0
    %v554 = vsel %vm549, %v520, 0
    %v557 = vsel %vm549, %v521, 0
    %559 = vmatpush.bf16.msra.mxu0 0
    %560 = vmatpush.bf16.msra.mxu0 0
    %561 = vmatpush.bf16.msra.mxu0 0
    %562 = vmatpush.bf16.msra.mxu0 0
    %563 = vmatpush.bf16.msra.mxu0 %v544
    %564 = vmatpush.bf16.msra.mxu0 %v543
    %565 = vmatpush.bf16.msra.mxu0 %v542
    %566 = vmatpush.bf16.msra.mxu0 %v541
    %567 = vmatmul.bf16.gmra.mxu0 %v551
    %v568 = vpop.f32.mrf.mxu0
    %v569 = vadd.f32 %v523, %v568
    %v570 = vpop.f32.mrf.mxu0
    %v571 = vadd.f32 %v523, %v570
    %572 = vmatmul.bf16.gmra.mxu0 %v554
    %v573 = vpop.f32.mrf.mxu0
    %v574 = vadd.f32 %v523, %v573
    %v575 = vpop.f32.mrf.mxu0
    %v576 = vadd.f32 %v523, %v575
    %577 = vmatmul.bf16.gmra.mxu0 %v557
    %v578 = vpop.f32.mrf.mxu0
    %v579 = vadd.f32 %v523, %v578
    %v580 = vpop.f32.mrf.mxu0
    %v581 = vadd.f32 %v523, %v580
    %582 = vdwg.mxu0
    %v583 = vmax.f32 %v569, 0.0
    %v584 = vmax.f32 %v571, 0.0
    %v585 = vmax.f32 %v574, 0.0
    %v586 = vmax.f32 %v576, 0.0
    %v587 = vmax.f32 %v579, 0.0
    %v588 = vmax.f32 %v581, 0.0
    %s589 = scalar_lea.vmem %s4, 32
    %v590 = vld [vmem:[%s589] sm:$0xf]
    %v591 = vld [vmem:[%s589 + $0x4] sm:$0xf]
    %v592 = vld [vmem:[%s589 + $0x8] sm:$0xf]
    %v593 = vld [vmem:[%s589 + $0xc] sm:$0xf]
    %v594 = vld [vmem:[%s589 + $0x10] sm:$0xf]
    %v595 = vld [vmem:[%s589 + $0x14] sm:$0xf]
    %v596 = vld [vmem:[%s589 + $0x18] sm:$0xf]
    %v597 = vld [vmem:[%s589 + $0x1c] sm:$0xf]
    %s598 = scalar_lea.vmem %s5, 1
    %v599 = vld [vmem:[%s598] sm:$0x1]
    %v600 = vpack.c.bf16 %v584, %v583
    %v601 = vpack.c.bf16 %v586, %v585
    %v602 = vpack.c.bf16 %v588, %v587
    %603 = vmatpush.bf16.msra.mxu0 0
    %604 = vmatpush.bf16.msra.mxu0 0
    %605 = vmatpush.bf16.msra.mxu0 0
    %606 = vmatpush.bf16.msra.mxu0 0
    %607 = vmatpush.bf16.msra.mxu0 0
    %608 = vmatpush.bf16.msra.mxu0 %v602
    %609 = vmatpush.bf16.msra.mxu0 %v601
    %610 = vmatpush.bf16.msra.mxu0 %v600
    %611 = vmatmul.bf16.gmra.mxu0 %v114
    %v612 = vpop.f32.mrf.mxu0
    %v613 = vadd.f32 0.0, %v612
    %v614 = vpop.f32.mrf.mxu0
    %v615 = vadd.f32 0.0, %v614
    %616 = vmatmul.bf16.gmra.mxu0 %v117
    %v617 = vpop.f32.mrf.mxu0
    %v618 = vadd.f32 0.0, %v617
    %v619 = vpop.f32.mrf.mxu0
    %v620 = vadd.f32 0.0, %v619
    %621 = vmatmul.bf16.gmra.mxu0 %v120
    %v622 = vpop.f32.mrf.mxu0
    %v623 = vadd.f32 0.0, %v622
    %v624 = vpop.f32.mrf.mxu0
    %v625 = vadd.f32 0.0, %v624
    %626 = vdwg.mxu0
    %633 = vrot.lane.b32.xlu0 %v583, 32
    %v634 = vpop.permute.xlu0 %633
    %635 = vrot.lane.b32.xlu0 %v584, 32
    %v636 = vpop.permute.xlu0 %635
    %637 = vrot.lane.b32.xlu0 %v585, 32
    %v638 = vpop.permute.xlu0 %637
    %639 = vrot.lane.b32.xlu0 %v586, 32
    %v640 = vpop.permute.xlu0 %639
    %641 = vrot.lane.b32.xlu0 %v587, 32
    %v642 = vpop.permute.xlu0 %641
    %643 = vrot.lane.b32.xlu0 %v588, 32
    %v644 = vpop.permute.xlu0 %643
    %v651 = vsel %vm512, %v613, %v634
    %v652 = vsel %vm512, %v615, %v636
    %v653 = vsel %vm512, %v618, %v638
    %v654 = vsel %vm512, %v620, %v640
    %v655 = vsel %vm512, %v623, %v642
    %v656 = vsel %vm512, %v625, %v644
    %v657 = vpack.c.bf16 %v652, %v651
    %v658 = vpack.c.bf16 %v654, %v653
    %v659 = vpack.c.bf16 %v656, %v655
    %v661 = vperm.slane %v599, 0
    %v671 = vunpack.c.l.b16 %v590
    %v672 = vunpack.c.l.b16 %v591
    %v673 = vunpack.c.l.b16 %v592
    %v674 = vunpack.c.l.b16 %v593
    %v675 = vunpack.c.l.b16 %v594
    %v676 = vunpack.c.l.b16 %v595
    %v677 = vunpack.c.l.b16 %v596
    %v678 = vunpack.c.l.b16 %v597
    %v679 = vpack.c.b16 %v672, %v671
    %v680 = vpack.c.b16 %v674, %v673
    %v681 = vpack.c.b16 %v676, %v675
    %v682 = vpack.c.b16 %v678, %v677
    %v688 = vsel %vm549, %v657, 0
    %v691 = vsel %vm549, %v658, 0
    %v694 = vsel %vm549, %v659, 0
    %696 = vmatpush.bf16.msra.mxu0 0
    %697 = vmatpush.bf16.msra.mxu0 0
    %698 = vmatpush.bf16.msra.mxu0 0
    %699 = vmatpush.bf16.msra.mxu0 0
    %700 = vmatpush.bf16.msra.mxu0 %v682
    %701 = vmatpush.bf16.msra.mxu0 %v681
    %702 = vmatpush.bf16.msra.mxu0 %v680
    %703 = vmatpush.bf16.msra.mxu0 %v679
    %704 = vmatmul.bf16.gmra.mxu0 %v688
    %v705 = vpop.f32.mrf.mxu0
    %v706 = vadd.f32 %v661, %v705
    %v707 = vpop.f32.mrf.mxu0
    %v708 = vadd.f32 %v661, %v707
    %709 = vmatmul.bf16.gmra.mxu0 %v691
    %v710 = vpop.f32.mrf.mxu0
    %v711 = vadd.f32 %v661, %v710
    %v712 = vpop.f32.mrf.mxu0
    %v713 = vadd.f32 %v661, %v712
    %714 = vmatmul.bf16.gmra.mxu0 %v694
    %v715 = vpop.f32.mrf.mxu0
    %v716 = vadd.f32 %v661, %v715
    %v717 = vpop.f32.mrf.mxu0
    %v718 = vadd.f32 %v661, %v717
    %719 = vdwg.mxu0
    %v720 = vmax.f32 %v706, 0.0
    %v721 = vmax.f32 %v708, 0.0
    %v722 = vmax.f32 %v711, 0.0
    %v723 = vmax.f32 %v713, 0.0
    %v724 = vmax.f32 %v716, 0.0
    %v725 = vmax.f32 %v718, 0.0
    %v726 = vadd.f32 %v446, %v720
    %v727 = vadd.f32 %v447, %v721
    %v728 = vadd.f32 %v448, %v722
    %v729 = vadd.f32 %v449, %v723
    %v730 = vadd.f32 %v450, %v724
    %v731 = vadd.f32 %v451, %v725
    %v732 = vmul.f32 %v726, 0.5
    %v733 = vmul.f32 %v727, 0.5
    %v734 = vmul.f32 %v728, 0.5
    %v735 = vmul.f32 %v729, 0.5
    %v736 = vmul.f32 %v730, 0.5
    %v737 = vmul.f32 %v731, 0.5
    %s738 = scalar_lea.vmem %s4, 64
    %v739 = vld [vmem:[%s738] sm:$0xf]
    %v740 = vld [vmem:[%s738 + $0x4] sm:$0xf]
    %v741 = vld [vmem:[%s738 + $0x8] sm:$0xf]
    %v742 = vld [vmem:[%s738 + $0xc] sm:$0xf]
    %v743 = vld [vmem:[%s738 + $0x10] sm:$0xf]
    %v744 = vld [vmem:[%s738 + $0x14] sm:$0xf]
    %v745 = vld [vmem:[%s738 + $0x18] sm:$0xf]
    %v746 = vld [vmem:[%s738 + $0x1c] sm:$0xf]
    %s747 = scalar_lea.vmem %s5, 2
    %v748 = vld [vmem:[%s747] sm:$0x1]
    %v749 = vpack.c.bf16 %v733, %v732
    %v750 = vpack.c.bf16 %v735, %v734
    %v751 = vpack.c.bf16 %v737, %v736
    %752 = vmatpush.bf16.msra.mxu0 0
    %753 = vmatpush.bf16.msra.mxu0 0
    %754 = vmatpush.bf16.msra.mxu0 0
    %755 = vmatpush.bf16.msra.mxu0 0
    %756 = vmatpush.bf16.msra.mxu0 0
    %757 = vmatpush.bf16.msra.mxu0 %v751
    %758 = vmatpush.bf16.msra.mxu0 %v750
    %759 = vmatpush.bf16.msra.mxu0 %v749
    %760 = vmatmul.bf16.gmra.mxu0 %v114
    %v761 = vpop.f32.mrf.mxu0
    %v762 = vadd.f32 0.0, %v761
    %v763 = vpop.f32.mrf.mxu0
    %v764 = vadd.f32 0.0, %v763
    %765 = vmatmul.bf16.gmra.mxu0 %v117
    %v766 = vpop.f32.mrf.mxu0
    %v767 = vadd.f32 0.0, %v766
    %v768 = vpop.f32.mrf.mxu0
    %v769 = vadd.f32 0.0, %v768
    %770 = vmatmul.bf16.gmra.mxu0 %v120
    %v771 = vpop.f32.mrf.mxu0
    %v772 = vadd.f32 0.0, %v771
    %v773 = vpop.f32.mrf.mxu0
    %v774 = vadd.f32 0.0, %v773
    %775 = vdwg.mxu0
    %782 = vrot.lane.b32.xlu0 %v732, 32
    %v783 = vpop.permute.xlu0 %782
    %784 = vrot.lane.b32.xlu0 %v733, 32
    %v785 = vpop.permute.xlu0 %784
    %786 = vrot.lane.b32.xlu0 %v734, 32
    %v787 = vpop.permute.xlu0 %786
    %788 = vrot.lane.b32.xlu0 %v735, 32
    %v789 = vpop.permute.xlu0 %788
    %790 = vrot.lane.b32.xlu0 %v736, 32
    %v791 = vpop.permute.xlu0 %790
    %792 = vrot.lane.b32.xlu0 %v737, 32
    %v793 = vpop.permute.xlu0 %792
    %v800 = vsel %vm512, %v762, %v783
    %v801 = vsel %vm512, %v764, %v785
    %v802 = vsel %vm512, %v767, %v787
    %v803 = vsel %vm512, %v769, %v789
    %v804 = vsel %vm512, %v772, %v791
    %v805 = vsel %vm512, %v774, %v793
    %v806 = vpack.c.bf16 %v801, %v800
    %v807 = vpack.c.bf16 %v803, %v802
    %v808 = vpack.c.bf16 %v805, %v804
    %v810 = vperm.slane %v748, 0
    %v820 = vunpack.c.l.b16 %v739
    %v821 = vunpack.c.l.b16 %v740
    %v822 = vunpack.c.l.b16 %v741
    %v823 = vunpack.c.l.b16 %v742
    %v824 = vunpack.c.l.b16 %v743
    %v825 = vunpack.c.l.b16 %v744
    %v826 = vunpack.c.l.b16 %v745
    %v827 = vunpack.c.l.b16 %v746
    %v828 = vpack.c.b16 %v821, %v820
    %v829 = vpack.c.b16 %v823, %v822
    %v830 = vpack.c.b16 %v825, %v824
    %v831 = vpack.c.b16 %v827, %v826
    %v837 = vsel %vm549, %v806, 0
    %v840 = vsel %vm549, %v807, 0
    %v843 = vsel %vm549, %v808, 0
    %845 = vmatpush.bf16.msra.mxu0 0
    %846 = vmatpush.bf16.msra.mxu0 0
    %847 = vmatpush.bf16.msra.mxu0 0
    %848 = vmatpush.bf16.msra.mxu0 0
    %849 = vmatpush.bf16.msra.mxu0 %v831
    %850 = vmatpush.bf16.msra.mxu0 %v830
    %851 = vmatpush.bf16.msra.mxu0 %v829
    %852 = vmatpush.bf16.msra.mxu0 %v828
    %853 = vmatmul.bf16.gmra.mxu0 %v837
    %v854 = vpop.f32.mrf.mxu0
    %v855 = vadd.f32 %v810, %v854
    %v856 = vpop.f32.mrf.mxu0
    %v857 = vadd.f32 %v810, %v856
    %858 = vmatmul.bf16.gmra.mxu0 %v840
    %v859 = vpop.f32.mrf.mxu0
    %v860 = vadd.f32 %v810, %v859
    %v861 = vpop.f32.mrf.mxu0
    %v862 = vadd.f32 %v810, %v861
    %863 = vmatmul.bf16.gmra.mxu0 %v843
    %v864 = vpop.f32.mrf.mxu0
    %v865 = vadd.f32 %v810, %v864
    %v866 = vpop.f32.mrf.mxu0
    %v867 = vadd.f32 %v810, %v866
    %868 = vdwg.mxu0
    %v869 = vmax.f32 %v855, 0.0
    %v870 = vmax.f32 %v857, 0.0
    %v871 = vmax.f32 %v860, 0.0
    %v872 = vmax.f32 %v862, 0.0
    %v873 = vmax.f32 %v865, 0.0
    %v874 = vmax.f32 %v867, 0.0
    %s875 = scalar_lea.vmem %s4, 96
    %v876 = vld [vmem:[%s875] sm:$0xf]
    %v877 = vld [vmem:[%s875 + $0x4] sm:$0xf]
    %v878 = vld [vmem:[%s875 + $0x8] sm:$0xf]
    %v879 = vld [vmem:[%s875 + $0xc] sm:$0xf]
    %v880 = vld [vmem:[%s875 + $0x10] sm:$0xf]
    %v881 = vld [vmem:[%s875 + $0x14] sm:$0xf]
    %v882 = vld [vmem:[%s875 + $0x18] sm:$0xf]
    %v883 = vld [vmem:[%s875 + $0x1c] sm:$0xf]
    %s884 = scalar_lea.vmem %s5, 3
    %v885 = vld [vmem:[%s884] sm:$0x1]
    %v886 = vpack.c.bf16 %v870, %v869
    %v887 = vpack.c.bf16 %v872, %v871
    %v888 = vpack.c.bf16 %v874, %v873
    %889 = vmatpush.bf16.msra.mxu0 0
    %890 = vmatpush.bf16.msra.mxu0 0
    %891 = vmatpush.bf16.msra.mxu0 0
    %892 = vmatpush.bf16.msra.mxu0 0
    %893 = vmatpush.bf16.msra.mxu0 0
    %894 = vmatpush.bf16.msra.mxu0 %v888
    %895 = vmatpush.bf16.msra.mxu0 %v887
    %896 = vmatpush.bf16.msra.mxu0 %v886
    %897 = vmatmul.bf16.gmra.mxu0 %v114
    %v898 = vpop.f32.mrf.mxu0
    %v899 = vadd.f32 0.0, %v898
    %v900 = vpop.f32.mrf.mxu0
    %v901 = vadd.f32 0.0, %v900
    %902 = vmatmul.bf16.gmra.mxu0 %v117
    %v903 = vpop.f32.mrf.mxu0
    %v904 = vadd.f32 0.0, %v903
    %v905 = vpop.f32.mrf.mxu0
    %v906 = vadd.f32 0.0, %v905
    %907 = vmatmul.bf16.gmra.mxu0 %v120
    %v908 = vpop.f32.mrf.mxu0
    %v909 = vadd.f32 0.0, %v908
    %v910 = vpop.f32.mrf.mxu0
    %v911 = vadd.f32 0.0, %v910
    %912 = vdwg.mxu0
    %919 = vrot.lane.b32.xlu0 %v869, 32
    %v920 = vpop.permute.xlu0 %919
    %921 = vrot.lane.b32.xlu0 %v870, 32
    %v922 = vpop.permute.xlu0 %921
    %923 = vrot.lane.b32.xlu0 %v871, 32
    %v924 = vpop.permute.xlu0 %923
    %925 = vrot.lane.b32.xlu0 %v872, 32
    %v926 = vpop.permute.xlu0 %925
    %927 = vrot.lane.b32.xlu0 %v873, 32
    %v928 = vpop.permute.xlu0 %927
    %929 = vrot.lane.b32.xlu0 %v874, 32
    %v930 = vpop.permute.xlu0 %929
    %v937 = vsel %vm512, %v899, %v920
    %v938 = vsel %vm512, %v901, %v922
    %v939 = vsel %vm512, %v904, %v924
    %v940 = vsel %vm512, %v906, %v926
    %v941 = vsel %vm512, %v909, %v928
    %v942 = vsel %vm512, %v911, %v930
    %v943 = vpack.c.bf16 %v938, %v937
    %v944 = vpack.c.bf16 %v940, %v939
    %v945 = vpack.c.bf16 %v942, %v941
    %v947 = vperm.slane %v885, 0
    %v957 = vunpack.c.l.b16 %v876
    %v958 = vunpack.c.l.b16 %v877
    %v959 = vunpack.c.l.b16 %v878
    %v960 = vunpack.c.l.b16 %v879
    %v961 = vunpack.c.l.b16 %v880
    %v962 = vunpack.c.l.b16 %v881
    %v963 = vunpack.c.l.b16 %v882
    %v964 = vunpack.c.l.b16 %v883
    %v965 = vpack.c.b16 %v958, %v957
    %v966 = vpack.c.b16 %v960, %v959
    %v967 = vpack.c.b16 %v962, %v961
    %v968 = vpack.c.b16 %v964, %v963
    %v974 = vsel %vm549, %v943, 0
    %v977 = vsel %vm549, %v944, 0
    %v980 = vsel %vm549, %v945, 0
    %982 = vmatpush.bf16.msra.mxu0 0
    %983 = vmatpush.bf16.msra.mxu0 0
    %984 = vmatpush.bf16.msra.mxu0 0
    %985 = vmatpush.bf16.msra.mxu0 0
    %986 = vmatpush.bf16.msra.mxu0 %v968
    %987 = vmatpush.bf16.msra.mxu0 %v967
    %988 = vmatpush.bf16.msra.mxu0 %v966
    %989 = vmatpush.bf16.msra.mxu0 %v965
    %990 = vmatmul.bf16.gmra.mxu0 %v974
    %v991 = vpop.f32.mrf.mxu0
    %v992 = vadd.f32 %v947, %v991
    %v993 = vpop.f32.mrf.mxu0
    %v994 = vadd.f32 %v947, %v993
    %995 = vmatmul.bf16.gmra.mxu0 %v977
    %v996 = vpop.f32.mrf.mxu0
    %v997 = vadd.f32 %v947, %v996
    %v998 = vpop.f32.mrf.mxu0
    %v999 = vadd.f32 %v947, %v998
    %1000 = vmatmul.bf16.gmra.mxu0 %v980
    %v1001 = vpop.f32.mrf.mxu0
    %v1002 = vadd.f32 %v947, %v1001
    %v1003 = vpop.f32.mrf.mxu0
    %v1004 = vadd.f32 %v947, %v1003
    %1005 = vdwg.mxu0
    %v1006 = vmax.f32 %v992, 0.0
    %v1007 = vmax.f32 %v994, 0.0
    %v1008 = vmax.f32 %v997, 0.0
    %v1009 = vmax.f32 %v999, 0.0
    %v1010 = vmax.f32 %v1002, 0.0
    %v1011 = vmax.f32 %v1004, 0.0
    %v1012 = vadd.f32 %v732, %v1006
    %v1013 = vadd.f32 %v733, %v1007
    %v1014 = vadd.f32 %v734, %v1008
    %v1015 = vadd.f32 %v735, %v1009
    %v1016 = vadd.f32 %v736, %v1010
    %v1017 = vadd.f32 %v737, %v1011
    %v1018 = vmul.f32 %v1012, 0.5
    %v1019 = vmul.f32 %v1013, 0.5
    %v1020 = vmul.f32 %v1014, 0.5
    %v1021 = vmul.f32 %v1015, 0.5
    %v1022 = vmul.f32 %v1016, 0.5
    %v1023 = vmul.f32 %v1017, 0.5
    %s1024 = scalar_lea.vmem %s4, 128
    %v1025 = vld [vmem:[%s1024] sm:$0xf]
    %v1026 = vld [vmem:[%s1024 + $0x4] sm:$0xf]
    %v1027 = vld [vmem:[%s1024 + $0x8] sm:$0xf]
    %v1028 = vld [vmem:[%s1024 + $0xc] sm:$0xf]
    %v1029 = vld [vmem:[%s1024 + $0x10] sm:$0xf]
    %v1030 = vld [vmem:[%s1024 + $0x14] sm:$0xf]
    %v1031 = vld [vmem:[%s1024 + $0x18] sm:$0xf]
    %v1032 = vld [vmem:[%s1024 + $0x1c] sm:$0xf]
    %s1033 = scalar_lea.vmem %s5, 4
    %v1034 = vld [vmem:[%s1033] sm:$0x1]
    %v1035 = vpack.c.bf16 %v1019, %v1018
    %v1036 = vpack.c.bf16 %v1021, %v1020
    %v1037 = vpack.c.bf16 %v1023, %v1022
    %1038 = vmatpush.bf16.msra.mxu0 0
    %1039 = vmatpush.bf16.msra.mxu0 0
    %1040 = vmatpush.bf16.msra.mxu0 0
    %1041 = vmatpush.bf16.msra.mxu0 0
    %1042 = vmatpush.bf16.msra.mxu0 0
    %1043 = vmatpush.bf16.msra.mxu0 %v1037
    %1044 = vmatpush.bf16.msra.mxu0 %v1036
    %1045 = vmatpush.bf16.msra.mxu0 %v1035
    %1046 = vmatmul.bf16.gmra.mxu0 %v114
    %v1047 = vpop.f32.mrf.mxu0
    %v1048 = vadd.f32 0.0, %v1047
    %v1049 = vpop.f32.mrf.mxu0
    %v1050 = vadd.f32 0.0, %v1049
    %1051 = vmatmul.bf16.gmra.mxu0 %v117
    %v1052 = vpop.f32.mrf.mxu0
    %v1053 = vadd.f32 0.0, %v1052
    %v1054 = vpop.f32.mrf.mxu0
    %v1055 = vadd.f32 0.0, %v1054
    %1056 = vmatmul.bf16.gmra.mxu0 %v120
    %v1057 = vpop.f32.mrf.mxu0
    %v1058 = vadd.f32 0.0, %v1057
    %v1059 = vpop.f32.mrf.mxu0
    %v1060 = vadd.f32 0.0, %v1059
    %1061 = vdwg.mxu0
    %1068 = vrot.lane.b32.xlu0 %v1018, 32
    %v1069 = vpop.permute.xlu0 %1068
    %1070 = vrot.lane.b32.xlu0 %v1019, 32
    %v1071 = vpop.permute.xlu0 %1070
    %1072 = vrot.lane.b32.xlu0 %v1020, 32
    %v1073 = vpop.permute.xlu0 %1072
    %1074 = vrot.lane.b32.xlu0 %v1021, 32
    %v1075 = vpop.permute.xlu0 %1074
    %1076 = vrot.lane.b32.xlu0 %v1022, 32
    %v1077 = vpop.permute.xlu0 %1076
    %1078 = vrot.lane.b32.xlu0 %v1023, 32
    %v1079 = vpop.permute.xlu0 %1078
    %v1086 = vsel %vm512, %v1048, %v1069
    %v1087 = vsel %vm512, %v1050, %v1071
    %v1088 = vsel %vm512, %v1053, %v1073
    %v1089 = vsel %vm512, %v1055, %v1075
    %v1090 = vsel %vm512, %v1058, %v1077
    %v1091 = vsel %vm512, %v1060, %v1079
    %v1092 = vpack.c.bf16 %v1087, %v1086
    %v1093 = vpack.c.bf16 %v1089, %v1088
    %v1094 = vpack.c.bf16 %v1091, %v1090
    %v1096 = vperm.slane %v1034, 0
    %v1106 = vunpack.c.l.b16 %v1025
    %v1107 = vunpack.c.l.b16 %v1026
    %v1108 = vunpack.c.l.b16 %v1027
    %v1109 = vunpack.c.l.b16 %v1028
    %v1110 = vunpack.c.l.b16 %v1029
    %v1111 = vunpack.c.l.b16 %v1030
    %v1112 = vunpack.c.l.b16 %v1031
    %v1113 = vunpack.c.l.b16 %v1032
    %v1114 = vpack.c.b16 %v1107, %v1106
    %v1115 = vpack.c.b16 %v1109, %v1108
    %v1116 = vpack.c.b16 %v1111, %v1110
    %v1117 = vpack.c.b16 %v1113, %v1112
    %v1123 = vsel %vm549, %v1092, 0
    %v1126 = vsel %vm549, %v1093, 0
    %v1129 = vsel %vm549, %v1094, 0
    %1131 = vmatpush.bf16.msra.mxu0 0
    %1132 = vmatpush.bf16.msra.mxu0 0
    %1133 = vmatpush.bf16.msra.mxu0 0
    %1134 = vmatpush.bf16.msra.mxu0 0
    %1135 = vmatpush.bf16.msra.mxu0 %v1117
    %1136 = vmatpush.bf16.msra.mxu0 %v1116
    %1137 = vmatpush.bf16.msra.mxu0 %v1115
    %1138 = vmatpush.bf16.msra.mxu0 %v1114
    %1139 = vmatmul.bf16.gmra.mxu0 %v1123
    %v1140 = vpop.f32.mrf.mxu0
    %v1141 = vadd.f32 %v1096, %v1140
    %v1142 = vpop.f32.mrf.mxu0
    %v1143 = vadd.f32 %v1096, %v1142
    %1144 = vmatmul.bf16.gmra.mxu0 %v1126
    %v1145 = vpop.f32.mrf.mxu0
    %v1146 = vadd.f32 %v1096, %v1145
    %v1147 = vpop.f32.mrf.mxu0
    %v1148 = vadd.f32 %v1096, %v1147
    %1149 = vmatmul.bf16.gmra.mxu0 %v1129
    %v1150 = vpop.f32.mrf.mxu0
    %v1151 = vadd.f32 %v1096, %v1150
    %v1152 = vpop.f32.mrf.mxu0
    %v1153 = vadd.f32 %v1096, %v1152
    %1154 = vdwg.mxu0
    %v1155 = vmax.f32 %v1141, 0.0
    %v1156 = vmax.f32 %v1143, 0.0
    %v1157 = vmax.f32 %v1146, 0.0
    %v1158 = vmax.f32 %v1148, 0.0
    %v1159 = vmax.f32 %v1151, 0.0
    %v1160 = vmax.f32 %v1153, 0.0
    %s1161 = scalar_lea.vmem %s4, 160
    %v1162 = vld [vmem:[%s1161] sm:$0xf]
    %v1163 = vld [vmem:[%s1161 + $0x4] sm:$0xf]
    %v1164 = vld [vmem:[%s1161 + $0x8] sm:$0xf]
    %v1165 = vld [vmem:[%s1161 + $0xc] sm:$0xf]
    %v1166 = vld [vmem:[%s1161 + $0x10] sm:$0xf]
    %v1167 = vld [vmem:[%s1161 + $0x14] sm:$0xf]
    %v1168 = vld [vmem:[%s1161 + $0x18] sm:$0xf]
    %v1169 = vld [vmem:[%s1161 + $0x1c] sm:$0xf]
    %s1170 = scalar_lea.vmem %s5, 5
    %v1171 = vld [vmem:[%s1170] sm:$0x1]
    %v1172 = vpack.c.bf16 %v1156, %v1155
    %v1173 = vpack.c.bf16 %v1158, %v1157
    %v1174 = vpack.c.bf16 %v1160, %v1159
    %1175 = vmatpush.bf16.msra.mxu0 0
    %1176 = vmatpush.bf16.msra.mxu0 0
    %1177 = vmatpush.bf16.msra.mxu0 0
    %1178 = vmatpush.bf16.msra.mxu0 0
    %1179 = vmatpush.bf16.msra.mxu0 0
    %1180 = vmatpush.bf16.msra.mxu0 %v1174
    %1181 = vmatpush.bf16.msra.mxu0 %v1173
    %1182 = vmatpush.bf16.msra.mxu0 %v1172
    %1183 = vmatmul.bf16.gmra.mxu0 %v114
    %v1184 = vpop.f32.mrf.mxu0
    %v1185 = vadd.f32 0.0, %v1184
    %v1186 = vpop.f32.mrf.mxu0
    %v1187 = vadd.f32 0.0, %v1186
    %1188 = vmatmul.bf16.gmra.mxu0 %v117
    %v1189 = vpop.f32.mrf.mxu0
    %v1190 = vadd.f32 0.0, %v1189
    %v1191 = vpop.f32.mrf.mxu0
    %v1192 = vadd.f32 0.0, %v1191
    %1193 = vmatmul.bf16.gmra.mxu0 %v120
    %v1194 = vpop.f32.mrf.mxu0
    %v1195 = vadd.f32 0.0, %v1194
    %v1196 = vpop.f32.mrf.mxu0
    %v1197 = vadd.f32 0.0, %v1196
    %1198 = vdwg.mxu0
    %1205 = vrot.lane.b32.xlu0 %v1155, 32
    %v1206 = vpop.permute.xlu0 %1205
    %1207 = vrot.lane.b32.xlu0 %v1156, 32
    %v1208 = vpop.permute.xlu0 %1207
    %1209 = vrot.lane.b32.xlu0 %v1157, 32
    %v1210 = vpop.permute.xlu0 %1209
    %1211 = vrot.lane.b32.xlu0 %v1158, 32
    %v1212 = vpop.permute.xlu0 %1211
    %1213 = vrot.lane.b32.xlu0 %v1159, 32
    %v1214 = vpop.permute.xlu0 %1213
    %1215 = vrot.lane.b32.xlu0 %v1160, 32
    %v1216 = vpop.permute.xlu0 %1215
    %v1223 = vsel %vm512, %v1185, %v1206
    %v1224 = vsel %vm512, %v1187, %v1208
    %v1225 = vsel %vm512, %v1190, %v1210
    %v1226 = vsel %vm512, %v1192, %v1212
    %v1227 = vsel %vm512, %v1195, %v1214
    %v1228 = vsel %vm512, %v1197, %v1216
    %v1229 = vpack.c.bf16 %v1224, %v1223
    %v1230 = vpack.c.bf16 %v1226, %v1225
    %v1231 = vpack.c.bf16 %v1228, %v1227
    %v1233 = vperm.slane %v1171, 0
    %v1243 = vunpack.c.l.b16 %v1162
    %v1244 = vunpack.c.l.b16 %v1163
    %v1245 = vunpack.c.l.b16 %v1164
    %v1246 = vunpack.c.l.b16 %v1165
    %v1247 = vunpack.c.l.b16 %v1166
    %v1248 = vunpack.c.l.b16 %v1167
    %v1249 = vunpack.c.l.b16 %v1168
    %v1250 = vunpack.c.l.b16 %v1169
    %v1251 = vpack.c.b16 %v1244, %v1243
    %v1252 = vpack.c.b16 %v1246, %v1245
    %v1253 = vpack.c.b16 %v1248, %v1247
    %v1254 = vpack.c.b16 %v1250, %v1249
    %v1260 = vsel %vm549, %v1229, 0
    %v1263 = vsel %vm549, %v1230, 0
    %v1266 = vsel %vm549, %v1231, 0
    %1268 = vmatpush.bf16.msra.mxu0 0
    %1269 = vmatpush.bf16.msra.mxu0 0
    %1270 = vmatpush.bf16.msra.mxu0 0
    %1271 = vmatpush.bf16.msra.mxu0 0
    %1272 = vmatpush.bf16.msra.mxu0 %v1254
    %1273 = vmatpush.bf16.msra.mxu0 %v1253
    %1274 = vmatpush.bf16.msra.mxu0 %v1252
    %1275 = vmatpush.bf16.msra.mxu0 %v1251
    %1276 = vmatmul.bf16.gmra.mxu0 %v1260
    %v1277 = vpop.f32.mrf.mxu0
    %v1278 = vadd.f32 %v1233, %v1277
    %v1279 = vpop.f32.mrf.mxu0
    %v1280 = vadd.f32 %v1233, %v1279
    %1281 = vmatmul.bf16.gmra.mxu0 %v1263
    %v1282 = vpop.f32.mrf.mxu0
    %v1283 = vadd.f32 %v1233, %v1282
    %v1284 = vpop.f32.mrf.mxu0
    %v1285 = vadd.f32 %v1233, %v1284
    %1286 = vmatmul.bf16.gmra.mxu0 %v1266
    %v1287 = vpop.f32.mrf.mxu0
    %v1288 = vadd.f32 %v1233, %v1287
    %v1289 = vpop.f32.mrf.mxu0
    %v1290 = vadd.f32 %v1233, %v1289
    %1291 = vdwg.mxu0
    %v1292 = vmax.f32 %v1278, 0.0
    %v1293 = vmax.f32 %v1280, 0.0
    %v1294 = vmax.f32 %v1283, 0.0
    %v1295 = vmax.f32 %v1285, 0.0
    %v1296 = vmax.f32 %v1288, 0.0
    %v1297 = vmax.f32 %v1290, 0.0
    %v1298 = vadd.f32 %v1018, %v1292
    %v1299 = vadd.f32 %v1019, %v1293
    %v1300 = vadd.f32 %v1020, %v1294
    %v1301 = vadd.f32 %v1021, %v1295
    %v1302 = vadd.f32 %v1022, %v1296
    %v1303 = vadd.f32 %v1023, %v1297
    %v1304 = vmul.f32 %v1298, 0.5
    %v1305 = vmul.f32 %v1299, 0.5
    %v1306 = vmul.f32 %v1300, 0.5
    %v1307 = vmul.f32 %v1301, 0.5
    %v1308 = vmul.f32 %v1302, 0.5
    %v1309 = vmul.f32 %v1303, 0.5
    %s1310 = scalar_lea.vmem %s4, 192
    %v1311 = vld [vmem:[%s1310] sm:$0xf]
    %v1312 = vld [vmem:[%s1310 + $0x4] sm:$0xf]
    %v1313 = vld [vmem:[%s1310 + $0x8] sm:$0xf]
    %v1314 = vld [vmem:[%s1310 + $0xc] sm:$0xf]
    %v1315 = vld [vmem:[%s1310 + $0x10] sm:$0xf]
    %v1316 = vld [vmem:[%s1310 + $0x14] sm:$0xf]
    %v1317 = vld [vmem:[%s1310 + $0x18] sm:$0xf]
    %v1318 = vld [vmem:[%s1310 + $0x1c] sm:$0xf]
    %s1319 = scalar_lea.vmem %s5, 6
    %v1320 = vld [vmem:[%s1319] sm:$0x1]
    %v1321 = vpack.c.bf16 %v1305, %v1304
    %v1322 = vpack.c.bf16 %v1307, %v1306
    %v1323 = vpack.c.bf16 %v1309, %v1308
    %1324 = vmatpush.bf16.msra.mxu0 0
    %1325 = vmatpush.bf16.msra.mxu0 0
    %1326 = vmatpush.bf16.msra.mxu0 0
    %1327 = vmatpush.bf16.msra.mxu0 0
    %1328 = vmatpush.bf16.msra.mxu0 0
    %1329 = vmatpush.bf16.msra.mxu0 %v1323
    %1330 = vmatpush.bf16.msra.mxu0 %v1322
    %1331 = vmatpush.bf16.msra.mxu0 %v1321
    %1332 = vmatmul.bf16.gmra.mxu0 %v114
    %v1333 = vpop.f32.mrf.mxu0
    %v1334 = vadd.f32 0.0, %v1333
    %v1335 = vpop.f32.mrf.mxu0
    %v1336 = vadd.f32 0.0, %v1335
    %1337 = vmatmul.bf16.gmra.mxu0 %v117
    %v1338 = vpop.f32.mrf.mxu0
    %v1339 = vadd.f32 0.0, %v1338
    %v1340 = vpop.f32.mrf.mxu0
    %v1341 = vadd.f32 0.0, %v1340
    %1342 = vmatmul.bf16.gmra.mxu0 %v120
    %v1343 = vpop.f32.mrf.mxu0
    %v1344 = vadd.f32 0.0, %v1343
    %v1345 = vpop.f32.mrf.mxu0
    %v1346 = vadd.f32 0.0, %v1345
    %1347 = vdwg.mxu0
    %1354 = vrot.lane.b32.xlu0 %v1304, 32
    %v1355 = vpop.permute.xlu0 %1354
    %1356 = vrot.lane.b32.xlu0 %v1305, 32
    %v1357 = vpop.permute.xlu0 %1356
    %1358 = vrot.lane.b32.xlu0 %v1306, 32
    %v1359 = vpop.permute.xlu0 %1358
    %1360 = vrot.lane.b32.xlu0 %v1307, 32
    %v1361 = vpop.permute.xlu0 %1360
    %1362 = vrot.lane.b32.xlu0 %v1308, 32
    %v1363 = vpop.permute.xlu0 %1362
    %1364 = vrot.lane.b32.xlu0 %v1309, 32
    %v1365 = vpop.permute.xlu0 %1364
    %v1372 = vsel %vm512, %v1334, %v1355
    %v1373 = vsel %vm512, %v1336, %v1357
    %v1374 = vsel %vm512, %v1339, %v1359
    %v1375 = vsel %vm512, %v1341, %v1361
    %v1376 = vsel %vm512, %v1344, %v1363
    %v1377 = vsel %vm512, %v1346, %v1365
    %v1378 = vpack.c.bf16 %v1373, %v1372
    %v1379 = vpack.c.bf16 %v1375, %v1374
    %v1380 = vpack.c.bf16 %v1377, %v1376
    %v1382 = vperm.slane %v1320, 0
    %v1392 = vunpack.c.l.b16 %v1311
    %v1393 = vunpack.c.l.b16 %v1312
    %v1394 = vunpack.c.l.b16 %v1313
    %v1395 = vunpack.c.l.b16 %v1314
    %v1396 = vunpack.c.l.b16 %v1315
    %v1397 = vunpack.c.l.b16 %v1316
    %v1398 = vunpack.c.l.b16 %v1317
    %v1399 = vunpack.c.l.b16 %v1318
    %v1400 = vpack.c.b16 %v1393, %v1392
    %v1401 = vpack.c.b16 %v1395, %v1394
    %v1402 = vpack.c.b16 %v1397, %v1396
    %v1403 = vpack.c.b16 %v1399, %v1398
    %v1409 = vsel %vm549, %v1378, 0
    %v1412 = vsel %vm549, %v1379, 0
    %v1415 = vsel %vm549, %v1380, 0
    %1417 = vmatpush.bf16.msra.mxu0 0
    %1418 = vmatpush.bf16.msra.mxu0 0
    %1419 = vmatpush.bf16.msra.mxu0 0
    %1420 = vmatpush.bf16.msra.mxu0 0
    %1421 = vmatpush.bf16.msra.mxu0 %v1403
    %1422 = vmatpush.bf16.msra.mxu0 %v1402
    %1423 = vmatpush.bf16.msra.mxu0 %v1401
    %1424 = vmatpush.bf16.msra.mxu0 %v1400
    %1425 = vmatmul.bf16.gmra.mxu0 %v1409
    %v1426 = vpop.f32.mrf.mxu0
    %v1427 = vadd.f32 %v1382, %v1426
    %v1428 = vpop.f32.mrf.mxu0
    %v1429 = vadd.f32 %v1382, %v1428
    %1430 = vmatmul.bf16.gmra.mxu0 %v1412
    %v1431 = vpop.f32.mrf.mxu0
    %v1432 = vadd.f32 %v1382, %v1431
    %v1433 = vpop.f32.mrf.mxu0
    %v1434 = vadd.f32 %v1382, %v1433
    %1435 = vmatmul.bf16.gmra.mxu0 %v1415
    %v1436 = vpop.f32.mrf.mxu0
    %v1437 = vadd.f32 %v1382, %v1436
    %v1438 = vpop.f32.mrf.mxu0
    %v1439 = vadd.f32 %v1382, %v1438
    %1440 = vdwg.mxu0
    %v1441 = vmax.f32 %v1427, 0.0
    %v1442 = vmax.f32 %v1429, 0.0
    %v1443 = vmax.f32 %v1432, 0.0
    %v1444 = vmax.f32 %v1434, 0.0
    %v1445 = vmax.f32 %v1437, 0.0
    %v1446 = vmax.f32 %v1439, 0.0
    %s1447 = scalar_lea.vmem %s4, 224
    %v1448 = vld [vmem:[%s1447] sm:$0xf]
    %v1449 = vld [vmem:[%s1447 + $0x4] sm:$0xf]
    %v1450 = vld [vmem:[%s1447 + $0x8] sm:$0xf]
    %v1451 = vld [vmem:[%s1447 + $0xc] sm:$0xf]
    %v1452 = vld [vmem:[%s1447 + $0x10] sm:$0xf]
    %v1453 = vld [vmem:[%s1447 + $0x14] sm:$0xf]
    %v1454 = vld [vmem:[%s1447 + $0x18] sm:$0xf]
    %v1455 = vld [vmem:[%s1447 + $0x1c] sm:$0xf]
    %s1456 = scalar_lea.vmem %s5, 7
    %v1457 = vld [vmem:[%s1456] sm:$0x1]
    %v1458 = vpack.c.bf16 %v1442, %v1441
    %v1459 = vpack.c.bf16 %v1444, %v1443
    %v1460 = vpack.c.bf16 %v1446, %v1445
    %1461 = vmatpush.bf16.msra.mxu0 0
    %1462 = vmatpush.bf16.msra.mxu0 0
    %1463 = vmatpush.bf16.msra.mxu0 0
    %1464 = vmatpush.bf16.msra.mxu0 0
    %1465 = vmatpush.bf16.msra.mxu0 0
    %1466 = vmatpush.bf16.msra.mxu0 %v1460
    %1467 = vmatpush.bf16.msra.mxu0 %v1459
    %1468 = vmatpush.bf16.msra.mxu0 %v1458
    %1469 = vmatmul.bf16.gmra.mxu0 %v114
    %v1470 = vpop.f32.mrf.mxu0
    %v1471 = vadd.f32 0.0, %v1470
    %v1472 = vpop.f32.mrf.mxu0
    %v1473 = vadd.f32 0.0, %v1472
    %1474 = vmatmul.bf16.gmra.mxu0 %v117
    %v1475 = vpop.f32.mrf.mxu0
    %v1476 = vadd.f32 0.0, %v1475
    %v1477 = vpop.f32.mrf.mxu0
    %v1478 = vadd.f32 0.0, %v1477
    %1479 = vmatmul.bf16.gmra.mxu0 %v120
    %v1480 = vpop.f32.mrf.mxu0
    %v1481 = vadd.f32 0.0, %v1480
    %v1482 = vpop.f32.mrf.mxu0
    %v1483 = vadd.f32 0.0, %v1482
    %1484 = vdwg.mxu0
    %1491 = vrot.lane.b32.xlu0 %v1441, 32
    %v1492 = vpop.permute.xlu0 %1491
    %1493 = vrot.lane.b32.xlu0 %v1442, 32
    %v1494 = vpop.permute.xlu0 %1493
    %1495 = vrot.lane.b32.xlu0 %v1443, 32
    %v1496 = vpop.permute.xlu0 %1495
    %1497 = vrot.lane.b32.xlu0 %v1444, 32
    %v1498 = vpop.permute.xlu0 %1497
    %1499 = vrot.lane.b32.xlu0 %v1445, 32
    %v1500 = vpop.permute.xlu0 %1499
    %1501 = vrot.lane.b32.xlu0 %v1446, 32
    %v1502 = vpop.permute.xlu0 %1501
    %v1509 = vsel %vm512, %v1471, %v1492
    %v1510 = vsel %vm512, %v1473, %v1494
    %v1511 = vsel %vm512, %v1476, %v1496
    %v1512 = vsel %vm512, %v1478, %v1498
    %v1513 = vsel %vm512, %v1481, %v1500
    %v1514 = vsel %vm512, %v1483, %v1502
    %v1515 = vpack.c.bf16 %v1510, %v1509
    %v1516 = vpack.c.bf16 %v1512, %v1511
    %v1517 = vpack.c.bf16 %v1514, %v1513
    %v1519 = vperm.slane %v1457, 0
    %v1529 = vunpack.c.l.b16 %v1448
    %v1530 = vunpack.c.l.b16 %v1449
    %v1531 = vunpack.c.l.b16 %v1450
    %v1532 = vunpack.c.l.b16 %v1451
    %v1533 = vunpack.c.l.b16 %v1452
    %v1534 = vunpack.c.l.b16 %v1453
    %v1535 = vunpack.c.l.b16 %v1454
    %v1536 = vunpack.c.l.b16 %v1455
    %v1537 = vpack.c.b16 %v1530, %v1529
    %v1538 = vpack.c.b16 %v1532, %v1531
    %v1539 = vpack.c.b16 %v1534, %v1533
    %v1540 = vpack.c.b16 %v1536, %v1535
    %v1546 = vsel %vm549, %v1515, 0
    %v1549 = vsel %vm549, %v1516, 0
    %v1552 = vsel %vm549, %v1517, 0
    %1554 = vmatpush.bf16.msra.mxu0 0
    %1555 = vmatpush.bf16.msra.mxu0 0
    %1556 = vmatpush.bf16.msra.mxu0 0
    %1557 = vmatpush.bf16.msra.mxu0 0
    %1558 = vmatpush.bf16.msra.mxu0 %v1540
    %1559 = vmatpush.bf16.msra.mxu0 %v1539
    %1560 = vmatpush.bf16.msra.mxu0 %v1538
    %1561 = vmatpush.bf16.msra.mxu0 %v1537
    %1562 = vmatmul.bf16.gmra.mxu0 %v1546
    %v1563 = vpop.f32.mrf.mxu0
    %v1564 = vadd.f32 %v1519, %v1563
    %v1565 = vpop.f32.mrf.mxu0
    %v1566 = vadd.f32 %v1519, %v1565
    %1567 = vmatmul.bf16.gmra.mxu0 %v1549
    %v1568 = vpop.f32.mrf.mxu0
    %v1569 = vadd.f32 %v1519, %v1568
    %v1570 = vpop.f32.mrf.mxu0
    %v1571 = vadd.f32 %v1519, %v1570
    %1572 = vmatmul.bf16.gmra.mxu0 %v1552
    %v1573 = vpop.f32.mrf.mxu0
    %v1574 = vadd.f32 %v1519, %v1573
    %v1575 = vpop.f32.mrf.mxu0
    %v1576 = vadd.f32 %v1519, %v1575
    %1577 = vdwg.mxu0
    %v1578 = vmax.f32 %v1564, 0.0
    %v1579 = vmax.f32 %v1566, 0.0
    %v1580 = vmax.f32 %v1569, 0.0
    %v1581 = vmax.f32 %v1571, 0.0
    %v1582 = vmax.f32 %v1574, 0.0
    %v1583 = vmax.f32 %v1576, 0.0
    %v1584 = vadd.f32 %v1304, %v1578
    %v1585 = vadd.f32 %v1305, %v1579
    %v1586 = vadd.f32 %v1306, %v1580
    %v1587 = vadd.f32 %v1307, %v1581
    %v1588 = vadd.f32 %v1308, %v1582
    %v1589 = vadd.f32 %v1309, %v1583
    %v1590 = vmul.f32 %v1584, 0.5
    %v1591 = vmul.f32 %v1585, 0.5
    %v1592 = vmul.f32 %v1586, 0.5
    %v1593 = vmul.f32 %v1587, 0.5
    %v1594 = vmul.f32 %v1588, 0.5
    %v1595 = vmul.f32 %v1589, 0.5
    %s1596 = scalar_lea.vmem %s4, 256
    %v1597 = vld [vmem:[%s1596] sm:$0xf]
    %v1598 = vld [vmem:[%s1596 + $0x4] sm:$0xf]
    %v1599 = vld [vmem:[%s1596 + $0x8] sm:$0xf]
    %v1600 = vld [vmem:[%s1596 + $0xc] sm:$0xf]
    %v1601 = vld [vmem:[%s1596 + $0x10] sm:$0xf]
    %v1602 = vld [vmem:[%s1596 + $0x14] sm:$0xf]
    %v1603 = vld [vmem:[%s1596 + $0x18] sm:$0xf]
    %v1604 = vld [vmem:[%s1596 + $0x1c] sm:$0xf]
    %s1605 = scalar_lea.vmem %s5, 8
    %v1606 = vld [vmem:[%s1605] sm:$0x1]
    %v1607 = vpack.c.bf16 %v1591, %v1590
    %v1608 = vpack.c.bf16 %v1593, %v1592
    %v1609 = vpack.c.bf16 %v1595, %v1594
    %1610 = vmatpush.bf16.msra.mxu0 0
    %1611 = vmatpush.bf16.msra.mxu0 0
    %1612 = vmatpush.bf16.msra.mxu0 0
    %1613 = vmatpush.bf16.msra.mxu0 0
    %1614 = vmatpush.bf16.msra.mxu0 0
    %1615 = vmatpush.bf16.msra.mxu0 %v1609
    %1616 = vmatpush.bf16.msra.mxu0 %v1608
    %1617 = vmatpush.bf16.msra.mxu0 %v1607
    %1618 = vmatmul.bf16.gmra.mxu0 %v114
    %v1619 = vpop.f32.mrf.mxu0
    %v1620 = vadd.f32 0.0, %v1619
    %v1621 = vpop.f32.mrf.mxu0
    %v1622 = vadd.f32 0.0, %v1621
    %1623 = vmatmul.bf16.gmra.mxu0 %v117
    %v1624 = vpop.f32.mrf.mxu0
    %v1625 = vadd.f32 0.0, %v1624
    %v1626 = vpop.f32.mrf.mxu0
    %v1627 = vadd.f32 0.0, %v1626
    %1628 = vmatmul.bf16.gmra.mxu0 %v120
    %v1629 = vpop.f32.mrf.mxu0
    %v1630 = vadd.f32 0.0, %v1629
    %v1631 = vpop.f32.mrf.mxu0
    %v1632 = vadd.f32 0.0, %v1631
    %1633 = vdwg.mxu0
    %1640 = vrot.lane.b32.xlu0 %v1590, 32
    %v1641 = vpop.permute.xlu0 %1640
    %1642 = vrot.lane.b32.xlu0 %v1591, 32
    %v1643 = vpop.permute.xlu0 %1642
    %1644 = vrot.lane.b32.xlu0 %v1592, 32
    %v1645 = vpop.permute.xlu0 %1644
    %1646 = vrot.lane.b32.xlu0 %v1593, 32
    %v1647 = vpop.permute.xlu0 %1646
    %1648 = vrot.lane.b32.xlu0 %v1594, 32
    %v1649 = vpop.permute.xlu0 %1648
    %1650 = vrot.lane.b32.xlu0 %v1595, 32
    %v1651 = vpop.permute.xlu0 %1650
    %v1658 = vsel %vm512, %v1620, %v1641
    %v1659 = vsel %vm512, %v1622, %v1643
    %v1660 = vsel %vm512, %v1625, %v1645
    %v1661 = vsel %vm512, %v1627, %v1647
    %v1662 = vsel %vm512, %v1630, %v1649
    %v1663 = vsel %vm512, %v1632, %v1651
    %v1664 = vpack.c.bf16 %v1659, %v1658
    %v1665 = vpack.c.bf16 %v1661, %v1660
    %v1666 = vpack.c.bf16 %v1663, %v1662
    %v1668 = vperm.slane %v1606, 0
    %v1678 = vunpack.c.l.b16 %v1597
    %v1679 = vunpack.c.l.b16 %v1598
    %v1680 = vunpack.c.l.b16 %v1599
    %v1681 = vunpack.c.l.b16 %v1600
    %v1682 = vunpack.c.l.b16 %v1601
    %v1683 = vunpack.c.l.b16 %v1602
    %v1684 = vunpack.c.l.b16 %v1603
    %v1685 = vunpack.c.l.b16 %v1604
    %v1686 = vpack.c.b16 %v1679, %v1678
    %v1687 = vpack.c.b16 %v1681, %v1680
    %v1688 = vpack.c.b16 %v1683, %v1682
    %v1689 = vpack.c.b16 %v1685, %v1684
    %v1695 = vsel %vm549, %v1664, 0
    %v1698 = vsel %vm549, %v1665, 0
    %v1701 = vsel %vm549, %v1666, 0
    %1703 = vmatpush.bf16.msra.mxu0 0
    %1704 = vmatpush.bf16.msra.mxu0 0
    %1705 = vmatpush.bf16.msra.mxu0 0
    %1706 = vmatpush.bf16.msra.mxu0 0
    %1707 = vmatpush.bf16.msra.mxu0 %v1689
    %1708 = vmatpush.bf16.msra.mxu0 %v1688
    %1709 = vmatpush.bf16.msra.mxu0 %v1687
    %1710 = vmatpush.bf16.msra.mxu0 %v1686
    %1711 = vmatmul.bf16.gmra.mxu0 %v1695
    %v1712 = vpop.f32.mrf.mxu0
    %v1713 = vadd.f32 %v1668, %v1712
    %v1714 = vpop.f32.mrf.mxu0
    %v1715 = vadd.f32 %v1668, %v1714
    %1716 = vmatmul.bf16.gmra.mxu0 %v1698
    %v1717 = vpop.f32.mrf.mxu0
    %v1718 = vadd.f32 %v1668, %v1717
    %v1719 = vpop.f32.mrf.mxu0
    %v1720 = vadd.f32 %v1668, %v1719
    %1721 = vmatmul.bf16.gmra.mxu0 %v1701
    %v1722 = vpop.f32.mrf.mxu0
    %v1723 = vadd.f32 %v1668, %v1722
    %v1724 = vpop.f32.mrf.mxu0
    %v1725 = vadd.f32 %v1668, %v1724
    %1726 = vdwg.mxu0
    %v1727 = vmax.f32 %v1713, 0.0
    %v1728 = vmax.f32 %v1715, 0.0
    %v1729 = vmax.f32 %v1718, 0.0
    %v1730 = vmax.f32 %v1720, 0.0
    %v1731 = vmax.f32 %v1723, 0.0
    %v1732 = vmax.f32 %v1725, 0.0
    %s1733 = scalar_lea.vmem %s4, 288
    %v1734 = vld [vmem:[%s1733] sm:$0xf]
    %v1735 = vld [vmem:[%s1733 + $0x4] sm:$0xf]
    %v1736 = vld [vmem:[%s1733 + $0x8] sm:$0xf]
    %v1737 = vld [vmem:[%s1733 + $0xc] sm:$0xf]
    %v1738 = vld [vmem:[%s1733 + $0x10] sm:$0xf]
    %v1739 = vld [vmem:[%s1733 + $0x14] sm:$0xf]
    %v1740 = vld [vmem:[%s1733 + $0x18] sm:$0xf]
    %v1741 = vld [vmem:[%s1733 + $0x1c] sm:$0xf]
    %s1742 = scalar_lea.vmem %s5, 9
    %v1743 = vld [vmem:[%s1742] sm:$0x1]
    %v1744 = vpack.c.bf16 %v1728, %v1727
    %v1745 = vpack.c.bf16 %v1730, %v1729
    %v1746 = vpack.c.bf16 %v1732, %v1731
    %1747 = vmatpush.bf16.msra.mxu0 0
    %1748 = vmatpush.bf16.msra.mxu0 0
    %1749 = vmatpush.bf16.msra.mxu0 0
    %1750 = vmatpush.bf16.msra.mxu0 0
    %1751 = vmatpush.bf16.msra.mxu0 0
    %1752 = vmatpush.bf16.msra.mxu0 %v1746
    %1753 = vmatpush.bf16.msra.mxu0 %v1745
    %1754 = vmatpush.bf16.msra.mxu0 %v1744
    %1755 = vmatmul.bf16.gmra.mxu0 %v114
    %v1756 = vpop.f32.mrf.mxu0
    %v1757 = vadd.f32 0.0, %v1756
    %v1758 = vpop.f32.mrf.mxu0
    %v1759 = vadd.f32 0.0, %v1758
    %1760 = vmatmul.bf16.gmra.mxu0 %v117
    %v1761 = vpop.f32.mrf.mxu0
    %v1762 = vadd.f32 0.0, %v1761
    %v1763 = vpop.f32.mrf.mxu0
    %v1764 = vadd.f32 0.0, %v1763
    %1765 = vmatmul.bf16.gmra.mxu0 %v120
    %v1766 = vpop.f32.mrf.mxu0
    %v1767 = vadd.f32 0.0, %v1766
    %v1768 = vpop.f32.mrf.mxu0
    %v1769 = vadd.f32 0.0, %v1768
    %1770 = vdwg.mxu0
    %1777 = vrot.lane.b32.xlu0 %v1727, 32
    %v1778 = vpop.permute.xlu0 %1777
    %1779 = vrot.lane.b32.xlu0 %v1728, 32
    %v1780 = vpop.permute.xlu0 %1779
    %1781 = vrot.lane.b32.xlu0 %v1729, 32
    %v1782 = vpop.permute.xlu0 %1781
    %1783 = vrot.lane.b32.xlu0 %v1730, 32
    %v1784 = vpop.permute.xlu0 %1783
    %1785 = vrot.lane.b32.xlu0 %v1731, 32
    %v1786 = vpop.permute.xlu0 %1785
    %1787 = vrot.lane.b32.xlu0 %v1732, 32
    %v1788 = vpop.permute.xlu0 %1787
    %v1795 = vsel %vm512, %v1757, %v1778
    %v1796 = vsel %vm512, %v1759, %v1780
    %v1797 = vsel %vm512, %v1762, %v1782
    %v1798 = vsel %vm512, %v1764, %v1784
    %v1799 = vsel %vm512, %v1767, %v1786
    %v1800 = vsel %vm512, %v1769, %v1788
    %v1801 = vpack.c.bf16 %v1796, %v1795
    %v1802 = vpack.c.bf16 %v1798, %v1797
    %v1803 = vpack.c.bf16 %v1800, %v1799
    %v1805 = vperm.slane %v1743, 0
    %v1815 = vunpack.c.l.b16 %v1734
    %v1816 = vunpack.c.l.b16 %v1735
    %v1817 = vunpack.c.l.b16 %v1736
    %v1818 = vunpack.c.l.b16 %v1737
    %v1819 = vunpack.c.l.b16 %v1738
    %v1820 = vunpack.c.l.b16 %v1739
    %v1821 = vunpack.c.l.b16 %v1740
    %v1822 = vunpack.c.l.b16 %v1741
    %v1823 = vpack.c.b16 %v1816, %v1815
    %v1824 = vpack.c.b16 %v1818, %v1817
    %v1825 = vpack.c.b16 %v1820, %v1819
    %v1826 = vpack.c.b16 %v1822, %v1821
    %v1832 = vsel %vm549, %v1801, 0
    %v1835 = vsel %vm549, %v1802, 0
    %v1838 = vsel %vm549, %v1803, 0
    %1840 = vmatpush.bf16.msra.mxu0 0
    %1841 = vmatpush.bf16.msra.mxu0 0
    %1842 = vmatpush.bf16.msra.mxu0 0
    %1843 = vmatpush.bf16.msra.mxu0 0
    %1844 = vmatpush.bf16.msra.mxu0 %v1826
    %1845 = vmatpush.bf16.msra.mxu0 %v1825
    %1846 = vmatpush.bf16.msra.mxu0 %v1824
    %1847 = vmatpush.bf16.msra.mxu0 %v1823
    %1848 = vmatmul.bf16.gmra.mxu0 %v1832
    %v1849 = vpop.f32.mrf.mxu0
    %v1850 = vadd.f32 %v1805, %v1849
    %v1851 = vpop.f32.mrf.mxu0
    %v1852 = vadd.f32 %v1805, %v1851
    %1853 = vmatmul.bf16.gmra.mxu0 %v1835
    %v1854 = vpop.f32.mrf.mxu0
    %v1855 = vadd.f32 %v1805, %v1854
    %v1856 = vpop.f32.mrf.mxu0
    %v1857 = vadd.f32 %v1805, %v1856
    %1858 = vmatmul.bf16.gmra.mxu0 %v1838
    %v1859 = vpop.f32.mrf.mxu0
    %v1860 = vadd.f32 %v1805, %v1859
    %v1861 = vpop.f32.mrf.mxu0
    %v1862 = vadd.f32 %v1805, %v1861
    %1863 = vdwg.mxu0
    %v1864 = vmax.f32 %v1850, 0.0
    %v1865 = vmax.f32 %v1852, 0.0
    %v1866 = vmax.f32 %v1855, 0.0
    %v1867 = vmax.f32 %v1857, 0.0
    %v1868 = vmax.f32 %v1860, 0.0
    %v1869 = vmax.f32 %v1862, 0.0
    %v1870 = vadd.f32 %v1590, %v1864
    %v1871 = vadd.f32 %v1591, %v1865
    %v1872 = vadd.f32 %v1592, %v1866
    %v1873 = vadd.f32 %v1593, %v1867
    %v1874 = vadd.f32 %v1594, %v1868
    %v1875 = vadd.f32 %v1595, %v1869
    %v1876 = vmul.f32 %v1870, 0.5
    %v1877 = vmul.f32 %v1871, 0.5
    %v1878 = vmul.f32 %v1872, 0.5
    %v1879 = vmul.f32 %v1873, 0.5
    %v1880 = vmul.f32 %v1874, 0.5
    %v1881 = vmul.f32 %v1875, 0.5
    %s1882 = scalar_lea.vmem %s4, 320
    %v1883 = vld [vmem:[%s1882] sm:$0xf]
    %v1884 = vld [vmem:[%s1882 + $0x4] sm:$0xf]
    %v1885 = vld [vmem:[%s1882 + $0x8] sm:$0xf]
    %v1886 = vld [vmem:[%s1882 + $0xc] sm:$0xf]
    %v1887 = vld [vmem:[%s1882 + $0x10] sm:$0xf]
    %v1888 = vld [vmem:[%s1882 + $0x14] sm:$0xf]
    %v1889 = vld [vmem:[%s1882 + $0x18] sm:$0xf]
    %v1890 = vld [vmem:[%s1882 + $0x1c] sm:$0xf]
    %s1891 = scalar_lea.vmem %s5, 10
    %v1892 = vld [vmem:[%s1891] sm:$0x1]
    %v1893 = vpack.c.bf16 %v1877, %v1876
    %v1894 = vpack.c.bf16 %v1879, %v1878
    %v1895 = vpack.c.bf16 %v1881, %v1880
    %1896 = vmatpush.bf16.msra.mxu0 0
    %1897 = vmatpush.bf16.msra.mxu0 0
    %1898 = vmatpush.bf16.msra.mxu0 0
    %1899 = vmatpush.bf16.msra.mxu0 0
    %1900 = vmatpush.bf16.msra.mxu0 0
    %1901 = vmatpush.bf16.msra.mxu0 %v1895
    %1902 = vmatpush.bf16.msra.mxu0 %v1894
    %1903 = vmatpush.bf16.msra.mxu0 %v1893
    %1904 = vmatmul.bf16.gmra.mxu0 %v114
    %v1905 = vpop.f32.mrf.mxu0
    %v1906 = vadd.f32 0.0, %v1905
    %v1907 = vpop.f32.mrf.mxu0
    %v1908 = vadd.f32 0.0, %v1907
    %1909 = vmatmul.bf16.gmra.mxu0 %v117
    %v1910 = vpop.f32.mrf.mxu0
    %v1911 = vadd.f32 0.0, %v1910
    %v1912 = vpop.f32.mrf.mxu0
    %v1913 = vadd.f32 0.0, %v1912
    %1914 = vmatmul.bf16.gmra.mxu0 %v120
    %v1915 = vpop.f32.mrf.mxu0
    %v1916 = vadd.f32 0.0, %v1915
    %v1917 = vpop.f32.mrf.mxu0
    %v1918 = vadd.f32 0.0, %v1917
    %1919 = vdwg.mxu0
    %1926 = vrot.lane.b32.xlu0 %v1876, 32
    %v1927 = vpop.permute.xlu0 %1926
    %1928 = vrot.lane.b32.xlu0 %v1877, 32
    %v1929 = vpop.permute.xlu0 %1928
    %1930 = vrot.lane.b32.xlu0 %v1878, 32
    %v1931 = vpop.permute.xlu0 %1930
    %1932 = vrot.lane.b32.xlu0 %v1879, 32
    %v1933 = vpop.permute.xlu0 %1932
    %1934 = vrot.lane.b32.xlu0 %v1880, 32
    %v1935 = vpop.permute.xlu0 %1934
    %1936 = vrot.lane.b32.xlu0 %v1881, 32
    %v1937 = vpop.permute.xlu0 %1936
    %v1944 = vsel %vm512, %v1906, %v1927
    %v1945 = vsel %vm512, %v1908, %v1929
    %v1946 = vsel %vm512, %v1911, %v1931
    %v1947 = vsel %vm512, %v1913, %v1933
    %v1948 = vsel %vm512, %v1916, %v1935
    %v1949 = vsel %vm512, %v1918, %v1937
    %v1950 = vpack.c.bf16 %v1945, %v1944
    %v1951 = vpack.c.bf16 %v1947, %v1946
    %v1952 = vpack.c.bf16 %v1949, %v1948
    %v1954 = vperm.slane %v1892, 0
    %v1964 = vunpack.c.l.b16 %v1883
    %v1965 = vunpack.c.l.b16 %v1884
    %v1966 = vunpack.c.l.b16 %v1885
    %v1967 = vunpack.c.l.b16 %v1886
    %v1968 = vunpack.c.l.b16 %v1887
    %v1969 = vunpack.c.l.b16 %v1888
    %v1970 = vunpack.c.l.b16 %v1889
    %v1971 = vunpack.c.l.b16 %v1890
    %v1972 = vpack.c.b16 %v1965, %v1964
    %v1973 = vpack.c.b16 %v1967, %v1966
    %v1974 = vpack.c.b16 %v1969, %v1968
    %v1975 = vpack.c.b16 %v1971, %v1970
    %v1981 = vsel %vm549, %v1950, 0
    %v1984 = vsel %vm549, %v1951, 0
    %v1987 = vsel %vm549, %v1952, 0
    %1989 = vmatpush.bf16.msra.mxu0 0
    %1990 = vmatpush.bf16.msra.mxu0 0
    %1991 = vmatpush.bf16.msra.mxu0 0
    %1992 = vmatpush.bf16.msra.mxu0 0
    %1993 = vmatpush.bf16.msra.mxu0 %v1975
    %1994 = vmatpush.bf16.msra.mxu0 %v1974
    %1995 = vmatpush.bf16.msra.mxu0 %v1973
    %1996 = vmatpush.bf16.msra.mxu0 %v1972
    %1997 = vmatmul.bf16.gmra.mxu0 %v1981
    %v1998 = vpop.f32.mrf.mxu0
    %v1999 = vadd.f32 %v1954, %v1998
    %v2000 = vpop.f32.mrf.mxu0
    %v2001 = vadd.f32 %v1954, %v2000
    %2002 = vmatmul.bf16.gmra.mxu0 %v1984
    %v2003 = vpop.f32.mrf.mxu0
    %v2004 = vadd.f32 %v1954, %v2003
    %v2005 = vpop.f32.mrf.mxu0
    %v2006 = vadd.f32 %v1954, %v2005
    %2007 = vmatmul.bf16.gmra.mxu0 %v1987
    %v2008 = vpop.f32.mrf.mxu0
    %v2009 = vadd.f32 %v1954, %v2008
    %v2010 = vpop.f32.mrf.mxu0
    %v2011 = vadd.f32 %v1954, %v2010
    %2012 = vdwg.mxu0
    %v2013 = vmax.f32 %v1999, 0.0
    %v2014 = vmax.f32 %v2001, 0.0
    %v2015 = vmax.f32 %v2004, 0.0
    %v2016 = vmax.f32 %v2006, 0.0
    %v2017 = vmax.f32 %v2009, 0.0
    %v2018 = vmax.f32 %v2011, 0.0
    %s2019 = scalar_lea.vmem %s4, 352
    %v2020 = vld [vmem:[%s2019] sm:$0xf]
    %v2021 = vld [vmem:[%s2019 + $0x4] sm:$0xf]
    %v2022 = vld [vmem:[%s2019 + $0x8] sm:$0xf]
    %v2023 = vld [vmem:[%s2019 + $0xc] sm:$0xf]
    %v2024 = vld [vmem:[%s2019 + $0x10] sm:$0xf]
    %v2025 = vld [vmem:[%s2019 + $0x14] sm:$0xf]
    %v2026 = vld [vmem:[%s2019 + $0x18] sm:$0xf]
    %v2027 = vld [vmem:[%s2019 + $0x1c] sm:$0xf]
    %s2028 = scalar_lea.vmem %s5, 11
    %v2029 = vld [vmem:[%s2028] sm:$0x1]
    %v2030 = vpack.c.bf16 %v2014, %v2013
    %v2031 = vpack.c.bf16 %v2016, %v2015
    %v2032 = vpack.c.bf16 %v2018, %v2017
    %2033 = vmatpush.bf16.msra.mxu0 0
    %2034 = vmatpush.bf16.msra.mxu0 0
    %2035 = vmatpush.bf16.msra.mxu0 0
    %2036 = vmatpush.bf16.msra.mxu0 0
    %2037 = vmatpush.bf16.msra.mxu0 0
    %2038 = vmatpush.bf16.msra.mxu0 %v2032
    %2039 = vmatpush.bf16.msra.mxu0 %v2031
    %2040 = vmatpush.bf16.msra.mxu0 %v2030
    %2041 = vmatmul.bf16.gmra.mxu0 %v114
    %v2042 = vpop.f32.mrf.mxu0
    %v2043 = vadd.f32 0.0, %v2042
    %v2044 = vpop.f32.mrf.mxu0
    %v2045 = vadd.f32 0.0, %v2044
    %2046 = vmatmul.bf16.gmra.mxu0 %v117
    %v2047 = vpop.f32.mrf.mxu0
    %v2048 = vadd.f32 0.0, %v2047
    %v2049 = vpop.f32.mrf.mxu0
    %v2050 = vadd.f32 0.0, %v2049
    %2051 = vmatmul.bf16.gmra.mxu0 %v120
    %v2052 = vpop.f32.mrf.mxu0
    %v2053 = vadd.f32 0.0, %v2052
    %v2054 = vpop.f32.mrf.mxu0
    %v2055 = vadd.f32 0.0, %v2054
    %2056 = vdwg.mxu0
    %2063 = vrot.lane.b32.xlu0 %v2013, 32
    %v2064 = vpop.permute.xlu0 %2063
    %2065 = vrot.lane.b32.xlu0 %v2014, 32
    %v2066 = vpop.permute.xlu0 %2065
    %2067 = vrot.lane.b32.xlu0 %v2015, 32
    %v2068 = vpop.permute.xlu0 %2067
    %2069 = vrot.lane.b32.xlu0 %v2016, 32
    %v2070 = vpop.permute.xlu0 %2069
    %2071 = vrot.lane.b32.xlu0 %v2017, 32
    %v2072 = vpop.permute.xlu0 %2071
    %2073 = vrot.lane.b32.xlu0 %v2018, 32
    %v2074 = vpop.permute.xlu0 %2073
    %v2081 = vsel %vm512, %v2043, %v2064
    %v2082 = vsel %vm512, %v2045, %v2066
    %v2083 = vsel %vm512, %v2048, %v2068
    %v2084 = vsel %vm512, %v2050, %v2070
    %v2085 = vsel %vm512, %v2053, %v2072
    %v2086 = vsel %vm512, %v2055, %v2074
    %v2087 = vpack.c.bf16 %v2082, %v2081
    %v2088 = vpack.c.bf16 %v2084, %v2083
    %v2089 = vpack.c.bf16 %v2086, %v2085
    %v2091 = vperm.slane %v2029, 0
    %v2101 = vunpack.c.l.b16 %v2020
    %v2102 = vunpack.c.l.b16 %v2021
    %v2103 = vunpack.c.l.b16 %v2022
    %v2104 = vunpack.c.l.b16 %v2023
    %v2105 = vunpack.c.l.b16 %v2024
    %v2106 = vunpack.c.l.b16 %v2025
    %v2107 = vunpack.c.l.b16 %v2026
    %v2108 = vunpack.c.l.b16 %v2027
    %v2109 = vpack.c.b16 %v2102, %v2101
    %v2110 = vpack.c.b16 %v2104, %v2103
    %v2111 = vpack.c.b16 %v2106, %v2105
    %v2112 = vpack.c.b16 %v2108, %v2107
    %v2118 = vsel %vm549, %v2087, 0
    %v2121 = vsel %vm549, %v2088, 0
    %v2124 = vsel %vm549, %v2089, 0
    %2126 = vmatpush.bf16.msra.mxu0 0
    %2127 = vmatpush.bf16.msra.mxu0 0
    %2128 = vmatpush.bf16.msra.mxu0 0
    %2129 = vmatpush.bf16.msra.mxu0 0
    %2130 = vmatpush.bf16.msra.mxu0 %v2112
    %2131 = vmatpush.bf16.msra.mxu0 %v2111
    %2132 = vmatpush.bf16.msra.mxu0 %v2110
    %2133 = vmatpush.bf16.msra.mxu0 %v2109
    %2134 = vmatmul.bf16.gmra.mxu0 %v2118
    %v2135 = vpop.f32.mrf.mxu0
    %v2136 = vadd.f32 %v2091, %v2135
    %v2137 = vpop.f32.mrf.mxu0
    %v2138 = vadd.f32 %v2091, %v2137
    %2139 = vmatmul.bf16.gmra.mxu0 %v2121
    %v2140 = vpop.f32.mrf.mxu0
    %v2141 = vadd.f32 %v2091, %v2140
    %v2142 = vpop.f32.mrf.mxu0
    %v2143 = vadd.f32 %v2091, %v2142
    %2144 = vmatmul.bf16.gmra.mxu0 %v2124
    %v2145 = vpop.f32.mrf.mxu0
    %v2146 = vadd.f32 %v2091, %v2145
    %v2147 = vpop.f32.mrf.mxu0
    %v2148 = vadd.f32 %v2091, %v2147
    %2149 = vdwg.mxu0
    %v2150 = vmax.f32 %v2136, 0.0
    %v2151 = vmax.f32 %v2138, 0.0
    %v2152 = vmax.f32 %v2141, 0.0
    %v2153 = vmax.f32 %v2143, 0.0
    %v2154 = vmax.f32 %v2146, 0.0
    %v2155 = vmax.f32 %v2148, 0.0
    %v2156 = vadd.f32 %v1876, %v2150
    %v2157 = vadd.f32 %v1877, %v2151
    %v2158 = vadd.f32 %v1878, %v2152
    %v2159 = vadd.f32 %v1879, %v2153
    %v2160 = vadd.f32 %v1880, %v2154
    %v2161 = vadd.f32 %v1881, %v2155
    %v2162 = vmul.f32 %v2156, 0.5
    %v2163 = vmul.f32 %v2157, 0.5
    %v2164 = vmul.f32 %v2158, 0.5
    %v2165 = vmul.f32 %v2159, 0.5
    %v2166 = vmul.f32 %v2160, 0.5
    %v2167 = vmul.f32 %v2161, 0.5
    %v2168 = vld [vmem:[%s6] sm:$0xf]
    %v2169 = vld [vmem:[%s6 + $0x4] sm:$0xf]
    %v2170 = vld [vmem:[%s6 + $0x8] sm:$0xf]
    %v2171 = vld [vmem:[%s6 + $0xc] sm:$0xf]
    %v2172 = vld [vmem:[%s6 + $0x10] sm:$0xf]
    %v2173 = vld [vmem:[%s6 + $0x14] sm:$0xf]
    %v2174 = vld [vmem:[%s6 + $0x18] sm:$0xf]
    %v2175 = vld [vmem:[%s6 + $0x1c] sm:$0xf]
    %v2176 = vld [vmem:[%s7] sm:$0x1]
    %v2177 = vpack.c.bf16 %v2163, %v2162
    %v2178 = vpack.c.bf16 %v2165, %v2164
    %v2179 = vpack.c.bf16 %v2167, %v2166
    %2180 = vmatpush.bf16.msra.mxu0 0
    %2181 = vmatpush.bf16.msra.mxu0 0
    %2182 = vmatpush.bf16.msra.mxu0 0
    %2183 = vmatpush.bf16.msra.mxu0 0
    %2184 = vmatpush.bf16.msra.mxu0 0
    %2185 = vmatpush.bf16.msra.mxu0 %v2179
    %2186 = vmatpush.bf16.msra.mxu0 %v2178
    %2187 = vmatpush.bf16.msra.mxu0 %v2177
    %2188 = vmatmul.bf16.gmra.mxu0 %v114
    %v2189 = vpop.f32.mrf.mxu0
    %v2190 = vadd.f32 0.0, %v2189
    %v2191 = vpop.f32.mrf.mxu0
    %v2192 = vadd.f32 0.0, %v2191
    %2193 = vmatmul.bf16.gmra.mxu0 %v117
    %v2194 = vpop.f32.mrf.mxu0
    %v2195 = vadd.f32 0.0, %v2194
    %v2196 = vpop.f32.mrf.mxu0
    %v2197 = vadd.f32 0.0, %v2196
    %2198 = vmatmul.bf16.gmra.mxu0 %v120
    %v2199 = vpop.f32.mrf.mxu0
    %v2200 = vadd.f32 0.0, %v2199
    %v2201 = vpop.f32.mrf.mxu0
    %v2202 = vadd.f32 0.0, %v2201
    %2203 = vdwg.mxu0
    %2210 = vrot.lane.b32.xlu0 %v2162, 32
    %v2211 = vpop.permute.xlu0 %2210
    %2212 = vrot.lane.b32.xlu0 %v2163, 32
    %v2213 = vpop.permute.xlu0 %2212
    %2214 = vrot.lane.b32.xlu0 %v2164, 32
    %v2215 = vpop.permute.xlu0 %2214
    %2216 = vrot.lane.b32.xlu0 %v2165, 32
    %v2217 = vpop.permute.xlu0 %2216
    %2218 = vrot.lane.b32.xlu0 %v2166, 32
    %v2219 = vpop.permute.xlu0 %2218
    %2220 = vrot.lane.b32.xlu0 %v2167, 32
    %v2221 = vpop.permute.xlu0 %2220
    %v2228 = vsel %vm512, %v2190, %v2211
    %v2229 = vsel %vm512, %v2192, %v2213
    %v2230 = vsel %vm512, %v2195, %v2215
    %v2231 = vsel %vm512, %v2197, %v2217
    %v2232 = vsel %vm512, %v2200, %v2219
    %v2233 = vsel %vm512, %v2202, %v2221
    %v2234 = vpack.c.bf16 %v2229, %v2228
    %v2235 = vpack.c.bf16 %v2231, %v2230
    %v2236 = vpack.c.bf16 %v2233, %v2232
    %v2238 = vperm.slane %v2176, 0
    %v2248 = vunpack.c.l.b16 %v2168
    %v2249 = vunpack.c.l.b16 %v2169
    %v2250 = vunpack.c.l.b16 %v2170
    %v2251 = vunpack.c.l.b16 %v2171
    %v2252 = vunpack.c.l.b16 %v2172
    %v2253 = vunpack.c.l.b16 %v2173
    %v2254 = vunpack.c.l.b16 %v2174
    %v2255 = vunpack.c.l.b16 %v2175
    %v2256 = vpack.c.b16 %v2249, %v2248
    %v2257 = vpack.c.b16 %v2251, %v2250
    %v2258 = vpack.c.b16 %v2253, %v2252
    %v2259 = vpack.c.b16 %v2255, %v2254
    %v2265 = vsel %vm549, %v2234, 0
    %v2268 = vsel %vm549, %v2235, 0
    %v2271 = vsel %vm549, %v2236, 0
    %2273 = vmatpush.bf16.msra.mxu0 0
    %2274 = vmatpush.bf16.msra.mxu0 0
    %2275 = vmatpush.bf16.msra.mxu0 0
    %2276 = vmatpush.bf16.msra.mxu0 0
    %2277 = vmatpush.bf16.msra.mxu0 %v2259
    %2278 = vmatpush.bf16.msra.mxu0 %v2258
    %2279 = vmatpush.bf16.msra.mxu0 %v2257
    %2280 = vmatpush.bf16.msra.mxu0 %v2256
    %2281 = vmatmul.bf16.gmra.mxu0 %v2265
    %v2282 = vpop.f32.mrf.mxu0
    %v2283 = vadd.f32 %v2238, %v2282
    %v2284 = vpop.f32.mrf.mxu0
    %v2285 = vadd.f32 %v2238, %v2284
    %2286 = vmatmul.bf16.gmra.mxu0 %v2268
    %v2287 = vpop.f32.mrf.mxu0
    %v2288 = vadd.f32 %v2238, %v2287
    %v2289 = vpop.f32.mrf.mxu0
    %v2290 = vadd.f32 %v2238, %v2289
    %2291 = vmatmul.bf16.gmra.mxu0 %v2271
    %v2292 = vpop.f32.mrf.mxu0
    %v2293 = vadd.f32 %v2238, %v2292
    %v2294 = vpop.f32.mrf.mxu0
    %v2295 = vadd.f32 %v2238, %v2294
    %2296 = vdwg.mxu0
    %vm2297 = vcmask 130048
    %2298 = vst.msk [vmem:[%s8] sm:$0xff] %vm2297, %v2283
    %2299 = vst.msk [vmem:[%s8 + $0x8] sm:$0xff] %vm2297, %v2285
    %2300 = vst.msk [vmem:[%s8 + $0x10] sm:$0xff] %vm2297, %v2288
    %2301 = vst.msk [vmem:[%s8 + $0x18] sm:$0xff] %vm2297, %v2290
    %2302 = vst.msk [vmem:[%s8 + $0x20] sm:$0xff] %vm2297, %v2293
    %2303 = vst.msk [vmem:[%s8 + $0x28] sm:$0xff] %vm2297, %v2295
    %2304 = vst.msk [vmem:[#allocation2] sm:$0xff] %vm512, %v2162
    %2305 = vst.msk [vmem:[#allocation2 + $0x8] sm:$0xff] %vm512, %v2163
    %2306 = vst.msk [vmem:[#allocation2 + $0x10] sm:$0xff] %vm512, %v2164
    %2307 = vst.msk [vmem:[#allocation2 + $0x18] sm:$0xff] %vm512, %v2165
    %2308 = vst.msk [vmem:[#allocation2 + $0x20] sm:$0xff] %vm512, %v2166
    %2309 = vst.msk [vmem:[#allocation2 + $0x28] sm:$0xff] %vm512, %v2167
    // Predicated region
    $region34: #{reconstruction3d_forward.14} parent=1 // pred_check
      _
    $region35: #{reconstruction3d_forward.14} parent=1 // pred_check_branch
      %2311 = sbr.rel (0) target = $region37
    $region36: #{reconstruction3d_forward.14} parent=1 // pred_region
      _
    $region37: #{reconstruction3d_forward.14} parent=1 // pred_fallthru
      _
    // Predicated region
    $region38: #{reconstruction3d_forward.14} parent=1 // pred_check
      _
    $region39: #{reconstruction3d_forward.14} parent=1 // pred_check_branch
      %2313 = sbr.rel (0) target = $region41
    $region40: #{reconstruction3d_forward.14} parent=1 // pred_region
      %2315 = vsyncadd [#allocation3], 0
      %s2316 = sshll.u32 [#allocation2], 4
      %s2317 = int_to_ptr.vmem [resolvable:$true] %s2316
      %s2318 = sshll.u32 %s9, 4
      %s2319 = int_to_ptr.hbm [resolvable:$true] %s2318
      %2324 = dma.vmem_to_hbm [thread:$0]  %s2317, 768, %s2319, [#allocation3], 128, 128, 8
    $region41: #{reconstruction3d_forward.14} parent=1 // pred_fallthru
      _
    // Predicated region
    $region42: #{reconstruction3d_forward.14} parent=1 // pred_check
      _
    $region43: #{reconstruction3d_forward.14} parent=1 // pred_check_branch
      %2326 = sbr.rel (0) target = $region45
    $region44: #{reconstruction3d_forward.14} parent=1 // pred_region
      _
    $region45: #{reconstruction3d_forward.14} parent=1 // pred_fallthru
      _
    // Predicated region
    $region46: #{reconstruction3d_forward.14} parent=1 // pred_check
      _
    $region47: #{reconstruction3d_forward.14} parent=1 // pred_check_branch
      %2328 = sbr.rel (0) target = $region49
    $region48: #{reconstruction3d_forward.14} parent=1 // pred_region
      %2330 = dma.done [#allocation3], 768
    $region49: #{reconstruction3d_forward.14} parent=1 // pred_fallthru
      _
    %2331 = vsyncpa [#allocation3], 1

</llo_original>
